<compile_context>
chip_gen: v7x
topology: tpu7x:2x2x1
jax: 0.10.0
libtpu: 0.0.40
codegen_flags: <defaults>
</compile_context>

<pallas_src>
import functools

import jax
import jax.numpy as jnp
from jax import lax
from jax.experimental import pallas as pl
from jax.experimental.pallas import tpu as pltpu

EPS = 1e-5
SLOPE = 0.2            # LeakyReLU(0.2)


def _vmem_limit_bytes():
    """Generation-aware VMEM budget (v7x: 64 MiB physical, v5e/v6e: 128 MiB)."""
    cap = 64 * 1024 * 1024
    try:
        cap = int(pltpu.get_tpu_info().vmem_capacity_bytes)
    except Exception:
        pass
    return int(min(cap * 3 // 4, 100 * 1024 * 1024))


# ----------------------------- in-kernel helpers ----------------------------

def _lrelu(x):
    return jnp.where(x >= 0, x, SLOPE * x)


def _expand(x):
    """torch.cat((cos(x), sin(x), x), channel-dim), computed in VMEM (EUP)."""
    return jnp.concatenate([jnp.cos(x), jnp.sin(x), x], axis=0)


# ------------------------------- Pallas kernels ------------------------------

def conv0_kernel(u_ref, mask_ref, w_ref, b_ref, y_ref, s_ref, q_ref, *, w4):
    """Conv3x3(24->4) at half resolution (pre-BN) for one image.

    u_ref   : (32, MI)   window-grouped raw input, rows = 8*plane + in_ch
    mask_ref: (9, 1, MI) quarter-res border masks, index (dh+1)*3 + (dw+1)
    w_ref   : (16, 384)  tap/plane stacked conv weights
    b_ref   : (16, 1)    per-row bias (row = 4*plane + out_ch)
    y_ref   : (16, MI)   pre-BN conv output
    s_ref/q_ref : (16, 1) per-row sum / sum-of-squares (BatchNorm partials)
    """
    u = u_ref[...]
    mi = u.shape[-1]
    # cos/sin channel expansion of each source plane, computed once in VMEM.
    e = [_expand(u[8 * p:8 * p + 8, :]) for p in range(4)]          # 4 x (24, MI)

    # 16 distinct (source plane, quarter-res shift) combinations; every
    # (output plane, tap) pair maps onto one of them (weights packed to match).
    parts = []
    for k in range(16):
        ar, ac = k // 4 - 1, k % 4 - 1            # half-res offsets in [-1, 2]
        ip, dh = ar % 2, ar // 2
        jp, dw = ac % 2, ac // 2
        g = e[2 * ip + jp]
        off = dh * w4 + dw
        if off != 0:
            g = pltpu.roll(g, shift=(-off) % mi, axis=1)
            g = g * mask_ref[(dh + 1) * 3 + (dw + 1)]   # zero wrapped lanes
        parts.append(g)
    rhs = jnp.concatenate(parts, axis=0)                            # (384, MI)

    y = jnp.dot(w_ref[...], rhs, preferred_element_type=jnp.float32) + b_ref[...]
    y_ref[...] = y
    s_ref[...] = jnp.sum(y, axis=1, keepdims=True)
    q_ref[...] = jnp.sum(y * y, axis=1, keepdims=True)


def bn0_pool_conv1_kernel(y0_ref, mean0_ref, inv0_ref, mask_ref,
                          wc_ref, ws_ref, wi_ref, b1_ref,
                          o0_ref, y1_ref, s1_ref, q1_ref, *, w4):
    """BN0 + LReLU -> o0, MaxPool2d(2,2), Conv3x3(12->4) pre-BN, one image."""
    o0 = _lrelu((y0_ref[...] - mean0_ref[...]) * inv0_ref[...])     # (16, MI)
    o0_ref[...] = o0
    pooled = jnp.maximum(jnp.maximum(o0[0:4], o0[4:8]),
                         jnp.maximum(o0[8:12], o0[12:16]))          # (4, MI)
    mi = pooled.shape[-1]
    cosp = jnp.cos(pooled)
    sinp = jnp.sin(pooled)

    # conv1 taps accumulated as small dots (keeps every sublane access
    # 8-aligned); conv0 (the dominant conv) uses the fully stacked matmul.
    # TODO(synk): stack conv1 taps into a single (4,108)@(108,MI) matmul too.
    acc = jnp.zeros((4, mi), jnp.float32)
    t = 0
    for dy in range(3):
        for dx in range(3):
            dh, dw = dy - 1, dx - 1
            off = dh * w4 + dw
            mk = None if off == 0 else mask_ref[(dh + 1) * 3 + (dw + 1)]
            for src, wref in ((cosp, wc_ref), (sinp, ws_ref), (pooled, wi_ref)):
                g = src
                if off != 0:
                    g = pltpu.roll(g, shift=(-off) % mi, axis=1) * mk
                acc = acc + jnp.dot(wref[t], g,
                                    preferred_element_type=jnp.float32)
            t += 1
    y1 = acc + b1_ref[...]
    y1_ref[...] = y1
    s1_ref[...] = jnp.sum(y1, axis=1, keepdims=True)
    q1_ref[...] = jnp.sum(y1 * y1, axis=1, keepdims=True)


def bn1_tconv_kernel(y1_ref, mean1_ref, inv1_ref, wt_ref, bt_ref,
                     t_ref, st_ref, qt_ref):
    """BN1 + LReLU -> o1, then ConvTranspose2d(4->4, k=2, s=2) pre-BN."""
    o1 = _lrelu((y1_ref[...] - mean1_ref[...]) * inv1_ref[...])     # (4, MI)
    t = jnp.dot(wt_ref[...], o1, preferred_element_type=jnp.float32) + bt_ref[...]
    t_ref[...] = t                                                  # (16, MI)
    st_ref[...] = jnp.sum(t, axis=1, keepdims=True)
    qt_ref[...] = jnp.sum(t * t, axis=1, keepdims=True)


def bnt_conv9_kernel(o0_ref, tp_ref, meant_ref, invt_ref, w9_ref, b9_ref,
                     out_ref):
    """BN_t + LReLU on the upsampled map, then 1x1 conv (24 -> 4)."""
    o0 = o0_ref[...]                                                # (16, MI)
    t = _lrelu((tp_ref[...] - meant_ref[...]) * invt_ref[...])      # (16, MI)
    # cos/sin expansion of cat(o0, t), reordered into sublane-aligned 16-row
    # blocks; the w9 columns are permuted host-side to match this order.
    rhs = jnp.concatenate([jnp.cos(o0), jnp.cos(t),
                           jnp.sin(o0), jnp.sin(t), o0, t], axis=0)  # (96, MI)
    out_ref[...] = (jnp.dot(w9_ref[...], rhs,
                            preferred_element_type=jnp.float32) + b9_ref[...])


# --------------------------- host-side weight packing ------------------------

def _pack_conv0(w0):
    """(4,24,3,3) -> (16, 16*24) stacked over (output plane, source combo)."""
    w = jnp.zeros((16, 16 * 24), jnp.float32)
    for i in range(2):
        for j in range(2):
            p = 2 * i + j
            for dy in range(3):
                for dx in range(3):
                    k = (i + dy) * 4 + (j + dx)
                    w = w.at[4 * p:4 * p + 4,
                             24 * k:24 * k + 24].set(w0[:, :, dy, dx])
    return w


def _pack_conv9(w9):
    """(4,24) -> (16, 96) matching the kernel-4 RHS row order."""
    w = jnp.zeros((16, 96), jnp.float32)
    for p in range(4):
        for blk in range(6):
            w = w.at[4 * p:4 * p + 4,
                     16 * blk + 4 * p:16 * blk + 4 * p + 4].set(
                         w9[:, 4 * blk:4 * blk + 4])
    return w


def _rows16(v):
    """(4,) per-channel vector -> (16, 1) with row index 4*plane + channel."""
    return jnp.tile(v.reshape(1, 4), (4, 1)).reshape(16, 1)


# ---------------------------------- wrapper ----------------------------------

def forward(x_complex, params):
    B, Cc, H, W = x_complex.shape
    assert Cc == 1 and H % 4 == 0 and W % 4 == 0
    H4, W4 = H // 4, W // 4
    MI = H4 * W4                       # quarter-res pixels per image (lane axis)
    assert MI % 128 == 0, "H/4 * W/4 must be a multiple of 128"
    f32 = jnp.float32

    # --- host data plumbing: real/imag cat, PixelUnshuffle(2), window grouping
    info = jnp.concatenate([jnp.real(x_complex), jnp.imag(x_complex)],
                           axis=1).astype(f32)                       # (B,2,H,W)
    ti = info.reshape(B, 2, H4, 2, 2, W4, 2, 2)                      # b c h4 i i2 w4 j j2
    u_wg = ti.transpose(0, 3, 6, 1, 4, 7, 2, 5).reshape(B, 32, MI)   # rows = 8p + ch

    # border-validity masks on the quarter-res grid, shared by both 3x3 convs;
    # batch independent so they are fetched into VMEM once per kernel.
    # TODO(synk): generate in-kernel from broadcasted_iota (needs vector int
    # div/mod lowering verified on all target generations).
    hv, wv = jnp.arange(H4), jnp.arange(W4)
    masks = []
    for dh in (-1, 0, 1):
        hok = ((hv + dh) >= 0) & ((hv + dh) < H4)
        for dw in (-1, 0, 1):
            wok = ((wv + dw) >= 0) & ((wv + dw) < W4)
            masks.append((hok[:, None] & wok[None, :]).astype(f32).reshape(1, MI))
    border = jnp.stack(masks, axis=0)                                # (9, 1, MI)

    # --- weights packed for the stacked / plane-folded layouts
    w0p = _pack_conv0(params["w0"])                                  # (16, 384)
    w1t = jnp.transpose(params["w1"], (2, 3, 0, 1))                  # (3,3,4,12)
    w1c = w1t[..., 0:4].reshape(9, 4, 4)
    w1s = w1t[..., 4:8].reshape(9, 4, 4)
    w1i = w1t[..., 8:12].reshape(9, 4, 4)
    wtp = jnp.transpose(params["wt"], (2, 3, 1, 0)).reshape(16, 4)   # (16, 4)
    w9b = _pack_conv9(params["w9"].reshape(4, 24))                   # (16, 96)
    b0r = _rows16(params["b0"])
    b1r = params["b1"].reshape(4, 1)
    btr = _rows16(params["bt"])
    b9r = _rows16(params["b9"])

    cp = pltpu.CompilerParams(dimension_semantics=("parallel",),
                              vmem_limit_bytes=_vmem_limit_bytes())

    def img_spec(rows):
        return pl.BlockSpec((None, rows, MI), lambda b: (b, 0, 0))

    def stat_spec(rows):
        return pl.BlockSpec((None, rows, 1), lambda b: (b, 0, 0))

    def bc_spec(shape):
        nd = len(shape)
        return pl.BlockSpec(shape, lambda b: (0,) * nd)

    # --- K1: conv0 3x3 (24->4) pre-BN + BN partial stats, one image per step
    y0, s0, q0 = pl.pallas_call(
        functools.partial(conv0_kernel, w4=W4),
        grid=(B,),
        in_specs=[img_spec(32), bc_spec((9, 1, MI)), bc_spec((16, 384)),
                  bc_spec((16, 1))],
        out_specs=(img_spec(16), stat_spec(16), stat_spec(16)),
        out_shape=(jax.ShapeDtypeStruct((B, 16, MI), f32),
                   jax.ShapeDtypeStruct((B, 16, 1), f32),
                   jax.ShapeDtypeStruct((B, 16, 1), f32)),
        compiler_params=cp,
    )(u_wg, border, w0p, b0r)

    # tiny host reduction: exact training-mode BatchNorm stats for conv0
    cnt0 = 4.0 * B * MI                          # N * H/2 * W/2 per channel
    m0 = s0.reshape(B, 4, 4).sum(axis=(0, 1)) / cnt0
    v0 = jnp.maximum(q0.reshape(B, 4, 4).sum(axis=(0, 1)) / cnt0 - m0 * m0, 0.0)
    mean0, inv0 = _rows16(m0), _rows16(lax.rsqrt(v0 + EPS))

    # --- K2: BN0 + LReLU -> o0, MaxPool(2,2), conv1 3x3 (12->4) pre-BN
    o0, y1, s1, q1 = pl.pallas_call(
        functools.partial(bn0_pool_conv1_kernel, w4=W4),
        grid=(B,),
        in_specs=[img_spec(16), bc_spec((16, 1)), bc_spec((16, 1)),
                  bc_spec((9, 1, MI)), bc_spec((9, 4, 4)), bc_spec((9, 4, 4)),
                  bc_spec((9, 4, 4)), bc_spec((4, 1))],
        out_specs=(img_spec(16), img_spec(4), stat_spec(4), stat_spec(4)),
        out_shape=(jax.ShapeDtypeStruct((B, 16, MI), f32),
                   jax.ShapeDtypeStruct((B, 4, MI), f32),
                   jax.ShapeDtypeStruct((B, 4, 1), f32),
                   jax.ShapeDtypeStruct((B, 4, 1), f32)),
        compiler_params=cp,
    )(y0, mean0, inv0, border, w1c, w1s, w1i, b1r)

    cnt1 = 1.0 * B * MI
    m1 = s1.reshape(B, 4).sum(axis=0) / cnt1
    v1 = jnp.maximum(q1.reshape(B, 4).sum(axis=0) / cnt1 - m1 * m1, 0.0)
    mean1, inv1 = m1.reshape(4, 1), lax.rsqrt(v1 + EPS).reshape(4, 1)

    # --- K3: BN1 + LReLU -> o1, ConvTranspose2d(4->4, 2, 2) pre-BN
    t_pre, st, qt = pl.pallas_call(
        bn1_tconv_kernel,
        grid=(B,),
        in_specs=[img_spec(4), bc_spec((4, 1)), bc_spec((4, 1)),
                  bc_spec((16, 4)), bc_spec((16, 1))],
        out_specs=(img_spec(16), stat_spec(16), stat_spec(16)),
        out_shape=(jax.ShapeDtypeStruct((B, 16, MI), f32),
                   jax.ShapeDtypeStruct((B, 16, 1), f32),
                   jax.ShapeDtypeStruct((B, 16, 1), f32)),
        compiler_params=cp,
    )(y1, mean1, inv1, wtp, btr)

    cntt = 4.0 * B * MI
    mt = st.reshape(B, 4, 4).sum(axis=(0, 1)) / cntt
    vt = jnp.maximum(qt.reshape(B, 4, 4).sum(axis=(0, 1)) / cntt - mt * mt, 0.0)
    meant, invt = _rows16(mt), _rows16(lax.rsqrt(vt + EPS))

    # --- K4: BN_t + LReLU, in-kernel cos/sin expansion, 1x1 conv (24->4)
    out_wg = pl.pallas_call(
        bnt_conv9_kernel,
        grid=(B,),
        in_specs=[img_spec(16), img_spec(16), bc_spec((16, 1)), bc_spec((16, 1)),
                  bc_spec((16, 96)), bc_spec((16, 1))],
        out_specs=img_spec(16),
        out_shape=jax.ShapeDtypeStruct((B, 16, MI), f32),
        compiler_params=cp,
    )(o0, t_pre, meant, invt, w9b, b9r)

    # --- host: un-group the window planes + PixelShuffle(2) -> NCHW
    o = out_wg.reshape(B, 2, 2, 2, 2, H4, W4)        # b i j r2 c2 h4 w4
    o = o.transpose(0, 5, 1, 3, 6, 2, 4).reshape(B, 1, H, W)
    return o


# ------------------------ deterministic parameter init -----------------------

def init_params(key):
    ks = jax.random.split(key, 6)
    gain = (2.0 / (1.0 + 0.01 ** 2)) ** 0.5   # kaiming gain for leaky_relu

    # conv0_0: Conv2d(24, 4, 3, 3), kaiming_normal fan_in, bias = 0
    w0 = jax.random.normal(ks[0], (4, 24, 3, 3), jnp.float32) * (gain / (24 * 9) ** 0.5)
    b0 = jnp.zeros((4,), jnp.float32)
    # conv1_0: Conv2d(12, 4, 3, 3), kaiming_normal fan_in, bias = 0
    w1 = jax.random.normal(ks[1], (4, 12, 3, 3), jnp.float32) * (gain / (12 * 9) ** 0.5)
    b1 = jnp.zeros((4,), jnp.float32)
    # transposeConv1_0: ConvTranspose2d(4, 4, 2, 2) (deterministic stand-in)
    wt = jax.random.normal(ks[2], (4, 4, 2, 2), jnp.float32) * (1.0 / (4 * 4) ** 0.5)
    bt = jax.random.normal(ks[3], (4,), jnp.float32) * 0.05
    # conv9_9: Conv2d(24, 4, 1, 1) (deterministic stand-in)
    w9 = jax.random.normal(ks[4], (4, 24, 1, 1), jnp.float32) * (1.0 / 24 ** 0.5)
    b9 = jax.random.normal(ks[5], (4,), jnp.float32) * 0.05
    return dict(w0=w0, b0=b0, w1=w1, b1=b1, wt=wt, bt=bt, w9=w9, b9=b9)


if __name__ == "__main__":
    key = jax.random.PRNGKey(0)
    kx, kp = jax.random.split(key)
    B, H, W = 2, 64, 64              # MI = (H/4)*(W/4) = 256 lanes per image
    xr = jax.random.normal(kx, (B, 1, H, W), jnp.float32)
    xi = jax.random.normal(jax.random.fold_in(kx, 1), (B, 1, H, W), jnp.float32)
    x = (xr + 1j * xi).astype(jnp.complex64)   # complex input, 1 channel

    params = init_params(kp)
    out = jax.jit(forward)(x, params)
    jax.block_until_ready(out)
    assert out.shape == (B, 1, H, W) and out.dtype == jnp.float32
    print("KERNEL_OK")
</pallas_src>

<mosaic_0001>
module attributes {stable_mosaic.version = 11 : i64} {
  func.func @conv0_kernel(%arg0: i32, %arg1: memref<1x32x256xf32, #tpu.memory_space<vmem>>, %arg2: memref<9x1x256xf32, #tpu.memory_space<vmem>>, %arg3: memref<16x384xf32, #tpu.memory_space<vmem>>, %arg4: memref<16x1xf32, #tpu.memory_space<vmem>>, %arg5: memref<1x16x256xf32, #tpu.memory_space<vmem>>, %arg6: memref<1x16x1xf32, #tpu.memory_space<vmem>>, %arg7: memref<1x16x1xf32, #tpu.memory_space<vmem>>) attributes {dimension_semantics = [#tpu.dimension_semantics<parallel>], iteration_bounds = array<i64: 2>, scalar_prefetch = 0 : i64, scratch_operands = 0 : i64, tpu.core_type = #tpu.core_type<tc>, window_params = [{transform_indices = @transform_0, window_bounds = array<i64: 1, 32, 256>}, {pipeline_mode = #tpu.pipeline_mode<synchronous>, transform_indices = @transform_1, window_bounds = array<i64: 9, 1, 256>}, {pipeline_mode = #tpu.pipeline_mode<synchronous>, transform_indices = @transform_2, window_bounds = array<i64: 16, 384>}, {pipeline_mode = #tpu.pipeline_mode<synchronous>, transform_indices = @transform_3, window_bounds = array<i64: 16, 1>}, {transform_indices = @transform_4, window_bounds = array<i64: 1, 16, 256>}, {transform_indices = @transform_5, window_bounds = array<i64: 1, 16, 1>}, {transform_indices = @transform_6, window_bounds = array<i64: 1, 16, 1>}]} {
    %c0 = arith.constant 0 : index
    %c0_0 = arith.constant 0 : index
    %c0_1 = arith.constant 0 : index
    %0 = vector.load %arg1[%c0, %c0_0, %c0_1] : memref<1x32x256xf32, #tpu.memory_space<vmem>>, vector<1x32x256xf32>
    %1 = vector.shape_cast %0 : vector<1x32x256xf32> to vector<32x256xf32>
    %2 = vector.extract_strided_slice %1 {offsets = [0, 0], sizes = [8, 256], strides = [1, 1]} : vector<32x256xf32> to vector<8x256xf32>
    %3 = math.cos %2 : vector<8x256xf32>
    %4 = math.sin %2 : vector<8x256xf32>
    %5 = tpu.concatenate %3, %4, %2 in 0 : vector<8x256xf32>, vector<8x256xf32>, vector<8x256xf32> -> vector<24x256xf32>
    %6 = vector.extract_strided_slice %1 {offsets = [8, 0], sizes = [8, 256], strides = [1, 1]} : vector<32x256xf32> to vector<8x256xf32>
    %7 = math.cos %6 : vector<8x256xf32>
    %8 = math.sin %6 : vector<8x256xf32>
    %9 = tpu.concatenate %7, %8, %6 in 0 : vector<8x256xf32>, vector<8x256xf32>, vector<8x256xf32> -> vector<24x256xf32>
    %10 = vector.extract_strided_slice %1 {offsets = [16, 0], sizes = [8, 256], strides = [1, 1]} : vector<32x256xf32> to vector<8x256xf32>
    %11 = math.cos %10 : vector<8x256xf32>
    %12 = math.sin %10 : vector<8x256xf32>
    %13 = tpu.concatenate %11, %12, %10 in 0 : vector<8x256xf32>, vector<8x256xf32>, vector<8x256xf32> -> vector<24x256xf32>
    %14 = vector.extract_strided_slice %1 {offsets = [24, 0], sizes = [8, 256], strides = [1, 1]} : vector<32x256xf32> to vector<8x256xf32>
    %15 = math.cos %14 : vector<8x256xf32>
    %16 = math.sin %14 : vector<8x256xf32>
    %17 = tpu.concatenate %15, %16, %14 in 0 : vector<8x256xf32>, vector<8x256xf32>, vector<8x256xf32> -> vector<24x256xf32>
    %c17_i32 = arith.constant 17 : i32
    %18 = tpu.dynamic_rotate %17 by %c17_i32 dim 1 : vector<24x256xf32>, i32 -> vector<24x256xf32>
    %c0_2 = arith.constant 0 : index
    %c0_3 = arith.constant 0 : index
    %c0_4 = arith.constant 0 : index
    %19 = vector.load %arg2[%c0_2, %c0_3, %c0_4] : memref<9x1x256xf32, #tpu.memory_space<vmem>>, vector<1x1x256xf32>
    %20 = vector.shape_cast %19 : vector<1x1x256xf32> to vector<1x256xf32>
    %21 = vector.broadcast %20 : vector<1x256xf32> to vector<24x256xf32>
    %22 = arith.mulf %18, %21 : vector<24x256xf32>
    %c16_i32 = arith.constant 16 : i32
    %23 = tpu.dynamic_rotate %13 by %c16_i32 dim 1 : vector<24x256xf32>, i32 -> vector<24x256xf32>
    %c1 = arith.constant 1 : index
    %c0_5 = arith.constant 0 : index
    %c0_6 = arith.constant 0 : index
    %24 = vector.load %arg2[%c1, %c0_5, %c0_6] : memref<9x1x256xf32, #tpu.memory_space<vmem>>, vector<1x1x256xf32>
    %25 = vector.shape_cast %24 : vector<1x1x256xf32> to vector<1x256xf32>
    %26 = vector.broadcast %25 : vector<1x256xf32> to vector<24x256xf32>
    %27 = arith.mulf %23, %26 : vector<24x256xf32>
    %c16_i32_7 = arith.constant 16 : i32
    %28 = tpu.dynamic_rotate %17 by %c16_i32_7 dim 1 : vector<24x256xf32>, i32 -> vector<24x256xf32>
    %c1_8 = arith.constant 1 : index
    %c0_9 = arith.constant 0 : index
    %c0_10 = arith.constant 0 : index
    %29 = vector.load %arg2[%c1_8, %c0_9, %c0_10] : memref<9x1x256xf32, #tpu.memory_space<vmem>>, vector<1x1x256xf32>
    %30 = vector.shape_cast %29 : vector<1x1x256xf32> to vector<1x256xf32>
    %31 = vector.broadcast %30 : vector<1x256xf32> to vector<24x256xf32>
    %32 = arith.mulf %28, %31 : vector<24x256xf32>
    %c15_i32 = arith.constant 15 : i32
    %33 = tpu.dynamic_rotate %13 by %c15_i32 dim 1 : vector<24x256xf32>, i32 -> vector<24x256xf32>
    %c2 = arith.constant 2 : index
    %c0_11 = arith.constant 0 : index
    %c0_12 = arith.constant 0 : index
    %34 = vector.load %arg2[%c2, %c0_11, %c0_12] : memref<9x1x256xf32, #tpu.memory_space<vmem>>, vector<1x1x256xf32>
    %35 = vector.shape_cast %34 : vector<1x1x256xf32> to vector<1x256xf32>
    %36 = vector.broadcast %35 : vector<1x256xf32> to vector<24x256xf32>
    %37 = arith.mulf %33, %36 : vector<24x256xf32>
    %c1_i32 = arith.constant 1 : i32
    %38 = tpu.dynamic_rotate %9 by %c1_i32 dim 1 : vector<24x256xf32>, i32 -> vector<24x256xf32>
    %c3 = arith.constant 3 : index
    %c0_13 = arith.constant 0 : index
    %c0_14 = arith.constant 0 : index
    %39 = vector.load %arg2[%c3, %c0_13, %c0_14] : memref<9x1x256xf32, #tpu.memory_space<vmem>>, vector<1x1x256xf32>
    %40 = vector.shape_cast %39 : vector<1x1x256xf32> to vector<1x256xf32>
    %41 = vector.broadcast %40 : vector<1x256xf32> to vector<24x256xf32>
    %42 = arith.mulf %38, %41 : vector<24x256xf32>
    %c255_i32 = arith.constant 255 : i32
    %43 = tpu.dynamic_rotate %5 by %c255_i32 dim 1 : vector<24x256xf32>, i32 -> vector<24x256xf32>
    %c5 = arith.constant 5 : index
    %c0_15 = arith.constant 0 : index
    %c0_16 = arith.constant 0 : index
    %44 = vector.load %arg2[%c5, %c0_15, %c0_16] : memref<9x1x256xf32, #tpu.memory_space<vmem>>, vector<1x1x256xf32>
    %45 = vector.shape_cast %44 : vector<1x1x256xf32> to vector<1x256xf32>
    %46 = vector.broadcast %45 : vector<1x256xf32> to vector<24x256xf32>
    %47 = arith.mulf %43, %46 : vector<24x256xf32>
    %c1_i32_17 = arith.constant 1 : i32
    %48 = tpu.dynamic_rotate %17 by %c1_i32_17 dim 1 : vector<24x256xf32>, i32 -> vector<24x256xf32>
    %c3_18 = arith.constant 3 : index
    %c0_19 = arith.constant 0 : index
    %c0_20 = arith.constant 0 : index
    %49 = vector.load %arg2[%c3_18, %c0_19, %c0_20] : memref<9x1x256xf32, #tpu.memory_space<vmem>>, vector<1x1x256xf32>
    %50 = vector.shape_cast %49 : vector<1x1x256xf32> to vector<1x256xf32>
    %51 = vector.broadcast %50 : vector<1x256xf32> to vector<24x256xf32>
    %52 = arith.mulf %48, %51 : vector<24x256xf32>
    %c255_i32_21 = arith.constant 255 : i32
    %53 = tpu.dynamic_rotate %13 by %c255_i32_21 dim 1 : vector<24x256xf32>, i32 -> vector<24x256xf32>
    %c5_22 = arith.constant 5 : index
    %c0_23 = arith.constant 0 : index
    %c0_24 = arith.constant 0 : index
    %54 = vector.load %arg2[%c5_22, %c0_23, %c0_24] : memref<9x1x256xf32, #tpu.memory_space<vmem>>, vector<1x1x256xf32>
    %55 = vector.shape_cast %54 : vector<1x1x256xf32> to vector<1x256xf32>
    %56 = vector.broadcast %55 : vector<1x256xf32> to vector<24x256xf32>
    %57 = arith.mulf %53, %56 : vector<24x256xf32>
    %c241_i32 = arith.constant 241 : i32
    %58 = tpu.dynamic_rotate %9 by %c241_i32 dim 1 : vector<24x256xf32>, i32 -> vector<24x256xf32>
    %c6 = arith.constant 6 : index
    %c0_25 = arith.constant 0 : index
    %c0_26 = arith.constant 0 : index
    %59 = vector.load %arg2[%c6, %c0_25, %c0_26] : memref<9x1x256xf32, #tpu.memory_space<vmem>>, vector<1x1x256xf32>
    %60 = vector.shape_cast %59 : vector<1x1x256xf32> to vector<1x256xf32>
    %61 = vector.broadcast %60 : vector<1x256xf32> to vector<24x256xf32>
    %62 = arith.mulf %58, %61 : vector<24x256xf32>
    %c240_i32 = arith.constant 240 : i32
    %63 = tpu.dynamic_rotate %5 by %c240_i32 dim 1 : vector<24x256xf32>, i32 -> vector<24x256xf32>
    %c7 = arith.constant 7 : index
    %c0_27 = arith.constant 0 : index
    %c0_28 = arith.constant 0 : index
    %64 = vector.load %arg2[%c7, %c0_27, %c0_28] : memref<9x1x256xf32, #tpu.memory_space<vmem>>, vector<1x1x256xf32>
    %65 = vector.shape_cast %64 : vector<1x1x256xf32> to vector<1x256xf32>
    %66 = vector.broadcast %65 : vector<1x256xf32> to vector<24x256xf32>
    %67 = arith.mulf %63, %66 : vector<24x256xf32>
    %c240_i32_29 = arith.constant 240 : i32
    %68 = tpu.dynamic_rotate %9 by %c240_i32_29 dim 1 : vector<24x256xf32>, i32 -> vector<24x256xf32>
    %c7_30 = arith.constant 7 : index
    %c0_31 = arith.constant 0 : index
    %c0_32 = arith.constant 0 : index
    %69 = vector.load %arg2[%c7_30, %c0_31, %c0_32] : memref<9x1x256xf32, #tpu.memory_space<vmem>>, vector<1x1x256xf32>
    %70 = vector.shape_cast %69 : vector<1x1x256xf32> to vector<1x256xf32>
    %71 = vector.broadcast %70 : vector<1x256xf32> to vector<24x256xf32>
    %72 = arith.mulf %68, %71 : vector<24x256xf32>
    %c239_i32 = arith.constant 239 : i32
    %73 = tpu.dynamic_rotate %5 by %c239_i32 dim 1 : vector<24x256xf32>, i32 -> vector<24x256xf32>
    %c8 = arith.constant 8 : index
    %c0_33 = arith.constant 0 : index
    %c0_34 = arith.constant 0 : index
    %74 = vector.load %arg2[%c8, %c0_33, %c0_34] : memref<9x1x256xf32, #tpu.memory_space<vmem>>, vector<1x1x256xf32>
    %75 = vector.shape_cast %74 : vector<1x1x256xf32> to vector<1x256xf32>
    %76 = vector.broadcast %75 : vector<1x256xf32> to vector<24x256xf32>
    %77 = arith.mulf %73, %76 : vector<24x256xf32>
    %78 = tpu.concatenate %22, %27, %32, %37, %42, %5, %9, %47, %52, %13, %17, %57, %62, %67, %72, %77 in 0 : vector<24x256xf32>, vector<24x256xf32>, vector<24x256xf32>, vector<24x256xf32>, vector<24x256xf32>, vector<24x256xf32>, vector<24x256xf32>, vector<24x256xf32>, vector<24x256xf32>, vector<24x256xf32>, vector<24x256xf32>, vector<24x256xf32>, vector<24x256xf32>, vector<24x256xf32>, vector<24x256xf32>, vector<24x256xf32> -> vector<384x256xf32>
    %c0_35 = arith.constant 0 : index
    %c0_36 = arith.constant 0 : index
    %79 = vector.load %arg3[%c0_35, %c0_36] : memref<16x384xf32, #tpu.memory_space<vmem>>, vector<16x384xf32>
    %cst = arith.constant dense<0.000000e+00> : vector<16x256xf32>
    %80 = tpu.matmul %79, %78, %cst {dimension_numbers = #tpu.dot_dimension_numbers<[1], [0], [0], [1], [0, 0, 1, 1], [], []>} : vector<16x384xf32>, vector<384x256xf32>, vector<16x256xf32> -> vector<16x256xf32>
    %c0_37 = arith.constant 0 : index
    %c0_38 = arith.constant 0 : index
    %81 = vector.load %arg4[%c0_37, %c0_38] : memref<16x1xf32, #tpu.memory_space<vmem>>, vector<16x1xf32>
    %82 = vector.broadcast %81 : vector<16x1xf32> to vector<16x256xf32>
    %83 = arith.addf %80, %82 : vector<16x256xf32>
    %c0_39 = arith.constant 0 : index
    %c0_40 = arith.constant 0 : index
    %c0_41 = arith.constant 0 : index
    %84 = vector.load %arg5[%c0_39, %c0_40, %c0_41] : memref<1x16x256xf32, #tpu.memory_space<vmem>>, vector<1x16x256xf32>
    %85 = vector.shape_cast %84 : vector<1x16x256xf32> to vector<16x256xf32>
    %86 = vector.shape_cast %83 : vector<16x256xf32> to vector<1x16x256xf32>
    tpu.vector_store %arg5[%c0_39, %c0_40, %c0_41], %86 {strides = array<i32>} : memref<1x16x256xf32, #tpu.memory_space<vmem>>, vector<1x16x256xf32>,
    %cst_42 = arith.constant dense<0.000000e+00> : vector<16xf32>
    %87 = vector.multi_reduction <add>, %83, %cst_42 [1] : vector<16x256xf32> to vector<16xf32>
    %88 = vector.shape_cast %87 : vector<16xf32> to vector<16x1xf32>
    %c0_43 = arith.constant 0 : index
    %c0_44 = arith.constant 0 : index
    %c0_45 = arith.constant 0 : index
    %89 = vector.load %arg6[%c0_43, %c0_44, %c0_45] : memref<1x16x1xf32, #tpu.memory_space<vmem>>, vector<1x16x1xf32>
    %90 = vector.shape_cast %89 : vector<1x16x1xf32> to vector<16x1xf32>
    %91 = vector.shape_cast %88 : vector<16x1xf32> to vector<1x16x1xf32>
    tpu.vector_store %arg6[%c0_43, %c0_44, %c0_45], %91 {strides = array<i32>} : memref<1x16x1xf32, #tpu.memory_space<vmem>>, vector<1x16x1xf32>,
    %92 = arith.mulf %83, %83 : vector<16x256xf32>
    %cst_46 = arith.constant dense<0.000000e+00> : vector<16xf32>
    %93 = vector.multi_reduction <add>, %92, %cst_46 [1] : vector<16x256xf32> to vector<16xf32>
    %94 = vector.shape_cast %93 : vector<16xf32> to vector<16x1xf32>
    %c0_47 = arith.constant 0 : index
    %c0_48 = arith.constant 0 : index
    %c0_49 = arith.constant 0 : index
    %95 = vector.load %arg7[%c0_47, %c0_48, %c0_49] : memref<1x16x1xf32, #tpu.memory_space<vmem>>, vector<1x16x1xf32>
    %96 = vector.shape_cast %95 : vector<1x16x1xf32> to vector<16x1xf32>
    %97 = vector.shape_cast %94 : vector<16x1xf32> to vector<1x16x1xf32>
    tpu.vector_store %arg7[%c0_47, %c0_48, %c0_49], %97 {strides = array<i32>} : memref<1x16x1xf32, #tpu.memory_space<vmem>>, vector<1x16x1xf32>,
    return
  }
  func.func @transform_0(%arg0: i32) -> (i32, i32, i32) {
    %c0_i32 = arith.constant 0 : i32
    %c0_i32_0 = arith.constant 0 : i32
    %c0_i32_1 = arith.constant 0 : i32
    return %arg0, %c0_i32, %c0_i32_0 : i32, i32, i32
  }
  func.func @transform_1(%arg0: i32) -> (i32, i32, i32) {
    %c0_i32 = arith.constant 0 : i32
    %c0_i32_0 = arith.constant 0 : i32
    %c0_i32_1 = arith.constant 0 : i32
    %c0_i32_2 = arith.constant 0 : i32
    return %c0_i32, %c0_i32_0, %c0_i32_1 : i32, i32, i32
  }
  func.func @transform_2(%arg0: i32) -> (i32, i32) {
    %c0_i32 = arith.constant 0 : i32
    %c0_i32_0 = arith.constant 0 : i32
    %c0_i32_1 = arith.constant 0 : i32
    return %c0_i32, %c0_i32_0 : i32, i32
  }
  func.func @transform_3(%arg0: i32) -> (i32, i32) {
    %c0_i32 = arith.constant 0 : i32
    %c0_i32_0 = arith.constant 0 : i32
    %c0_i32_1 = arith.constant 0 : i32
    return %c0_i32, %c0_i32_0 : i32, i32
  }
  func.func @transform_4(%arg0: i32) -> (i32, i32, i32) {
    %c0_i32 = arith.constant 0 : i32
    %c0_i32_0 = arith.constant 0 : i32
    %c0_i32_1 = arith.constant 0 : i32
    return %arg0, %c0_i32, %c0_i32_0 : i32, i32, i32
  }
  func.func @transform_5(%arg0: i32) -> (i32, i32, i32) {
    %c0_i32 = arith.constant 0 : i32
    %c0_i32_0 = arith.constant 0 : i32
    %c0_i32_1 = arith.constant 0 : i32
    return %arg0, %c0_i32, %c0_i32_0 : i32, i32, i32
  }
  func.func @transform_6(%arg0: i32) -> (i32, i32, i32) {
    %c0_i32 = arith.constant 0 : i32
    %c0_i32_0 = arith.constant 0 : i32
    %c0_i32_1 = arith.constant 0 : i32
    return %arg0, %c0_i32, %c0_i32_0 : i32, i32, i32
  }
}

module attributes {stable_mosaic.version = 11 : i64} {
  func.func @bn0_pool_conv1_kernel(%arg0: i32, %arg1: memref<1x16x256xf32, #tpu.memory_space<vmem>>, %arg2: memref<16x1xf32, #tpu.memory_space<vmem>>, %arg3: memref<16x1xf32, #tpu.memory_space<vmem>>, %arg4: memref<9x1x256xf32, #tpu.memory_space<vmem>>, %arg5: memref<9x4x4xf32, #tpu.memory_space<vmem>>, %arg6: memref<9x4x4xf32, #tpu.memory_space<vmem>>, %arg7: memref<9x4x4xf32, #tpu.memory_space<vmem>>, %arg8: memref<4x1xf32, #tpu.memory_space<vmem>>, %arg9: memref<1x16x256xf32, #tpu.memory_space<vmem>>, %arg10: memref<1x4x256xf32, #tpu.memory_space<vmem>>, %arg11: memref<1x4x1xf32, #tpu.memory_space<vmem>>, %arg12: memref<1x4x1xf32, #tpu.memory_space<vmem>>) attributes {dimension_semantics = [#tpu.dimension_semantics<parallel>], iteration_bounds = array<i64: 2>, scalar_prefetch = 0 : i64, scratch_operands = 0 : i64, tpu.core_type = #tpu.core_type<tc>, window_params = [{transform_indices = @transform_0, window_bounds = array<i64: 1, 16, 256>}, {pipeline_mode = #tpu.pipeline_mode<synchronous>, transform_indices = @transform_1, window_bounds = array<i64: 16, 1>}, {pipeline_mode = #tpu.pipeline_mode<synchronous>, transform_indices = @transform_2, window_bounds = array<i64: 16, 1>}, {pipeline_mode = #tpu.pipeline_mode<synchronous>, transform_indices = @transform_3, window_bounds = array<i64: 9, 1, 256>}, {pipeline_mode = #tpu.pipeline_mode<synchronous>, transform_indices = @transform_4, window_bounds = array<i64: 9, 4, 4>}, {pipeline_mode = #tpu.pipeline_mode<synchronous>, transform_indices = @transform_5, window_bounds = array<i64: 9, 4, 4>}, {pipeline_mode = #tpu.pipeline_mode<synchronous>, transform_indices = @transform_6, window_bounds = array<i64: 9, 4, 4>}, {pipeline_mode = #tpu.pipeline_mode<synchronous>, transform_indices = @transform_7, window_bounds = array<i64: 4, 1>}, {transform_indices = @transform_8, window_bounds = array<i64: 1, 16, 256>}, {transform_indices = @transform_9, window_bounds = array<i64: 1, 4, 256>}, {transform_indices = @transform_10, window_bounds = array<i64: 1, 4, 1>}, {transform_indices = @transform_11, window_bounds = array<i64: 1, 4, 1>}]} {
    %c0 = arith.constant 0 : index
    %c0_0 = arith.constant 0 : index
    %c0_1 = arith.constant 0 : index
    %0 = vector.load %arg1[%c0, %c0_0, %c0_1] : memref<1x16x256xf32, #tpu.memory_space<vmem>>, vector<1x16x256xf32>
    %1 = vector.shape_cast %0 : vector<1x16x256xf32> to vector<16x256xf32>
    %c0_2 = arith.constant 0 : index
    %c0_3 = arith.constant 0 : index
    %2 = vector.load %arg2[%c0_2, %c0_3] : memref<16x1xf32, #tpu.memory_space<vmem>>, vector<16x1xf32>
    %3 = vector.broadcast %2 : vector<16x1xf32> to vector<16x256xf32>
    %4 = arith.subf %1, %3 : vector<16x256xf32>
    %c0_4 = arith.constant 0 : index
    %c0_5 = arith.constant 0 : index
    %5 = vector.load %arg3[%c0_4, %c0_5] : memref<16x1xf32, #tpu.memory_space<vmem>>, vector<16x1xf32>
    %6 = vector.broadcast %5 : vector<16x1xf32> to vector<16x256xf32>
    %7 = arith.mulf %4, %6 : vector<16x256xf32>
    %cst = arith.constant 0.000000e+00 : f32
    %8 = vector.broadcast %cst : f32 to vector<16x256xf32>
    %9 = arith.cmpf oge, %7, %8 : vector<16x256xf32>
    %cst_6 = arith.constant 2.000000e-01 : f32
    %10 = vector.broadcast %cst_6 : f32 to vector<16x256xf32>
    %11 = arith.mulf %10, %7 : vector<16x256xf32>
    %12 = arith.select %9, %7, %11 : vector<16x256xi1>, vector<16x256xf32>
    %c0_7 = arith.constant 0 : index
    %c0_8 = arith.constant 0 : index
    %c0_9 = arith.constant 0 : index
    %13 = vector.load %arg9[%c0_7, %c0_8, %c0_9] : memref<1x16x256xf32, #tpu.memory_space<vmem>>, vector<1x16x256xf32>
    %14 = vector.shape_cast %13 : vector<1x16x256xf32> to vector<16x256xf32>
    %15 = vector.shape_cast %12 : vector<16x256xf32> to vector<1x16x256xf32>
    tpu.vector_store %arg9[%c0_7, %c0_8, %c0_9], %15 {strides = array<i32>} : memref<1x16x256xf32, #tpu.memory_space<vmem>>, vector<1x16x256xf32>,
    %16 = vector.extract_strided_slice %12 {offsets = [0, 0], sizes = [4, 256], strides = [1, 1]} : vector<16x256xf32> to vector<4x256xf32>
    %17 = vector.extract_strided_slice %12 {offsets = [4, 0], sizes = [4, 256], strides = [1, 1]} : vector<16x256xf32> to vector<4x256xf32>
    %18 = arith.maximumf %16, %17 : vector<4x256xf32>
    %19 = vector.extract_strided_slice %12 {offsets = [8, 0], sizes = [4, 256], strides = [1, 1]} : vector<16x256xf32> to vector<4x256xf32>
    %20 = vector.extract_strided_slice %12 {offsets = [12, 0], sizes = [4, 256], strides = [1, 1]} : vector<16x256xf32> to vector<4x256xf32>
    %21 = arith.maximumf %19, %20 : vector<4x256xf32>
    %22 = arith.maximumf %18, %21 : vector<4x256xf32>
    %23 = math.cos %22 : vector<4x256xf32>
    %24 = math.sin %22 : vector<4x256xf32>
    %cst_10 = arith.constant 0.000000e+00 : f32
    %25 = vector.broadcast %cst_10 : f32 to vector<4x256xf32>
    %c0_11 = arith.constant 0 : index
    %c0_12 = arith.constant 0 : index
    %c0_13 = arith.constant 0 : index
    %26 = vector.load %arg4[%c0_11, %c0_12, %c0_13] : memref<9x1x256xf32, #tpu.memory_space<vmem>>, vector<1x1x256xf32>
    %27 = vector.shape_cast %26 : vector<1x1x256xf32> to vector<1x256xf32>
    %c17_i32 = arith.constant 17 : i32
    %28 = tpu.dynamic_rotate %23 by %c17_i32 dim 1 : vector<4x256xf32>, i32 -> vector<4x256xf32>
    %29 = vector.broadcast %27 : vector<1x256xf32> to vector<4x256xf32>
    %30 = arith.mulf %28, %29 : vector<4x256xf32>
    %c0_14 = arith.constant 0 : index
    %c0_15 = arith.constant 0 : index
    %c0_16 = arith.constant 0 : index
    %31 = vector.load %arg5[%c0_14, %c0_15, %c0_16] : memref<9x4x4xf32, #tpu.memory_space<vmem>>, vector<1x4x4xf32>
    %32 = vector.shape_cast %31 : vector<1x4x4xf32> to vector<4x4xf32>
    %cst_17 = arith.constant dense<0.000000e+00> : vector<4x256xf32>
    %33 = tpu.matmul %32, %30, %cst_17 {dimension_numbers = #tpu.dot_dimension_numbers<[1], [0], [0], [1], [0, 0, 1, 1], [], []>} : vector<4x4xf32>, vector<4x256xf32>, vector<4x256xf32> -> vector<4x256xf32>
    %34 = arith.addf %25, %33 : vector<4x256xf32>
    %c17_i32_18 = arith.constant 17 : i32
    %35 = tpu.dynamic_rotate %24 by %c17_i32_18 dim 1 : vector<4x256xf32>, i32 -> vector<4x256xf32>
    %36 = vector.broadcast %27 : vector<1x256xf32> to vector<4x256xf32>
    %37 = arith.mulf %35, %36 : vector<4x256xf32>
    %c0_19 = arith.constant 0 : index
    %c0_20 = arith.constant 0 : index
    %c0_21 = arith.constant 0 : index
    %38 = vector.load %arg6[%c0_19, %c0_20, %c0_21] : memref<9x4x4xf32, #tpu.memory_space<vmem>>, vector<1x4x4xf32>
    %39 = vector.shape_cast %38 : vector<1x4x4xf32> to vector<4x4xf32>
    %cst_22 = arith.constant dense<0.000000e+00> : vector<4x256xf32>
    %40 = tpu.matmul %39, %37, %cst_22 {dimension_numbers = #tpu.dot_dimension_numbers<[1], [0], [0], [1], [0, 0, 1, 1], [], []>} : vector<4x4xf32>, vector<4x256xf32>, vector<4x256xf32> -> vector<4x256xf32>
    %41 = arith.addf %34, %40 : vector<4x256xf32>
    %c17_i32_23 = arith.constant 17 : i32
    %42 = tpu.dynamic_rotate %22 by %c17_i32_23 dim 1 : vector<4x256xf32>, i32 -> vector<4x256xf32>
    %43 = vector.broadcast %27 : vector<1x256xf32> to vector<4x256xf32>
    %44 = arith.mulf %42, %43 : vector<4x256xf32>
    %c0_24 = arith.constant 0 : index
    %c0_25 = arith.constant 0 : index
    %c0_26 = arith.constant 0 : index
    %45 = vector.load %arg7[%c0_24, %c0_25, %c0_26] : memref<9x4x4xf32, #tpu.memory_space<vmem>>, vector<1x4x4xf32>
    %46 = vector.shape_cast %45 : vector<1x4x4xf32> to vector<4x4xf32>
    %cst_27 = arith.constant dense<0.000000e+00> : vector<4x256xf32>
    %47 = tpu.matmul %46, %44, %cst_27 {dimension_numbers = #tpu.dot_dimension_numbers<[1], [0], [0], [1], [0, 0, 1, 1], [], []>} : vector<4x4xf32>, vector<4x256xf32>, vector<4x256xf32> -> vector<4x256xf32>
    %48 = arith.addf %41, %47 : vector<4x256xf32>
    %c1 = arith.constant 1 : index
    %c0_28 = arith.constant 0 : index
    %c0_29 = arith.constant 0 : index
    %49 = vector.load %arg4[%c1, %c0_28, %c0_29] : memref<9x1x256xf32, #tpu.memory_space<vmem>>, vector<1x1x256xf32>
    %50 = vector.shape_cast %49 : vector<1x1x256xf32> to vector<1x256xf32>
    %c16_i32 = arith.constant 16 : i32
    %51 = tpu.dynamic_rotate %23 by %c16_i32 dim 1 : vector<4x256xf32>, i32 -> vector<4x256xf32>
    %52 = vector.broadcast %50 : vector<1x256xf32> to vector<4x256xf32>
    %53 = arith.mulf %51, %52 : vector<4x256xf32>
    %c1_30 = arith.constant 1 : index
    %c0_31 = arith.constant 0 : index
    %c0_32 = arith.constant 0 : index
    %54 = vector.load %arg5[%c1_30, %c0_31, %c0_32] : memref<9x4x4xf32, #tpu.memory_space<vmem>>, vector<1x4x4xf32>
    %55 = vector.shape_cast %54 : vector<1x4x4xf32> to vector<4x4xf32>
    %cst_33 = arith.constant dense<0.000000e+00> : vector<4x256xf32>
    %56 = tpu.matmul %55, %53, %cst_33 {dimension_numbers = #tpu.dot_dimension_numbers<[1], [0], [0], [1], [0, 0, 1, 1], [], []>} : vector<4x4xf32>, vector<4x256xf32>, vector<4x256xf32> -> vector<4x256xf32>
    %57 = arith.addf %48, %56 : vector<4x256xf32>
    %c16_i32_34 = arith.constant 16 : i32
    %58 = tpu.dynamic_rotate %24 by %c16_i32_34 dim 1 : vector<4x256xf32>, i32 -> vector<4x256xf32>
    %59 = vector.broadcast %50 : vector<1x256xf32> to vector<4x256xf32>
    %60 = arith.mulf %58, %59 : vector<4x256xf32>
    %c1_35 = arith.constant 1 : index
    %c0_36 = arith.constant 0 : index
    %c0_37 = arith.constant 0 : index
    %61 = vector.load %arg6[%c1_35, %c0_36, %c0_37] : memref<9x4x4xf32, #tpu.memory_space<vmem>>, vector<1x4x4xf32>
    %62 = vector.shape_cast %61 : vector<1x4x4xf32> to vector<4x4xf32>
    %cst_38 = arith.constant dense<0.000000e+00> : vector<4x256xf32>
    %63 = tpu.matmul %62, %60, %cst_38 {dimension_numbers = #tpu.dot_dimension_numbers<[1], [0], [0], [1], [0, 0, 1, 1], [], []>} : vector<4x4xf32>, vector<4x256xf32>, vector<4x256xf32> -> vector<4x256xf32>
    %64 = arith.addf %57, %63 : vector<4x256xf32>
    %c16_i32_39 = arith.constant 16 : i32
    %65 = tpu.dynamic_rotate %22 by %c16_i32_39 dim 1 : vector<4x256xf32>, i32 -> vector<4x256xf32>
    %66 = vector.broadcast %50 : vector<1x256xf32> to vector<4x256xf32>
    %67 = arith.mulf %65, %66 : vector<4x256xf32>
    %c1_40 = arith.constant 1 : index
    %c0_41 = arith.constant 0 : index
    %c0_42 = arith.constant 0 : index
    %68 = vector.load %arg7[%c1_40, %c0_41, %c0_42] : memref<9x4x4xf32, #tpu.memory_space<vmem>>, vector<1x4x4xf32>
    %69 = vector.shape_cast %68 : vector<1x4x4xf32> to vector<4x4xf32>
    %cst_43 = arith.constant dense<0.000000e+00> : vector<4x256xf32>
    %70 = tpu.matmul %69, %67, %cst_43 {dimension_numbers = #tpu.dot_dimension_numbers<[1], [0], [0], [1], [0, 0, 1, 1], [], []>} : vector<4x4xf32>, vector<4x256xf32>, vector<4x256xf32> -> vector<4x256xf32>
    %71 = arith.addf %64, %70 : vector<4x256xf32>
    %c2 = arith.constant 2 : index
    %c0_44 = arith.constant 0 : index
    %c0_45 = arith.constant 0 : index
    %72 = vector.load %arg4[%c2, %c0_44, %c0_45] : memref<9x1x256xf32, #tpu.memory_space<vmem>>, vector<1x1x256xf32>
    %73 = vector.shape_cast %72 : vector<1x1x256xf32> to vector<1x256xf32>
    %c15_i32 = arith.constant 15 : i32
    %74 = tpu.dynamic_rotate %23 by %c15_i32 dim 1 : vector<4x256xf32>, i32 -> vector<4x256xf32>
    %75 = vector.broadcast %73 : vector<1x256xf32> to vector<4x256xf32>
    %76 = arith.mulf %74, %75 : vector<4x256xf32>
    %c2_46 = arith.constant 2 : index
    %c0_47 = arith.constant 0 : index
    %c0_48 = arith.constant 0 : index
    %77 = vector.load %arg5[%c2_46, %c0_47, %c0_48] : memref<9x4x4xf32, #tpu.memory_space<vmem>>, vector<1x4x4xf32>
    %78 = vector.shape_cast %77 : vector<1x4x4xf32> to vector<4x4xf32>
    %cst_49 = arith.constant dense<0.000000e+00> : vector<4x256xf32>
    %79 = tpu.matmul %78, %76, %cst_49 {dimension_numbers = #tpu.dot_dimension_numbers<[1], [0], [0], [1], [0, 0, 1, 1], [], []>} : vector<4x4xf32>, vector<4x256xf32>, vector<4x256xf32> -> vector<4x256xf32>
    %80 = arith.addf %71, %79 : vector<4x256xf32>
    %c15_i32_50 = arith.constant 15 : i32
    %81 = tpu.dynamic_rotate %24 by %c15_i32_50 dim 1 : vector<4x256xf32>, i32 -> vector<4x256xf32>
    %82 = vector.broadcast %73 : vector<1x256xf32> to vector<4x256xf32>
    %83 = arith.mulf %81, %82 : vector<4x256xf32>
    %c2_51 = arith.constant 2 : index
    %c0_52 = arith.constant 0 : index
    %c0_53 = arith.constant 0 : index
    %84 = vector.load %arg6[%c2_51, %c0_52, %c0_53] : memref<9x4x4xf32, #tpu.memory_space<vmem>>, vector<1x4x4xf32>
    %85 = vector.shape_cast %84 : vector<1x4x4xf32> to vector<4x4xf32>
    %cst_54 = arith.constant dense<0.000000e+00> : vector<4x256xf32>
    %86 = tpu.matmul %85, %83, %cst_54 {dimension_numbers = #tpu.dot_dimension_numbers<[1], [0], [0], [1], [0, 0, 1, 1], [], []>} : vector<4x4xf32>, vector<4x256xf32>, vector<4x256xf32> -> vector<4x256xf32>
    %87 = arith.addf %80, %86 : vector<4x256xf32>
    %c15_i32_55 = arith.constant 15 : i32
    %88 = tpu.dynamic_rotate %22 by %c15_i32_55 dim 1 : vector<4x256xf32>, i32 -> vector<4x256xf32>
    %89 = vector.broadcast %73 : vector<1x256xf32> to vector<4x256xf32>
    %90 = arith.mulf %88, %89 : vector<4x256xf32>
    %c2_56 = arith.constant 2 : index
    %c0_57 = arith.constant 0 : index
    %c0_58 = arith.constant 0 : index
    %91 = vector.load %arg7[%c2_56, %c0_57, %c0_58] : memref<9x4x4xf32, #tpu.memory_space<vmem>>, vector<1x4x4xf32>
    %92 = vector.shape_cast %91 : vector<1x4x4xf32> to vector<4x4xf32>
    %cst_59 = arith.constant dense<0.000000e+00> : vector<4x256xf32>
    %93 = tpu.matmul %92, %90, %cst_59 {dimension_numbers = #tpu.dot_dimension_numbers<[1], [0], [0], [1], [0, 0, 1, 1], [], []>} : vector<4x4xf32>, vector<4x256xf32>, vector<4x256xf32> -> vector<4x256xf32>
    %94 = arith.addf %87, %93 : vector<4x256xf32>
    %c3 = arith.constant 3 : index
    %c0_60 = arith.constant 0 : index
    %c0_61 = arith.constant 0 : index
    %95 = vector.load %arg4[%c3, %c0_60, %c0_61] : memref<9x1x256xf32, #tpu.memory_space<vmem>>, vector<1x1x256xf32>
    %96 = vector.shape_cast %95 : vector<1x1x256xf32> to vector<1x256xf32>
    %c1_i32 = arith.constant 1 : i32
    %97 = tpu.dynamic_rotate %23 by %c1_i32 dim 1 : vector<4x256xf32>, i32 -> vector<4x256xf32>
    %98 = vector.broadcast %96 : vector<1x256xf32> to vector<4x256xf32>
    %99 = arith.mulf %97, %98 : vector<4x256xf32>
    %c3_62 = arith.constant 3 : index
    %c0_63 = arith.constant 0 : index
    %c0_64 = arith.constant 0 : index
    %100 = vector.load %arg5[%c3_62, %c0_63, %c0_64] : memref<9x4x4xf32, #tpu.memory_space<vmem>>, vector<1x4x4xf32>
    %101 = vector.shape_cast %100 : vector<1x4x4xf32> to vector<4x4xf32>
    %cst_65 = arith.constant dense<0.000000e+00> : vector<4x256xf32>
    %102 = tpu.matmul %101, %99, %cst_65 {dimension_numbers = #tpu.dot_dimension_numbers<[1], [0], [0], [1], [0, 0, 1, 1], [], []>} : vector<4x4xf32>, vector<4x256xf32>, vector<4x256xf32> -> vector<4x256xf32>
    %103 = arith.addf %94, %102 : vector<4x256xf32>
    %c1_i32_66 = arith.constant 1 : i32
    %104 = tpu.dynamic_rotate %24 by %c1_i32_66 dim 1 : vector<4x256xf32>, i32 -> vector<4x256xf32>
    %105 = vector.broadcast %96 : vector<1x256xf32> to vector<4x256xf32>
    %106 = arith.mulf %104, %105 : vector<4x256xf32>
    %c3_67 = arith.constant 3 : index
    %c0_68 = arith.constant 0 : index
    %c0_69 = arith.constant 0 : index
    %107 = vector.load %arg6[%c3_67, %c0_68, %c0_69] : memref<9x4x4xf32, #tpu.memory_space<vmem>>, vector<1x4x4xf32>
    %108 = vector.shape_cast %107 : vector<1x4x4xf32> to vector<4x4xf32>
    %cst_70 = arith.constant dense<0.000000e+00> : vector<4x256xf32>
    %109 = tpu.matmul %108, %106, %cst_70 {dimension_numbers = #tpu.dot_dimension_numbers<[1], [0], [0], [1], [0, 0, 1, 1], [], []>} : vector<4x4xf32>, vector<4x256xf32>, vector<4x256xf32> -> vector<4x256xf32>
    %110 = arith.addf %103, %109 : vector<4x256xf32>
    %c1_i32_71 = arith.constant 1 : i32
    %111 = tpu.dynamic_rotate %22 by %c1_i32_71 dim 1 : vector<4x256xf32>, i32 -> vector<4x256xf32>
    %112 = vector.broadcast %96 : vector<1x256xf32> to vector<4x256xf32>
    %113 = arith.mulf %111, %112 : vector<4x256xf32>
    %c3_72 = arith.constant 3 : index
    %c0_73 = arith.constant 0 : index
    %c0_74 = arith.constant 0 : index
    %114 = vector.load %arg7[%c3_72, %c0_73, %c0_74] : memref<9x4x4xf32, #tpu.memory_space<vmem>>, vector<1x4x4xf32>
    %115 = vector.shape_cast %114 : vector<1x4x4xf32> to vector<4x4xf32>
    %cst_75 = arith.constant dense<0.000000e+00> : vector<4x256xf32>
    %116 = tpu.matmul %115, %113, %cst_75 {dimension_numbers = #tpu.dot_dimension_numbers<[1], [0], [0], [1], [0, 0, 1, 1], [], []>} : vector<4x4xf32>, vector<4x256xf32>, vector<4x256xf32> -> vector<4x256xf32>
    %117 = arith.addf %110, %116 : vector<4x256xf32>
    %c4 = arith.constant 4 : index
    %c0_76 = arith.constant 0 : index
    %c0_77 = arith.constant 0 : index
    %118 = vector.load %arg5[%c4, %c0_76, %c0_77] : memref<9x4x4xf32, #tpu.memory_space<vmem>>, vector<1x4x4xf32>
    %119 = vector.shape_cast %118 : vector<1x4x4xf32> to vector<4x4xf32>
    %cst_78 = arith.constant dense<0.000000e+00> : vector<4x256xf32>
    %120 = tpu.matmul %119, %23, %cst_78 {dimension_numbers = #tpu.dot_dimension_numbers<[1], [0], [0], [1], [0, 0, 1, 1], [], []>} : vector<4x4xf32>, vector<4x256xf32>, vector<4x256xf32> -> vector<4x256xf32>
    %121 = arith.addf %117, %120 : vector<4x256xf32>
    %c4_79 = arith.constant 4 : index
    %c0_80 = arith.constant 0 : index
    %c0_81 = arith.constant 0 : index
    %122 = vector.load %arg6[%c4_79, %c0_80, %c0_81] : memref<9x4x4xf32, #tpu.memory_space<vmem>>, vector<1x4x4xf32>
    %123 = vector.shape_cast %122 : vector<1x4x4xf32> to vector<4x4xf32>
    %cst_82 = arith.constant dense<0.000000e+00> : vector<4x256xf32>
    %124 = tpu.matmul %123, %24, %cst_82 {dimension_numbers = #tpu.dot_dimension_numbers<[1], [0], [0], [1], [0, 0, 1, 1], [], []>} : vector<4x4xf32>, vector<4x256xf32>, vector<4x256xf32> -> vector<4x256xf32>
    %125 = arith.addf %121, %124 : vector<4x256xf32>
    %c4_83 = arith.constant 4 : index
    %c0_84 = arith.constant 0 : index
    %c0_85 = arith.constant 0 : index
    %126 = vector.load %arg7[%c4_83, %c0_84, %c0_85] : memref<9x4x4xf32, #tpu.memory_space<vmem>>, vector<1x4x4xf32>
    %127 = vector.shape_cast %126 : vector<1x4x4xf32> to vector<4x4xf32>
    %cst_86 = arith.constant dense<0.000000e+00> : vector<4x256xf32>
    %128 = tpu.matmul %127, %22, %cst_86 {dimension_numbers = #tpu.dot_dimension_numbers<[1], [0], [0], [1], [0, 0, 1, 1], [], []>} : vector<4x4xf32>, vector<4x256xf32>, vector<4x256xf32> -> vector<4x256xf32>
    %129 = arith.addf %125, %128 : vector<4x256xf32>
    %c5 = arith.constant 5 : index
    %c0_87 = arith.constant 0 : index
    %c0_88 = arith.constant 0 : index
    %130 = vector.load %arg4[%c5, %c0_87, %c0_88] : memref<9x1x256xf32, #tpu.memory_space<vmem>>, vector<1x1x256xf32>
    %131 = vector.shape_cast %130 : vector<1x1x256xf32> to vector<1x256xf32>
    %c255_i32 = arith.constant 255 : i32
    %132 = tpu.dynamic_rotate %23 by %c255_i32 dim 1 : vector<4x256xf32>, i32 -> vector<4x256xf32>
    %133 = vector.broadcast %131 : vector<1x256xf32> to vector<4x256xf32>
    %134 = arith.mulf %132, %133 : vector<4x256xf32>
    %c5_89 = arith.constant 5 : index
    %c0_90 = arith.constant 0 : index
    %c0_91 = arith.constant 0 : index
    %135 = vector.load %arg5[%c5_89, %c0_90, %c0_91] : memref<9x4x4xf32, #tpu.memory_space<vmem>>, vector<1x4x4xf32>
    %136 = vector.shape_cast %135 : vector<1x4x4xf32> to vector<4x4xf32>
    %cst_92 = arith.constant dense<0.000000e+00> : vector<4x256xf32>
    %137 = tpu.matmul %136, %134, %cst_92 {dimension_numbers = #tpu.dot_dimension_numbers<[1], [0], [0], [1], [0, 0, 1, 1], [], []>} : vector<4x4xf32>, vector<4x256xf32>, vector<4x256xf32> -> vector<4x256xf32>
    %138 = arith.addf %129, %137 : vector<4x256xf32>
    %c255_i32_93 = arith.constant 255 : i32
    %139 = tpu.dynamic_rotate %24 by %c255_i32_93 dim 1 : vector<4x256xf32>, i32 -> vector<4x256xf32>
    %140 = vector.broadcast %131 : vector<1x256xf32> to vector<4x256xf32>
    %141 = arith.mulf %139, %140 : vector<4x256xf32>
    %c5_94 = arith.constant 5 : index
    %c0_95 = arith.constant 0 : index
    %c0_96 = arith.constant 0 : index
    %142 = vector.load %arg6[%c5_94, %c0_95, %c0_96] : memref<9x4x4xf32, #tpu.memory_space<vmem>>, vector<1x4x4xf32>
    %143 = vector.shape_cast %142 : vector<1x4x4xf32> to vector<4x4xf32>
    %cst_97 = arith.constant dense<0.000000e+00> : vector<4x256xf32>
    %144 = tpu.matmul %143, %141, %cst_97 {dimension_numbers = #tpu.dot_dimension_numbers<[1], [0], [0], [1], [0, 0, 1, 1], [], []>} : vector<4x4xf32>, vector<4x256xf32>, vector<4x256xf32> -> vector<4x256xf32>
    %145 = arith.addf %138, %144 : vector<4x256xf32>
    %c255_i32_98 = arith.constant 255 : i32
    %146 = tpu.dynamic_rotate %22 by %c255_i32_98 dim 1 : vector<4x256xf32>, i32 -> vector<4x256xf32>
    %147 = vector.broadcast %131 : vector<1x256xf32> to vector<4x256xf32>
    %148 = arith.mulf %146, %147 : vector<4x256xf32>
    %c5_99 = arith.constant 5 : index
    %c0_100 = arith.constant 0 : index
    %c0_101 = arith.constant 0 : index
    %149 = vector.load %arg7[%c5_99, %c0_100, %c0_101] : memref<9x4x4xf32, #tpu.memory_space<vmem>>, vector<1x4x4xf32>
    %150 = vector.shape_cast %149 : vector<1x4x4xf32> to vector<4x4xf32>
    %cst_102 = arith.constant dense<0.000000e+00> : vector<4x256xf32>
    %151 = tpu.matmul %150, %148, %cst_102 {dimension_numbers = #tpu.dot_dimension_numbers<[1], [0], [0], [1], [0, 0, 1, 1], [], []>} : vector<4x4xf32>, vector<4x256xf32>, vector<4x256xf32> -> vector<4x256xf32>
    %152 = arith.addf %145, %151 : vector<4x256xf32>
    %c6 = arith.constant 6 : index
    %c0_103 = arith.constant 0 : index
    %c0_104 = arith.constant 0 : index
    %153 = vector.load %arg4[%c6, %c0_103, %c0_104] : memref<9x1x256xf32, #tpu.memory_space<vmem>>, vector<1x1x256xf32>
    %154 = vector.shape_cast %153 : vector<1x1x256xf32> to vector<1x256xf32>
    %c241_i32 = arith.constant 241 : i32
    %155 = tpu.dynamic_rotate %23 by %c241_i32 dim 1 : vector<4x256xf32>, i32 -> vector<4x256xf32>
    %156 = vector.broadcast %154 : vector<1x256xf32> to vector<4x256xf32>
    %157 = arith.mulf %155, %156 : vector<4x256xf32>
    %c6_105 = arith.constant 6 : index
    %c0_106 = arith.constant 0 : index
    %c0_107 = arith.constant 0 : index
    %158 = vector.load %arg5[%c6_105, %c0_106, %c0_107] : memref<9x4x4xf32, #tpu.memory_space<vmem>>, vector<1x4x4xf32>
    %159 = vector.shape_cast %158 : vector<1x4x4xf32> to vector<4x4xf32>
    %cst_108 = arith.constant dense<0.000000e+00> : vector<4x256xf32>
    %160 = tpu.matmul %159, %157, %cst_108 {dimension_numbers = #tpu.dot_dimension_numbers<[1], [0], [0], [1], [0, 0, 1, 1], [], []>} : vector<4x4xf32>, vector<4x256xf32>, vector<4x256xf32> -> vector<4x256xf32>
    %161 = arith.addf %152, %160 : vector<4x256xf32>
    %c241_i32_109 = arith.constant 241 : i32
    %162 = tpu.dynamic_rotate %24 by %c241_i32_109 dim 1 : vector<4x256xf32>, i32 -> vector<4x256xf32>
    %163 = vector.broadcast %154 : vector<1x256xf32> to vector<4x256xf32>
    %164 = arith.mulf %162, %163 : vector<4x256xf32>
    %c6_110 = arith.constant 6 : index
    %c0_111 = arith.constant 0 : index
    %c0_112 = arith.constant 0 : index
    %165 = vector.load %arg6[%c6_110, %c0_111, %c0_112] : memref<9x4x4xf32, #tpu.memory_space<vmem>>, vector<1x4x4xf32>
    %166 = vector.shape_cast %165 : vector<1x4x4xf32> to vector<4x4xf32>
    %cst_113 = arith.constant dense<0.000000e+00> : vector<4x256xf32>
    %167 = tpu.matmul %166, %164, %cst_113 {dimension_numbers = #tpu.dot_dimension_numbers<[1], [0], [0], [1], [0, 0, 1, 1], [], []>} : vector<4x4xf32>, vector<4x256xf32>, vector<4x256xf32> -> vector<4x256xf32>
    %168 = arith.addf %161, %167 : vector<4x256xf32>
    %c241_i32_114 = arith.constant 241 : i32
    %169 = tpu.dynamic_rotate %22 by %c241_i32_114 dim 1 : vector<4x256xf32>, i32 -> vector<4x256xf32>
    %170 = vector.broadcast %154 : vector<1x256xf32> to vector<4x256xf32>
    %171 = arith.mulf %169, %170 : vector<4x256xf32>
    %c6_115 = arith.constant 6 : index
    %c0_116 = arith.constant 0 : index
    %c0_117 = arith.constant 0 : index
    %172 = vector.load %arg7[%c6_115, %c0_116, %c0_117] : memref<9x4x4xf32, #tpu.memory_space<vmem>>, vector<1x4x4xf32>
    %173 = vector.shape_cast %172 : vector<1x4x4xf32> to vector<4x4xf32>
    %cst_118 = arith.constant dense<0.000000e+00> : vector<4x256xf32>
    %174 = tpu.matmul %173, %171, %cst_118 {dimension_numbers = #tpu.dot_dimension_numbers<[1], [0], [0], [1], [0, 0, 1, 1], [], []>} : vector<4x4xf32>, vector<4x256xf32>, vector<4x256xf32> -> vector<4x256xf32>
    %175 = arith.addf %168, %174 : vector<4x256xf32>
    %c7 = arith.constant 7 : index
    %c0_119 = arith.constant 0 : index
    %c0_120 = arith.constant 0 : index
    %176 = vector.load %arg4[%c7, %c0_119, %c0_120] : memref<9x1x256xf32, #tpu.memory_space<vmem>>, vector<1x1x256xf32>
    %177 = vector.shape_cast %176 : vector<1x1x256xf32> to vector<1x256xf32>
    %c240_i32 = arith.constant 240 : i32
    %178 = tpu.dynamic_rotate %23 by %c240_i32 dim 1 : vector<4x256xf32>, i32 -> vector<4x256xf32>
    %179 = vector.broadcast %177 : vector<1x256xf32> to vector<4x256xf32>
    %180 = arith.mulf %178, %179 : vector<4x256xf32>
    %c7_121 = arith.constant 7 : index
    %c0_122 = arith.constant 0 : index
    %c0_123 = arith.constant 0 : index
    %181 = vector.load %arg5[%c7_121, %c0_122, %c0_123] : memref<9x4x4xf32, #tpu.memory_space<vmem>>, vector<1x4x4xf32>
    %182 = vector.shape_cast %181 : vector<1x4x4xf32> to vector<4x4xf32>
    %cst_124 = arith.constant dense<0.000000e+00> : vector<4x256xf32>
    %183 = tpu.matmul %182, %180, %cst_124 {dimension_numbers = #tpu.dot_dimension_numbers<[1], [0], [0], [1], [0, 0, 1, 1], [], []>} : vector<4x4xf32>, vector<4x256xf32>, vector<4x256xf32> -> vector<4x256xf32>
    %184 = arith.addf %175, %183 : vector<4x256xf32>
    %c240_i32_125 = arith.constant 240 : i32
    %185 = tpu.dynamic_rotate %24 by %c240_i32_125 dim 1 : vector<4x256xf32>, i32 -> vector<4x256xf32>
    %186 = vector.broadcast %177 : vector<1x256xf32> to vector<4x256xf32>
    %187 = arith.mulf %185, %186 : vector<4x256xf32>
    %c7_126 = arith.constant 7 : index
    %c0_127 = arith.constant 0 : index
    %c0_128 = arith.constant 0 : index
    %188 = vector.load %arg6[%c7_126, %c0_127, %c0_128] : memref<9x4x4xf32, #tpu.memory_space<vmem>>, vector<1x4x4xf32>
    %189 = vector.shape_cast %188 : vector<1x4x4xf32> to vector<4x4xf32>
    %cst_129 = arith.constant dense<0.000000e+00> : vector<4x256xf32>
    %190 = tpu.matmul %189, %187, %cst_129 {dimension_numbers = #tpu.dot_dimension_numbers<[1], [0], [0], [1], [0, 0, 1, 1], [], []>} : vector<4x4xf32>, vector<4x256xf32>, vector<4x256xf32> -> vector<4x256xf32>
    %191 = arith.addf %184, %190 : vector<4x256xf32>
    %c240_i32_130 = arith.constant 240 : i32
    %192 = tpu.dynamic_rotate %22 by %c240_i32_130 dim 1 : vector<4x256xf32>, i32 -> vector<4x256xf32>
    %193 = vector.broadcast %177 : vector<1x256xf32> to vector<4x256xf32>
    %194 = arith.mulf %192, %193 : vector<4x256xf32>
    %c7_131 = arith.constant 7 : index
    %c0_132 = arith.constant 0 : index
    %c0_133 = arith.constant 0 : index
    %195 = vector.load %arg7[%c7_131, %c0_132, %c0_133] : memref<9x4x4xf32, #tpu.memory_space<vmem>>, vector<1x4x4xf32>
    %196 = vector.shape_cast %195 : vector<1x4x4xf32> to vector<4x4xf32>
    %cst_134 = arith.constant dense<0.000000e+00> : vector<4x256xf32>
    %197 = tpu.matmul %196, %194, %cst_134 {dimension_numbers = #tpu.dot_dimension_numbers<[1], [0], [0], [1], [0, 0, 1, 1], [], []>} : vector<4x4xf32>, vector<4x256xf32>, vector<4x256xf32> -> vector<4x256xf32>
    %198 = arith.addf %191, %197 : vector<4x256xf32>
    %c8 = arith.constant 8 : index
    %c0_135 = arith.constant 0 : index
    %c0_136 = arith.constant 0 : index
    %199 = vector.load %arg4[%c8, %c0_135, %c0_136] : memref<9x1x256xf32, #tpu.memory_space<vmem>>, vector<1x1x256xf32>
    %200 = vector.shape_cast %199 : vector<1x1x256xf32> to vector<1x256xf32>
    %c239_i32 = arith.constant 239 : i32
    %201 = tpu.dynamic_rotate %23 by %c239_i32 dim 1 : vector<4x256xf32>, i32 -> vector<4x256xf32>
    %202 = vector.broadcast %200 : vector<1x256xf32> to vector<4x256xf32>
    %203 = arith.mulf %201, %202 : vector<4x256xf32>
    %c8_137 = arith.constant 8 : index
    %c0_138 = arith.constant 0 : index
    %c0_139 = arith.constant 0 : index
    %204 = vector.load %arg5[%c8_137, %c0_138, %c0_139] : memref<9x4x4xf32, #tpu.memory_space<vmem>>, vector<1x4x4xf32>
    %205 = vector.shape_cast %204 : vector<1x4x4xf32> to vector<4x4xf32>
    %cst_140 = arith.constant dense<0.000000e+00> : vector<4x256xf32>
    %206 = tpu.matmul %205, %203, %cst_140 {dimension_numbers = #tpu.dot_dimension_numbers<[1], [0], [0], [1], [0, 0, 1, 1], [], []>} : vector<4x4xf32>, vector<4x256xf32>, vector<4x256xf32> -> vector<4x256xf32>
    %207 = arith.addf %198, %206 : vector<4x256xf32>
    %c239_i32_141 = arith.constant 239 : i32
    %208 = tpu.dynamic_rotate %24 by %c239_i32_141 dim 1 : vector<4x256xf32>, i32 -> vector<4x256xf32>
    %209 = vector.broadcast %200 : vector<1x256xf32> to vector<4x256xf32>
    %210 = arith.mulf %208, %209 : vector<4x256xf32>
    %c8_142 = arith.constant 8 : index
    %c0_143 = arith.constant 0 : index
    %c0_144 = arith.constant 0 : index
    %211 = vector.load %arg6[%c8_142, %c0_143, %c0_144] : memref<9x4x4xf32, #tpu.memory_space<vmem>>, vector<1x4x4xf32>
    %212 = vector.shape_cast %211 : vector<1x4x4xf32> to vector<4x4xf32>
    %cst_145 = arith.constant dense<0.000000e+00> : vector<4x256xf32>
    %213 = tpu.matmul %212, %210, %cst_145 {dimension_numbers = #tpu.dot_dimension_numbers<[1], [0], [0], [1], [0, 0, 1, 1], [], []>} : vector<4x4xf32>, vector<4x256xf32>, vector<4x256xf32> -> vector<4x256xf32>
    %214 = arith.addf %207, %213 : vector<4x256xf32>
    %c239_i32_146 = arith.constant 239 : i32
    %215 = tpu.dynamic_rotate %22 by %c239_i32_146 dim 1 : vector<4x256xf32>, i32 -> vector<4x256xf32>
    %216 = vector.broadcast %200 : vector<1x256xf32> to vector<4x256xf32>
    %217 = arith.mulf %215, %216 : vector<4x256xf32>
    %c8_147 = arith.constant 8 : index
    %c0_148 = arith.constant 0 : index
    %c0_149 = arith.constant 0 : index
    %218 = vector.load %arg7[%c8_147, %c0_148, %c0_149] : memref<9x4x4xf32, #tpu.memory_space<vmem>>, vector<1x4x4xf32>
    %219 = vector.shape_cast %218 : vector<1x4x4xf32> to vector<4x4xf32>
    %cst_150 = arith.constant dense<0.000000e+00> : vector<4x256xf32>
    %220 = tpu.matmul %219, %217, %cst_150 {dimension_numbers = #tpu.dot_dimension_numbers<[1], [0], [0], [1], [0, 0, 1, 1], [], []>} : vector<4x4xf32>, vector<4x256xf32>, vector<4x256xf32> -> vector<4x256xf32>
    %221 = arith.addf %214, %220 : vector<4x256xf32>
    %c0_151 = arith.constant 0 : index
    %c0_152 = arith.constant 0 : index
    %222 = vector.load %arg8[%c0_151, %c0_152] : memref<4x1xf32, #tpu.memory_space<vmem>>, vector<4x1xf32>
    %223 = vector.broadcast %222 : vector<4x1xf32> to vector<4x256xf32>
    %224 = arith.addf %221, %223 : vector<4x256xf32>
    %c0_153 = arith.constant 0 : index
    %c0_154 = arith.constant 0 : index
    %c0_155 = arith.constant 0 : index
    %225 = vector.load %arg10[%c0_153, %c0_154, %c0_155] : memref<1x4x256xf32, #tpu.memory_space<vmem>>, vector<1x4x256xf32>
    %226 = vector.shape_cast %225 : vector<1x4x256xf32> to vector<4x256xf32>
    %227 = vector.shape_cast %224 : vector<4x256xf32> to vector<1x4x256xf32>
    tpu.vector_store %arg10[%c0_153, %c0_154, %c0_155], %227 {strides = array<i32>} : memref<1x4x256xf32, #tpu.memory_space<vmem>>, vector<1x4x256xf32>,
    %cst_156 = arith.constant dense<0.000000e+00> : vector<4xf32>
    %228 = vector.multi_reduction <add>, %224, %cst_156 [1] : vector<4x256xf32> to vector<4xf32>
    %229 = vector.shape_cast %228 : vector<4xf32> to vector<4x1xf32>
    %c0_157 = arith.constant 0 : index
    %c0_158 = arith.constant 0 : index
    %c0_159 = arith.constant 0 : index
    %230 = vector.load %arg11[%c0_157, %c0_158, %c0_159] : memref<1x4x1xf32, #tpu.memory_space<vmem>>, vector<1x4x1xf32>
    %231 = vector.shape_cast %230 : vector<1x4x1xf32> to vector<4x1xf32>
    %232 = vector.shape_cast %229 : vector<4x1xf32> to vector<1x4x1xf32>
    tpu.vector_store %arg11[%c0_157, %c0_158, %c0_159], %232 {strides = array<i32>} : memref<1x4x1xf32, #tpu.memory_space<vmem>>, vector<1x4x1xf32>,
    %233 = arith.mulf %224, %224 : vector<4x256xf32>
    %cst_160 = arith.constant dense<0.000000e+00> : vector<4xf32>
    %234 = vector.multi_reduction <add>, %233, %cst_160 [1] : vector<4x256xf32> to vector<4xf32>
    %235 = vector.shape_cast %234 : vector<4xf32> to vector<4x1xf32>
    %c0_161 = arith.constant 0 : index
    %c0_162 = arith.constant 0 : index
    %c0_163 = arith.constant 0 : index
    %236 = vector.load %arg12[%c0_161, %c0_162, %c0_163] : memref<1x4x1xf32, #tpu.memory_space<vmem>>, vector<1x4x1xf32>
    %237 = vector.shape_cast %236 : vector<1x4x1xf32> to vector<4x1xf32>
    %238 = vector.shape_cast %235 : vector<4x1xf32> to vector<1x4x1xf32>
    tpu.vector_store %arg12[%c0_161, %c0_162, %c0_163], %238 {strides = array<i32>} : memref<1x4x1xf32, #tpu.memory_space<vmem>>, vector<1x4x1xf32>,
    return
  }
  func.func @transform_0(%arg0: i32) -> (i32, i32, i32) {
    %c0_i32 = arith.constant 0 : i32
    %c0_i32_0 = arith.constant 0 : i32
    %c0_i32_1 = arith.constant 0 : i32
    return %arg0, %c0_i32, %c0_i32_0 : i32, i32, i32
  }
  func.func @transform_1(%arg0: i32) -> (i32, i32) {
    %c0_i32 = arith.constant 0 : i32
    %c0_i32_0 = arith.constant 0 : i32
    %c0_i32_1 = arith.constant 0 : i32
    return %c0_i32, %c0_i32_0 : i32, i32
  }
  func.func @transform_2(%arg0: i32) -> (i32, i32) {
    %c0_i32 = arith.constant 0 : i32
    %c0_i32_0 = arith.constant 0 : i32
    %c0_i32_1 = arith.constant 0 : i32
    return %c0_i32, %c0_i32_0 : i32, i32
  }
  func.func @transform_3(%arg0: i32) -> (i32, i32, i32) {
    %c0_i32 = arith.constant 0 : i32
    %c0_i32_0 = arith.constant 0 : i32
    %c0_i32_1 = arith.constant 0 : i32
    %c0_i32_2 = arith.constant 0 : i32
    return %c0_i32, %c0_i32_0, %c0_i32_1 : i32, i32, i32
  }
  func.func @transform_4(%arg0: i32) -> (i32, i32, i32) {
    %c0_i32 = arith.constant 0 : i32
    %c0_i32_0 = arith.constant 0 : i32
    %c0_i32_1 = arith.constant 0 : i32
    %c0_i32_2 = arith.constant 0 : i32
    return %c0_i32, %c0_i32_0, %c0_i32_1 : i32, i32, i32
  }
  func.func @transform_5(%arg0: i32) -> (i32, i32, i32) {
    %c0_i32 = arith.constant 0 : i32
    %c0_i32_0 = arith.constant 0 : i32
    %c0_i32_1 = arith.constant 0 : i32
    %c0_i32_2 = arith.constant 0 : i32
    return %c0_i32, %c0_i32_0, %c0_i32_1 : i32, i32, i32
  }
  func.func @transform_6(%arg0: i32) -> (i32, i32, i32) {
    %c0_i32 = arith.constant 0 : i32
    %c0_i32_0 = arith.constant 0 : i32
    %c0_i32_1 = arith.constant 0 : i32
    %c0_i32_2 = arith.constant 0 : i32
    return %c0_i32, %c0_i32_0, %c0_i32_1 : i32, i32, i32
  }
  func.func @transform_7(%arg0: i32) -> (i32, i32) {
    %c0_i32 = arith.constant 0 : i32
    %c0_i32_0 = arith.constant 0 : i32
    %c0_i32_1 = arith.constant 0 : i32
    return %c0_i32, %c0_i32_0 : i32, i32
  }
  func.func @transform_8(%arg0: i32) -> (i32, i32, i32) {
    %c0_i32 = arith.constant 0 : i32
    %c0_i32_0 = arith.constant 0 : i32
    %c0_i32_1 = arith.constant 0 : i32
    return %arg0, %c0_i32, %c0_i32_0 : i32, i32, i32
  }
  func.func @transform_9(%arg0: i32) -> (i32, i32, i32) {
    %c0_i32 = arith.constant 0 : i32
    %c0_i32_0 = arith.constant 0 : i32
    %c0_i32_1 = arith.constant 0 : i32
    return %arg0, %c0_i32, %c0_i32_0 : i32, i32, i32
  }
  func.func @transform_10(%arg0: i32) -> (i32, i32, i32) {
    %c0_i32 = arith.constant 0 : i32
    %c0_i32_0 = arith.constant 0 : i32
    %c0_i32_1 = arith.constant 0 : i32
    return %arg0, %c0_i32, %c0_i32_0 : i32, i32, i32
  }
  func.func @transform_11(%arg0: i32) -> (i32, i32, i32) {
    %c0_i32 = arith.constant 0 : i32
    %c0_i32_0 = arith.constant 0 : i32
    %c0_i32_1 = arith.constant 0 : i32
    return %arg0, %c0_i32, %c0_i32_0 : i32, i32, i32
  }
}

module attributes {stable_mosaic.version = 11 : i64} {
  func.func @bn1_tconv_kernel(%arg0: i32, %arg1: memref<1x4x256xf32, #tpu.memory_space<vmem>>, %arg2: memref<4x1xf32, #tpu.memory_space<vmem>>, %arg3: memref<4x1xf32, #tpu.memory_space<vmem>>, %arg4: memref<16x4xf32, #tpu.memory_space<vmem>>, %arg5: memref<16x1xf32, #tpu.memory_space<vmem>>, %arg6: memref<1x16x256xf32, #tpu.memory_space<vmem>>, %arg7: memref<1x16x1xf32, #tpu.memory_space<vmem>>, %arg8: memref<1x16x1xf32, #tpu.memory_space<vmem>>) attributes {dimension_semantics = [#tpu.dimension_semantics<parallel>], iteration_bounds = array<i64: 2>, scalar_prefetch = 0 : i64, scratch_operands = 0 : i64, tpu.core_type = #tpu.core_type<tc>, window_params = [{transform_indices = @transform_0, window_bounds = array<i64: 1, 4, 256>}, {pipeline_mode = #tpu.pipeline_mode<synchronous>, transform_indices = @transform_1, window_bounds = array<i64: 4, 1>}, {pipeline_mode = #tpu.pipeline_mode<synchronous>, transform_indices = @transform_2, window_bounds = array<i64: 4, 1>}, {pipeline_mode = #tpu.pipeline_mode<synchronous>, transform_indices = @transform_3, window_bounds = array<i64: 16, 4>}, {pipeline_mode = #tpu.pipeline_mode<synchronous>, transform_indices = @transform_4, window_bounds = array<i64: 16, 1>}, {transform_indices = @transform_5, window_bounds = array<i64: 1, 16, 256>}, {transform_indices = @transform_6, window_bounds = array<i64: 1, 16, 1>}, {transform_indices = @transform_7, window_bounds = array<i64: 1, 16, 1>}]} {
    %c0 = arith.constant 0 : index
    %c0_0 = arith.constant 0 : index
    %c0_1 = arith.constant 0 : index
    %0 = vector.load %arg1[%c0, %c0_0, %c0_1] : memref<1x4x256xf32, #tpu.memory_space<vmem>>, vector<1x4x256xf32>
    %1 = vector.shape_cast %0 : vector<1x4x256xf32> to vector<4x256xf32>
    %c0_2 = arith.constant 0 : index
    %c0_3 = arith.constant 0 : index
    %2 = vector.load %arg2[%c0_2, %c0_3] : memref<4x1xf32, #tpu.memory_space<vmem>>, vector<4x1xf32>
    %3 = vector.broadcast %2 : vector<4x1xf32> to vector<4x256xf32>
    %4 = arith.subf %1, %3 : vector<4x256xf32>
    %c0_4 = arith.constant 0 : index
    %c0_5 = arith.constant 0 : index
    %5 = vector.load %arg3[%c0_4, %c0_5] : memref<4x1xf32, #tpu.memory_space<vmem>>, vector<4x1xf32>
    %6 = vector.broadcast %5 : vector<4x1xf32> to vector<4x256xf32>
    %7 = arith.mulf %4, %6 : vector<4x256xf32>
    %cst = arith.constant 0.000000e+00 : f32
    %8 = vector.broadcast %cst : f32 to vector<4x256xf32>
    %9 = arith.cmpf oge, %7, %8 : vector<4x256xf32>
    %cst_6 = arith.constant 2.000000e-01 : f32
    %10 = vector.broadcast %cst_6 : f32 to vector<4x256xf32>
    %11 = arith.mulf %10, %7 : vector<4x256xf32>
    %12 = arith.select %9, %7, %11 : vector<4x256xi1>, vector<4x256xf32>
    %c0_7 = arith.constant 0 : index
    %c0_8 = arith.constant 0 : index
    %13 = vector.load %arg4[%c0_7, %c0_8] : memref<16x4xf32, #tpu.memory_space<vmem>>, vector<16x4xf32>
    %cst_9 = arith.constant dense<0.000000e+00> : vector<16x256xf32>
    %14 = tpu.matmul %13, %12, %cst_9 {dimension_numbers = #tpu.dot_dimension_numbers<[1], [0], [0], [1], [0, 0, 1, 1], [], []>} : vector<16x4xf32>, vector<4x256xf32>, vector<16x256xf32> -> vector<16x256xf32>
    %c0_10 = arith.constant 0 : index
    %c0_11 = arith.constant 0 : index
    %15 = vector.load %arg5[%c0_10, %c0_11] : memref<16x1xf32, #tpu.memory_space<vmem>>, vector<16x1xf32>
    %16 = vector.broadcast %15 : vector<16x1xf32> to vector<16x256xf32>
    %17 = arith.addf %14, %16 : vector<16x256xf32>
    %c0_12 = arith.constant 0 : index
    %c0_13 = arith.constant 0 : index
    %c0_14 = arith.constant 0 : index
    %18 = vector.load %arg6[%c0_12, %c0_13, %c0_14] : memref<1x16x256xf32, #tpu.memory_space<vmem>>, vector<1x16x256xf32>
    %19 = vector.shape_cast %18 : vector<1x16x256xf32> to vector<16x256xf32>
    %20 = vector.shape_cast %17 : vector<16x256xf32> to vector<1x16x256xf32>
    tpu.vector_store %arg6[%c0_12, %c0_13, %c0_14], %20 {strides = array<i32>} : memref<1x16x256xf32, #tpu.memory_space<vmem>>, vector<1x16x256xf32>,
    %cst_15 = arith.constant dense<0.000000e+00> : vector<16xf32>
    %21 = vector.multi_reduction <add>, %17, %cst_15 [1] : vector<16x256xf32> to vector<16xf32>
    %22 = vector.shape_cast %21 : vector<16xf32> to vector<16x1xf32>
    %c0_16 = arith.constant 0 : index
    %c0_17 = arith.constant 0 : index
    %c0_18 = arith.constant 0 : index
    %23 = vector.load %arg7[%c0_16, %c0_17, %c0_18] : memref<1x16x1xf32, #tpu.memory_space<vmem>>, vector<1x16x1xf32>
    %24 = vector.shape_cast %23 : vector<1x16x1xf32> to vector<16x1xf32>
    %25 = vector.shape_cast %22 : vector<16x1xf32> to vector<1x16x1xf32>
    tpu.vector_store %arg7[%c0_16, %c0_17, %c0_18], %25 {strides = array<i32>} : memref<1x16x1xf32, #tpu.memory_space<vmem>>, vector<1x16x1xf32>,
    %26 = arith.mulf %17, %17 : vector<16x256xf32>
    %cst_19 = arith.constant dense<0.000000e+00> : vector<16xf32>
    %27 = vector.multi_reduction <add>, %26, %cst_19 [1] : vector<16x256xf32> to vector<16xf32>
    %28 = vector.shape_cast %27 : vector<16xf32> to vector<16x1xf32>
    %c0_20 = arith.constant 0 : index
    %c0_21 = arith.constant 0 : index
    %c0_22 = arith.constant 0 : index
    %29 = vector.load %arg8[%c0_20, %c0_21, %c0_22] : memref<1x16x1xf32, #tpu.memory_space<vmem>>, vector<1x16x1xf32>
    %30 = vector.shape_cast %29 : vector<1x16x1xf32> to vector<16x1xf32>
    %31 = vector.shape_cast %28 : vector<16x1xf32> to vector<1x16x1xf32>
    tpu.vector_store %arg8[%c0_20, %c0_21, %c0_22], %31 {strides = array<i32>} : memref<1x16x1xf32, #tpu.memory_space<vmem>>, vector<1x16x1xf32>,
    return
  }
  func.func @transform_0(%arg0: i32) -> (i32, i32, i32) {
    %c0_i32 = arith.constant 0 : i32
    %c0_i32_0 = arith.constant 0 : i32
    %c0_i32_1 = arith.constant 0 : i32
    return %arg0, %c0_i32, %c0_i32_0 : i32, i32, i32
  }
  func.func @transform_1(%arg0: i32) -> (i32, i32) {
    %c0_i32 = arith.constant 0 : i32
    %c0_i32_0 = arith.constant 0 : i32
    %c0_i32_1 = arith.constant 0 : i32
    return %c0_i32, %c0_i32_0 : i32, i32
  }
  func.func @transform_2(%arg0: i32) -> (i32, i32) {
    %c0_i32 = arith.constant 0 : i32
    %c0_i32_0 = arith.constant 0 : i32
    %c0_i32_1 = arith.constant 0 : i32
    return %c0_i32, %c0_i32_0 : i32, i32
  }
  func.func @transform_3(%arg0: i32) -> (i32, i32) {
    %c0_i32 = arith.constant 0 : i32
    %c0_i32_0 = arith.constant 0 : i32
    %c0_i32_1 = arith.constant 0 : i32
    return %c0_i32, %c0_i32_0 : i32, i32
  }
  func.func @transform_4(%arg0: i32) -> (i32, i32) {
    %c0_i32 = arith.constant 0 : i32
    %c0_i32_0 = arith.constant 0 : i32
    %c0_i32_1 = arith.constant 0 : i32
    return %c0_i32, %c0_i32_0 : i32, i32
  }
  func.func @transform_5(%arg0: i32) -> (i32, i32, i32) {
    %c0_i32 = arith.constant 0 : i32
    %c0_i32_0 = arith.constant 0 : i32
    %c0_i32_1 = arith.constant 0 : i32
    return %arg0, %c0_i32, %c0_i32_0 : i32, i32, i32
  }
  func.func @transform_6(%arg0: i32) -> (i32, i32, i32) {
    %c0_i32 = arith.constant 0 : i32
    %c0_i32_0 = arith.constant 0 : i32
    %c0_i32_1 = arith.constant 0 : i32
    return %arg0, %c0_i32, %c0_i32_0 : i32, i32, i32
  }
  func.func @transform_7(%arg0: i32) -> (i32, i32, i32) {
    %c0_i32 = arith.constant 0 : i32
    %c0_i32_0 = arith.constant 0 : i32
    %c0_i32_1 = arith.constant 0 : i32
    return %arg0, %c0_i32, %c0_i32_0 : i32, i32, i32
  }
}

module attributes {stable_mosaic.version = 11 : i64} {
  func.func @bnt_conv9_kernel(%arg0: i32, %arg1: memref<1x16x256xf32, #tpu.memory_space<vmem>>, %arg2: memref<1x16x256xf32, #tpu.memory_space<vmem>>, %arg3: memref<16x1xf32, #tpu.memory_space<vmem>>, %arg4: memref<16x1xf32, #tpu.memory_space<vmem>>, %arg5: memref<16x96xf32, #tpu.memory_space<vmem>>, %arg6: memref<16x1xf32, #tpu.memory_space<vmem>>, %arg7: memref<1x16x256xf32, #tpu.memory_space<vmem>>) attributes {dimension_semantics = [#tpu.dimension_semantics<parallel>], iteration_bounds = array<i64: 2>, scalar_prefetch = 0 : i64, scratch_operands = 0 : i64, tpu.core_type = #tpu.core_type<tc>, window_params = [{transform_indices = @transform_0, window_bounds = array<i64: 1, 16, 256>}, {transform_indices = @transform_1, window_bounds = array<i64: 1, 16, 256>}, {pipeline_mode = #tpu.pipeline_mode<synchronous>, transform_indices = @transform_2, window_bounds = array<i64: 16, 1>}, {pipeline_mode = #tpu.pipeline_mode<synchronous>, transform_indices = @transform_3, window_bounds = array<i64: 16, 1>}, {pipeline_mode = #tpu.pipeline_mode<synchronous>, transform_indices = @transform_4, window_bounds = array<i64: 16, 96>}, {pipeline_mode = #tpu.pipeline_mode<synchronous>, transform_indices = @transform_5, window_bounds = array<i64: 16, 1>}, {transform_indices = @transform_6, window_bounds = array<i64: 1, 16, 256>}]} {
    %c0 = arith.constant 0 : index
    %c0_0 = arith.constant 0 : index
    %c0_1 = arith.constant 0 : index
    %0 = vector.load %arg1[%c0, %c0_0, %c0_1] : memref<1x16x256xf32, #tpu.memory_space<vmem>>, vector<1x16x256xf32>
    %1 = vector.shape_cast %0 : vector<1x16x256xf32> to vector<16x256xf32>
    %c0_2 = arith.constant 0 : index
    %c0_3 = arith.constant 0 : index
    %c0_4 = arith.constant 0 : index
    %2 = vector.load %arg2[%c0_2, %c0_3, %c0_4] : memref<1x16x256xf32, #tpu.memory_space<vmem>>, vector<1x16x256xf32>
    %3 = vector.shape_cast %2 : vector<1x16x256xf32> to vector<16x256xf32>
    %c0_5 = arith.constant 0 : index
    %c0_6 = arith.constant 0 : index
    %4 = vector.load %arg3[%c0_5, %c0_6] : memref<16x1xf32, #tpu.memory_space<vmem>>, vector<16x1xf32>
    %5 = vector.broadcast %4 : vector<16x1xf32> to vector<16x256xf32>
    %6 = arith.subf %3, %5 : vector<16x256xf32>
    %c0_7 = arith.constant 0 : index
    %c0_8 = arith.constant 0 : index
    %7 = vector.load %arg4[%c0_7, %c0_8] : memref<16x1xf32, #tpu.memory_space<vmem>>, vector<16x1xf32>
    %8 = vector.broadcast %7 : vector<16x1xf32> to vector<16x256xf32>
    %9 = arith.mulf %6, %8 : vector<16x256xf32>
    %cst = arith.constant 0.000000e+00 : f32
    %10 = vector.broadcast %cst : f32 to vector<16x256xf32>
    %11 = arith.cmpf oge, %9, %10 : vector<16x256xf32>
    %cst_9 = arith.constant 2.000000e-01 : f32
    %12 = vector.broadcast %cst_9 : f32 to vector<16x256xf32>
    %13 = arith.mulf %12, %9 : vector<16x256xf32>
    %14 = arith.select %11, %9, %13 : vector<16x256xi1>, vector<16x256xf32>
    %15 = math.cos %1 : vector<16x256xf32>
    %16 = math.cos %14 : vector<16x256xf32>
    %17 = math.sin %1 : vector<16x256xf32>
    %18 = math.sin %14 : vector<16x256xf32>
    %19 = tpu.concatenate %15, %16, %17, %18, %1, %14 in 0 : vector<16x256xf32>, vector<16x256xf32>, vector<16x256xf32>, vector<16x256xf32>, vector<16x256xf32>, vector<16x256xf32> -> vector<96x256xf32>
    %c0_10 = arith.constant 0 : index
    %c0_11 = arith.constant 0 : index
    %20 = vector.load %arg5[%c0_10, %c0_11] : memref<16x96xf32, #tpu.memory_space<vmem>>, vector<16x96xf32>
    %cst_12 = arith.constant dense<0.000000e+00> : vector<16x256xf32>
    %21 = tpu.matmul %20, %19, %cst_12 {dimension_numbers = #tpu.dot_dimension_numbers<[1], [0], [0], [1], [0, 0, 1, 1], [], []>} : vector<16x96xf32>, vector<96x256xf32>, vector<16x256xf32> -> vector<16x256xf32>
    %c0_13 = arith.constant 0 : index
    %c0_14 = arith.constant 0 : index
    %22 = vector.load %arg6[%c0_13, %c0_14] : memref<16x1xf32, #tpu.memory_space<vmem>>, vector<16x1xf32>
    %23 = vector.broadcast %22 : vector<16x1xf32> to vector<16x256xf32>
    %24 = arith.addf %21, %23 : vector<16x256xf32>
    %c0_15 = arith.constant 0 : index
    %c0_16 = arith.constant 0 : index
    %c0_17 = arith.constant 0 : index
    %25 = vector.load %arg7[%c0_15, %c0_16, %c0_17] : memref<1x16x256xf32, #tpu.memory_space<vmem>>, vector<1x16x256xf32>
    %26 = vector.shape_cast %25 : vector<1x16x256xf32> to vector<16x256xf32>
    %27 = vector.shape_cast %24 : vector<16x256xf32> to vector<1x16x256xf32>
    tpu.vector_store %arg7[%c0_15, %c0_16, %c0_17], %27 {strides = array<i32>} : memref<1x16x256xf32, #tpu.memory_space<vmem>>, vector<1x16x256xf32>,
    return
  }
  func.func @transform_0(%arg0: i32) -> (i32, i32, i32) {
    %c0_i32 = arith.constant 0 : i32
    %c0_i32_0 = arith.constant 0 : i32
    %c0_i32_1 = arith.constant 0 : i32
    return %arg0, %c0_i32, %c0_i32_0 : i32, i32, i32
  }
  func.func @transform_1(%arg0: i32) -> (i32, i32, i32) {
    %c0_i32 = arith.constant 0 : i32
    %c0_i32_0 = arith.constant 0 : i32
    %c0_i32_1 = arith.constant 0 : i32
    return %arg0, %c0_i32, %c0_i32_0 : i32, i32, i32
  }
  func.func @transform_2(%arg0: i32) -> (i32, i32) {
    %c0_i32 = arith.constant 0 : i32
    %c0_i32_0 = arith.constant 0 : i32
    %c0_i32_1 = arith.constant 0 : i32
    return %c0_i32, %c0_i32_0 : i32, i32
  }
  func.func @transform_3(%arg0: i32) -> (i32, i32) {
    %c0_i32 = arith.constant 0 : i32
    %c0_i32_0 = arith.constant 0 : i32
    %c0_i32_1 = arith.constant 0 : i32
    return %c0_i32, %c0_i32_0 : i32, i32
  }
  func.func @transform_4(%arg0: i32) -> (i32, i32) {
    %c0_i32 = arith.constant 0 : i32
    %c0_i32_0 = arith.constant 0 : i32
    %c0_i32_1 = arith.constant 0 : i32
    return %c0_i32, %c0_i32_0 : i32, i32
  }
  func.func @transform_5(%arg0: i32) -> (i32, i32) {
    %c0_i32 = arith.constant 0 : i32
    %c0_i32_0 = arith.constant 0 : i32
    %c0_i32_1 = arith.constant 0 : i32
    return %c0_i32, %c0_i32_0 : i32, i32
  }
  func.func @transform_6(%arg0: i32) -> (i32, i32, i32) {
    %c0_i32 = arith.constant 0 : i32
    %c0_i32_0 = arith.constant 0 : i32
    %c0_i32_1 = arith.constant 0 : i32
    return %arg0, %c0_i32, %c0_i32_0 : i32, i32, i32
  }
}

</mosaic_0001>

<llo_original>
// kernel: custom-call
$region0: #{custom-call}
  %s0 = inlined_call_operand.hbm [shape: c64[2,1,64,64], index: 0, kind: input, shape index: {}]
  %s1 = inlined_call_operand.vmem [shape: f32[2,1,64,64], index: 1, kind: output, shape index: {}]
  $region1: #{custom-call} parent=0
    #allocation0 [shape = 's32[1]{0}', space=sflag, size = 0x4, scoped, tag = 'scoped memory for custom-call']
    %2 = vsyncpa [#allocation0], 0
    %s3 = sshll.u32 %s1, 4
    %s4 = int_to_ptr.vmem [resolvable:$true] %s3
    %6 = dma.hbm_to_vmem [thread:$0]  %s0, 2048, %s4, [#allocation0]
    %7 = dma.done [#allocation0], 2048
    %8 = vsyncpa [#allocation0], 1

// kernel: custom-call.1
$region0: #{custom-call.1}
  %s0 = inlined_call_operand.hbm [shape: c64[2,1,64,64], index: 0, kind: input, shape index: {}]
  %s1 = inlined_call_operand.vmem [shape: f32[2,1,64,64], index: 1, kind: output, shape index: {}]
  %s2 = scalar_lea.hbm %s0, 2048
  $region1: #{custom-call.1} parent=0
    #allocation0 [shape = 's32[1]{0}', space=sflag, size = 0x4, scoped, tag = 'scoped memory for custom-call.1']
    %3 = vsyncpa [#allocation0], 0
    %s4 = sshll.u32 %s1, 4
    %s5 = int_to_ptr.vmem [resolvable:$true] %s4
    %7 = dma.hbm_to_vmem [thread:$0]  %s2, 2048, %s5, [#allocation0]
    %8 = dma.done [#allocation0], 2048
    %9 = vsyncpa [#allocation0], 1

// kernel: tile.30
$region0: #{tile.30}
  #allocation0 [shape = 's32[1]{0}', space=sflag, size = 0x4, scoped, tag = 'scoped memory for tile.30']
  %s0 = inlined_call_operand.vmem [shape: f32[4], index: 0, kind: input, shape index: {}]
  %s1 = inlined_call_operand.vmem [shape: f32[4,1,1,4], index: 1, kind: output, shape index: {}]
  // Predicated region
  $region2: #{tile.30} parent=0 // pred_check
    _
  $region3: #{tile.30} parent=0 // pred_check_branch
    %3 = sbr.rel (0) target = $region5
  $region4: #{tile.30} parent=0 // pred_region
    _
  $region5: #{tile.30} parent=0 // pred_fallthru
    _
  %v4 = vld [vmem:[%s0] ss:$0 sm:$0xff]
  %5 = vst [vmem:[%s1] sm:$0xf] %v4

// kernel: tile.0
$region0: #{tile.0}
  %s0 = inlined_call_operand.vmem [shape: f32[4,1,1,4], index: 0, kind: input, shape index: {}]
  %s1 = inlined_call_operand.vmem [shape: f32[16,1], index: 1, kind: output, shape index: {}]
  $region1: #{tile.0} parent=0
    #allocation0 [shape = 'u8[4096]{0}', space=vmem, size = 0x1000, scoped, tag = 'scoped mem for input reshape']
    %s3 = sshllo.u32 0, 4
    %v4 = vld [vmem:[%s0] sm:%s3]
    %5 = vst [vmem:[#allocation0] sm:%s3] %v4
    %v6 = vld [vmem:[#allocation0] sm:$0xf]
    %vm7 = vcmask 7168
    %8 = vst.msk [vmem:[%s1] ss:$4 sm:$0xf] %vm7, %v6
    %v9 = vld [vmem:[#allocation0] sm:$0xf]
    %10 = vrot.lane.b32.xlu0 %v9, 127
    %v11 = vpop.permute.xlu0 %10
    %vm12 = vcmask 7168
    %s13 = scalar_lea.vmem %s1, 1
    %14 = vst.msk [vmem:[%s13] ss:$4 sm:$0xf] %vm12, %v11
    %v15 = vld [vmem:[#allocation0] sm:$0xf]
    %16 = vrot.lane.b32.xlu0 %v15, 126
    %v17 = vpop.permute.xlu0 %16
    %vm18 = vcmask 7168
    %s19 = scalar_lea.vmem %s1, 2
    %20 = vst.msk [vmem:[%s19] ss:$4 sm:$0xf] %vm18, %v17
    %v21 = vld [vmem:[#allocation0] sm:$0xf]
    %22 = vrot.lane.b32.xlu0 %v21, 125
    %v23 = vpop.permute.xlu0 %22
    %vm24 = vcmask 7168
    %s25 = scalar_lea.vmem %s1, 3
    %26 = vst.msk [vmem:[%s25] ss:$4 sm:$0xf] %vm24, %v23

// kernel: forward.6
$region0: #{forward.6}
  #allocation0 [shape = 'u32[]', space=smem, size = 0x4, offset = 0x4, fixed_abs, tag = 'smem constant byte address 0x4 - core index']
  #allocation1 [shape = 'u32[144,128]{1,0:T(1,128)}', space=vmem, size = 0x12000, scoped, tag = 'internal scratch']
  %s0 = inlined_call_operand.vmem [shape: f32[2,4,256], index: 0, kind: input, shape index: {}]
  %s1 = inlined_call_operand.vmem [shape: f32[4,1], index: 1, kind: input, shape index: {}]
  %s2 = inlined_call_operand.vmem [shape: f32[4,1], index: 2, kind: input, shape index: {}]
  %s3 = inlined_call_operand.vmem [shape: f32[16,4], index: 3, kind: input, shape index: {}]
  %s4 = inlined_call_operand.vmem [shape: f32[16,1], index: 4, kind: input, shape index: {}]
  %s5 = inlined_call_operand.vmem [shape: f32[2,16,256], index: 5, kind: output, shape index: {0}]
  %s6 = inlined_call_operand.vmem [shape: f32[2,16,1], index: 6, kind: output, shape index: {1}]
  %s7 = inlined_call_operand.vmem [shape: f32[2,16,1], index: 7, kind: output, shape index: {2}]
  %8 = xla_tuple %s5, %s6, %s7
  %s9 = sld [smem:[#allocation0]]
  $region69: #{forward.6} parent=0
    _
  %s11 = ssub.s32 1, %s9
  %s12 = scalar_select 0, %s11, %s9
  loop: start=0, step=1, limit=4
  $region2: #{forward.6} parent=0 // loop_pre_header
    _
  $region3: #{forward.6} parent=0 // loop_header
    %s14 = sphi 0, %s18
    %p15 = scmp.ge.s32.totalorder %s14, 4
    %s24 = sphi 0, %s26
    %s27 = sphi 0, %s24
    %s28 = sphi 0, %s27
    %s44 = sphi 0, %s28
    %s48 = sphi 0, %s48
    %s50 = sphi 0, %s48
    %s51 = sphi 0, %s50
    %s65 = sphi 0, %s51
    %s69 = sphi 0, %s69
    %s71 = sphi 0, %s69
    %s72 = sphi 0, %s71
    %s86 = sphi 0, %s72
    %s90 = sphi 0, %s90
    %s92 = sphi 0, %s90
    %s93 = sphi 0, %s92
    %s107 = sphi 0, %s93
    %s111 = sphi 0, %s111
    %s113 = sphi 0, %s111
    %s114 = sphi 0, %s113
    %s128 = sphi 0, %s114
    %s134 = sphi 0, %s136
    %s137 = sphi 0, %s134
    %s138 = sphi 0, %s137
    %s154 = sphi 0, %s138
    %s160 = sphi 0, %s162
    %s163 = sphi 0, %s160
    %s164 = sphi 0, %s163
    %s180 = sphi 0, %s164
    %s186 = sphi 0, %s188
    %s189 = sphi 0, %s186
    %s190 = sphi 0, %s189
    %s206 = sphi 0, %s190
  $region4: #{forward.6} parent=0 // loop_header_branch
    %17 = sbr.rel (%p15) target = $region8
  $region5: #{forward.6} parent=0 // loop_body
    %s19 = ssub.s32 %s14, 1
    %s20 = ssub.s32 %s14, 2
    %s21 = sadd.s32 %s14, 1
    %s22 = ssub.s32 %s14, %s21
    %p23 = scmp.eq.s32.totalorder %s22, 0
    %s25 = sadd.s32 %s24, 1
    %s26 = scalar_select %p23, %s24, %s25
    %p29 = pneg %p23
    %p30 = scmp.eq.s32.totalorder %s14, 1
    %p31 = por %p29, %p30
    %p32 = scmp.ne.s32.totalorder %s24, %s27
    %p33 = scmp.eq.s32.totalorder %s14, 0
    %p34 = por %p32, %p33
    %p35 = scmp.ne.s32.totalorder %s24, %s27
    %p36 = scmp.eq.s32.totalorder %s19, 1
    %p37 = por %p35, %p36
    %p38 = scmp.ne.s32.totalorder %s27, %s28
    %p39 = scmp.eq.s32.totalorder %s19, 0
    %p40 = por %p38, %p39
    %p41 = scmp.ne.s32.totalorder %s27, %s28
    %p42 = scmp.eq.s32.totalorder %s20, 1
    %p43 = por %p41, %p42
    %p45 = scmp.ne.s32.totalorder %s28, %s44
    %p46 = scmp.eq.s32.totalorder %s20, 0
    %p47 = por %p45, %p46
    %s49 = sadd.s32 %s48, 1
    %p52 = scmp.eq.s32.totalorder %s14, 1
    %p53 = scmp.ne.s32.totalorder %s48, %s50
    %p54 = scmp.eq.s32.totalorder %s14, 0
    %p55 = por %p53, %p54
    %p56 = scmp.ne.s32.totalorder %s48, %s50
    %p57 = scmp.eq.s32.totalorder %s19, 1
    %p58 = por %p56, %p57
    %p59 = scmp.ne.s32.totalorder %s50, %s51
    %p60 = scmp.eq.s32.totalorder %s19, 0
    %p61 = por %p59, %p60
    %p62 = scmp.ne.s32.totalorder %s50, %s51
    %p63 = scmp.eq.s32.totalorder %s20, 1
    %p64 = por %p62, %p63
    %p66 = scmp.ne.s32.totalorder %s51, %s65
    %p67 = scmp.eq.s32.totalorder %s20, 0
    %p68 = por %p66, %p67
    %s70 = sadd.s32 %s69, 1
    %p73 = scmp.eq.s32.totalorder %s14, 1
    %p74 = scmp.ne.s32.totalorder %s69, %s71
    %p75 = scmp.eq.s32.totalorder %s14, 0
    %p76 = por %p74, %p75
    %p77 = scmp.ne.s32.totalorder %s69, %s71
    %p78 = scmp.eq.s32.totalorder %s19, 1
    %p79 = por %p77, %p78
    %p80 = scmp.ne.s32.totalorder %s71, %s72
    %p81 = scmp.eq.s32.totalorder %s19, 0
    %p82 = por %p80, %p81
    %p83 = scmp.ne.s32.totalorder %s71, %s72
    %p84 = scmp.eq.s32.totalorder %s20, 1
    %p85 = por %p83, %p84
    %p87 = scmp.ne.s32.totalorder %s72, %s86
    %p88 = scmp.eq.s32.totalorder %s20, 0
    %p89 = por %p87, %p88
    %s91 = sadd.s32 %s90, 1
    %p94 = scmp.eq.s32.totalorder %s14, 1
    %p95 = scmp.ne.s32.totalorder %s90, %s92
    %p96 = scmp.eq.s32.totalorder %s14, 0
    %p97 = por %p95, %p96
    %p98 = scmp.ne.s32.totalorder %s90, %s92
    %p99 = scmp.eq.s32.totalorder %s19, 1
    %p100 = por %p98, %p99
    %p101 = scmp.ne.s32.totalorder %s92, %s93
    %p102 = scmp.eq.s32.totalorder %s19, 0
    %p103 = por %p101, %p102
    %p104 = scmp.ne.s32.totalorder %s92, %s93
    %p105 = scmp.eq.s32.totalorder %s20, 1
    %p106 = por %p104, %p105
    %p108 = scmp.ne.s32.totalorder %s93, %s107
    %p109 = scmp.eq.s32.totalorder %s20, 0
    %p110 = por %p108, %p109
    %s112 = sadd.s32 %s111, 1
    %p115 = scmp.eq.s32.totalorder %s14, 1
    %p116 = scmp.ne.s32.totalorder %s111, %s113
    %p117 = scmp.eq.s32.totalorder %s14, 0
    %p118 = por %p116, %p117
    %p119 = scmp.ne.s32.totalorder %s111, %s113
    %p120 = scmp.eq.s32.totalorder %s19, 1
    %p121 = por %p119, %p120
    %p122 = scmp.ne.s32.totalorder %s113, %s114
    %p123 = scmp.eq.s32.totalorder %s19, 0
    %p124 = por %p122, %p123
    %p125 = scmp.ne.s32.totalorder %s113, %s114
    %p126 = scmp.eq.s32.totalorder %s20, 1
    %p127 = por %p125, %p126
    %p129 = scmp.ne.s32.totalorder %s114, %s128
    %p130 = scmp.eq.s32.totalorder %s20, 0
    %p131 = por %p129, %p130
    %s132 = ssub.s32 %s14, %s21
    %p133 = scmp.eq.s32.totalorder %s132, 0
    %s135 = sadd.s32 %s134, 1
    %s136 = scalar_select %p133, %s134, %s135
    %p139 = pneg %p133
    %p140 = scmp.eq.s32.totalorder %s14, 1
    %p141 = por %p139, %p140
    %p142 = scmp.ne.s32.totalorder %s134, %s137
    %p143 = scmp.eq.s32.totalorder %s14, 0
    %p144 = por %p142, %p143
    %p145 = scmp.ne.s32.totalorder %s134, %s137
    %p146 = scmp.eq.s32.totalorder %s19, 1
    %p147 = por %p145, %p146
    %p148 = scmp.ne.s32.totalorder %s137, %s138
    %p149 = scmp.eq.s32.totalorder %s19, 0
    %p150 = por %p148, %p149
    %p151 = scmp.ne.s32.totalorder %s137, %s138
    %p152 = scmp.eq.s32.totalorder %s20, 1
    %p153 = por %p151, %p152
    %p155 = scmp.ne.s32.totalorder %s138, %s154
    %p156 = scmp.eq.s32.totalorder %s20, 0
    %p157 = por %p155, %p156
    %s158 = ssub.s32 %s14, %s21
    %p159 = scmp.eq.s32.totalorder %s158, 0
    %s161 = sadd.s32 %s160, 1
    %s162 = scalar_select %p159, %s160, %s161
    %p165 = pneg %p159
    %p166 = scmp.eq.s32.totalorder %s14, 1
    %p167 = por %p165, %p166
    %p168 = scmp.ne.s32.totalorder %s160, %s163
    %p169 = scmp.eq.s32.totalorder %s14, 0
    %p170 = por %p168, %p169
    %p171 = scmp.ne.s32.totalorder %s160, %s163
    %p172 = scmp.eq.s32.totalorder %s19, 1
    %p173 = por %p171, %p172
    %p174 = scmp.ne.s32.totalorder %s163, %s164
    %p175 = scmp.eq.s32.totalorder %s19, 0
    %p176 = por %p174, %p175
    %p177 = scmp.ne.s32.totalorder %s163, %s164
    %p178 = scmp.eq.s32.totalorder %s20, 1
    %p179 = por %p177, %p178
    %p181 = scmp.ne.s32.totalorder %s164, %s180
    %p182 = scmp.eq.s32.totalorder %s20, 0
    %p183 = por %p181, %p182
    %s184 = ssub.s32 %s14, %s21
    %p185 = scmp.eq.s32.totalorder %s184, 0
    %s187 = sadd.s32 %s186, 1
    %s188 = scalar_select %p185, %s186, %s187
    %p191 = pneg %p185
    %p192 = scmp.eq.s32.totalorder %s14, 1
    %p193 = por %p191, %p192
    %p194 = scmp.ne.s32.totalorder %s186, %s189
    %p195 = scmp.eq.s32.totalorder %s14, 0
    %p196 = por %p194, %p195
    %p197 = scmp.ne.s32.totalorder %s186, %s189
    %p198 = scmp.eq.s32.totalorder %s19, 1
    %p199 = por %p197, %p198
    %p200 = scmp.ne.s32.totalorder %s189, %s190
    %p201 = scmp.eq.s32.totalorder %s19, 0
    %p202 = por %p200, %p201
    %p203 = scmp.ne.s32.totalorder %s189, %s190
    %p204 = scmp.eq.s32.totalorder %s20, 1
    %p205 = por %p203, %p204
    %p207 = scmp.ne.s32.totalorder %s190, %s206
    %p208 = scmp.eq.s32.totalorder %s20, 0
    %p209 = por %p207, %p208
    %p210 = scmp.le.s32.totalorder 1, %s14
    %p211 = scmp.lt.s32.totalorder %s14, 3
    %p212 = pnand %p210, %p211
    %p213 = pneg %p212
    // Predicated region
    $region9: #{forward.6} parent=5 // pred_check
      _
    $region10: #{forward.6} parent=5 // pred_check_branch
      %215 = sbr.rel (%p212) target = $region12
    $region11: #{forward.6} parent=5 // pred_region
      %s216 = ssub.s32 %s14, 1
      // Predicated region
      $region13: #{forward.6} parent=11 // pred_check
        %p217 = pneg %p61
      $region14: #{forward.6} parent=11 // pred_check_branch
        %219 = sbr.rel (%p217) target = $region16
      $region15: #{forward.6} parent=11 // pred_region
        _
      $region16: #{forward.6} parent=11 // pred_fallthru
        _
      // Predicated region
      $region17: #{forward.6} parent=11 // pred_check
        %p220 = pneg %p82
      $region18: #{forward.6} parent=11 // pred_check_branch
        %222 = sbr.rel (%p220) target = $region20
      $region19: #{forward.6} parent=11 // pred_region
        _
      $region20: #{forward.6} parent=11 // pred_fallthru
        _
      // Predicated region
      $region21: #{forward.6} parent=11 // pred_check
        %p223 = pneg %p103
      $region22: #{forward.6} parent=11 // pred_check_branch
        %225 = sbr.rel (%p223) target = $region24
      $region23: #{forward.6} parent=11 // pred_region
        _
      $region24: #{forward.6} parent=11 // pred_fallthru
        _
      // Predicated region
      $region25: #{forward.6} parent=11 // pred_check
        %p226 = pneg %p124
      $region26: #{forward.6} parent=11 // pred_check_branch
        %228 = sbr.rel (%p226) target = $region28
      $region27: #{forward.6} parent=11 // pred_region
        _
      $region28: #{forward.6} parent=11 // pred_fallthru
        _
    $region12: #{forward.6} parent=5 // pred_fallthru
      _
    %p229 = scmp.lt.s32.totalorder %s14, 2
    // Predicated region
    $region29: #{forward.6} parent=5 // pred_check
      %p230 = pneg %p229
    $region30: #{forward.6} parent=5 // pred_check_branch
      %232 = sbr.rel (%p230) target = $region32
    $region31: #{forward.6} parent=5 // pred_region
      // Predicated region
      $region33: #{forward.6} parent=31 // pred_check
        %p233 = pneg %p34
      $region34: #{forward.6} parent=31 // pred_check_branch
        %235 = sbr.rel (%p233) target = $region36
      $region35: #{forward.6} parent=31 // pred_region
        %p236 = scmp.lt.s32.totalorder %s14, 1
        %s237 = scalar_select %p236, %s14, 1
        %s238 = smul.addr %s237, 2
        %s239 = smul.addr %s238, 4
        %s240 = scalar_lea.vmem %s0, %s239
      $region36: #{forward.6} parent=31 // pred_fallthru
        _
    $region32: #{forward.6} parent=5 // pred_fallthru
      _
    %p241 = scmp.le.s32.totalorder 1, %s14
    %p242 = scmp.lt.s32.totalorder %s14, 3
    %p243 = pnand %p241, %p242
    %p244 = pneg %p243
    // Predicated region
    $region37: #{forward.6} parent=5 // pred_check
      _
    $region38: #{forward.6} parent=5 // pred_check_branch
      %246 = sbr.rel (%p243) target = $region40
    $region39: #{forward.6} parent=5 // pred_region
      %s247 = ssub.s32 %s14, 1
      %p248 = scmp.lt.s32.totalorder %s19, 1
      %s249 = scalar_select %p248, %s19, 1
      %s250 = smul.addr %s249, 2
      %s251 = smul.addr %s250, 4
      %s252 = scalar_lea.vmem %s0, %s251
      %p253 = pneg %p40
      %p254 = pneg %p37
      %p255 = pneg %p61
      %p256 = pneg %p58
      %p257 = pneg %p82
      %p258 = pneg %p79
      %p259 = pneg %p103
      %p260 = pneg %p100
      %p261 = pneg %p124
      %p262 = pneg %p121
      %p263 = pneg %p150
      %p264 = pneg %p147
      %p265 = scmp.lt.s32.totalorder %s19, 1
      %s266 = scalar_select %p265, %s19, 1
      %s267 = smul.addr %s266, 4
      %s268 = smul.addr %s267, 8
      %s269 = scalar_lea.vmem %s5, %s268
      %p270 = pneg %p176
      %p271 = pneg %p173
      %p272 = scmp.lt.s32.totalorder %s19, 1
      %s273 = scalar_select %p272, %s19, 1
      %s274 = smul.addr %s273, 2
      %s275 = smul.addr %s274, 8
      %s276 = scalar_lea.vmem %s6, %s275
      %p277 = pneg %p202
      %p278 = pneg %p199
      %p279 = scmp.lt.s32.totalorder %s19, 1
      %s280 = scalar_select %p279, %s19, 1
      %s281 = smul.addr %s280, 2
      %s282 = smul.addr %s281, 8
      %s283 = scalar_lea.vmem %s7, %s282
      %p284 = scmp.lt.s32.totalorder %s19, 1
      %s285 = scalar_select %p284, %s19, 1
      %s286 = smul.addr %s285, 2
      %s287 = smul.addr %s286, 4
      %s288 = scalar_lea.vmem %s0, %s287
      %p289 = scmp.lt.s32.totalorder %s19, 1
      %s290 = scalar_select %p289, %s19, 1
      %s291 = smul.addr %s290, 4
      %s292 = smul.addr %s291, 8
      %s293 = scalar_lea.vmem %s5, %s292
      %p294 = scmp.lt.s32.totalorder %s19, 1
      %s295 = scalar_select %p294, %s19, 1
      %s296 = smul.addr %s295, 2
      %s297 = smul.addr %s296, 8
      %s298 = scalar_lea.vmem %s6, %s297
      %p299 = scmp.lt.s32.totalorder %s19, 1
      %s300 = scalar_select %p299, %s19, 1
      %s301 = smul.addr %s300, 2
      %s302 = smul.addr %s301, 8
      %s303 = scalar_lea.vmem %s7, %s302
      %v304 = vld [vmem:[%s288] sm:$0xff]
      %v305 = vld [vmem:[%s1] sm:$0xf]
      %307 = vset.pattern.permute.xlu0 0
      %308 = vperm.xlu0 %307, %v305
      %v309 = vpop.permute.xlu0 %308
      %v311 = vunpack.c.l.s4 839922192
      %v312 = vunpack.c.0.s8 %v311
      %v313 = vlaneseq
      %v314 = vshrl.u32 %v313, 7
      %v315 = vsub.s32 %v312, %v314
      %v316 = vrot.slane %v309, %v315
      %v318 = vsub.f32 %v304, %v316
      %v319 = vld [vmem:[%s2] sm:$0xf]
      %321 = vset.pattern.permute.xlu0 0
      %322 = vperm.xlu0 %321, %v319
      %v323 = vpop.permute.xlu0 %322
      %v325 = vunpack.c.l.s4 839922192
      %v326 = vunpack.c.0.s8 %v325
      %v327 = vlaneseq
      %v328 = vshrl.u32 %v327, 7
      %v329 = vsub.s32 %v326, %v328
      %v330 = vrot.slane %v323, %v329
      %v332 = vmul.f32 %v318, %v330
      %vm333 = vcmp.ge.f32.partialorder %v332, 0.0
      %v334 = vmul.f32 %v332, 0.2
      %v335 = vsel %vm333, %v332, %v334
      %v336 = vld [vmem:[%s3] sm:$0xff]
      %v337 = vld [vmem:[%s3 + $0x8] sm:$0xff]
      %v338 = vld [vmem:[%s4] sm:$0xff]
      %v339 = vld [vmem:[%s4 + $0x8] sm:$0xff]
      %341 = vset.pattern.permute.xlu0 0
      %342 = vperm.xlu0 %341, %v338
      %v343 = vpop.permute.xlu0 %342
      %346 = vset.pattern.permute.xlu0 0
      %347 = vperm.xlu0 %346, %v339
      %v348 = vpop.permute.xlu0 %347
      %v351 = vcombine.high %v335, %v335
      %vm352 = vcmask 31744
      %v354 = vsel %vm352, %v336, 0
      %v357 = vsel %vm352, %v337, 0
      %vm359 = vcmask 1043456
      %v360 = vsel %vm359, %v335, 0
      %v362 = vsel %vm359, %v351, 0
      %364 = vmatprep.subr.mxu0 %v362
      %365 = vmatpush1.msra.mxu0 %v360
      %366 = vmatprep.subr.mxu0 0.0
      %367 = vmatpush1.msra.mxu0 0.0
      %368 = vmatprep.subr.mxu0 0.0
      %369 = vmatpush1.msra.mxu0 0.0
      %370 = vmatprep.subr.mxu0 0.0
      %371 = vmatpush1.msra.mxu0 0.0
      %372 = vmatprep.subr.mxu0 0.0
      %373 = vmatpush1.msra.mxu0 0.0
      %374 = vmatprep.subr.mxu0 0.0
      %375 = vmatpush1.msra.mxu0 0.0
      %376 = vmatprep.subr.mxu0 0.0
      %377 = vmatpush1.msra.mxu0 0.0
      %378 = vmatprep.subr.mxu0 0.0
      %379 = vmatpush1.msra.mxu0 0.0
      %380 = vmatprep.subr.mxu0 0.0
      %381 = vmatpush1.msra.mxu0 0.0
      %382 = vmatprep.subr.mxu0 0.0
      %383 = vmatpush1.msra.mxu0 0.0
      %384 = vmatprep.subr.mxu0 0.0
      %385 = vmatpush1.msra.mxu0 0.0
      %386 = vmatprep.subr.mxu0 0.0
      %387 = vmatpush1.msra.mxu0 0.0
      %388 = vmatprep.subr.mxu0 0.0
      %389 = vmatpush1.msra.mxu0 0.0
      %390 = vmatprep.subr.mxu0 0.0
      %391 = vmatpush1.msra.mxu0 0.0
      %392 = vmatprep.subr.mxu0 0.0
      %393 = vmatpush1.msra.mxu0 0.0
      %394 = vmatprep.subr.mxu0 0.0
      %395 = vmatpush1.msra.mxu0 0.0
      %396 = vmatprep.subr.mxu0 0.0
      %397 = vmatpush1.msra.mxu0 0.0
      %398 = vmatprep.subr.mxu0 0.0
      %399 = vmatpush1.msra.mxu0 0.0
      %400 = vmatprep.subr.mxu0 0.0
      %401 = vmatpush1.msra.mxu0 0.0
      %402 = vmatprep.subr.mxu0 0.0
      %403 = vmatpush1.msra.mxu0 0.0
      %404 = vmatprep.subr.mxu0 0.0
      %405 = vmatpush1.msra.mxu0 0.0
      %406 = vmatprep.subr.mxu0 0.0
      %407 = vmatpush1.msra.mxu0 0.0
      %408 = vmatprep.subr.mxu0 0.0
      %409 = vmatpush1.msra.mxu0 0.0
      %410 = vmatprep.subr.mxu0 0.0
      %411 = vmatpush1.msra.mxu0 0.0
      %412 = vmatprep.subr.mxu0 0.0
      %413 = vmatpush1.msra.mxu0 0.0
      %414 = vmatprep.subr.mxu0 0.0
      %415 = vmatpush1.msra.mxu0 0.0
      %416 = vmatprep.subr.mxu0 0.0
      %417 = vmatpush1.msra.mxu0 0.0
      %418 = vmatprep.subr.mxu0 0.0
      %419 = vmatpush1.msra.mxu0 0.0
      %420 = vmatprep.subr.mxu0 0.0
      %421 = vmatpush1.msra.mxu0 0.0
      %422 = vmatprep.subr.mxu0 0.0
      %423 = vmatpush1.msra.mxu0 0.0
      %424 = vmatprep.subr.mxu0 0.0
      %425 = vmatpush1.msra.mxu0 0.0
      %426 = vmatprep.subr.mxu0 0.0
      %427 = vmatpush1.msra.mxu0 0.0
      %428 = vmatprep.mubr.f32.mxu0 0.0
      %429 = vmatmul.mubr.f32.gmra.mrb[0].mxu0 %v354
      %v430 = vpop.f32.mrb[0].mxu0
      %v431 = vadd.f32 %v343, %v430
      %v432 = vpop.f32.mrb[0].mxu0
      %v433 = vadd.f32 %v343, %v432
      %434 = vmatprep.mubr.f32.mxu0 0.0
      %435 = vmatmul.mubr.f32.gmra.mrb[0].mxu0 %v357
      %v436 = vpop.f32.mrb[0].mxu0
      %v437 = vadd.f32 %v348, %v436
      %v438 = vpop.f32.mrb[0].mxu0
      %v439 = vadd.f32 %v348, %v438
      %440 = vdwg.mxu0
      %441 = vst [vmem:[%s293] sm:$0xff] %v431
      %442 = vst [vmem:[%s293 + $0x8] sm:$0xff] %v433
      %443 = vst [vmem:[%s293 + $0x10] sm:$0xff] %v437
      %444 = vst [vmem:[%s293 + $0x18] sm:$0xff] %v439
      %v445 = vadd.f32 %v431, %v433
      %446 = vadd.xlane.f32.xlu0 %v445
      %v447 = vpop.xlane.xlu0 %446
      %v448 = vadd.f32 %v437, %v439
      %449 = vadd.xlane.f32.xlu0 %v448
      %v450 = vpop.xlane.xlu0 %449
      %vm451 = vcmask 7168
      %452 = vst.msk [vmem:[%s298] sm:$0xff] %vm451, %v447
      %453 = vst.msk [vmem:[%s298 + $0x8] sm:$0xff] %vm451, %v450
      %v454 = vmul.f32 %v431, %v431
      %v455 = vmul.f32 %v433, %v433
      %v456 = vmul.f32 %v437, %v437
      %v457 = vmul.f32 %v439, %v439
      %v458 = vadd.f32 %v454, %v455
      %459 = vadd.xlane.f32.xlu0 %v458
      %v460 = vpop.xlane.xlu0 %459
      %v461 = vadd.f32 %v456, %v457
      %462 = vadd.xlane.f32.xlu0 %v461
      %v463 = vpop.xlane.xlu0 %462
      %464 = vst.msk [vmem:[%s303] sm:$0xff] %vm451, %v460
      %465 = vst.msk [vmem:[%s303 + $0x8] sm:$0xff] %vm451, %v463
      %p466 = scmp.lt.s32.totalorder %s19, 1
      %s467 = scalar_select %p466, %s19, 1
      %s468 = smul.addr %s467, 4
      %s469 = smul.addr %s468, 8
      %s470 = scalar_lea.vmem %s5, %s469
      %p471 = scmp.lt.s32.totalorder %s19, 1
      %s472 = scalar_select %p471, %s19, 1
      %s473 = smul.addr %s472, 2
      %s474 = smul.addr %s473, 8
      %s475 = scalar_lea.vmem %s6, %s474
      %p476 = scmp.lt.s32.totalorder %s19, 1
      %s477 = scalar_select %p476, %s19, 1
      %s478 = smul.addr %s477, 2
      %s479 = smul.addr %s478, 8
      %s480 = scalar_lea.vmem %s7, %s479
      // Predicated region
      $region41: #{forward.6} parent=39 // pred_check
        %p481 = pneg %p147
      $region42: #{forward.6} parent=39 // pred_check_branch
        %483 = sbr.rel (%p481) target = $region44
      $region43: #{forward.6} parent=39 // pred_region
        _
      $region44: #{forward.6} parent=39 // pred_fallthru
        _
      // Predicated region
      $region45: #{forward.6} parent=39 // pred_check
        %p484 = pneg %p173
      $region46: #{forward.6} parent=39 // pred_check_branch
        %486 = sbr.rel (%p484) target = $region48
      $region47: #{forward.6} parent=39 // pred_region
        _
      $region48: #{forward.6} parent=39 // pred_fallthru
        _
      // Predicated region
      $region49: #{forward.6} parent=39 // pred_check
        %p487 = pneg %p199
      $region50: #{forward.6} parent=39 // pred_check_branch
        %489 = sbr.rel (%p487) target = $region52
      $region51: #{forward.6} parent=39 // pred_region
        _
      $region52: #{forward.6} parent=39 // pred_fallthru
        _
    $region40: #{forward.6} parent=5 // pred_fallthru
      _
    %p490 = scmp.le.s32.totalorder 2, %s14
    // Predicated region
    $region53: #{forward.6} parent=5 // pred_check
      %p491 = pneg %p490
    $region54: #{forward.6} parent=5 // pred_check_branch
      %493 = sbr.rel (%p491) target = $region56
    $region55: #{forward.6} parent=5 // pred_region
      %s494 = ssub.s32 %s14, 2
      // Predicated region
      $region57: #{forward.6} parent=55 // pred_check
        %p495 = pneg %p153
      $region58: #{forward.6} parent=55 // pred_check_branch
        %497 = sbr.rel (%p495) target = $region60
      $region59: #{forward.6} parent=55 // pred_region
        %p498 = scmp.lt.s32.totalorder %s20, 1
        %s499 = scalar_select %p498, %s20, 1
        %s500 = smul.addr %s499, 4
        %s501 = smul.addr %s500, 8
        %s502 = scalar_lea.vmem %s5, %s501
      $region60: #{forward.6} parent=55 // pred_fallthru
        _
      // Predicated region
      $region61: #{forward.6} parent=55 // pred_check
        %p503 = pneg %p179
      $region62: #{forward.6} parent=55 // pred_check_branch
        %505 = sbr.rel (%p503) target = $region64
      $region63: #{forward.6} parent=55 // pred_region
        %p506 = scmp.lt.s32.totalorder %s20, 1
        %s507 = scalar_select %p506, %s20, 1
        %s508 = smul.addr %s507, 2
        %s509 = smul.addr %s508, 8
        %s510 = scalar_lea.vmem %s6, %s509
      $region64: #{forward.6} parent=55 // pred_fallthru
        _
      // Predicated region
      $region65: #{forward.6} parent=55 // pred_check
        %p511 = pneg %p205
      $region66: #{forward.6} parent=55 // pred_check_branch
        %513 = sbr.rel (%p511) target = $region68
      $region67: #{forward.6} parent=55 // pred_region
        %p514 = scmp.lt.s32.totalorder %s20, 1
        %s515 = scalar_select %p514, %s20, 1
        %s516 = smul.addr %s515, 2
        %s517 = smul.addr %s516, 8
        %s518 = scalar_lea.vmem %s7, %s517
      $region68: #{forward.6} parent=55 // pred_fallthru
        _
    $region56: #{forward.6} parent=5 // pred_fallthru
      _
  $region6: #{forward.6} parent=0 // loop_footer
    %s18 = sadd.s32 1, %s14
  $region7: #{forward.6} parent=0 // loop_footer_branch
    %13 = sbr.rel target = $region3
  $region8: #{forward.6} parent=0 // loop_exit
    _

// kernel: forward.4
$region0: #{forward.4}
  #allocation0 [shape = 'u32[]', space=smem, size = 0x4, offset = 0x4, fixed_abs, tag = 'smem constant byte address 0x4 - core index']
  #allocation1 [shape = 'u32[144,128]{1,0:T(1,128)}', space=vmem, size = 0x12000, scoped, tag = 'internal scratch']
  %s0 = inlined_call_operand.vmem [shape: f32[2,32,256], index: 0, kind: input, shape index: {}]
  %s1 = inlined_call_operand.vmem [shape: f32[9,1,256], index: 1, kind: input, shape index: {}]
  %s2 = inlined_call_operand.vmem [shape: f32[16,384], index: 2, kind: input, shape index: {}]
  %s3 = inlined_call_operand.vmem [shape: f32[16,1], index: 3, kind: input, shape index: {}]
  %s4 = inlined_call_operand.vmem [shape: f32[2,16,256], index: 4, kind: output, shape index: {0}]
  %s5 = inlined_call_operand.vmem [shape: f32[2,16,1], index: 5, kind: output, shape index: {1}]
  %s6 = inlined_call_operand.vmem [shape: f32[2,16,1], index: 6, kind: output, shape index: {2}]
  %7 = xla_tuple %s4, %s5, %s6
  %s8 = sld [smem:[#allocation0]]
  $region65: #{forward.4} parent=0
    _
  %s10 = ssub.s32 1, %s8
  %s11 = scalar_select 0, %s10, %s8
  loop: start=0, step=1, limit=4
  $region2: #{forward.4} parent=0 // loop_pre_header
    _
  $region3: #{forward.4} parent=0 // loop_header
    %s13 = sphi 0, %s17
    %p14 = scmp.ge.s32.totalorder %s13, 4
    %s23 = sphi 0, %s25
    %s26 = sphi 0, %s23
    %s27 = sphi 0, %s26
    %s43 = sphi 0, %s27
    %s47 = sphi 0, %s47
    %s49 = sphi 0, %s47
    %s50 = sphi 0, %s49
    %s64 = sphi 0, %s50
    %s68 = sphi 0, %s68
    %s70 = sphi 0, %s68
    %s71 = sphi 0, %s70
    %s85 = sphi 0, %s71
    %s89 = sphi 0, %s89
    %s91 = sphi 0, %s89
    %s92 = sphi 0, %s91
    %s106 = sphi 0, %s92
    %s112 = sphi 0, %s114
    %s115 = sphi 0, %s112
    %s116 = sphi 0, %s115
    %s132 = sphi 0, %s116
    %s138 = sphi 0, %s140
    %s141 = sphi 0, %s138
    %s142 = sphi 0, %s141
    %s158 = sphi 0, %s142
    %s164 = sphi 0, %s166
    %s167 = sphi 0, %s164
    %s168 = sphi 0, %s167
    %s184 = sphi 0, %s168
  $region4: #{forward.4} parent=0 // loop_header_branch
    %16 = sbr.rel (%p14) target = $region8
  $region5: #{forward.4} parent=0 // loop_body
    %s18 = ssub.s32 %s13, 1
    %s19 = ssub.s32 %s13, 2
    %s20 = sadd.s32 %s13, 1
    %s21 = ssub.s32 %s13, %s20
    %p22 = scmp.eq.s32.totalorder %s21, 0
    %s24 = sadd.s32 %s23, 1
    %s25 = scalar_select %p22, %s23, %s24
    %p28 = pneg %p22
    %p29 = scmp.eq.s32.totalorder %s13, 1
    %p30 = por %p28, %p29
    %p31 = scmp.ne.s32.totalorder %s23, %s26
    %p32 = scmp.eq.s32.totalorder %s13, 0
    %p33 = por %p31, %p32
    %p34 = scmp.ne.s32.totalorder %s23, %s26
    %p35 = scmp.eq.s32.totalorder %s18, 1
    %p36 = por %p34, %p35
    %p37 = scmp.ne.s32.totalorder %s26, %s27
    %p38 = scmp.eq.s32.totalorder %s18, 0
    %p39 = por %p37, %p38
    %p40 = scmp.ne.s32.totalorder %s26, %s27
    %p41 = scmp.eq.s32.totalorder %s19, 1
    %p42 = por %p40, %p41
    %p44 = scmp.ne.s32.totalorder %s27, %s43
    %p45 = scmp.eq.s32.totalorder %s19, 0
    %p46 = por %p44, %p45
    %s48 = sadd.s32 %s47, 1
    %p51 = scmp.eq.s32.totalorder %s13, 1
    %p52 = scmp.ne.s32.totalorder %s47, %s49
    %p53 = scmp.eq.s32.totalorder %s13, 0
    %p54 = por %p52, %p53
    %p55 = scmp.ne.s32.totalorder %s47, %s49
    %p56 = scmp.eq.s32.totalorder %s18, 1
    %p57 = por %p55, %p56
    %p58 = scmp.ne.s32.totalorder %s49, %s50
    %p59 = scmp.eq.s32.totalorder %s18, 0
    %p60 = por %p58, %p59
    %p61 = scmp.ne.s32.totalorder %s49, %s50
    %p62 = scmp.eq.s32.totalorder %s19, 1
    %p63 = por %p61, %p62
    %p65 = scmp.ne.s32.totalorder %s50, %s64
    %p66 = scmp.eq.s32.totalorder %s19, 0
    %p67 = por %p65, %p66
    %s69 = sadd.s32 %s68, 1
    %p72 = scmp.eq.s32.totalorder %s13, 1
    %p73 = scmp.ne.s32.totalorder %s68, %s70
    %p74 = scmp.eq.s32.totalorder %s13, 0
    %p75 = por %p73, %p74
    %p76 = scmp.ne.s32.totalorder %s68, %s70
    %p77 = scmp.eq.s32.totalorder %s18, 1
    %p78 = por %p76, %p77
    %p79 = scmp.ne.s32.totalorder %s70, %s71
    %p80 = scmp.eq.s32.totalorder %s18, 0
    %p81 = por %p79, %p80
    %p82 = scmp.ne.s32.totalorder %s70, %s71
    %p83 = scmp.eq.s32.totalorder %s19, 1
    %p84 = por %p82, %p83
    %p86 = scmp.ne.s32.totalorder %s71, %s85
    %p87 = scmp.eq.s32.totalorder %s19, 0
    %p88 = por %p86, %p87
    %s90 = sadd.s32 %s89, 1
    %p93 = scmp.eq.s32.totalorder %s13, 1
    %p94 = scmp.ne.s32.totalorder %s89, %s91
    %p95 = scmp.eq.s32.totalorder %s13, 0
    %p96 = por %p94, %p95
    %p97 = scmp.ne.s32.totalorder %s89, %s91
    %p98 = scmp.eq.s32.totalorder %s18, 1
    %p99 = por %p97, %p98
    %p100 = scmp.ne.s32.totalorder %s91, %s92
    %p101 = scmp.eq.s32.totalorder %s18, 0
    %p102 = por %p100, %p101
    %p103 = scmp.ne.s32.totalorder %s91, %s92
    %p104 = scmp.eq.s32.totalorder %s19, 1
    %p105 = por %p103, %p104
    %p107 = scmp.ne.s32.totalorder %s92, %s106
    %p108 = scmp.eq.s32.totalorder %s19, 0
    %p109 = por %p107, %p108
    %s110 = ssub.s32 %s13, %s20
    %p111 = scmp.eq.s32.totalorder %s110, 0
    %s113 = sadd.s32 %s112, 1
    %s114 = scalar_select %p111, %s112, %s113
    %p117 = pneg %p111
    %p118 = scmp.eq.s32.totalorder %s13, 1
    %p119 = por %p117, %p118
    %p120 = scmp.ne.s32.totalorder %s112, %s115
    %p121 = scmp.eq.s32.totalorder %s13, 0
    %p122 = por %p120, %p121
    %p123 = scmp.ne.s32.totalorder %s112, %s115
    %p124 = scmp.eq.s32.totalorder %s18, 1
    %p125 = por %p123, %p124
    %p126 = scmp.ne.s32.totalorder %s115, %s116
    %p127 = scmp.eq.s32.totalorder %s18, 0
    %p128 = por %p126, %p127
    %p129 = scmp.ne.s32.totalorder %s115, %s116
    %p130 = scmp.eq.s32.totalorder %s19, 1
    %p131 = por %p129, %p130
    %p133 = scmp.ne.s32.totalorder %s116, %s132
    %p134 = scmp.eq.s32.totalorder %s19, 0
    %p135 = por %p133, %p134
    %s136 = ssub.s32 %s13, %s20
    %p137 = scmp.eq.s32.totalorder %s136, 0
    %s139 = sadd.s32 %s138, 1
    %s140 = scalar_select %p137, %s138, %s139
    %p143 = pneg %p137
    %p144 = scmp.eq.s32.totalorder %s13, 1
    %p145 = por %p143, %p144
    %p146 = scmp.ne.s32.totalorder %s138, %s141
    %p147 = scmp.eq.s32.totalorder %s13, 0
    %p148 = por %p146, %p147
    %p149 = scmp.ne.s32.totalorder %s138, %s141
    %p150 = scmp.eq.s32.totalorder %s18, 1
    %p151 = por %p149, %p150
    %p152 = scmp.ne.s32.totalorder %s141, %s142
    %p153 = scmp.eq.s32.totalorder %s18, 0
    %p154 = por %p152, %p153
    %p155 = scmp.ne.s32.totalorder %s141, %s142
    %p156 = scmp.eq.s32.totalorder %s19, 1
    %p157 = por %p155, %p156
    %p159 = scmp.ne.s32.totalorder %s142, %s158
    %p160 = scmp.eq.s32.totalorder %s19, 0
    %p161 = por %p159, %p160
    %s162 = ssub.s32 %s13, %s20
    %p163 = scmp.eq.s32.totalorder %s162, 0
    %s165 = sadd.s32 %s164, 1
    %s166 = scalar_select %p163, %s164, %s165
    %p169 = pneg %p163
    %p170 = scmp.eq.s32.totalorder %s13, 1
    %p171 = por %p169, %p170
    %p172 = scmp.ne.s32.totalorder %s164, %s167
    %p173 = scmp.eq.s32.totalorder %s13, 0
    %p174 = por %p172, %p173
    %p175 = scmp.ne.s32.totalorder %s164, %s167
    %p176 = scmp.eq.s32.totalorder %s18, 1
    %p177 = por %p175, %p176
    %p178 = scmp.ne.s32.totalorder %s167, %s168
    %p179 = scmp.eq.s32.totalorder %s18, 0
    %p180 = por %p178, %p179
    %p181 = scmp.ne.s32.totalorder %s167, %s168
    %p182 = scmp.eq.s32.totalorder %s19, 1
    %p183 = por %p181, %p182
    %p185 = scmp.ne.s32.totalorder %s168, %s184
    %p186 = scmp.eq.s32.totalorder %s19, 0
    %p187 = por %p185, %p186
    %p188 = scmp.le.s32.totalorder 1, %s13
    %p189 = scmp.lt.s32.totalorder %s13, 3
    %p190 = pnand %p188, %p189
    %p191 = pneg %p190
    // Predicated region
    $region9: #{forward.4} parent=5 // pred_check
      _
    $region10: #{forward.4} parent=5 // pred_check_branch
      %193 = sbr.rel (%p190) target = $region12
    $region11: #{forward.4} parent=5 // pred_region
      %s194 = ssub.s32 %s13, 1
      // Predicated region
      $region13: #{forward.4} parent=11 // pred_check
        %p195 = pneg %p60
      $region14: #{forward.4} parent=11 // pred_check_branch
        %197 = sbr.rel (%p195) target = $region16
      $region15: #{forward.4} parent=11 // pred_region
        _
      $region16: #{forward.4} parent=11 // pred_fallthru
        _
      // Predicated region
      $region17: #{forward.4} parent=11 // pred_check
        %p198 = pneg %p81
      $region18: #{forward.4} parent=11 // pred_check_branch
        %200 = sbr.rel (%p198) target = $region20
      $region19: #{forward.4} parent=11 // pred_region
        _
      $region20: #{forward.4} parent=11 // pred_fallthru
        _
      // Predicated region
      $region21: #{forward.4} parent=11 // pred_check
        %p201 = pneg %p102
      $region22: #{forward.4} parent=11 // pred_check_branch
        %203 = sbr.rel (%p201) target = $region24
      $region23: #{forward.4} parent=11 // pred_region
        _
      $region24: #{forward.4} parent=11 // pred_fallthru
        _
    $region12: #{forward.4} parent=5 // pred_fallthru
      _
    %p204 = scmp.lt.s32.totalorder %s13, 2
    // Predicated region
    $region25: #{forward.4} parent=5 // pred_check
      %p205 = pneg %p204
    $region26: #{forward.4} parent=5 // pred_check_branch
      %207 = sbr.rel (%p205) target = $region28
    $region27: #{forward.4} parent=5 // pred_region
      // Predicated region
      $region29: #{forward.4} parent=27 // pred_check
        %p208 = pneg %p33
      $region30: #{forward.4} parent=27 // pred_check_branch
        %210 = sbr.rel (%p208) target = $region32
      $region31: #{forward.4} parent=27 // pred_region
        %p211 = scmp.lt.s32.totalorder %s13, 1
        %s212 = scalar_select %p211, %s13, 1
        %s213 = smul.addr %s212, 8
        %s214 = smul.addr %s213, 8
        %s215 = scalar_lea.vmem %s0, %s214
      $region32: #{forward.4} parent=27 // pred_fallthru
        _
    $region28: #{forward.4} parent=5 // pred_fallthru
      _
    %p216 = scmp.le.s32.totalorder 1, %s13
    %p217 = scmp.lt.s32.totalorder %s13, 3
    %p218 = pnand %p216, %p217
    %p219 = pneg %p218
    // Predicated region
    $region33: #{forward.4} parent=5 // pred_check
      _
    $region34: #{forward.4} parent=5 // pred_check_branch
      %221 = sbr.rel (%p218) target = $region36
    $region35: #{forward.4} parent=5 // pred_region
      %s222 = ssub.s32 %s13, 1
      %p223 = scmp.lt.s32.totalorder %s18, 1
      %s224 = scalar_select %p223, %s18, 1
      %s225 = smul.addr %s224, 8
      %s226 = smul.addr %s225, 8
      %s227 = scalar_lea.vmem %s0, %s226
      %p228 = pneg %p39
      %p229 = pneg %p36
      %p230 = pneg %p60
      %p231 = pneg %p57
      %p232 = pneg %p81
      %p233 = pneg %p78
      %p234 = pneg %p102
      %p235 = pneg %p99
      %p236 = pneg %p128
      %p237 = pneg %p125
      %p238 = scmp.lt.s32.totalorder %s18, 1
      %s239 = scalar_select %p238, %s18, 1
      %s240 = smul.addr %s239, 4
      %s241 = smul.addr %s240, 8
      %s242 = scalar_lea.vmem %s4, %s241
      %p243 = pneg %p154
      %p244 = pneg %p151
      %p245 = scmp.lt.s32.totalorder %s18, 1
      %s246 = scalar_select %p245, %s18, 1
      %s247 = smul.addr %s246, 2
      %s248 = smul.addr %s247, 8
      %s249 = scalar_lea.vmem %s5, %s248
      %p250 = pneg %p180
      %p251 = pneg %p177
      %p252 = scmp.lt.s32.totalorder %s18, 1
      %s253 = scalar_select %p252, %s18, 1
      %s254 = smul.addr %s253, 2
      %s255 = smul.addr %s254, 8
      %s256 = scalar_lea.vmem %s6, %s255
      %p257 = scmp.lt.s32.totalorder %s18, 1
      %s258 = scalar_select %p257, %s18, 1
      %s259 = smul.addr %s258, 8
      %s260 = smul.addr %s259, 8
      %s261 = scalar_lea.vmem %s0, %s260
      %p262 = scmp.lt.s32.totalorder %s18, 1
      %s263 = scalar_select %p262, %s18, 1
      %s264 = smul.addr %s263, 4
      %s265 = smul.addr %s264, 8
      %s266 = scalar_lea.vmem %s4, %s265
      %p267 = scmp.lt.s32.totalorder %s18, 1
      %s268 = scalar_select %p267, %s18, 1
      %s269 = smul.addr %s268, 2
      %s270 = smul.addr %s269, 8
      %s271 = scalar_lea.vmem %s5, %s270
      %p272 = scmp.lt.s32.totalorder %s18, 1
      %s273 = scalar_select %p272, %s18, 1
      %s274 = smul.addr %s273, 2
      %s275 = smul.addr %s274, 8
      %s276 = scalar_lea.vmem %s6, %s275
      %v277 = vld [vmem:[%s261] sm:$0xff]
      %v278 = vld [vmem:[%s261 + $0x8] sm:$0xff]
      %v279 = vld [vmem:[%s261 + $0x10] sm:$0xff]
      %v280 = vld [vmem:[%s261 + $0x18] sm:$0xff]
      %v281 = vld [vmem:[%s261 + $0x20] sm:$0xff]
      %v282 = vld [vmem:[%s261 + $0x28] sm:$0xff]
      %v283 = vld [vmem:[%s261 + $0x30] sm:$0xff]
      %v284 = vld [vmem:[%s261 + $0x38] sm:$0xff]
      %v285 = vand.u32 2147483647, %v277
      %vm286 = vcmp.le.f32.partialorder %v285, 0.7853982
      %vm287 = vcmp.lt.s32.totalorder %v277, 0
      %v288 = vand.u32 %v277, 2139095040
      %v289 = vshrl.u32 %v288, 23
      %v290 = vsub.s32 %v289, 127
      %v291 = vand.u32 2147483647, %v277
      %v292 = vand.u32 %v291, 8388607
      %v293 = vor.u32 %v292, 8388608
      %v294 = vsub.s32 0, %v293
      %v295 = vadd.s32 %v290, 1
      %vm296 = vcmp.gt.s32.totalorder %v295, 0
      %v297 = vsel %vm296, %v295, 0
      %v298 = vshrl.u32 %v297, 5
      %v299 = vand.u32 %v297, 31
      %v300 = vsub.s32 32, %v299
      %v301 = vshrl.u32 683565275, %v300
      %v302 = vshll.u32 683565275, %v299
      %v303 = vshrl.u32 2475754826, %v300
      %v304 = vor.u32 %v302, %v303
      %v305 = vshll.u32 2475754826, %v299
      %v306 = vshrl.u32 2131351028, %v300
      %v307 = vor.u32 %v305, %v306
      %v308 = vshll.u32 2131351028, %v299
      %v309 = vshrl.u32 2102212464, %v300
      %v310 = vor.u32 %v308, %v309
      %v311 = vshll.u32 2102212464, %v299
      %v312 = vshrl.u32 920167782, %v300
      %v313 = vor.u32 %v311, %v312
      %v314 = vshll.u32 920167782, %v299
      %v315 = vshrl.u32 1326507024, %v300
      %v316 = vor.u32 %v314, %v315
      %vm317 = vcmp.lt.s32.totalorder %v298, 1
      %vm318 = vcmp.lt.s32.totalorder %v298, 2
      %vm319 = vcmp.lt.s32.totalorder %v298, 3
      %vm320 = vcmp.lt.s32.totalorder %v298, 4
      %v321 = vsel %vm317, %v301, %v304
      %v322 = vsel %vm320, %v310, 2102212464
      %v323 = vsel %vm319, %v307, %v322
      %v324 = vsel %vm318, %v321, %v323
      %v325 = vsel %vm317, %v304, %v307
      %v326 = vsel %vm320, %v313, 920167782
      %v327 = vsel %vm319, %v310, %v326
      %v328 = vsel %vm318, %v325, %v327
      %v329 = vsel %vm317, %v307, %v310
      %v330 = vsel %vm320, %v316, 1326507024
      %v331 = vsel %vm319, %v313, %v330
      %v332 = vsel %vm318, %v329, %v331
      %v333 = vshll.u32 %v293, 8
      %v334 = vmul.u32.u64.compose %v333, %v332
      %v335 = vextract.low.u32 %v334
      %v336 = vextract.high.u32 %v334
      %v337 = vmul.u32.u64.compose %v333, %v328
      %v338 = vextract.low.u32 %v337
      %v339 = vextract.high.u32 %v337
      %v340 = vmul.u32 %v333, %v324
      %v341 = vadd.s32 %v336, %v338
      %vm342 = vc.u32 %v336, %v338
      %v343 = vadd.s32 %v339, 1
      %v344 = vsel %vm342, %v343, %v339
      %v345 = vadd.s32 %v340, %v344
      %v346 = vadd.s32 %v345, 536870912
      %v347 = vshrl.u32 %v346, 30
      %v348 = vshll.u32 %v347, 30
      %v349 = vsub.s32 %v345, %v348
      %vm350 = vcmp.lt.s32.totalorder %v349, 0
      %v351 = vsub.s32 0, %v349
      %v352 = vsel %vm350, %v351, %v349
      %v353 = vclz %v352
      %v354 = vsub.s32 %v353, 2
      %vm355 = vcmp.gt.s32.totalorder 0, %v354
      %v356 = vsel %vm355, 0, %v354
      %v357 = vsub.s32 32, %v356
      %v358 = vshll.u32 %v349, %v356
      %v359 = vshrl.u32 %v341, %v357
      %v360 = vor.u32 %v358, %v359
      %v361 = vsub.s32 4294967266, %v356
      %v362 = vadd.s32 %v361, 127
      %v363 = vshll.u32 %v362, 23
      %v364 = vor.u32 4788187, %v363
      %v365 = vand.u32 2147483647, %v364
      %v367 = vcvt.s32.f32 %v360
      %v368 = vmul.f32 %v367, %v365
      %v369 = vxor.u32 %v368, 2147483648
      %v370 = vsel %vm287, %v369, %v368
      %v371 = vsub.s32 4, %v347
      %v372 = vsel %vm287, %v371, %v347
      %v373 = vsel %vm286, %v277, %v370
      %v374 = vsel %vm286, 0, %v372
      %v375 = vcosq.f32.pop %v373
      %v376 = vsinq.f32.pop %v373
      %vm377 = vweird.f32 %v277
      %v378 = vand.u32 %v374, 3
      %vm379 = vcmp.lt.s32.totalorder %v378, 2
      %vm380 = vcmp.eq.s32.totalorder %v378, 0
      %v381 = vxor.u32 %v376, 2147483648
      %v382 = vsel %vm380, %v375, %v381
      %vm383 = vcmp.eq.s32.totalorder %v378, 2
      %v384 = vxor.u32 %v375, 2147483648
      %v385 = vsel %vm383, %v384, %v376
      %v386 = vsel %vm379, %v382, %v385
      %v387 = vsel %vm377, nan, %v386
      %v388 = vand.u32 2147483647, %v278
      %vm389 = vcmp.le.f32.partialorder %v388, 0.7853982
      %vm390 = vcmp.lt.s32.totalorder %v278, 0
      %v391 = vand.u32 %v278, 2139095040
      %v392 = vshrl.u32 %v391, 23
      %v393 = vsub.s32 %v392, 127
      %v394 = vand.u32 2147483647, %v278
      %v395 = vand.u32 %v394, 8388607
      %v396 = vor.u32 %v395, 8388608
      %v397 = vsub.s32 0, %v396
      %v398 = vadd.s32 %v393, 1
      %vm399 = vcmp.gt.s32.totalorder %v398, 0
      %v400 = vsel %vm399, %v398, 0
      %v401 = vshrl.u32 %v400, 5
      %v402 = vand.u32 %v400, 31
      %v403 = vsub.s32 32, %v402
      %v404 = vshrl.u32 683565275, %v403
      %v405 = vshll.u32 683565275, %v402
      %v406 = vshrl.u32 2475754826, %v403
      %v407 = vor.u32 %v405, %v406
      %v408 = vshll.u32 2475754826, %v402
      %v409 = vshrl.u32 2131351028, %v403
      %v410 = vor.u32 %v408, %v409
      %v411 = vshll.u32 2131351028, %v402
      %v412 = vshrl.u32 2102212464, %v403
      %v413 = vor.u32 %v411, %v412
      %v414 = vshll.u32 2102212464, %v402
      %v415 = vshrl.u32 920167782, %v403
      %v416 = vor.u32 %v414, %v415
      %v417 = vshll.u32 920167782, %v402
      %v418 = vshrl.u32 1326507024, %v403
      %v419 = vor.u32 %v417, %v418
      %vm420 = vcmp.lt.s32.totalorder %v401, 1
      %vm421 = vcmp.lt.s32.totalorder %v401, 2
      %vm422 = vcmp.lt.s32.totalorder %v401, 3
      %vm423 = vcmp.lt.s32.totalorder %v401, 4
      %v424 = vsel %vm420, %v404, %v407
      %v425 = vsel %vm423, %v413, 2102212464
      %v426 = vsel %vm422, %v410, %v425
      %v427 = vsel %vm421, %v424, %v426
      %v428 = vsel %vm420, %v407, %v410
      %v429 = vsel %vm423, %v416, 920167782
      %v430 = vsel %vm422, %v413, %v429
      %v431 = vsel %vm421, %v428, %v430
      %v432 = vsel %vm420, %v410, %v413
      %v433 = vsel %vm423, %v419, 1326507024
      %v434 = vsel %vm422, %v416, %v433
      %v435 = vsel %vm421, %v432, %v434
      %v436 = vshll.u32 %v396, 8
      %v437 = vmul.u32.u64.compose %v436, %v435
      %v438 = vextract.low.u32 %v437
      %v439 = vextract.high.u32 %v437
      %v440 = vmul.u32.u64.compose %v436, %v431
      %v441 = vextract.low.u32 %v440
      %v442 = vextract.high.u32 %v440
      %v443 = vmul.u32 %v436, %v427
      %v444 = vadd.s32 %v439, %v441
      %vm445 = vc.u32 %v439, %v441
      %v446 = vadd.s32 %v442, 1
      %v447 = vsel %vm445, %v446, %v442
      %v448 = vadd.s32 %v443, %v447
      %v449 = vadd.s32 %v448, 536870912
      %v450 = vshrl.u32 %v449, 30
      %v451 = vshll.u32 %v450, 30
      %v452 = vsub.s32 %v448, %v451
      %vm453 = vcmp.lt.s32.totalorder %v452, 0
      %v454 = vsub.s32 0, %v452
      %v455 = vsel %vm453, %v454, %v452
      %v456 = vclz %v455
      %v457 = vsub.s32 %v456, 2
      %vm458 = vcmp.gt.s32.totalorder 0, %v457
      %v459 = vsel %vm458, 0, %v457
      %v460 = vsub.s32 32, %v459
      %v461 = vshll.u32 %v452, %v459
      %v462 = vshrl.u32 %v444, %v460
      %v463 = vor.u32 %v461, %v462
      %v464 = vsub.s32 4294967266, %v459
      %v465 = vadd.s32 %v464, 127
      %v466 = vshll.u32 %v465, 23
      %v467 = vor.u32 4788187, %v466
      %v468 = vand.u32 2147483647, %v467
      %v470 = vcvt.s32.f32 %v463
      %v471 = vmul.f32 %v470, %v468
      %v472 = vxor.u32 %v471, 2147483648
      %v473 = vsel %vm390, %v472, %v471
      %v474 = vsub.s32 4, %v450
      %v475 = vsel %vm390, %v474, %v450
      %v476 = vsel %vm389, %v278, %v473
      %v477 = vsel %vm389, 0, %v475
      %v478 = vcosq.f32.pop %v476
      %v479 = vsinq.f32.pop %v476
      %vm480 = vweird.f32 %v278
      %v481 = vand.u32 %v477, 3
      %vm482 = vcmp.lt.s32.totalorder %v481, 2
      %vm483 = vcmp.eq.s32.totalorder %v481, 0
      %v484 = vxor.u32 %v479, 2147483648
      %v485 = vsel %vm483, %v478, %v484
      %vm486 = vcmp.eq.s32.totalorder %v481, 2
      %v487 = vxor.u32 %v478, 2147483648
      %v488 = vsel %vm486, %v487, %v479
      %v489 = vsel %vm482, %v485, %v488
      %v490 = vsel %vm480, nan, %v489
      %v491 = vand.u32 2147483647, %v277
      %vm492 = vcmp.le.f32.partialorder %v491, 0.7853982
      %vm493 = vcmp.lt.s32.totalorder %v277, 0
      %v494 = vand.u32 %v277, 2139095040
      %v495 = vshrl.u32 %v494, 23
      %v496 = vsub.s32 %v495, 127
      %v497 = vand.u32 2147483647, %v277
      %v498 = vand.u32 %v497, 8388607
      %v499 = vor.u32 %v498, 8388608
      %v500 = vsub.s32 0, %v499
      %v501 = vadd.s32 %v496, 1
      %vm502 = vcmp.gt.s32.totalorder %v501, 0
      %v503 = vsel %vm502, %v501, 0
      %v504 = vshrl.u32 %v503, 5
      %v505 = vand.u32 %v503, 31
      %v506 = vsub.s32 32, %v505
      %v507 = vshrl.u32 683565275, %v506
      %v508 = vshll.u32 683565275, %v505
      %v509 = vshrl.u32 2475754826, %v506
      %v510 = vor.u32 %v508, %v509
      %v511 = vshll.u32 2475754826, %v505
      %v512 = vshrl.u32 2131351028, %v506
      %v513 = vor.u32 %v511, %v512
      %v514 = vshll.u32 2131351028, %v505
      %v515 = vshrl.u32 2102212464, %v506
      %v516 = vor.u32 %v514, %v515
      %v517 = vshll.u32 2102212464, %v505
      %v518 = vshrl.u32 920167782, %v506
      %v519 = vor.u32 %v517, %v518
      %v520 = vshll.u32 920167782, %v505
      %v521 = vshrl.u32 1326507024, %v506
      %v522 = vor.u32 %v520, %v521
      %vm523 = vcmp.lt.s32.totalorder %v504, 1
      %vm524 = vcmp.lt.s32.totalorder %v504, 2
      %vm525 = vcmp.lt.s32.totalorder %v504, 3
      %vm526 = vcmp.lt.s32.totalorder %v504, 4
      %v527 = vsel %vm523, %v507, %v510
      %v528 = vsel %vm526, %v516, 2102212464
      %v529 = vsel %vm525, %v513, %v528
      %v530 = vsel %vm524, %v527, %v529
      %v531 = vsel %vm523, %v510, %v513
      %v532 = vsel %vm526, %v519, 920167782
      %v533 = vsel %vm525, %v516, %v532
      %v534 = vsel %vm524, %v531, %v533
      %v535 = vsel %vm523, %v513, %v516
      %v536 = vsel %vm526, %v522, 1326507024
      %v537 = vsel %vm525, %v519, %v536
      %v538 = vsel %vm524, %v535, %v537
      %v539 = vshll.u32 %v499, 8
      %v540 = vmul.u32.u64.compose %v539, %v538
      %v541 = vextract.low.u32 %v540
      %v542 = vextract.high.u32 %v540
      %v543 = vmul.u32.u64.compose %v539, %v534
      %v544 = vextract.low.u32 %v543
      %v545 = vextract.high.u32 %v543
      %v546 = vmul.u32 %v539, %v530
      %v547 = vadd.s32 %v542, %v544
      %vm548 = vc.u32 %v542, %v544
      %v549 = vadd.s32 %v545, 1
      %v550 = vsel %vm548, %v549, %v545
      %v551 = vadd.s32 %v546, %v550
      %v552 = vadd.s32 %v551, 536870912
      %v553 = vshrl.u32 %v552, 30
      %v554 = vshll.u32 %v553, 30
      %v555 = vsub.s32 %v551, %v554
      %vm556 = vcmp.lt.s32.totalorder %v555, 0
      %v557 = vsub.s32 0, %v555
      %v558 = vsel %vm556, %v557, %v555
      %v559 = vclz %v558
      %v560 = vsub.s32 %v559, 2
      %vm561 = vcmp.gt.s32.totalorder 0, %v560
      %v562 = vsel %vm561, 0, %v560
      %v563 = vsub.s32 32, %v562
      %v564 = vshll.u32 %v555, %v562
      %v565 = vshrl.u32 %v547, %v563
      %v566 = vor.u32 %v564, %v565
      %v567 = vsub.s32 4294967266, %v562
      %v568 = vadd.s32 %v567, 127
      %v569 = vshll.u32 %v568, 23
      %v570 = vor.u32 4788187, %v569
      %v571 = vand.u32 2147483647, %v570
      %v573 = vcvt.s32.f32 %v566
      %v574 = vmul.f32 %v573, %v571
      %v575 = vxor.u32 %v574, 2147483648
      %v576 = vsel %vm493, %v575, %v574
      %v577 = vsub.s32 4, %v553
      %v578 = vsel %vm493, %v577, %v553
      %v579 = vsel %vm492, %v277, %v576
      %v580 = vsel %vm492, 0, %v578
      %v581 = vcosq.f32.pop %v579
      %v582 = vsinq.f32.pop %v579
      %vm583 = vweird.f32 %v277
      %v584 = vadd.s32 %v580, 3
      %v585 = vand.u32 %v584, 3
      %vm586 = vcmp.lt.s32.totalorder %v585, 2
      %vm587 = vcmp.eq.s32.totalorder %v585, 0
      %v588 = vxor.u32 %v582, 2147483648
      %v589 = vsel %vm587, %v581, %v588
      %vm590 = vcmp.eq.s32.totalorder %v585, 2
      %v591 = vxor.u32 %v581, 2147483648
      %v592 = vsel %vm590, %v591, %v582
      %v593 = vsel %vm586, %v589, %v592
      %v594 = vsel %vm583, nan, %v593
      %v595 = vand.u32 2147483647, %v278
      %vm596 = vcmp.le.f32.partialorder %v595, 0.7853982
      %vm597 = vcmp.lt.s32.totalorder %v278, 0
      %v598 = vand.u32 %v278, 2139095040
      %v599 = vshrl.u32 %v598, 23
      %v600 = vsub.s32 %v599, 127
      %v601 = vand.u32 2147483647, %v278
      %v602 = vand.u32 %v601, 8388607
      %v603 = vor.u32 %v602, 8388608
      %v604 = vsub.s32 0, %v603
      %v605 = vadd.s32 %v600, 1
      %vm606 = vcmp.gt.s32.totalorder %v605, 0
      %v607 = vsel %vm606, %v605, 0
      %v608 = vshrl.u32 %v607, 5
      %v609 = vand.u32 %v607, 31
      %v610 = vsub.s32 32, %v609
      %v611 = vshrl.u32 683565275, %v610
      %v612 = vshll.u32 683565275, %v609
      %v613 = vshrl.u32 2475754826, %v610
      %v614 = vor.u32 %v612, %v613
      %v615 = vshll.u32 2475754826, %v609
      %v616 = vshrl.u32 2131351028, %v610
      %v617 = vor.u32 %v615, %v616
      %v618 = vshll.u32 2131351028, %v609
      %v619 = vshrl.u32 2102212464, %v610
      %v620 = vor.u32 %v618, %v619
      %v621 = vshll.u32 2102212464, %v609
      %v622 = vshrl.u32 920167782, %v610
      %v623 = vor.u32 %v621, %v622
      %v624 = vshll.u32 920167782, %v609
      %v625 = vshrl.u32 1326507024, %v610
      %v626 = vor.u32 %v624, %v625
      %vm627 = vcmp.lt.s32.totalorder %v608, 1
      %vm628 = vcmp.lt.s32.totalorder %v608, 2
      %vm629 = vcmp.lt.s32.totalorder %v608, 3
      %vm630 = vcmp.lt.s32.totalorder %v608, 4
      %v631 = vsel %vm627, %v611, %v614
      %v632 = vsel %vm630, %v620, 2102212464
      %v633 = vsel %vm629, %v617, %v632
      %v634 = vsel %vm628, %v631, %v633
      %v635 = vsel %vm627, %v614, %v617
      %v636 = vsel %vm630, %v623, 920167782
      %v637 = vsel %vm629, %v620, %v636
      %v638 = vsel %vm628, %v635, %v637
      %v639 = vsel %vm627, %v617, %v620
      %v640 = vsel %vm630, %v626, 1326507024
      %v641 = vsel %vm629, %v623, %v640
      %v642 = vsel %vm628, %v639, %v641
      %v643 = vshll.u32 %v603, 8
      %v644 = vmul.u32.u64.compose %v643, %v642
      %v645 = vextract.low.u32 %v644
      %v646 = vextract.high.u32 %v644
      %v647 = vmul.u32.u64.compose %v643, %v638
      %v648 = vextract.low.u32 %v647
      %v649 = vextract.high.u32 %v647
      %v650 = vmul.u32 %v643, %v634
      %v651 = vadd.s32 %v646, %v648
      %vm652 = vc.u32 %v646, %v648
      %v653 = vadd.s32 %v649, 1
      %v654 = vsel %vm652, %v653, %v649
      %v655 = vadd.s32 %v650, %v654
      %v656 = vadd.s32 %v655, 536870912
      %v657 = vshrl.u32 %v656, 30
      %v658 = vshll.u32 %v657, 30
      %v659 = vsub.s32 %v655, %v658
      %vm660 = vcmp.lt.s32.totalorder %v659, 0
      %v661 = vsub.s32 0, %v659
      %v662 = vsel %vm660, %v661, %v659
      %v663 = vclz %v662
      %v664 = vsub.s32 %v663, 2
      %vm665 = vcmp.gt.s32.totalorder 0, %v664
      %v666 = vsel %vm665, 0, %v664
      %v667 = vsub.s32 32, %v666
      %v668 = vshll.u32 %v659, %v666
      %v669 = vshrl.u32 %v651, %v667
      %v670 = vor.u32 %v668, %v669
      %v671 = vsub.s32 4294967266, %v666
      %v672 = vadd.s32 %v671, 127
      %v673 = vshll.u32 %v672, 23
      %v674 = vor.u32 4788187, %v673
      %v675 = vand.u32 2147483647, %v674
      %v677 = vcvt.s32.f32 %v670
      %v678 = vmul.f32 %v677, %v675
      %v679 = vxor.u32 %v678, 2147483648
      %v680 = vsel %vm597, %v679, %v678
      %v681 = vsub.s32 4, %v657
      %v682 = vsel %vm597, %v681, %v657
      %v683 = vsel %vm596, %v278, %v680
      %v684 = vsel %vm596, 0, %v682
      %v685 = vcosq.f32.pop %v683
      %v686 = vsinq.f32.pop %v683
      %vm687 = vweird.f32 %v278
      %v688 = vadd.s32 %v684, 3
      %v689 = vand.u32 %v688, 3
      %vm690 = vcmp.lt.s32.totalorder %v689, 2
      %vm691 = vcmp.eq.s32.totalorder %v689, 0
      %v692 = vxor.u32 %v686, 2147483648
      %v693 = vsel %vm691, %v685, %v692
      %vm694 = vcmp.eq.s32.totalorder %v689, 2
      %v695 = vxor.u32 %v685, 2147483648
      %v696 = vsel %vm694, %v695, %v686
      %v697 = vsel %vm690, %v693, %v696
      %v698 = vsel %vm687, nan, %v697
      %v699 = vand.u32 2147483647, %v279
      %vm700 = vcmp.le.f32.partialorder %v699, 0.7853982
      %vm701 = vcmp.lt.s32.totalorder %v279, 0
      %v702 = vand.u32 %v279, 2139095040
      %v703 = vshrl.u32 %v702, 23
      %v704 = vsub.s32 %v703, 127
      %v705 = vand.u32 2147483647, %v279
      %v706 = vand.u32 %v705, 8388607
      %v707 = vor.u32 %v706, 8388608
      %v708 = vsub.s32 0, %v707
      %v709 = vadd.s32 %v704, 1
      %vm710 = vcmp.gt.s32.totalorder %v709, 0
      %v711 = vsel %vm710, %v709, 0
      %v712 = vshrl.u32 %v711, 5
      %v713 = vand.u32 %v711, 31
      %v714 = vsub.s32 32, %v713
      %v715 = vshrl.u32 683565275, %v714
      %v716 = vshll.u32 683565275, %v713
      %v717 = vshrl.u32 2475754826, %v714
      %v718 = vor.u32 %v716, %v717
      %v719 = vshll.u32 2475754826, %v713
      %v720 = vshrl.u32 2131351028, %v714
      %v721 = vor.u32 %v719, %v720
      %v722 = vshll.u32 2131351028, %v713
      %v723 = vshrl.u32 2102212464, %v714
      %v724 = vor.u32 %v722, %v723
      %v725 = vshll.u32 2102212464, %v713
      %v726 = vshrl.u32 920167782, %v714
      %v727 = vor.u32 %v725, %v726
      %v728 = vshll.u32 920167782, %v713
      %v729 = vshrl.u32 1326507024, %v714
      %v730 = vor.u32 %v728, %v729
      %vm731 = vcmp.lt.s32.totalorder %v712, 1
      %vm732 = vcmp.lt.s32.totalorder %v712, 2
      %vm733 = vcmp.lt.s32.totalorder %v712, 3
      %vm734 = vcmp.lt.s32.totalorder %v712, 4
      %v735 = vsel %vm731, %v715, %v718
      %v736 = vsel %vm734, %v724, 2102212464
      %v737 = vsel %vm733, %v721, %v736
      %v738 = vsel %vm732, %v735, %v737
      %v739 = vsel %vm731, %v718, %v721
      %v740 = vsel %vm734, %v727, 920167782
      %v741 = vsel %vm733, %v724, %v740
      %v742 = vsel %vm732, %v739, %v741
      %v743 = vsel %vm731, %v721, %v724
      %v744 = vsel %vm734, %v730, 1326507024
      %v745 = vsel %vm733, %v727, %v744
      %v746 = vsel %vm732, %v743, %v745
      %v747 = vshll.u32 %v707, 8
      %v748 = vmul.u32.u64.compose %v747, %v746
      %v749 = vextract.low.u32 %v748
      %v750 = vextract.high.u32 %v748
      %v751 = vmul.u32.u64.compose %v747, %v742
      %v752 = vextract.low.u32 %v751
      %v753 = vextract.high.u32 %v751
      %v754 = vmul.u32 %v747, %v738
      %v755 = vadd.s32 %v750, %v752
      %vm756 = vc.u32 %v750, %v752
      %v757 = vadd.s32 %v753, 1
      %v758 = vsel %vm756, %v757, %v753
      %v759 = vadd.s32 %v754, %v758
      %v760 = vadd.s32 %v759, 536870912
      %v761 = vshrl.u32 %v760, 30
      %v762 = vshll.u32 %v761, 30
      %v763 = vsub.s32 %v759, %v762
      %vm764 = vcmp.lt.s32.totalorder %v763, 0
      %v765 = vsub.s32 0, %v763
      %v766 = vsel %vm764, %v765, %v763
      %v767 = vclz %v766
      %v768 = vsub.s32 %v767, 2
      %vm769 = vcmp.gt.s32.totalorder 0, %v768
      %v770 = vsel %vm769, 0, %v768
      %v771 = vsub.s32 32, %v770
      %v772 = vshll.u32 %v763, %v770
      %v773 = vshrl.u32 %v755, %v771
      %v774 = vor.u32 %v772, %v773
      %v775 = vsub.s32 4294967266, %v770
      %v776 = vadd.s32 %v775, 127
      %v777 = vshll.u32 %v776, 23
      %v778 = vor.u32 4788187, %v777
      %v779 = vand.u32 2147483647, %v778
      %v781 = vcvt.s32.f32 %v774
      %v782 = vmul.f32 %v781, %v779
      %v783 = vxor.u32 %v782, 2147483648
      %v784 = vsel %vm701, %v783, %v782
      %v785 = vsub.s32 4, %v761
      %v786 = vsel %vm701, %v785, %v761
      %v787 = vsel %vm700, %v279, %v784
      %v788 = vsel %vm700, 0, %v786
      %v789 = vcosq.f32.pop %v787
      %v790 = vsinq.f32.pop %v787
      %vm791 = vweird.f32 %v279
      %v792 = vand.u32 %v788, 3
      %vm793 = vcmp.lt.s32.totalorder %v792, 2
      %vm794 = vcmp.eq.s32.totalorder %v792, 0
      %v795 = vxor.u32 %v790, 2147483648
      %v796 = vsel %vm794, %v789, %v795
      %vm797 = vcmp.eq.s32.totalorder %v792, 2
      %v798 = vxor.u32 %v789, 2147483648
      %v799 = vsel %vm797, %v798, %v790
      %v800 = vsel %vm793, %v796, %v799
      %v801 = vsel %vm791, nan, %v800
      %v802 = vand.u32 2147483647, %v280
      %vm803 = vcmp.le.f32.partialorder %v802, 0.7853982
      %vm804 = vcmp.lt.s32.totalorder %v280, 0
      %v805 = vand.u32 %v280, 2139095040
      %v806 = vshrl.u32 %v805, 23
      %v807 = vsub.s32 %v806, 127
      %v808 = vand.u32 2147483647, %v280
      %v809 = vand.u32 %v808, 8388607
      %v810 = vor.u32 %v809, 8388608
      %v811 = vsub.s32 0, %v810
      %v812 = vadd.s32 %v807, 1
      %vm813 = vcmp.gt.s32.totalorder %v812, 0
      %v814 = vsel %vm813, %v812, 0
      %v815 = vshrl.u32 %v814, 5
      %v816 = vand.u32 %v814, 31
      %v817 = vsub.s32 32, %v816
      %v818 = vshrl.u32 683565275, %v817
      %v819 = vshll.u32 683565275, %v816
      %v820 = vshrl.u32 2475754826, %v817
      %v821 = vor.u32 %v819, %v820
      %v822 = vshll.u32 2475754826, %v816
      %v823 = vshrl.u32 2131351028, %v817
      %v824 = vor.u32 %v822, %v823
      %v825 = vshll.u32 2131351028, %v816
      %v826 = vshrl.u32 2102212464, %v817
      %v827 = vor.u32 %v825, %v826
      %v828 = vshll.u32 2102212464, %v816
      %v829 = vshrl.u32 920167782, %v817
      %v830 = vor.u32 %v828, %v829
      %v831 = vshll.u32 920167782, %v816
      %v832 = vshrl.u32 1326507024, %v817
      %v833 = vor.u32 %v831, %v832
      %vm834 = vcmp.lt.s32.totalorder %v815, 1
      %vm835 = vcmp.lt.s32.totalorder %v815, 2
      %vm836 = vcmp.lt.s32.totalorder %v815, 3
      %vm837 = vcmp.lt.s32.totalorder %v815, 4
      %v838 = vsel %vm834, %v818, %v821
      %v839 = vsel %vm837, %v827, 2102212464
      %v840 = vsel %vm836, %v824, %v839
      %v841 = vsel %vm835, %v838, %v840
      %v842 = vsel %vm834, %v821, %v824
      %v843 = vsel %vm837, %v830, 920167782
      %v844 = vsel %vm836, %v827, %v843
      %v845 = vsel %vm835, %v842, %v844
      %v846 = vsel %vm834, %v824, %v827
      %v847 = vsel %vm837, %v833, 1326507024
      %v848 = vsel %vm836, %v830, %v847
      %v849 = vsel %vm835, %v846, %v848
      %v850 = vshll.u32 %v810, 8
      %v851 = vmul.u32.u64.compose %v850, %v849
      %v852 = vextract.low.u32 %v851
      %v853 = vextract.high.u32 %v851
      %v854 = vmul.u32.u64.compose %v850, %v845
      %v855 = vextract.low.u32 %v854
      %v856 = vextract.high.u32 %v854
      %v857 = vmul.u32 %v850, %v841
      %v858 = vadd.s32 %v853, %v855
      %vm859 = vc.u32 %v853, %v855
      %v860 = vadd.s32 %v856, 1
      %v861 = vsel %vm859, %v860, %v856
      %v862 = vadd.s32 %v857, %v861
      %v863 = vadd.s32 %v862, 536870912
      %v864 = vshrl.u32 %v863, 30
      %v865 = vshll.u32 %v864, 30
      %v866 = vsub.s32 %v862, %v865
      %vm867 = vcmp.lt.s32.totalorder %v866, 0
      %v868 = vsub.s32 0, %v866
      %v869 = vsel %vm867, %v868, %v866
      %v870 = vclz %v869
      %v871 = vsub.s32 %v870, 2
      %vm872 = vcmp.gt.s32.totalorder 0, %v871
      %v873 = vsel %vm872, 0, %v871
      %v874 = vsub.s32 32, %v873
      %v875 = vshll.u32 %v866, %v873
      %v876 = vshrl.u32 %v858, %v874
      %v877 = vor.u32 %v875, %v876
      %v878 = vsub.s32 4294967266, %v873
      %v879 = vadd.s32 %v878, 127
      %v880 = vshll.u32 %v879, 23
      %v881 = vor.u32 4788187, %v880
      %v882 = vand.u32 2147483647, %v881
      %v884 = vcvt.s32.f32 %v877
      %v885 = vmul.f32 %v884, %v882
      %v886 = vxor.u32 %v885, 2147483648
      %v887 = vsel %vm804, %v886, %v885
      %v888 = vsub.s32 4, %v864
      %v889 = vsel %vm804, %v888, %v864
      %v890 = vsel %vm803, %v280, %v887
      %v891 = vsel %vm803, 0, %v889
      %v892 = vcosq.f32.pop %v890
      %v893 = vsinq.f32.pop %v890
      %vm894 = vweird.f32 %v280
      %v895 = vand.u32 %v891, 3
      %vm896 = vcmp.lt.s32.totalorder %v895, 2
      %vm897 = vcmp.eq.s32.totalorder %v895, 0
      %v898 = vxor.u32 %v893, 2147483648
      %v899 = vsel %vm897, %v892, %v898
      %vm900 = vcmp.eq.s32.totalorder %v895, 2
      %v901 = vxor.u32 %v892, 2147483648
      %v902 = vsel %vm900, %v901, %v893
      %v903 = vsel %vm896, %v899, %v902
      %v904 = vsel %vm894, nan, %v903
      %v905 = vand.u32 2147483647, %v279
      %vm906 = vcmp.le.f32.partialorder %v905, 0.7853982
      %vm907 = vcmp.lt.s32.totalorder %v279, 0
      %v908 = vand.u32 %v279, 2139095040
      %v909 = vshrl.u32 %v908, 23
      %v910 = vsub.s32 %v909, 127
      %v911 = vand.u32 2147483647, %v279
      %v912 = vand.u32 %v911, 8388607
      %v913 = vor.u32 %v912, 8388608
      %v914 = vsub.s32 0, %v913
      %v915 = vadd.s32 %v910, 1
      %vm916 = vcmp.gt.s32.totalorder %v915, 0
      %v917 = vsel %vm916, %v915, 0
      %v918 = vshrl.u32 %v917, 5
      %v919 = vand.u32 %v917, 31
      %v920 = vsub.s32 32, %v919
      %v921 = vshrl.u32 683565275, %v920
      %v922 = vshll.u32 683565275, %v919
      %v923 = vshrl.u32 2475754826, %v920
      %v924 = vor.u32 %v922, %v923
      %v925 = vshll.u32 2475754826, %v919
      %v926 = vshrl.u32 2131351028, %v920
      %v927 = vor.u32 %v925, %v926
      %v928 = vshll.u32 2131351028, %v919
      %v929 = vshrl.u32 2102212464, %v920
      %v930 = vor.u32 %v928, %v929
      %v931 = vshll.u32 2102212464, %v919
      %v932 = vshrl.u32 920167782, %v920
      %v933 = vor.u32 %v931, %v932
      %v934 = vshll.u32 920167782, %v919
      %v935 = vshrl.u32 1326507024, %v920
      %v936 = vor.u32 %v934, %v935
      %vm937 = vcmp.lt.s32.totalorder %v918, 1
      %vm938 = vcmp.lt.s32.totalorder %v918, 2
      %vm939 = vcmp.lt.s32.totalorder %v918, 3
      %vm940 = vcmp.lt.s32.totalorder %v918, 4
      %v941 = vsel %vm937, %v921, %v924
      %v942 = vsel %vm940, %v930, 2102212464
      %v943 = vsel %vm939, %v927, %v942
      %v944 = vsel %vm938, %v941, %v943
      %v945 = vsel %vm937, %v924, %v927
      %v946 = vsel %vm940, %v933, 920167782
      %v947 = vsel %vm939, %v930, %v946
      %v948 = vsel %vm938, %v945, %v947
      %v949 = vsel %vm937, %v927, %v930
      %v950 = vsel %vm940, %v936, 1326507024
      %v951 = vsel %vm939, %v933, %v950
      %v952 = vsel %vm938, %v949, %v951
      %v953 = vshll.u32 %v913, 8
      %v954 = vmul.u32.u64.compose %v953, %v952
      %v955 = vextract.low.u32 %v954
      %v956 = vextract.high.u32 %v954
      %v957 = vmul.u32.u64.compose %v953, %v948
      %v958 = vextract.low.u32 %v957
      %v959 = vextract.high.u32 %v957
      %v960 = vmul.u32 %v953, %v944
      %v961 = vadd.s32 %v956, %v958
      %vm962 = vc.u32 %v956, %v958
      %v963 = vadd.s32 %v959, 1
      %v964 = vsel %vm962, %v963, %v959
      %v965 = vadd.s32 %v960, %v964
      %v966 = vadd.s32 %v965, 536870912
      %v967 = vshrl.u32 %v966, 30
      %v968 = vshll.u32 %v967, 30
      %v969 = vsub.s32 %v965, %v968
      %vm970 = vcmp.lt.s32.totalorder %v969, 0
      %v971 = vsub.s32 0, %v969
      %v972 = vsel %vm970, %v971, %v969
      %v973 = vclz %v972
      %v974 = vsub.s32 %v973, 2
      %vm975 = vcmp.gt.s32.totalorder 0, %v974
      %v976 = vsel %vm975, 0, %v974
      %v977 = vsub.s32 32, %v976
      %v978 = vshll.u32 %v969, %v976
      %v979 = vshrl.u32 %v961, %v977
      %v980 = vor.u32 %v978, %v979
      %v981 = vsub.s32 4294967266, %v976
      %v982 = vadd.s32 %v981, 127
      %v983 = vshll.u32 %v982, 23
      %v984 = vor.u32 4788187, %v983
      %v985 = vand.u32 2147483647, %v984
      %v987 = vcvt.s32.f32 %v980
      %v988 = vmul.f32 %v987, %v985
      %v989 = vxor.u32 %v988, 2147483648
      %v990 = vsel %vm907, %v989, %v988
      %v991 = vsub.s32 4, %v967
      %v992 = vsel %vm907, %v991, %v967
      %v993 = vsel %vm906, %v279, %v990
      %v994 = vsel %vm906, 0, %v992
      %v995 = vcosq.f32.pop %v993
      %v996 = vsinq.f32.pop %v993
      %vm997 = vweird.f32 %v279
      %v998 = vadd.s32 %v994, 3
      %v999 = vand.u32 %v998, 3
      %vm1000 = vcmp.lt.s32.totalorder %v999, 2
      %vm1001 = vcmp.eq.s32.totalorder %v999, 0
      %v1002 = vxor.u32 %v996, 2147483648
      %v1003 = vsel %vm1001, %v995, %v1002
      %vm1004 = vcmp.eq.s32.totalorder %v999, 2
      %v1005 = vxor.u32 %v995, 2147483648
      %v1006 = vsel %vm1004, %v1005, %v996
      %v1007 = vsel %vm1000, %v1003, %v1006
      %v1008 = vsel %vm997, nan, %v1007
      %v1009 = vand.u32 2147483647, %v280
      %vm1010 = vcmp.le.f32.partialorder %v1009, 0.7853982
      %vm1011 = vcmp.lt.s32.totalorder %v280, 0
      %v1012 = vand.u32 %v280, 2139095040
      %v1013 = vshrl.u32 %v1012, 23
      %v1014 = vsub.s32 %v1013, 127
      %v1015 = vand.u32 2147483647, %v280
      %v1016 = vand.u32 %v1015, 8388607
      %v1017 = vor.u32 %v1016, 8388608
      %v1018 = vsub.s32 0, %v1017
      %v1019 = vadd.s32 %v1014, 1
      %vm1020 = vcmp.gt.s32.totalorder %v1019, 0
      %v1021 = vsel %vm1020, %v1019, 0
      %v1022 = vshrl.u32 %v1021, 5
      %v1023 = vand.u32 %v1021, 31
      %v1024 = vsub.s32 32, %v1023
      %v1025 = vshrl.u32 683565275, %v1024
      %v1026 = vshll.u32 683565275, %v1023
      %v1027 = vshrl.u32 2475754826, %v1024
      %v1028 = vor.u32 %v1026, %v1027
      %v1029 = vshll.u32 2475754826, %v1023
      %v1030 = vshrl.u32 2131351028, %v1024
      %v1031 = vor.u32 %v1029, %v1030
      %v1032 = vshll.u32 2131351028, %v1023
      %v1033 = vshrl.u32 2102212464, %v1024
      %v1034 = vor.u32 %v1032, %v1033
      %v1035 = vshll.u32 2102212464, %v1023
      %v1036 = vshrl.u32 920167782, %v1024
      %v1037 = vor.u32 %v1035, %v1036
      %v1038 = vshll.u32 920167782, %v1023
      %v1039 = vshrl.u32 1326507024, %v1024
      %v1040 = vor.u32 %v1038, %v1039
      %vm1041 = vcmp.lt.s32.totalorder %v1022, 1
      %vm1042 = vcmp.lt.s32.totalorder %v1022, 2
      %vm1043 = vcmp.lt.s32.totalorder %v1022, 3
      %vm1044 = vcmp.lt.s32.totalorder %v1022, 4
      %v1045 = vsel %vm1041, %v1025, %v1028
      %v1046 = vsel %vm1044, %v1034, 2102212464
      %v1047 = vsel %vm1043, %v1031, %v1046
      %v1048 = vsel %vm1042, %v1045, %v1047
      %v1049 = vsel %vm1041, %v1028, %v1031
      %v1050 = vsel %vm1044, %v1037, 920167782
      %v1051 = vsel %vm1043, %v1034, %v1050
      %v1052 = vsel %vm1042, %v1049, %v1051
      %v1053 = vsel %vm1041, %v1031, %v1034
      %v1054 = vsel %vm1044, %v1040, 1326507024
      %v1055 = vsel %vm1043, %v1037, %v1054
      %v1056 = vsel %vm1042, %v1053, %v1055
      %v1057 = vshll.u32 %v1017, 8
      %v1058 = vmul.u32.u64.compose %v1057, %v1056
      %v1059 = vextract.low.u32 %v1058
      %v1060 = vextract.high.u32 %v1058
      %v1061 = vmul.u32.u64.compose %v1057, %v1052
      %v1062 = vextract.low.u32 %v1061
      %v1063 = vextract.high.u32 %v1061
      %v1064 = vmul.u32 %v1057, %v1048
      %v1065 = vadd.s32 %v1060, %v1062
      %vm1066 = vc.u32 %v1060, %v1062
      %v1067 = vadd.s32 %v1063, 1
      %v1068 = vsel %vm1066, %v1067, %v1063
      %v1069 = vadd.s32 %v1064, %v1068
      %v1070 = vadd.s32 %v1069, 536870912
      %v1071 = vshrl.u32 %v1070, 30
      %v1072 = vshll.u32 %v1071, 30
      %v1073 = vsub.s32 %v1069, %v1072
      %vm1074 = vcmp.lt.s32.totalorder %v1073, 0
      %v1075 = vsub.s32 0, %v1073
      %v1076 = vsel %vm1074, %v1075, %v1073
      %v1077 = vclz %v1076
      %v1078 = vsub.s32 %v1077, 2
      %vm1079 = vcmp.gt.s32.totalorder 0, %v1078
      %v1080 = vsel %vm1079, 0, %v1078
      %v1081 = vsub.s32 32, %v1080
      %v1082 = vshll.u32 %v1073, %v1080
      %v1083 = vshrl.u32 %v1065, %v1081
      %v1084 = vor.u32 %v1082, %v1083
      %v1085 = vsub.s32 4294967266, %v1080
      %v1086 = vadd.s32 %v1085, 127
      %v1087 = vshll.u32 %v1086, 23
      %v1088 = vor.u32 4788187, %v1087
      %v1089 = vand.u32 2147483647, %v1088
      %v1091 = vcvt.s32.f32 %v1084
      %v1092 = vmul.f32 %v1091, %v1089
      %v1093 = vxor.u32 %v1092, 2147483648
      %v1094 = vsel %vm1011, %v1093, %v1092
      %v1095 = vsub.s32 4, %v1071
      %v1096 = vsel %vm1011, %v1095, %v1071
      %v1097 = vsel %vm1010, %v280, %v1094
      %v1098 = vsel %vm1010, 0, %v1096
      %v1099 = vcosq.f32.pop %v1097
      %v1100 = vsinq.f32.pop %v1097
      %vm1101 = vweird.f32 %v280
      %v1102 = vadd.s32 %v1098, 3
      %v1103 = vand.u32 %v1102, 3
      %vm1104 = vcmp.lt.s32.totalorder %v1103, 2
      %vm1105 = vcmp.eq.s32.totalorder %v1103, 0
      %v1106 = vxor.u32 %v1100, 2147483648
      %v1107 = vsel %vm1105, %v1099, %v1106
      %vm1108 = vcmp.eq.s32.totalorder %v1103, 2
      %v1109 = vxor.u32 %v1099, 2147483648
      %v1110 = vsel %vm1108, %v1109, %v1100
      %v1111 = vsel %vm1104, %v1107, %v1110
      %v1112 = vsel %vm1101, nan, %v1111
      %v1113 = vand.u32 2147483647, %v281
      %vm1114 = vcmp.le.f32.partialorder %v1113, 0.7853982
      %vm1115 = vcmp.lt.s32.totalorder %v281, 0
      %v1116 = vand.u32 %v281, 2139095040
      %v1117 = vshrl.u32 %v1116, 23
      %v1118 = vsub.s32 %v1117, 127
      %v1119 = vand.u32 2147483647, %v281
      %v1120 = vand.u32 %v1119, 8388607
      %v1121 = vor.u32 %v1120, 8388608
      %v1122 = vsub.s32 0, %v1121
      %v1123 = vadd.s32 %v1118, 1
      %vm1124 = vcmp.gt.s32.totalorder %v1123, 0
      %v1125 = vsel %vm1124, %v1123, 0
      %v1126 = vshrl.u32 %v1125, 5
      %v1127 = vand.u32 %v1125, 31
      %v1128 = vsub.s32 32, %v1127
      %v1129 = vshrl.u32 683565275, %v1128
      %v1130 = vshll.u32 683565275, %v1127
      %v1131 = vshrl.u32 2475754826, %v1128
      %v1132 = vor.u32 %v1130, %v1131
      %v1133 = vshll.u32 2475754826, %v1127
      %v1134 = vshrl.u32 2131351028, %v1128
      %v1135 = vor.u32 %v1133, %v1134
      %v1136 = vshll.u32 2131351028, %v1127
      %v1137 = vshrl.u32 2102212464, %v1128
      %v1138 = vor.u32 %v1136, %v1137
      %v1139 = vshll.u32 2102212464, %v1127
      %v1140 = vshrl.u32 920167782, %v1128
      %v1141 = vor.u32 %v1139, %v1140
      %v1142 = vshll.u32 920167782, %v1127
      %v1143 = vshrl.u32 1326507024, %v1128
      %v1144 = vor.u32 %v1142, %v1143
      %vm1145 = vcmp.lt.s32.totalorder %v1126, 1
      %vm1146 = vcmp.lt.s32.totalorder %v1126, 2
      %vm1147 = vcmp.lt.s32.totalorder %v1126, 3
      %vm1148 = vcmp.lt.s32.totalorder %v1126, 4
      %v1149 = vsel %vm1145, %v1129, %v1132
      %v1150 = vsel %vm1148, %v1138, 2102212464
      %v1151 = vsel %vm1147, %v1135, %v1150
      %v1152 = vsel %vm1146, %v1149, %v1151
      %v1153 = vsel %vm1145, %v1132, %v1135
      %v1154 = vsel %vm1148, %v1141, 920167782
      %v1155 = vsel %vm1147, %v1138, %v1154
      %v1156 = vsel %vm1146, %v1153, %v1155
      %v1157 = vsel %vm1145, %v1135, %v1138
      %v1158 = vsel %vm1148, %v1144, 1326507024
      %v1159 = vsel %vm1147, %v1141, %v1158
      %v1160 = vsel %vm1146, %v1157, %v1159
      %v1161 = vshll.u32 %v1121, 8
      %v1162 = vmul.u32.u64.compose %v1161, %v1160
      %v1163 = vextract.low.u32 %v1162
      %v1164 = vextract.high.u32 %v1162
      %v1165 = vmul.u32.u64.compose %v1161, %v1156
      %v1166 = vextract.low.u32 %v1165
      %v1167 = vextract.high.u32 %v1165
      %v1168 = vmul.u32 %v1161, %v1152
      %v1169 = vadd.s32 %v1164, %v1166
      %vm1170 = vc.u32 %v1164, %v1166
      %v1171 = vadd.s32 %v1167, 1
      %v1172 = vsel %vm1170, %v1171, %v1167
      %v1173 = vadd.s32 %v1168, %v1172
      %v1174 = vadd.s32 %v1173, 536870912
      %v1175 = vshrl.u32 %v1174, 30
      %v1176 = vshll.u32 %v1175, 30
      %v1177 = vsub.s32 %v1173, %v1176
      %vm1178 = vcmp.lt.s32.totalorder %v1177, 0
      %v1179 = vsub.s32 0, %v1177
      %v1180 = vsel %vm1178, %v1179, %v1177
      %v1181 = vclz %v1180
      %v1182 = vsub.s32 %v1181, 2
      %vm1183 = vcmp.gt.s32.totalorder 0, %v1182
      %v1184 = vsel %vm1183, 0, %v1182
      %v1185 = vsub.s32 32, %v1184
      %v1186 = vshll.u32 %v1177, %v1184
      %v1187 = vshrl.u32 %v1169, %v1185
      %v1188 = vor.u32 %v1186, %v1187
      %v1189 = vsub.s32 4294967266, %v1184
      %v1190 = vadd.s32 %v1189, 127
      %v1191 = vshll.u32 %v1190, 23
      %v1192 = vor.u32 4788187, %v1191
      %v1193 = vand.u32 2147483647, %v1192
      %v1195 = vcvt.s32.f32 %v1188
      %v1196 = vmul.f32 %v1195, %v1193
      %v1197 = vxor.u32 %v1196, 2147483648
      %v1198 = vsel %vm1115, %v1197, %v1196
      %v1199 = vsub.s32 4, %v1175
      %v1200 = vsel %vm1115, %v1199, %v1175
      %v1201 = vsel %vm1114, %v281, %v1198
      %v1202 = vsel %vm1114, 0, %v1200
      %v1203 = vcosq.f32.pop %v1201
      %v1204 = vsinq.f32.pop %v1201
      %vm1205 = vweird.f32 %v281
      %v1206 = vand.u32 %v1202, 3
      %vm1207 = vcmp.lt.s32.totalorder %v1206, 2
      %vm1208 = vcmp.eq.s32.totalorder %v1206, 0
      %v1209 = vxor.u32 %v1204, 2147483648
      %v1210 = vsel %vm1208, %v1203, %v1209
      %vm1211 = vcmp.eq.s32.totalorder %v1206, 2
      %v1212 = vxor.u32 %v1203, 2147483648
      %v1213 = vsel %vm1211, %v1212, %v1204
      %v1214 = vsel %vm1207, %v1210, %v1213
      %v1215 = vsel %vm1205, nan, %v1214
      %v1216 = vand.u32 2147483647, %v282
      %vm1217 = vcmp.le.f32.partialorder %v1216, 0.7853982
      %vm1218 = vcmp.lt.s32.totalorder %v282, 0
      %v1219 = vand.u32 %v282, 2139095040
      %v1220 = vshrl.u32 %v1219, 23
      %v1221 = vsub.s32 %v1220, 127
      %v1222 = vand.u32 2147483647, %v282
      %v1223 = vand.u32 %v1222, 8388607
      %v1224 = vor.u32 %v1223, 8388608
      %v1225 = vsub.s32 0, %v1224
      %v1226 = vadd.s32 %v1221, 1
      %vm1227 = vcmp.gt.s32.totalorder %v1226, 0
      %v1228 = vsel %vm1227, %v1226, 0
      %v1229 = vshrl.u32 %v1228, 5
      %v1230 = vand.u32 %v1228, 31
      %v1231 = vsub.s32 32, %v1230
      %v1232 = vshrl.u32 683565275, %v1231
      %v1233 = vshll.u32 683565275, %v1230
      %v1234 = vshrl.u32 2475754826, %v1231
      %v1235 = vor.u32 %v1233, %v1234
      %v1236 = vshll.u32 2475754826, %v1230
      %v1237 = vshrl.u32 2131351028, %v1231
      %v1238 = vor.u32 %v1236, %v1237
      %v1239 = vshll.u32 2131351028, %v1230
      %v1240 = vshrl.u32 2102212464, %v1231
      %v1241 = vor.u32 %v1239, %v1240
      %v1242 = vshll.u32 2102212464, %v1230
      %v1243 = vshrl.u32 920167782, %v1231
      %v1244 = vor.u32 %v1242, %v1243
      %v1245 = vshll.u32 920167782, %v1230
      %v1246 = vshrl.u32 1326507024, %v1231
      %v1247 = vor.u32 %v1245, %v1246
      %vm1248 = vcmp.lt.s32.totalorder %v1229, 1
      %vm1249 = vcmp.lt.s32.totalorder %v1229, 2
      %vm1250 = vcmp.lt.s32.totalorder %v1229, 3
      %vm1251 = vcmp.lt.s32.totalorder %v1229, 4
      %v1252 = vsel %vm1248, %v1232, %v1235
      %v1253 = vsel %vm1251, %v1241, 2102212464
      %v1254 = vsel %vm1250, %v1238, %v1253
      %v1255 = vsel %vm1249, %v1252, %v1254
      %v1256 = vsel %vm1248, %v1235, %v1238
      %v1257 = vsel %vm1251, %v1244, 920167782
      %v1258 = vsel %vm1250, %v1241, %v1257
      %v1259 = vsel %vm1249, %v1256, %v1258
      %v1260 = vsel %vm1248, %v1238, %v1241
      %v1261 = vsel %vm1251, %v1247, 1326507024
      %v1262 = vsel %vm1250, %v1244, %v1261
      %v1263 = vsel %vm1249, %v1260, %v1262
      %v1264 = vshll.u32 %v1224, 8
      %v1265 = vmul.u32.u64.compose %v1264, %v1263
      %v1266 = vextract.low.u32 %v1265
      %v1267 = vextract.high.u32 %v1265
      %v1268 = vmul.u32.u64.compose %v1264, %v1259
      %v1269 = vextract.low.u32 %v1268
      %v1270 = vextract.high.u32 %v1268
      %v1271 = vmul.u32 %v1264, %v1255
      %v1272 = vadd.s32 %v1267, %v1269
      %vm1273 = vc.u32 %v1267, %v1269
      %v1274 = vadd.s32 %v1270, 1
      %v1275 = vsel %vm1273, %v1274, %v1270
      %v1276 = vadd.s32 %v1271, %v1275
      %v1277 = vadd.s32 %v1276, 536870912
      %v1278 = vshrl.u32 %v1277, 30
      %v1279 = vshll.u32 %v1278, 30
      %v1280 = vsub.s32 %v1276, %v1279
      %vm1281 = vcmp.lt.s32.totalorder %v1280, 0
      %v1282 = vsub.s32 0, %v1280
      %v1283 = vsel %vm1281, %v1282, %v1280
      %v1284 = vclz %v1283
      %v1285 = vsub.s32 %v1284, 2
      %vm1286 = vcmp.gt.s32.totalorder 0, %v1285
      %v1287 = vsel %vm1286, 0, %v1285
      %v1288 = vsub.s32 32, %v1287
      %v1289 = vshll.u32 %v1280, %v1287
      %v1290 = vshrl.u32 %v1272, %v1288
      %v1291 = vor.u32 %v1289, %v1290
      %v1292 = vsub.s32 4294967266, %v1287
      %v1293 = vadd.s32 %v1292, 127
      %v1294 = vshll.u32 %v1293, 23
      %v1295 = vor.u32 4788187, %v1294
      %v1296 = vand.u32 2147483647, %v1295
      %v1298 = vcvt.s32.f32 %v1291
      %v1299 = vmul.f32 %v1298, %v1296
      %v1300 = vxor.u32 %v1299, 2147483648
      %v1301 = vsel %vm1218, %v1300, %v1299
      %v1302 = vsub.s32 4, %v1278
      %v1303 = vsel %vm1218, %v1302, %v1278
      %v1304 = vsel %vm1217, %v282, %v1301
      %v1305 = vsel %vm1217, 0, %v1303
      %v1306 = vcosq.f32.pop %v1304
      %v1307 = vsinq.f32.pop %v1304
      %vm1308 = vweird.f32 %v282
      %v1309 = vand.u32 %v1305, 3
      %vm1310 = vcmp.lt.s32.totalorder %v1309, 2
      %vm1311 = vcmp.eq.s32.totalorder %v1309, 0
      %v1312 = vxor.u32 %v1307, 2147483648
      %v1313 = vsel %vm1311, %v1306, %v1312
      %vm1314 = vcmp.eq.s32.totalorder %v1309, 2
      %v1315 = vxor.u32 %v1306, 2147483648
      %v1316 = vsel %vm1314, %v1315, %v1307
      %v1317 = vsel %vm1310, %v1313, %v1316
      %v1318 = vsel %vm1308, nan, %v1317
      %v1319 = vand.u32 2147483647, %v281
      %vm1320 = vcmp.le.f32.partialorder %v1319, 0.7853982
      %vm1321 = vcmp.lt.s32.totalorder %v281, 0
      %v1322 = vand.u32 %v281, 2139095040
      %v1323 = vshrl.u32 %v1322, 23
      %v1324 = vsub.s32 %v1323, 127
      %v1325 = vand.u32 2147483647, %v281
      %v1326 = vand.u32 %v1325, 8388607
      %v1327 = vor.u32 %v1326, 8388608
      %v1328 = vsub.s32 0, %v1327
      %v1329 = vadd.s32 %v1324, 1
      %vm1330 = vcmp.gt.s32.totalorder %v1329, 0
      %v1331 = vsel %vm1330, %v1329, 0
      %v1332 = vshrl.u32 %v1331, 5
      %v1333 = vand.u32 %v1331, 31
      %v1334 = vsub.s32 32, %v1333
      %v1335 = vshrl.u32 683565275, %v1334
      %v1336 = vshll.u32 683565275, %v1333
      %v1337 = vshrl.u32 2475754826, %v1334
      %v1338 = vor.u32 %v1336, %v1337
      %v1339 = vshll.u32 2475754826, %v1333
      %v1340 = vshrl.u32 2131351028, %v1334
      %v1341 = vor.u32 %v1339, %v1340
      %v1342 = vshll.u32 2131351028, %v1333
      %v1343 = vshrl.u32 2102212464, %v1334
      %v1344 = vor.u32 %v1342, %v1343
      %v1345 = vshll.u32 2102212464, %v1333
      %v1346 = vshrl.u32 920167782, %v1334
      %v1347 = vor.u32 %v1345, %v1346
      %v1348 = vshll.u32 920167782, %v1333
      %v1349 = vshrl.u32 1326507024, %v1334
      %v1350 = vor.u32 %v1348, %v1349
      %vm1351 = vcmp.lt.s32.totalorder %v1332, 1
      %vm1352 = vcmp.lt.s32.totalorder %v1332, 2
      %vm1353 = vcmp.lt.s32.totalorder %v1332, 3
      %vm1354 = vcmp.lt.s32.totalorder %v1332, 4
      %v1355 = vsel %vm1351, %v1335, %v1338
      %v1356 = vsel %vm1354, %v1344, 2102212464
      %v1357 = vsel %vm1353, %v1341, %v1356
      %v1358 = vsel %vm1352, %v1355, %v1357
      %v1359 = vsel %vm1351, %v1338, %v1341
      %v1360 = vsel %vm1354, %v1347, 920167782
      %v1361 = vsel %vm1353, %v1344, %v1360
      %v1362 = vsel %vm1352, %v1359, %v1361
      %v1363 = vsel %vm1351, %v1341, %v1344
      %v1364 = vsel %vm1354, %v1350, 1326507024
      %v1365 = vsel %vm1353, %v1347, %v1364
      %v1366 = vsel %vm1352, %v1363, %v1365
      %v1367 = vshll.u32 %v1327, 8
      %v1368 = vmul.u32.u64.compose %v1367, %v1366
      %v1369 = vextract.low.u32 %v1368
      %v1370 = vextract.high.u32 %v1368
      %v1371 = vmul.u32.u64.compose %v1367, %v1362
      %v1372 = vextract.low.u32 %v1371
      %v1373 = vextract.high.u32 %v1371
      %v1374 = vmul.u32 %v1367, %v1358
      %v1375 = vadd.s32 %v1370, %v1372
      %vm1376 = vc.u32 %v1370, %v1372
      %v1377 = vadd.s32 %v1373, 1
      %v1378 = vsel %vm1376, %v1377, %v1373
      %v1379 = vadd.s32 %v1374, %v1378
      %v1380 = vadd.s32 %v1379, 536870912
      %v1381 = vshrl.u32 %v1380, 30
      %v1382 = vshll.u32 %v1381, 30
      %v1383 = vsub.s32 %v1379, %v1382
      %vm1384 = vcmp.lt.s32.totalorder %v1383, 0
      %v1385 = vsub.s32 0, %v1383
      %v1386 = vsel %vm1384, %v1385, %v1383
      %v1387 = vclz %v1386
      %v1388 = vsub.s32 %v1387, 2
      %vm1389 = vcmp.gt.s32.totalorder 0, %v1388
      %v1390 = vsel %vm1389, 0, %v1388
      %v1391 = vsub.s32 32, %v1390
      %v1392 = vshll.u32 %v1383, %v1390
      %v1393 = vshrl.u32 %v1375, %v1391
      %v1394 = vor.u32 %v1392, %v1393
      %v1395 = vsub.s32 4294967266, %v1390
      %v1396 = vadd.s32 %v1395, 127
      %v1397 = vshll.u32 %v1396, 23
      %v1398 = vor.u32 4788187, %v1397
      %v1399 = vand.u32 2147483647, %v1398
      %v1401 = vcvt.s32.f32 %v1394
      %v1402 = vmul.f32 %v1401, %v1399
      %v1403 = vxor.u32 %v1402, 2147483648
      %v1404 = vsel %vm1321, %v1403, %v1402
      %v1405 = vsub.s32 4, %v1381
      %v1406 = vsel %vm1321, %v1405, %v1381
      %v1407 = vsel %vm1320, %v281, %v1404
      %v1408 = vsel %vm1320, 0, %v1406
      %v1409 = vcosq.f32.pop %v1407
      %v1410 = vsinq.f32.pop %v1407
      %vm1411 = vweird.f32 %v281
      %v1412 = vadd.s32 %v1408, 3
      %v1413 = vand.u32 %v1412, 3
      %vm1414 = vcmp.lt.s32.totalorder %v1413, 2
      %vm1415 = vcmp.eq.s32.totalorder %v1413, 0
      %v1416 = vxor.u32 %v1410, 2147483648
      %v1417 = vsel %vm1415, %v1409, %v1416
      %vm1418 = vcmp.eq.s32.totalorder %v1413, 2
      %v1419 = vxor.u32 %v1409, 2147483648
      %v1420 = vsel %vm1418, %v1419, %v1410
      %v1421 = vsel %vm1414, %v1417, %v1420
      %v1422 = vsel %vm1411, nan, %v1421
      %v1423 = vand.u32 2147483647, %v282
      %vm1424 = vcmp.le.f32.partialorder %v1423, 0.7853982
      %vm1425 = vcmp.lt.s32.totalorder %v282, 0
      %v1426 = vand.u32 %v282, 2139095040
      %v1427 = vshrl.u32 %v1426, 23
      %v1428 = vsub.s32 %v1427, 127
      %v1429 = vand.u32 2147483647, %v282
      %v1430 = vand.u32 %v1429, 8388607
      %v1431 = vor.u32 %v1430, 8388608
      %v1432 = vsub.s32 0, %v1431
      %v1433 = vadd.s32 %v1428, 1
      %vm1434 = vcmp.gt.s32.totalorder %v1433, 0
      %v1435 = vsel %vm1434, %v1433, 0
      %v1436 = vshrl.u32 %v1435, 5
      %v1437 = vand.u32 %v1435, 31
      %v1438 = vsub.s32 32, %v1437
      %v1439 = vshrl.u32 683565275, %v1438
      %v1440 = vshll.u32 683565275, %v1437
      %v1441 = vshrl.u32 2475754826, %v1438
      %v1442 = vor.u32 %v1440, %v1441
      %v1443 = vshll.u32 2475754826, %v1437
      %v1444 = vshrl.u32 2131351028, %v1438
      %v1445 = vor.u32 %v1443, %v1444
      %v1446 = vshll.u32 2131351028, %v1437
      %v1447 = vshrl.u32 2102212464, %v1438
      %v1448 = vor.u32 %v1446, %v1447
      %v1449 = vshll.u32 2102212464, %v1437
      %v1450 = vshrl.u32 920167782, %v1438
      %v1451 = vor.u32 %v1449, %v1450
      %v1452 = vshll.u32 920167782, %v1437
      %v1453 = vshrl.u32 1326507024, %v1438
      %v1454 = vor.u32 %v1452, %v1453
      %vm1455 = vcmp.lt.s32.totalorder %v1436, 1
      %vm1456 = vcmp.lt.s32.totalorder %v1436, 2
      %vm1457 = vcmp.lt.s32.totalorder %v1436, 3
      %vm1458 = vcmp.lt.s32.totalorder %v1436, 4
      %v1459 = vsel %vm1455, %v1439, %v1442
      %v1460 = vsel %vm1458, %v1448, 2102212464
      %v1461 = vsel %vm1457, %v1445, %v1460
      %v1462 = vsel %vm1456, %v1459, %v1461
      %v1463 = vsel %vm1455, %v1442, %v1445
      %v1464 = vsel %vm1458, %v1451, 920167782
      %v1465 = vsel %vm1457, %v1448, %v1464
      %v1466 = vsel %vm1456, %v1463, %v1465
      %v1467 = vsel %vm1455, %v1445, %v1448
      %v1468 = vsel %vm1458, %v1454, 1326507024
      %v1469 = vsel %vm1457, %v1451, %v1468
      %v1470 = vsel %vm1456, %v1467, %v1469
      %v1471 = vshll.u32 %v1431, 8
      %v1472 = vmul.u32.u64.compose %v1471, %v1470
      %v1473 = vextract.low.u32 %v1472
      %v1474 = vextract.high.u32 %v1472
      %v1475 = vmul.u32.u64.compose %v1471, %v1466
      %v1476 = vextract.low.u32 %v1475
      %v1477 = vextract.high.u32 %v1475
      %v1478 = vmul.u32 %v1471, %v1462
      %v1479 = vadd.s32 %v1474, %v1476
      %vm1480 = vc.u32 %v1474, %v1476
      %v1481 = vadd.s32 %v1477, 1
      %v1482 = vsel %vm1480, %v1481, %v1477
      %v1483 = vadd.s32 %v1478, %v1482
      %v1484 = vadd.s32 %v1483, 536870912
      %v1485 = vshrl.u32 %v1484, 30
      %v1486 = vshll.u32 %v1485, 30
      %v1487 = vsub.s32 %v1483, %v1486
      %vm1488 = vcmp.lt.s32.totalorder %v1487, 0
      %v1489 = vsub.s32 0, %v1487
      %v1490 = vsel %vm1488, %v1489, %v1487
      %v1491 = vclz %v1490
      %v1492 = vsub.s32 %v1491, 2
      %vm1493 = vcmp.gt.s32.totalorder 0, %v1492
      %v1494 = vsel %vm1493, 0, %v1492
      %v1495 = vsub.s32 32, %v1494
      %v1496 = vshll.u32 %v1487, %v1494
      %v1497 = vshrl.u32 %v1479, %v1495
      %v1498 = vor.u32 %v1496, %v1497
      %v1499 = vsub.s32 4294967266, %v1494
      %v1500 = vadd.s32 %v1499, 127
      %v1501 = vshll.u32 %v1500, 23
      %v1502 = vor.u32 4788187, %v1501
      %v1503 = vand.u32 2147483647, %v1502
      %v1505 = vcvt.s32.f32 %v1498
      %v1506 = vmul.f32 %v1505, %v1503
      %v1507 = vxor.u32 %v1506, 2147483648
      %v1508 = vsel %vm1425, %v1507, %v1506
      %v1509 = vsub.s32 4, %v1485
      %v1510 = vsel %vm1425, %v1509, %v1485
      %v1511 = vsel %vm1424, %v282, %v1508
      %v1512 = vsel %vm1424, 0, %v1510
      %v1513 = vcosq.f32.pop %v1511
      %v1514 = vsinq.f32.pop %v1511
      %vm1515 = vweird.f32 %v282
      %v1516 = vadd.s32 %v1512, 3
      %v1517 = vand.u32 %v1516, 3
      %vm1518 = vcmp.lt.s32.totalorder %v1517, 2
      %vm1519 = vcmp.eq.s32.totalorder %v1517, 0
      %v1520 = vxor.u32 %v1514, 2147483648
      %v1521 = vsel %vm1519, %v1513, %v1520
      %vm1522 = vcmp.eq.s32.totalorder %v1517, 2
      %v1523 = vxor.u32 %v1513, 2147483648
      %v1524 = vsel %vm1522, %v1523, %v1514
      %v1525 = vsel %vm1518, %v1521, %v1524
      %v1526 = vsel %vm1515, nan, %v1525
      %v1527 = vand.u32 2147483647, %v283
      %vm1528 = vcmp.le.f32.partialorder %v1527, 0.7853982
      %vm1529 = vcmp.lt.s32.totalorder %v283, 0
      %v1530 = vand.u32 %v283, 2139095040
      %v1531 = vshrl.u32 %v1530, 23
      %v1532 = vsub.s32 %v1531, 127
      %v1533 = vand.u32 2147483647, %v283
      %v1534 = vand.u32 %v1533, 8388607
      %v1535 = vor.u32 %v1534, 8388608
      %v1536 = vsub.s32 0, %v1535
      %v1537 = vadd.s32 %v1532, 1
      %vm1538 = vcmp.gt.s32.totalorder %v1537, 0
      %v1539 = vsel %vm1538, %v1537, 0
      %v1540 = vshrl.u32 %v1539, 5
      %v1541 = vand.u32 %v1539, 31
      %v1542 = vsub.s32 32, %v1541
      %v1543 = vshrl.u32 683565275, %v1542
      %v1544 = vshll.u32 683565275, %v1541
      %v1545 = vshrl.u32 2475754826, %v1542
      %v1546 = vor.u32 %v1544, %v1545
      %v1547 = vshll.u32 2475754826, %v1541
      %v1548 = vshrl.u32 2131351028, %v1542
      %v1549 = vor.u32 %v1547, %v1548
      %v1550 = vshll.u32 2131351028, %v1541
      %v1551 = vshrl.u32 2102212464, %v1542
      %v1552 = vor.u32 %v1550, %v1551
      %v1553 = vshll.u32 2102212464, %v1541
      %v1554 = vshrl.u32 920167782, %v1542
      %v1555 = vor.u32 %v1553, %v1554
      %v1556 = vshll.u32 920167782, %v1541
      %v1557 = vshrl.u32 1326507024, %v1542
      %v1558 = vor.u32 %v1556, %v1557
      %vm1559 = vcmp.lt.s32.totalorder %v1540, 1
      %vm1560 = vcmp.lt.s32.totalorder %v1540, 2
      %vm1561 = vcmp.lt.s32.totalorder %v1540, 3
      %vm1562 = vcmp.lt.s32.totalorder %v1540, 4
      %v1563 = vsel %vm1559, %v1543, %v1546
      %v1564 = vsel %vm1562, %v1552, 2102212464
      %v1565 = vsel %vm1561, %v1549, %v1564
      %v1566 = vsel %vm1560, %v1563, %v1565
      %v1567 = vsel %vm1559, %v1546, %v1549
      %v1568 = vsel %vm1562, %v1555, 920167782
      %v1569 = vsel %vm1561, %v1552, %v1568
      %v1570 = vsel %vm1560, %v1567, %v1569
      %v1571 = vsel %vm1559, %v1549, %v1552
      %v1572 = vsel %vm1562, %v1558, 1326507024
      %v1573 = vsel %vm1561, %v1555, %v1572
      %v1574 = vsel %vm1560, %v1571, %v1573
      %v1575 = vshll.u32 %v1535, 8
      %v1576 = vmul.u32.u64.compose %v1575, %v1574
      %v1577 = vextract.low.u32 %v1576
      %v1578 = vextract.high.u32 %v1576
      %v1579 = vmul.u32.u64.compose %v1575, %v1570
      %v1580 = vextract.low.u32 %v1579
      %v1581 = vextract.high.u32 %v1579
      %v1582 = vmul.u32 %v1575, %v1566
      %v1583 = vadd.s32 %v1578, %v1580
      %vm1584 = vc.u32 %v1578, %v1580
      %v1585 = vadd.s32 %v1581, 1
      %v1586 = vsel %vm1584, %v1585, %v1581
      %v1587 = vadd.s32 %v1582, %v1586
      %v1588 = vadd.s32 %v1587, 536870912
      %v1589 = vshrl.u32 %v1588, 30
      %v1590 = vshll.u32 %v1589, 30
      %v1591 = vsub.s32 %v1587, %v1590
      %vm1592 = vcmp.lt.s32.totalorder %v1591, 0
      %v1593 = vsub.s32 0, %v1591
      %v1594 = vsel %vm1592, %v1593, %v1591
      %v1595 = vclz %v1594
      %v1596 = vsub.s32 %v1595, 2
      %vm1597 = vcmp.gt.s32.totalorder 0, %v1596
      %v1598 = vsel %vm1597, 0, %v1596
      %v1599 = vsub.s32 32, %v1598
      %v1600 = vshll.u32 %v1591, %v1598
      %v1601 = vshrl.u32 %v1583, %v1599
      %v1602 = vor.u32 %v1600, %v1601
      %v1603 = vsub.s32 4294967266, %v1598
      %v1604 = vadd.s32 %v1603, 127
      %v1605 = vshll.u32 %v1604, 23
      %v1606 = vor.u32 4788187, %v1605
      %v1607 = vand.u32 2147483647, %v1606
      %v1609 = vcvt.s32.f32 %v1602
      %v1610 = vmul.f32 %v1609, %v1607
      %v1611 = vxor.u32 %v1610, 2147483648
      %v1612 = vsel %vm1529, %v1611, %v1610
      %v1613 = vsub.s32 4, %v1589
      %v1614 = vsel %vm1529, %v1613, %v1589
      %v1615 = vsel %vm1528, %v283, %v1612
      %v1616 = vsel %vm1528, 0, %v1614
      %v1617 = vcosq.f32.pop %v1615
      %v1618 = vsinq.f32.pop %v1615
      %vm1619 = vweird.f32 %v283
      %v1620 = vand.u32 %v1616, 3
      %vm1621 = vcmp.lt.s32.totalorder %v1620, 2
      %vm1622 = vcmp.eq.s32.totalorder %v1620, 0
      %v1623 = vxor.u32 %v1618, 2147483648
      %v1624 = vsel %vm1622, %v1617, %v1623
      %vm1625 = vcmp.eq.s32.totalorder %v1620, 2
      %v1626 = vxor.u32 %v1617, 2147483648
      %v1627 = vsel %vm1625, %v1626, %v1618
      %v1628 = vsel %vm1621, %v1624, %v1627
      %v1629 = vsel %vm1619, nan, %v1628
      %v1630 = vand.u32 2147483647, %v284
      %vm1631 = vcmp.le.f32.partialorder %v1630, 0.7853982
      %vm1632 = vcmp.lt.s32.totalorder %v284, 0
      %v1633 = vand.u32 %v284, 2139095040
      %v1634 = vshrl.u32 %v1633, 23
      %v1635 = vsub.s32 %v1634, 127
      %v1636 = vand.u32 2147483647, %v284
      %v1637 = vand.u32 %v1636, 8388607
      %v1638 = vor.u32 %v1637, 8388608
      %v1639 = vsub.s32 0, %v1638
      %v1640 = vadd.s32 %v1635, 1
      %vm1641 = vcmp.gt.s32.totalorder %v1640, 0
      %v1642 = vsel %vm1641, %v1640, 0
      %v1643 = vshrl.u32 %v1642, 5
      %v1644 = vand.u32 %v1642, 31
      %v1645 = vsub.s32 32, %v1644
      %v1646 = vshrl.u32 683565275, %v1645
      %v1647 = vshll.u32 683565275, %v1644
      %v1648 = vshrl.u32 2475754826, %v1645
      %v1649 = vor.u32 %v1647, %v1648
      %v1650 = vshll.u32 2475754826, %v1644
      %v1651 = vshrl.u32 2131351028, %v1645
      %v1652 = vor.u32 %v1650, %v1651
      %v1653 = vshll.u32 2131351028, %v1644
      %v1654 = vshrl.u32 2102212464, %v1645
      %v1655 = vor.u32 %v1653, %v1654
      %v1656 = vshll.u32 2102212464, %v1644
      %v1657 = vshrl.u32 920167782, %v1645
      %v1658 = vor.u32 %v1656, %v1657
      %v1659 = vshll.u32 920167782, %v1644
      %v1660 = vshrl.u32 1326507024, %v1645
      %v1661 = vor.u32 %v1659, %v1660
      %vm1662 = vcmp.lt.s32.totalorder %v1643, 1
      %vm1663 = vcmp.lt.s32.totalorder %v1643, 2
      %vm1664 = vcmp.lt.s32.totalorder %v1643, 3
      %vm1665 = vcmp.lt.s32.totalorder %v1643, 4
      %v1666 = vsel %vm1662, %v1646, %v1649
      %v1667 = vsel %vm1665, %v1655, 2102212464
      %v1668 = vsel %vm1664, %v1652, %v1667
      %v1669 = vsel %vm1663, %v1666, %v1668
      %v1670 = vsel %vm1662, %v1649, %v1652
      %v1671 = vsel %vm1665, %v1658, 920167782
      %v1672 = vsel %vm1664, %v1655, %v1671
      %v1673 = vsel %vm1663, %v1670, %v1672
      %v1674 = vsel %vm1662, %v1652, %v1655
      %v1675 = vsel %vm1665, %v1661, 1326507024
      %v1676 = vsel %vm1664, %v1658, %v1675
      %v1677 = vsel %vm1663, %v1674, %v1676
      %v1678 = vshll.u32 %v1638, 8
      %v1679 = vmul.u32.u64.compose %v1678, %v1677
      %v1680 = vextract.low.u32 %v1679
      %v1681 = vextract.high.u32 %v1679
      %v1682 = vmul.u32.u64.compose %v1678, %v1673
      %v1683 = vextract.low.u32 %v1682
      %v1684 = vextract.high.u32 %v1682
      %v1685 = vmul.u32 %v1678, %v1669
      %v1686 = vadd.s32 %v1681, %v1683
      %vm1687 = vc.u32 %v1681, %v1683
      %v1688 = vadd.s32 %v1684, 1
      %v1689 = vsel %vm1687, %v1688, %v1684
      %v1690 = vadd.s32 %v1685, %v1689
      %v1691 = vadd.s32 %v1690, 536870912
      %v1692 = vshrl.u32 %v1691, 30
      %v1693 = vshll.u32 %v1692, 30
      %v1694 = vsub.s32 %v1690, %v1693
      %vm1695 = vcmp.lt.s32.totalorder %v1694, 0
      %v1696 = vsub.s32 0, %v1694
      %v1697 = vsel %vm1695, %v1696, %v1694
      %v1698 = vclz %v1697
      %v1699 = vsub.s32 %v1698, 2
      %vm1700 = vcmp.gt.s32.totalorder 0, %v1699
      %v1701 = vsel %vm1700, 0, %v1699
      %v1702 = vsub.s32 32, %v1701
      %v1703 = vshll.u32 %v1694, %v1701
      %v1704 = vshrl.u32 %v1686, %v1702
      %v1705 = vor.u32 %v1703, %v1704
      %v1706 = vsub.s32 4294967266, %v1701
      %v1707 = vadd.s32 %v1706, 127
      %v1708 = vshll.u32 %v1707, 23
      %v1709 = vor.u32 4788187, %v1708
      %v1710 = vand.u32 2147483647, %v1709
      %v1712 = vcvt.s32.f32 %v1705
      %v1713 = vmul.f32 %v1712, %v1710
      %v1714 = vxor.u32 %v1713, 2147483648
      %v1715 = vsel %vm1632, %v1714, %v1713
      %v1716 = vsub.s32 4, %v1692
      %v1717 = vsel %vm1632, %v1716, %v1692
      %v1718 = vsel %vm1631, %v284, %v1715
      %v1719 = vsel %vm1631, 0, %v1717
      %v1720 = vcosq.f32.pop %v1718
      %v1721 = vsinq.f32.pop %v1718
      %vm1722 = vweird.f32 %v284
      %v1723 = vand.u32 %v1719, 3
      %vm1724 = vcmp.lt.s32.totalorder %v1723, 2
      %vm1725 = vcmp.eq.s32.totalorder %v1723, 0
      %v1726 = vxor.u32 %v1721, 2147483648
      %v1727 = vsel %vm1725, %v1720, %v1726
      %vm1728 = vcmp.eq.s32.totalorder %v1723, 2
      %v1729 = vxor.u32 %v1720, 2147483648
      %v1730 = vsel %vm1728, %v1729, %v1721
      %v1731 = vsel %vm1724, %v1727, %v1730
      %v1732 = vsel %vm1722, nan, %v1731
      %v1733 = vand.u32 2147483647, %v283
      %vm1734 = vcmp.le.f32.partialorder %v1733, 0.7853982
      %vm1735 = vcmp.lt.s32.totalorder %v283, 0
      %v1736 = vand.u32 %v283, 2139095040
      %v1737 = vshrl.u32 %v1736, 23
      %v1738 = vsub.s32 %v1737, 127
      %v1739 = vand.u32 2147483647, %v283
      %v1740 = vand.u32 %v1739, 8388607
      %v1741 = vor.u32 %v1740, 8388608
      %v1742 = vsub.s32 0, %v1741
      %v1743 = vadd.s32 %v1738, 1
      %vm1744 = vcmp.gt.s32.totalorder %v1743, 0
      %v1745 = vsel %vm1744, %v1743, 0
      %v1746 = vshrl.u32 %v1745, 5
      %v1747 = vand.u32 %v1745, 31
      %v1748 = vsub.s32 32, %v1747
      %v1749 = vshrl.u32 683565275, %v1748
      %v1750 = vshll.u32 683565275, %v1747
      %v1751 = vshrl.u32 2475754826, %v1748
      %v1752 = vor.u32 %v1750, %v1751
      %v1753 = vshll.u32 2475754826, %v1747
      %v1754 = vshrl.u32 2131351028, %v1748
      %v1755 = vor.u32 %v1753, %v1754
      %v1756 = vshll.u32 2131351028, %v1747
      %v1757 = vshrl.u32 2102212464, %v1748
      %v1758 = vor.u32 %v1756, %v1757
      %v1759 = vshll.u32 2102212464, %v1747
      %v1760 = vshrl.u32 920167782, %v1748
      %v1761 = vor.u32 %v1759, %v1760
      %v1762 = vshll.u32 920167782, %v1747
      %v1763 = vshrl.u32 1326507024, %v1748
      %v1764 = vor.u32 %v1762, %v1763
      %vm1765 = vcmp.lt.s32.totalorder %v1746, 1
      %vm1766 = vcmp.lt.s32.totalorder %v1746, 2
      %vm1767 = vcmp.lt.s32.totalorder %v1746, 3
      %vm1768 = vcmp.lt.s32.totalorder %v1746, 4
      %v1769 = vsel %vm1765, %v1749, %v1752
      %v1770 = vsel %vm1768, %v1758, 2102212464
      %v1771 = vsel %vm1767, %v1755, %v1770
      %v1772 = vsel %vm1766, %v1769, %v1771
      %v1773 = vsel %vm1765, %v1752, %v1755
      %v1774 = vsel %vm1768, %v1761, 920167782
      %v1775 = vsel %vm1767, %v1758, %v1774
      %v1776 = vsel %vm1766, %v1773, %v1775
      %v1777 = vsel %vm1765, %v1755, %v1758
      %v1778 = vsel %vm1768, %v1764, 1326507024
      %v1779 = vsel %vm1767, %v1761, %v1778
      %v1780 = vsel %vm1766, %v1777, %v1779
      %v1781 = vshll.u32 %v1741, 8
      %v1782 = vmul.u32.u64.compose %v1781, %v1780
      %v1783 = vextract.low.u32 %v1782
      %v1784 = vextract.high.u32 %v1782
      %v1785 = vmul.u32.u64.compose %v1781, %v1776
      %v1786 = vextract.low.u32 %v1785
      %v1787 = vextract.high.u32 %v1785
      %v1788 = vmul.u32 %v1781, %v1772
      %v1789 = vadd.s32 %v1784, %v1786
      %vm1790 = vc.u32 %v1784, %v1786
      %v1791 = vadd.s32 %v1787, 1
      %v1792 = vsel %vm1790, %v1791, %v1787
      %v1793 = vadd.s32 %v1788, %v1792
      %v1794 = vadd.s32 %v1793, 536870912
      %v1795 = vshrl.u32 %v1794, 30
      %v1796 = vshll.u32 %v1795, 30
      %v1797 = vsub.s32 %v1793, %v1796
      %vm1798 = vcmp.lt.s32.totalorder %v1797, 0
      %v1799 = vsub.s32 0, %v1797
      %v1800 = vsel %vm1798, %v1799, %v1797
      %v1801 = vclz %v1800
      %v1802 = vsub.s32 %v1801, 2
      %vm1803 = vcmp.gt.s32.totalorder 0, %v1802
      %v1804 = vsel %vm1803, 0, %v1802
      %v1805 = vsub.s32 32, %v1804
      %v1806 = vshll.u32 %v1797, %v1804
      %v1807 = vshrl.u32 %v1789, %v1805
      %v1808 = vor.u32 %v1806, %v1807
      %v1809 = vsub.s32 4294967266, %v1804
      %v1810 = vadd.s32 %v1809, 127
      %v1811 = vshll.u32 %v1810, 23
      %v1812 = vor.u32 4788187, %v1811
      %v1813 = vand.u32 2147483647, %v1812
      %v1815 = vcvt.s32.f32 %v1808
      %v1816 = vmul.f32 %v1815, %v1813
      %v1817 = vxor.u32 %v1816, 2147483648
      %v1818 = vsel %vm1735, %v1817, %v1816
      %v1819 = vsub.s32 4, %v1795
      %v1820 = vsel %vm1735, %v1819, %v1795
      %v1821 = vsel %vm1734, %v283, %v1818
      %v1822 = vsel %vm1734, 0, %v1820
      %v1823 = vcosq.f32.pop %v1821
      %v1824 = vsinq.f32.pop %v1821
      %vm1825 = vweird.f32 %v283
      %v1826 = vadd.s32 %v1822, 3
      %v1827 = vand.u32 %v1826, 3
      %vm1828 = vcmp.lt.s32.totalorder %v1827, 2
      %vm1829 = vcmp.eq.s32.totalorder %v1827, 0
      %v1830 = vxor.u32 %v1824, 2147483648
      %v1831 = vsel %vm1829, %v1823, %v1830
      %vm1832 = vcmp.eq.s32.totalorder %v1827, 2
      %v1833 = vxor.u32 %v1823, 2147483648
      %v1834 = vsel %vm1832, %v1833, %v1824
      %v1835 = vsel %vm1828, %v1831, %v1834
      %v1836 = vsel %vm1825, nan, %v1835
      %v1837 = vand.u32 2147483647, %v284
      %vm1838 = vcmp.le.f32.partialorder %v1837, 0.7853982
      %vm1839 = vcmp.lt.s32.totalorder %v284, 0
      %v1840 = vand.u32 %v284, 2139095040
      %v1841 = vshrl.u32 %v1840, 23
      %v1842 = vsub.s32 %v1841, 127
      %v1843 = vand.u32 2147483647, %v284
      %v1844 = vand.u32 %v1843, 8388607
      %v1845 = vor.u32 %v1844, 8388608
      %v1846 = vsub.s32 0, %v1845
      %v1847 = vadd.s32 %v1842, 1
      %vm1848 = vcmp.gt.s32.totalorder %v1847, 0
      %v1849 = vsel %vm1848, %v1847, 0
      %v1850 = vshrl.u32 %v1849, 5
      %v1851 = vand.u32 %v1849, 31
      %v1852 = vsub.s32 32, %v1851
      %v1853 = vshrl.u32 683565275, %v1852
      %v1854 = vshll.u32 683565275, %v1851
      %v1855 = vshrl.u32 2475754826, %v1852
      %v1856 = vor.u32 %v1854, %v1855
      %v1857 = vshll.u32 2475754826, %v1851
      %v1858 = vshrl.u32 2131351028, %v1852
      %v1859 = vor.u32 %v1857, %v1858
      %v1860 = vshll.u32 2131351028, %v1851
      %v1861 = vshrl.u32 2102212464, %v1852
      %v1862 = vor.u32 %v1860, %v1861
      %v1863 = vshll.u32 2102212464, %v1851
      %v1864 = vshrl.u32 920167782, %v1852
      %v1865 = vor.u32 %v1863, %v1864
      %v1866 = vshll.u32 920167782, %v1851
      %v1867 = vshrl.u32 1326507024, %v1852
      %v1868 = vor.u32 %v1866, %v1867
      %vm1869 = vcmp.lt.s32.totalorder %v1850, 1
      %vm1870 = vcmp.lt.s32.totalorder %v1850, 2
      %vm1871 = vcmp.lt.s32.totalorder %v1850, 3
      %vm1872 = vcmp.lt.s32.totalorder %v1850, 4
      %v1873 = vsel %vm1869, %v1853, %v1856
      %v1874 = vsel %vm1872, %v1862, 2102212464
      %v1875 = vsel %vm1871, %v1859, %v1874
      %v1876 = vsel %vm1870, %v1873, %v1875
      %v1877 = vsel %vm1869, %v1856, %v1859
      %v1878 = vsel %vm1872, %v1865, 920167782
      %v1879 = vsel %vm1871, %v1862, %v1878
      %v1880 = vsel %vm1870, %v1877, %v1879
      %v1881 = vsel %vm1869, %v1859, %v1862
      %v1882 = vsel %vm1872, %v1868, 1326507024
      %v1883 = vsel %vm1871, %v1865, %v1882
      %v1884 = vsel %vm1870, %v1881, %v1883
      %v1885 = vshll.u32 %v1845, 8
      %v1886 = vmul.u32.u64.compose %v1885, %v1884
      %v1887 = vextract.low.u32 %v1886
      %v1888 = vextract.high.u32 %v1886
      %v1889 = vmul.u32.u64.compose %v1885, %v1880
      %v1890 = vextract.low.u32 %v1889
      %v1891 = vextract.high.u32 %v1889
      %v1892 = vmul.u32 %v1885, %v1876
      %v1893 = vadd.s32 %v1888, %v1890
      %vm1894 = vc.u32 %v1888, %v1890
      %v1895 = vadd.s32 %v1891, 1
      %v1896 = vsel %vm1894, %v1895, %v1891
      %v1897 = vadd.s32 %v1892, %v1896
      %v1898 = vadd.s32 %v1897, 536870912
      %v1899 = vshrl.u32 %v1898, 30
      %v1900 = vshll.u32 %v1899, 30
      %v1901 = vsub.s32 %v1897, %v1900
      %vm1902 = vcmp.lt.s32.totalorder %v1901, 0
      %v1903 = vsub.s32 0, %v1901
      %v1904 = vsel %vm1902, %v1903, %v1901
      %v1905 = vclz %v1904
      %v1906 = vsub.s32 %v1905, 2
      %vm1907 = vcmp.gt.s32.totalorder 0, %v1906
      %v1908 = vsel %vm1907, 0, %v1906
      %v1909 = vsub.s32 32, %v1908
      %v1910 = vshll.u32 %v1901, %v1908
      %v1911 = vshrl.u32 %v1893, %v1909
      %v1912 = vor.u32 %v1910, %v1911
      %v1913 = vsub.s32 4294967266, %v1908
      %v1914 = vadd.s32 %v1913, 127
      %v1915 = vshll.u32 %v1914, 23
      %v1916 = vor.u32 4788187, %v1915
      %v1917 = vand.u32 2147483647, %v1916
      %v1919 = vcvt.s32.f32 %v1912
      %v1920 = vmul.f32 %v1919, %v1917
      %v1921 = vxor.u32 %v1920, 2147483648
      %v1922 = vsel %vm1839, %v1921, %v1920
      %v1923 = vsub.s32 4, %v1899
      %v1924 = vsel %vm1839, %v1923, %v1899
      %v1925 = vsel %vm1838, %v284, %v1922
      %v1926 = vsel %vm1838, 0, %v1924
      %v1927 = vcosq.f32.pop %v1925
      %v1928 = vsinq.f32.pop %v1925
      %vm1929 = vweird.f32 %v284
      %v1930 = vadd.s32 %v1926, 3
      %v1931 = vand.u32 %v1930, 3
      %vm1932 = vcmp.lt.s32.totalorder %v1931, 2
      %vm1933 = vcmp.eq.s32.totalorder %v1931, 0
      %v1934 = vxor.u32 %v1928, 2147483648
      %v1935 = vsel %vm1933, %v1927, %v1934
      %vm1936 = vcmp.eq.s32.totalorder %v1931, 2
      %v1937 = vxor.u32 %v1927, 2147483648
      %v1938 = vsel %vm1936, %v1937, %v1928
      %v1939 = vsel %vm1932, %v1935, %v1938
      %v1940 = vsel %vm1929, nan, %v1939
      %1941 = vrot.lane.b32.xlu0 %v1629, 17
      %v1942 = vpop.permute.xlu0 %1941
      %1943 = vrot.lane.b32.xlu0 %v1836, 17
      %v1944 = vpop.permute.xlu0 %1943
      %1945 = vrot.lane.b32.xlu0 %v283, 17
      %v1946 = vpop.permute.xlu0 %1945
      %1947 = vrot.lane.b32.xlu0 %v1732, 17
      %v1948 = vpop.permute.xlu0 %1947
      %1949 = vrot.lane.b32.xlu0 %v1940, 17
      %v1950 = vpop.permute.xlu0 %1949
      %1951 = vrot.lane.b32.xlu0 %v284, 17
      %v1952 = vpop.permute.xlu0 %1951
      %v1953 = vlaneseq
      %v1954 = vand.u32 %v1953, 127
      %vm1955 = vcmp.lt.s32.totalorder %v1954, 17
      %v1956 = vsel %vm1955, %v1942, %v1948
      %v1957 = vsel %vm1955, %v1944, %v1950
      %v1958 = vsel %vm1955, %v1946, %v1952
      %v1959 = vsel %vm1955, %v1948, %v1942
      %v1960 = vsel %vm1955, %v1950, %v1944
      %v1961 = vsel %vm1955, %v1952, %v1946
      %v1962 = vld [vmem:[%s1] sm:$0x3]
      %v1964 = vlaneseq
      %v1965 = vshrl.u32 %v1964, 7
      %v1966 = vsub.s32 0, %v1965
      %v1967 = vrot.slane %v1962, %v1966
      %v1968 = vlaneseq
      %v1969 = vshrl.u32 %v1968, 7
      %v1970 = vsub.s32 1, %v1969
      %v1971 = vrot.slane %v1962, %v1970
      %v1974 = vmul.f32 %v1959, %v1967
      %v1975 = vmul.f32 %v1956, %v1971
      %v1976 = vmul.f32 %v1960, %v1967
      %v1977 = vmul.f32 %v1957, %v1971
      %v1978 = vmul.f32 %v1961, %v1967
      %v1979 = vmul.f32 %v1958, %v1971
      %1980 = vrot.lane.b32.xlu0 %v1215, 16
      %v1981 = vpop.permute.xlu0 %1980
      %1982 = vrot.lane.b32.xlu0 %v1422, 16
      %v1983 = vpop.permute.xlu0 %1982
      %1984 = vrot.lane.b32.xlu0 %v281, 16
      %v1985 = vpop.permute.xlu0 %1984
      %1986 = vrot.lane.b32.xlu0 %v1318, 16
      %v1987 = vpop.permute.xlu0 %1986
      %1988 = vrot.lane.b32.xlu0 %v1526, 16
      %v1989 = vpop.permute.xlu0 %1988
      %1990 = vrot.lane.b32.xlu0 %v282, 16
      %v1991 = vpop.permute.xlu0 %1990
      %vm1992 = vcmp.lt.s32.totalorder %v1954, 16
      %v1993 = vsel %vm1992, %v1981, %v1987
      %v1994 = vsel %vm1992, %v1983, %v1989
      %v1995 = vsel %vm1992, %v1985, %v1991
      %v1996 = vsel %vm1992, %v1987, %v1981
      %v1997 = vsel %vm1992, %v1989, %v1983
      %v1998 = vsel %vm1992, %v1991, %v1985
      %s1999 = scalar_lea.vmem %s1, 2
      %v2000 = vld [vmem:[%s1999] sm:$0x3]
      %v2002 = vlaneseq
      %v2003 = vshrl.u32 %v2002, 7
      %v2004 = vsub.s32 0, %v2003
      %v2005 = vrot.slane %v2000, %v2004
      %v2006 = vlaneseq
      %v2007 = vshrl.u32 %v2006, 7
      %v2008 = vsub.s32 1, %v2007
      %v2009 = vrot.slane %v2000, %v2008
      %v2012 = vmul.f32 %v1996, %v2005
      %v2013 = vmul.f32 %v1993, %v2009
      %v2014 = vmul.f32 %v1997, %v2005
      %v2015 = vmul.f32 %v1994, %v2009
      %v2016 = vmul.f32 %v1998, %v2005
      %v2017 = vmul.f32 %v1995, %v2009
      %2018 = vrot.lane.b32.xlu0 %v1629, 16
      %v2019 = vpop.permute.xlu0 %2018
      %2020 = vrot.lane.b32.xlu0 %v1836, 16
      %v2021 = vpop.permute.xlu0 %2020
      %2022 = vrot.lane.b32.xlu0 %v283, 16
      %v2023 = vpop.permute.xlu0 %2022
      %2024 = vrot.lane.b32.xlu0 %v1732, 16
      %v2025 = vpop.permute.xlu0 %2024
      %2026 = vrot.lane.b32.xlu0 %v1940, 16
      %v2027 = vpop.permute.xlu0 %2026
      %2028 = vrot.lane.b32.xlu0 %v284, 16
      %v2029 = vpop.permute.xlu0 %2028
      %v2030 = vsel %vm1992, %v2019, %v2025
      %v2031 = vsel %vm1992, %v2021, %v2027
      %v2032 = vsel %vm1992, %v2023, %v2029
      %v2033 = vsel %vm1992, %v2025, %v2019
      %v2034 = vsel %vm1992, %v2027, %v2021
      %v2035 = vsel %vm1992, %v2029, %v2023
      %v2036 = vmul.f32 %v2033, %v2005
      %v2037 = vmul.f32 %v2030, %v2009
      %v2038 = vmul.f32 %v2034, %v2005
      %v2039 = vmul.f32 %v2031, %v2009
      %v2040 = vmul.f32 %v2035, %v2005
      %v2041 = vmul.f32 %v2032, %v2009
      %2042 = vrot.lane.b32.xlu0 %v1215, 15
      %v2043 = vpop.permute.xlu0 %2042
      %2044 = vrot.lane.b32.xlu0 %v1422, 15
      %v2045 = vpop.permute.xlu0 %2044
      %2046 = vrot.lane.b32.xlu0 %v281, 15
      %v2047 = vpop.permute.xlu0 %2046
      %2048 = vrot.lane.b32.xlu0 %v1318, 15
      %v2049 = vpop.permute.xlu0 %2048
      %2050 = vrot.lane.b32.xlu0 %v1526, 15
      %v2051 = vpop.permute.xlu0 %2050
      %2052 = vrot.lane.b32.xlu0 %v282, 15
      %v2053 = vpop.permute.xlu0 %2052
      %vm2054 = vcmp.lt.s32.totalorder %v1954, 15
      %v2055 = vsel %vm2054, %v2043, %v2049
      %v2056 = vsel %vm2054, %v2045, %v2051
      %v2057 = vsel %vm2054, %v2047, %v2053
      %v2058 = vsel %vm2054, %v2049, %v2043
      %v2059 = vsel %vm2054, %v2051, %v2045
      %v2060 = vsel %vm2054, %v2053, %v2047
      %s2061 = scalar_lea.vmem %s1, 4
      %v2062 = vld [vmem:[%s2061] sm:$0x3]
      %v2064 = vlaneseq
      %v2065 = vshrl.u32 %v2064, 7
      %v2066 = vsub.s32 0, %v2065
      %v2067 = vrot.slane %v2062, %v2066
      %v2068 = vlaneseq
      %v2069 = vshrl.u32 %v2068, 7
      %v2070 = vsub.s32 1, %v2069
      %v2071 = vrot.slane %v2062, %v2070
      %v2074 = vmul.f32 %v2058, %v2067
      %v2075 = vmul.f32 %v2055, %v2071
      %v2076 = vmul.f32 %v2059, %v2067
      %v2077 = vmul.f32 %v2056, %v2071
      %v2078 = vmul.f32 %v2060, %v2067
      %v2079 = vmul.f32 %v2057, %v2071
      %2080 = vrot.lane.b32.xlu0 %v801, 1
      %v2081 = vpop.permute.xlu0 %2080
      %2082 = vrot.lane.b32.xlu0 %v1008, 1
      %v2083 = vpop.permute.xlu0 %2082
      %2084 = vrot.lane.b32.xlu0 %v279, 1
      %v2085 = vpop.permute.xlu0 %2084
      %2086 = vrot.lane.b32.xlu0 %v904, 1
      %v2087 = vpop.permute.xlu0 %2086
      %2088 = vrot.lane.b32.xlu0 %v1112, 1
      %v2089 = vpop.permute.xlu0 %2088
      %2090 = vrot.lane.b32.xlu0 %v280, 1
      %v2091 = vpop.permute.xlu0 %2090
      %vm2092 = vcmp.lt.s32.totalorder %v1954, 1
      %v2093 = vsel %vm2092, %v2081, %v2087
      %v2094 = vsel %vm2092, %v2083, %v2089
      %v2095 = vsel %vm2092, %v2085, %v2091
      %v2096 = vsel %vm2092, %v2087, %v2081
      %v2097 = vsel %vm2092, %v2089, %v2083
      %v2098 = vsel %vm2092, %v2091, %v2085
      %s2099 = scalar_lea.vmem %s1, 6
      %v2100 = vld [vmem:[%s2099] sm:$0x3]
      %v2102 = vlaneseq
      %v2103 = vshrl.u32 %v2102, 7
      %v2104 = vsub.s32 0, %v2103
      %v2105 = vrot.slane %v2100, %v2104
      %v2106 = vlaneseq
      %v2107 = vshrl.u32 %v2106, 7
      %v2108 = vsub.s32 1, %v2107
      %v2109 = vrot.slane %v2100, %v2108
      %v2112 = vmul.f32 %v2096, %v2105
      %v2113 = vmul.f32 %v2093, %v2109
      %v2114 = vmul.f32 %v2097, %v2105
      %v2115 = vmul.f32 %v2094, %v2109
      %v2116 = vmul.f32 %v2098, %v2105
      %v2117 = vmul.f32 %v2095, %v2109
      %2118 = vrot.lane.b32.xlu0 %v387, 127
      %v2119 = vpop.permute.xlu0 %2118
      %2120 = vrot.lane.b32.xlu0 %v594, 127
      %v2121 = vpop.permute.xlu0 %2120
      %2122 = vrot.lane.b32.xlu0 %v277, 127
      %v2123 = vpop.permute.xlu0 %2122
      %2124 = vrot.lane.b32.xlu0 %v490, 127
      %v2125 = vpop.permute.xlu0 %2124
      %2126 = vrot.lane.b32.xlu0 %v698, 127
      %v2127 = vpop.permute.xlu0 %2126
      %2128 = vrot.lane.b32.xlu0 %v278, 127
      %v2129 = vpop.permute.xlu0 %2128
      %vm2130 = vcmp.lt.s32.totalorder %v1954, 127
      %v2131 = vsel %vm2130, %v2119, %v2125
      %v2132 = vsel %vm2130, %v2121, %v2127
      %v2133 = vsel %vm2130, %v2123, %v2129
      %v2134 = vsel %vm2130, %v2125, %v2119
      %v2135 = vsel %vm2130, %v2127, %v2121
      %v2136 = vsel %vm2130, %v2129, %v2123
      %s2137 = scalar_lea.vmem %s1, 10
      %v2138 = vld [vmem:[%s2137] sm:$0x3]
      %v2140 = vlaneseq
      %v2141 = vshrl.u32 %v2140, 7
      %v2142 = vsub.s32 0, %v2141
      %v2143 = vrot.slane %v2138, %v2142
      %v2144 = vlaneseq
      %v2145 = vshrl.u32 %v2144, 7
      %v2146 = vsub.s32 1, %v2145
      %v2147 = vrot.slane %v2138, %v2146
      %v2150 = vmul.f32 %v2131, %v2143
      %v2151 = vmul.f32 %v2134, %v2147
      %v2152 = vmul.f32 %v2132, %v2143
      %v2153 = vmul.f32 %v2135, %v2147
      %v2154 = vmul.f32 %v2133, %v2143
      %v2155 = vmul.f32 %v2136, %v2147
      %2156 = vrot.lane.b32.xlu0 %v1629, 1
      %v2157 = vpop.permute.xlu0 %2156
      %2158 = vrot.lane.b32.xlu0 %v1836, 1
      %v2159 = vpop.permute.xlu0 %2158
      %2160 = vrot.lane.b32.xlu0 %v283, 1
      %v2161 = vpop.permute.xlu0 %2160
      %2162 = vrot.lane.b32.xlu0 %v1732, 1
      %v2163 = vpop.permute.xlu0 %2162
      %2164 = vrot.lane.b32.xlu0 %v1940, 1
      %v2165 = vpop.permute.xlu0 %2164
      %2166 = vrot.lane.b32.xlu0 %v284, 1
      %v2167 = vpop.permute.xlu0 %2166
      %v2168 = vsel %vm2092, %v2157, %v2163
      %v2169 = vsel %vm2092, %v2159, %v2165
      %v2170 = vsel %vm2092, %v2161, %v2167
      %v2171 = vsel %vm2092, %v2163, %v2157
      %v2172 = vsel %vm2092, %v2165, %v2159
      %v2173 = vsel %vm2092, %v2167, %v2161
      %v2174 = vmul.f32 %v2171, %v2105
      %v2175 = vmul.f32 %v2168, %v2109
      %v2176 = vmul.f32 %v2172, %v2105
      %v2177 = vmul.f32 %v2169, %v2109
      %v2178 = vmul.f32 %v2173, %v2105
      %v2179 = vmul.f32 %v2170, %v2109
      %2180 = vrot.lane.b32.xlu0 %v1215, 127
      %v2181 = vpop.permute.xlu0 %2180
      %2182 = vrot.lane.b32.xlu0 %v1422, 127
      %v2183 = vpop.permute.xlu0 %2182
      %2184 = vrot.lane.b32.xlu0 %v281, 127
      %v2185 = vpop.permute.xlu0 %2184
      %2186 = vrot.lane.b32.xlu0 %v1318, 127
      %v2187 = vpop.permute.xlu0 %2186
      %2188 = vrot.lane.b32.xlu0 %v1526, 127
      %v2189 = vpop.permute.xlu0 %2188
      %2190 = vrot.lane.b32.xlu0 %v282, 127
      %v2191 = vpop.permute.xlu0 %2190
      %v2192 = vsel %vm2130, %v2181, %v2187
      %v2193 = vsel %vm2130, %v2183, %v2189
      %v2194 = vsel %vm2130, %v2185, %v2191
      %v2195 = vsel %vm2130, %v2187, %v2181
      %v2196 = vsel %vm2130, %v2189, %v2183
      %v2197 = vsel %vm2130, %v2191, %v2185
      %v2198 = vmul.f32 %v2192, %v2143
      %v2199 = vmul.f32 %v2195, %v2147
      %v2200 = vmul.f32 %v2193, %v2143
      %v2201 = vmul.f32 %v2196, %v2147
      %v2202 = vmul.f32 %v2194, %v2143
      %v2203 = vmul.f32 %v2197, %v2147
      %2204 = vrot.lane.b32.xlu0 %v801, 113
      %v2205 = vpop.permute.xlu0 %2204
      %2206 = vrot.lane.b32.xlu0 %v1008, 113
      %v2207 = vpop.permute.xlu0 %2206
      %2208 = vrot.lane.b32.xlu0 %v279, 113
      %v2209 = vpop.permute.xlu0 %2208
      %2210 = vrot.lane.b32.xlu0 %v904, 113
      %v2211 = vpop.permute.xlu0 %2210
      %2212 = vrot.lane.b32.xlu0 %v1112, 113
      %v2213 = vpop.permute.xlu0 %2212
      %2214 = vrot.lane.b32.xlu0 %v280, 113
      %v2215 = vpop.permute.xlu0 %2214
      %vm2216 = vcmp.lt.s32.totalorder %v1954, 113
      %v2217 = vsel %vm2216, %v2205, %v2211
      %v2218 = vsel %vm2216, %v2207, %v2213
      %v2219 = vsel %vm2216, %v2209, %v2215
      %v2220 = vsel %vm2216, %v2211, %v2205
      %v2221 = vsel %vm2216, %v2213, %v2207
      %v2222 = vsel %vm2216, %v2215, %v2209
      %s2223 = scalar_lea.vmem %s1, 12
      %v2224 = vld [vmem:[%s2223] sm:$0x3]
      %v2226 = vlaneseq
      %v2227 = vshrl.u32 %v2226, 7
      %v2228 = vsub.s32 0, %v2227
      %v2229 = vrot.slane %v2224, %v2228
      %v2230 = vlaneseq
      %v2231 = vshrl.u32 %v2230, 7
      %v2232 = vsub.s32 1, %v2231
      %v2233 = vrot.slane %v2224, %v2232
      %v2236 = vmul.f32 %v2217, %v2229
      %v2237 = vmul.f32 %v2220, %v2233
      %v2238 = vmul.f32 %v2218, %v2229
      %v2239 = vmul.f32 %v2221, %v2233
      %v2240 = vmul.f32 %v2219, %v2229
      %v2241 = vmul.f32 %v2222, %v2233
      %2242 = vrot.lane.b32.xlu0 %v387, 112
      %v2243 = vpop.permute.xlu0 %2242
      %2244 = vrot.lane.b32.xlu0 %v594, 112
      %v2245 = vpop.permute.xlu0 %2244
      %2246 = vrot.lane.b32.xlu0 %v277, 112
      %v2247 = vpop.permute.xlu0 %2246
      %2248 = vrot.lane.b32.xlu0 %v490, 112
      %v2249 = vpop.permute.xlu0 %2248
      %2250 = vrot.lane.b32.xlu0 %v698, 112
      %v2251 = vpop.permute.xlu0 %2250
      %2252 = vrot.lane.b32.xlu0 %v278, 112
      %v2253 = vpop.permute.xlu0 %2252
      %vm2254 = vcmp.lt.s32.totalorder %v1954, 112
      %v2255 = vsel %vm2254, %v2243, %v2249
      %v2256 = vsel %vm2254, %v2245, %v2251
      %v2257 = vsel %vm2254, %v2247, %v2253
      %v2258 = vsel %vm2254, %v2249, %v2243
      %v2259 = vsel %vm2254, %v2251, %v2245
      %v2260 = vsel %vm2254, %v2253, %v2247
      %s2261 = scalar_lea.vmem %s1, 14
      %v2262 = vld [vmem:[%s2261] sm:$0x3]
      %v2264 = vlaneseq
      %v2265 = vshrl.u32 %v2264, 7
      %v2266 = vsub.s32 0, %v2265
      %v2267 = vrot.slane %v2262, %v2266
      %v2268 = vlaneseq
      %v2269 = vshrl.u32 %v2268, 7
      %v2270 = vsub.s32 1, %v2269
      %v2271 = vrot.slane %v2262, %v2270
      %v2274 = vmul.f32 %v2255, %v2267
      %v2275 = vmul.f32 %v2258, %v2271
      %v2276 = vmul.f32 %v2256, %v2267
      %v2277 = vmul.f32 %v2259, %v2271
      %v2278 = vmul.f32 %v2257, %v2267
      %v2279 = vmul.f32 %v2260, %v2271
      %2280 = vrot.lane.b32.xlu0 %v801, 112
      %v2281 = vpop.permute.xlu0 %2280
      %2282 = vrot.lane.b32.xlu0 %v1008, 112
      %v2283 = vpop.permute.xlu0 %2282
      %2284 = vrot.lane.b32.xlu0 %v279, 112
      %v2285 = vpop.permute.xlu0 %2284
      %2286 = vrot.lane.b32.xlu0 %v904, 112
      %v2287 = vpop.permute.xlu0 %2286
      %2288 = vrot.lane.b32.xlu0 %v1112, 112
      %v2289 = vpop.permute.xlu0 %2288
      %2290 = vrot.lane.b32.xlu0 %v280, 112
      %v2291 = vpop.permute.xlu0 %2290
      %v2292 = vsel %vm2254, %v2281, %v2287
      %v2293 = vsel %vm2254, %v2283, %v2289
      %v2294 = vsel %vm2254, %v2285, %v2291
      %v2295 = vsel %vm2254, %v2287, %v2281
      %v2296 = vsel %vm2254, %v2289, %v2283
      %v2297 = vsel %vm2254, %v2291, %v2285
      %v2298 = vmul.f32 %v2292, %v2267
      %v2299 = vmul.f32 %v2295, %v2271
      %v2300 = vmul.f32 %v2293, %v2267
      %v2301 = vmul.f32 %v2296, %v2271
      %v2302 = vmul.f32 %v2294, %v2267
      %v2303 = vmul.f32 %v2297, %v2271
      %2304 = vrot.lane.b32.xlu0 %v387, 111
      %v2305 = vpop.permute.xlu0 %2304
      %2306 = vrot.lane.b32.xlu0 %v594, 111
      %v2307 = vpop.permute.xlu0 %2306
      %2308 = vrot.lane.b32.xlu0 %v277, 111
      %v2309 = vpop.permute.xlu0 %2308
      %2310 = vrot.lane.b32.xlu0 %v490, 111
      %v2311 = vpop.permute.xlu0 %2310
      %2312 = vrot.lane.b32.xlu0 %v698, 111
      %v2313 = vpop.permute.xlu0 %2312
      %2314 = vrot.lane.b32.xlu0 %v278, 111
      %v2315 = vpop.permute.xlu0 %2314
      %vm2316 = vcmp.lt.s32.totalorder %v1954, 111
      %v2317 = vsel %vm2316, %v2305, %v2311
      %v2318 = vsel %vm2316, %v2307, %v2313
      %v2319 = vsel %vm2316, %v2309, %v2315
      %v2320 = vsel %vm2316, %v2311, %v2305
      %v2321 = vsel %vm2316, %v2313, %v2307
      %v2322 = vsel %vm2316, %v2315, %v2309
      %s2323 = scalar_lea.vmem %s1, 16
      %v2324 = vld [vmem:[%s2323] sm:$0x3]
      %v2326 = vlaneseq
      %v2327 = vshrl.u32 %v2326, 7
      %v2328 = vsub.s32 0, %v2327
      %v2329 = vrot.slane %v2324, %v2328
      %v2330 = vlaneseq
      %v2331 = vshrl.u32 %v2330, 7
      %v2332 = vsub.s32 1, %v2331
      %v2333 = vrot.slane %v2324, %v2332
      %v2336 = vmul.f32 %v2317, %v2329
      %v2337 = vmul.f32 %v2320, %v2333
      %v2338 = vmul.f32 %v2318, %v2329
      %v2339 = vmul.f32 %v2321, %v2333
      %v2340 = vmul.f32 %v2319, %v2329
      %v2341 = vmul.f32 %v2322, %v2333
      %v2342 = vld [vmem:[%s2] sm:$0xff]
      %v2343 = vld [vmem:[%s2 + $0x8] sm:$0xff]
      %v2344 = vld [vmem:[%s2 + $0x10] sm:$0xff]
      %v2345 = vld [vmem:[%s2 + $0x18] sm:$0xff]
      %v2346 = vld [vmem:[%s2 + $0x20] sm:$0xff]
      %v2347 = vld [vmem:[%s2 + $0x28] sm:$0xff]
      %v2348 = vld [vmem:[%s3] sm:$0xff]
      %v2349 = vld [vmem:[%s3 + $0x8] sm:$0xff]
      %2351 = vset.pattern.permute.xlu0 0
      %2352 = vperm.xlu0 %2351, %v2348
      %v2353 = vpop.permute.xlu0 %2352
      %2356 = vset.pattern.permute.xlu0 0
      %2357 = vperm.xlu0 %2356, %v2349
      %v2358 = vpop.permute.xlu0 %2357
      %2360 = vmatprep.subr.mxu0 %v1975
      %2361 = vmatpush1.msra.mxu0 %v1974
      %2362 = vmatprep.subr.mxu0 %v1977
      %2363 = vmatpush1.msra.mxu0 %v1976
      %2364 = vmatprep.subr.mxu0 %v1979
      %2365 = vmatpush1.msra.mxu0 %v1978
      %2366 = vmatprep.subr.mxu0 %v2013
      %2367 = vmatpush1.msra.mxu0 %v2012
      %2368 = vmatprep.subr.mxu0 %v2015
      %2369 = vmatpush1.msra.mxu0 %v2014
      %2370 = vmatprep.subr.mxu0 %v2017
      %2371 = vmatpush1.msra.mxu0 %v2016
      %2372 = vmatprep.subr.mxu0 %v2037
      %2373 = vmatpush1.msra.mxu0 %v2036
      %2374 = vmatprep.subr.mxu0 %v2039
      %2375 = vmatpush1.msra.mxu0 %v2038
      %2376 = vmatprep.subr.mxu0 %v2041
      %2377 = vmatpush1.msra.mxu0 %v2040
      %2378 = vmatprep.subr.mxu0 %v2075
      %2379 = vmatpush1.msra.mxu0 %v2074
      %2380 = vmatprep.subr.mxu0 %v2077
      %2381 = vmatpush1.msra.mxu0 %v2076
      %2382 = vmatprep.subr.mxu0 %v2079
      %2383 = vmatpush1.msra.mxu0 %v2078
      %2384 = vmatprep.subr.mxu0 %v2113
      %2385 = vmatpush1.msra.mxu0 %v2112
      %2386 = vmatprep.subr.mxu0 %v2115
      %2387 = vmatpush1.msra.mxu0 %v2114
      %2388 = vmatprep.subr.mxu0 %v2117
      %2389 = vmatpush1.msra.mxu0 %v2116
      %2390 = vmatprep.subr.mxu0 %v490
      %2391 = vmatpush1.msra.mxu0 %v387
      %2392 = vmatprep.subr.mxu0 %v698
      %2393 = vmatpush1.msra.mxu0 %v594
      %2394 = vmatprep.subr.mxu0 %v278
      %2395 = vmatpush1.msra.mxu0 %v277
      %2396 = vmatprep.subr.mxu0 %v904
      %2397 = vmatpush1.msra.mxu0 %v801
      %2398 = vmatprep.subr.mxu0 %v1112
      %2399 = vmatpush1.msra.mxu0 %v1008
      %2400 = vmatprep.subr.mxu0 %v280
      %2401 = vmatpush1.msra.mxu0 %v279
      %2402 = vmatprep.subr.mxu0 %v2151
      %2403 = vmatpush1.msra.mxu0 %v2150
      %2404 = vmatprep.subr.mxu0 %v2153
      %2405 = vmatpush1.msra.mxu0 %v2152
      %2406 = vmatprep.subr.mxu0 %v2155
      %2407 = vmatpush1.msra.mxu0 %v2154
      %2408 = vmatprep.subr.mxu0 %v2175
      %2409 = vmatpush1.msra.mxu0 %v2174
      %2410 = vmatprep.subr.mxu0 %v2177
      %2411 = vmatpush1.msra.mxu0 %v2176
      %2412 = vmatprep.subr.mxu0 %v2179
      %2413 = vmatpush1.msra.mxu0 %v2178
      %2414 = vmatprep.subr.mxu0 %v1318
      %2415 = vmatpush1.msra.mxu0 %v1215
      %2416 = vmatprep.subr.mxu0 %v1526
      %2417 = vmatpush1.msra.mxu0 %v1422
      %2418 = vmatprep.subr.mxu0 %v282
      %2419 = vmatpush1.msra.mxu0 %v281
      %2420 = vmatprep.subr.mxu0 %v1732
      %2421 = vmatpush1.msra.mxu0 %v1629
      %2422 = vmatprep.subr.mxu0 %v1940
      %2423 = vmatpush1.msra.mxu0 %v1836
      %2424 = vmatprep.mubr.f32.mxu0 %v2343
      %2425 = vmatmul.mubr.f32.gmra.mrb[0].mxu0 %v2342
      %v2426 = vpop.f32.mrb[0].mxu0
      %v2427 = vadd.f32 %v2353, %v2426
      %v2428 = vpop.f32.mrb[0].mxu0
      %v2429 = vadd.f32 %v2353, %v2428
      %2430 = vmatprep.mubr.f32.mxu0 %v2346
      %2431 = vmatmul.mubr.f32.gmra.mrb[0].mxu0 %v2345
      %v2432 = vpop.f32.mrb[0].mxu0
      %v2433 = vadd.f32 %v2358, %v2432
      %v2434 = vpop.f32.mrb[0].mxu0
      %v2435 = vadd.f32 %v2358, %v2434
      %2436 = vdwg.mxu0
      %2437 = vmatprep.subr.mxu0 %v284
      %2438 = vmatpush1.msra.mxu0 %v283
      %2439 = vmatprep.subr.mxu0 %v2199
      %2440 = vmatpush1.msra.mxu0 %v2198
      %2441 = vmatprep.subr.mxu0 %v2201
      %2442 = vmatpush1.msra.mxu0 %v2200
      %2443 = vmatprep.subr.mxu0 %v2203
      %2444 = vmatpush1.msra.mxu0 %v2202
      %2445 = vmatprep.subr.mxu0 %v2237
      %2446 = vmatpush1.msra.mxu0 %v2236
      %2447 = vmatprep.subr.mxu0 %v2239
      %2448 = vmatpush1.msra.mxu0 %v2238
      %2449 = vmatprep.subr.mxu0 %v2241
      %2450 = vmatpush1.msra.mxu0 %v2240
      %2451 = vmatprep.subr.mxu0 %v2275
      %2452 = vmatpush1.msra.mxu0 %v2274
      %2453 = vmatprep.subr.mxu0 %v2277
      %2454 = vmatpush1.msra.mxu0 %v2276
      %2455 = vmatprep.subr.mxu0 %v2279
      %2456 = vmatpush1.msra.mxu0 %v2278
      %2457 = vmatprep.subr.mxu0 %v2299
      %2458 = vmatpush1.msra.mxu0 %v2298
      %2459 = vmatprep.subr.mxu0 %v2301
      %2460 = vmatpush1.msra.mxu0 %v2300
      %2461 = vmatprep.subr.mxu0 %v2303
      %2462 = vmatpush1.msra.mxu0 %v2302
      %2463 = vmatprep.subr.mxu0 %v2337
      %2464 = vmatpush1.msra.mxu0 %v2336
      %2465 = vmatprep.subr.mxu0 %v2339
      %2466 = vmatpush1.msra.mxu0 %v2338
      %2467 = vmatprep.subr.mxu0 %v2341
      %2468 = vmatpush1.msra.mxu0 %v2340
      %2469 = vmatprep.subr.mxu0 0.0
      %2470 = vmatpush1.msra.mxu0 0.0
      %2471 = vmatprep.subr.mxu0 0.0
      %2472 = vmatpush1.msra.mxu0 0.0
      %2473 = vmatprep.subr.mxu0 0.0
      %2474 = vmatpush1.msra.mxu0 0.0
      %2475 = vmatprep.subr.mxu0 0.0
      %2476 = vmatpush1.msra.mxu0 0.0
      %2477 = vmatprep.subr.mxu0 0.0
      %2478 = vmatpush1.msra.mxu0 0.0
      %2479 = vmatprep.subr.mxu0 0.0
      %2480 = vmatpush1.msra.mxu0 0.0
      %2481 = vmatprep.subr.mxu0 0.0
      %2482 = vmatpush1.msra.mxu0 0.0
      %2483 = vmatprep.subr.mxu0 0.0
      %2484 = vmatpush1.msra.mxu0 0.0
      %2485 = vmatprep.subr.mxu0 0.0
      %2486 = vmatpush1.msra.mxu0 0.0
      %2487 = vmatprep.subr.mxu0 0.0
      %2488 = vmatpush1.msra.mxu0 0.0
      %2489 = vmatprep.subr.mxu0 0.0
      %2490 = vmatpush1.msra.mxu0 0.0
      %2491 = vmatprep.subr.mxu0 0.0
      %2492 = vmatpush1.msra.mxu0 0.0
      %2493 = vmatprep.subr.mxu0 0.0
      %2494 = vmatpush1.msra.mxu0 0.0
      %2495 = vmatprep.subr.mxu0 0.0
      %2496 = vmatpush1.msra.mxu0 0.0
      %2497 = vmatprep.subr.mxu0 0.0
      %2498 = vmatpush1.msra.mxu0 0.0
      %2499 = vmatprep.subr.mxu0 0.0
      %2500 = vmatpush1.msra.mxu0 0.0
      %2501 = vmatprep.mubr.f32.mxu0 0.0
      %2502 = vmatmul.mubr.f32.gmra.mrb[0].mxu0 %v2344
      %v2503 = vpop.f32.mrb[0].mxu0
      %v2504 = vadd.f32 %v2427, %v2503
      %v2505 = vpop.f32.mrb[0].mxu0
      %v2506 = vadd.f32 %v2429, %v2505
      %2507 = vmatprep.mubr.f32.mxu0 0.0
      %2508 = vmatmul.mubr.f32.gmra.mrb[0].mxu0 %v2347
      %v2509 = vpop.f32.mrb[0].mxu0
      %v2510 = vadd.f32 %v2433, %v2509
      %v2511 = vpop.f32.mrb[0].mxu0
      %v2512 = vadd.f32 %v2435, %v2511
      %2513 = vdwg.mxu0
      %2514 = vst [vmem:[%s266] sm:$0xff] %v2504
      %2515 = vst [vmem:[%s266 + $0x8] sm:$0xff] %v2506
      %2516 = vst [vmem:[%s266 + $0x10] sm:$0xff] %v2510
      %2517 = vst [vmem:[%s266 + $0x18] sm:$0xff] %v2512
      %v2518 = vadd.f32 %v2504, %v2506
      %2519 = vadd.xlane.f32.xlu0 %v2518
      %v2520 = vpop.xlane.xlu0 %2519
      %v2521 = vadd.f32 %v2510, %v2512
      %2522 = vadd.xlane.f32.xlu0 %v2521
      %v2523 = vpop.xlane.xlu0 %2522
      %vm2524 = vcmask 7168
      %2525 = vst.msk [vmem:[%s271] sm:$0xff] %vm2524, %v2520
      %2526 = vst.msk [vmem:[%s271 + $0x8] sm:$0xff] %vm2524, %v2523
      %v2527 = vmul.f32 %v2504, %v2504
      %v2528 = vmul.f32 %v2506, %v2506
      %v2529 = vmul.f32 %v2510, %v2510
      %v2530 = vmul.f32 %v2512, %v2512
      %v2531 = vadd.f32 %v2527, %v2528
      %2532 = vadd.xlane.f32.xlu0 %v2531
      %v2533 = vpop.xlane.xlu0 %2532
      %v2534 = vadd.f32 %v2529, %v2530
      %2535 = vadd.xlane.f32.xlu0 %v2534
      %v2536 = vpop.xlane.xlu0 %2535
      %2537 = vst.msk [vmem:[%s276] sm:$0xff] %vm2524, %v2533
      %2538 = vst.msk [vmem:[%s276 + $0x8] sm:$0xff] %vm2524, %v2536
      %p2539 = scmp.lt.s32.totalorder %s18, 1
      %s2540 = scalar_select %p2539, %s18, 1
      %s2541 = smul.addr %s2540, 4
      %s2542 = smul.addr %s2541, 8
      %s2543 = scalar_lea.vmem %s4, %s2542
      %p2544 = scmp.lt.s32.totalorder %s18, 1
      %s2545 = scalar_select %p2544, %s18, 1
      %s2546 = smul.addr %s2545, 2
      %s2547 = smul.addr %s2546, 8
      %s2548 = scalar_lea.vmem %s5, %s2547
      %p2549 = scmp.lt.s32.totalorder %s18, 1
      %s2550 = scalar_select %p2549, %s18, 1
      %s2551 = smul.addr %s2550, 2
      %s2552 = smul.addr %s2551, 8
      %s2553 = scalar_lea.vmem %s6, %s2552
      // Predicated region
      $region37: #{forward.4} parent=35 // pred_check
        %p2554 = pneg %p125
      $region38: #{forward.4} parent=35 // pred_check_branch
        %2556 = sbr.rel (%p2554) target = $region40
      $region39: #{forward.4} parent=35 // pred_region
        _
      $region40: #{forward.4} parent=35 // pred_fallthru
        _
      // Predicated region
      $region41: #{forward.4} parent=35 // pred_check
        %p2557 = pneg %p151
      $region42: #{forward.4} parent=35 // pred_check_branch
        %2559 = sbr.rel (%p2557) target = $region44
      $region43: #{forward.4} parent=35 // pred_region
        _
      $region44: #{forward.4} parent=35 // pred_fallthru
        _
      // Predicated region
      $region45: #{forward.4} parent=35 // pred_check
        %p2560 = pneg %p177
      $region46: #{forward.4} parent=35 // pred_check_branch
        %2562 = sbr.rel (%p2560) target = $region48
      $region47: #{forward.4} parent=35 // pred_region
        _
      $region48: #{forward.4} parent=35 // pred_fallthru
        _
    $region36: #{forward.4} parent=5 // pred_fallthru
      _
    %p2563 = scmp.le.s32.totalorder 2, %s13
    // Predicated region
    $region49: #{forward.4} parent=5 // pred_check
      %p2564 = pneg %p2563
    $region50: #{forward.4} parent=5 // pred_check_branch
      %2566 = sbr.rel (%p2564) target = $region52
    $region51: #{forward.4} parent=5 // pred_region
      %s2567 = ssub.s32 %s13, 2
      // Predicated region
      $region53: #{forward.4} parent=51 // pred_check
        %p2568 = pneg %p131
      $region54: #{forward.4} parent=51 // pred_check_branch
        %2570 = sbr.rel (%p2568) target = $region56
      $region55: #{forward.4} parent=51 // pred_region
        %p2571 = scmp.lt.s32.totalorder %s19, 1
        %s2572 = scalar_select %p2571, %s19, 1
        %s2573 = smul.addr %s2572, 4
        %s2574 = smul.addr %s2573, 8
        %s2575 = scalar_lea.vmem %s4, %s2574
      $region56: #{forward.4} parent=51 // pred_fallthru
        _
      // Predicated region
      $region57: #{forward.4} parent=51 // pred_check
        %p2576 = pneg %p157
      $region58: #{forward.4} parent=51 // pred_check_branch
        %2578 = sbr.rel (%p2576) target = $region60
      $region59: #{forward.4} parent=51 // pred_region
        %p2579 = scmp.lt.s32.totalorder %s19, 1
        %s2580 = scalar_select %p2579, %s19, 1
        %s2581 = smul.addr %s2580, 2
        %s2582 = smul.addr %s2581, 8
        %s2583 = scalar_lea.vmem %s5, %s2582
      $region60: #{forward.4} parent=51 // pred_fallthru
        _
      // Predicated region
      $region61: #{forward.4} parent=51 // pred_check
        %p2584 = pneg %p183
      $region62: #{forward.4} parent=51 // pred_check_branch
        %2586 = sbr.rel (%p2584) target = $region64
      $region63: #{forward.4} parent=51 // pred_region
        %p2587 = scmp.lt.s32.totalorder %s19, 1
        %s2588 = scalar_select %p2587, %s19, 1
        %s2589 = smul.addr %s2588, 2
        %s2590 = smul.addr %s2589, 8
        %s2591 = scalar_lea.vmem %s6, %s2590
      $region64: #{forward.4} parent=51 // pred_fallthru
        _
    $region52: #{forward.4} parent=5 // pred_fallthru
      _
  $region6: #{forward.4} parent=0 // loop_footer
    %s17 = sadd.s32 1, %s13
  $region7: #{forward.4} parent=0 // loop_footer_branch
    %12 = sbr.rel target = $region3
  $region8: #{forward.4} parent=0 // loop_exit
    _

// kernel: forward.5
$region0: #{forward.5}
  #allocation0 [shape = 'u32[]', space=smem, size = 0x4, offset = 0x4, fixed_abs, tag = 'smem constant byte address 0x4 - core index']
  #allocation1 [shape = 'u32[144,128]{1,0:T(1,128)}', space=vmem, size = 0x12000, scoped, tag = 'internal scratch']
  %s0 = inlined_call_operand.vmem [shape: f32[2,16,256], index: 0, kind: input, shape index: {}]
  %s1 = inlined_call_operand.vmem [shape: f32[16,1], index: 1, kind: input, shape index: {}]
  %s2 = inlined_call_operand.vmem [shape: f32[16,1], index: 2, kind: input, shape index: {}]
  %s3 = inlined_call_operand.vmem [shape: f32[9,1,256], index: 3, kind: input, shape index: {}]
  %s4 = inlined_call_operand.vmem [shape: f32[9,4,4], index: 4, kind: input, shape index: {}]
  %s5 = inlined_call_operand.vmem [shape: f32[9,4,4], index: 5, kind: input, shape index: {}]
  %s6 = inlined_call_operand.vmem [shape: f32[9,4,4], index: 6, kind: input, shape index: {}]
  %s7 = inlined_call_operand.vmem [shape: f32[4,1], index: 7, kind: input, shape index: {}]
  %s8 = inlined_call_operand.vmem [shape: f32[2,16,256], index: 8, kind: output, shape index: {0}]
  %s9 = inlined_call_operand.vmem [shape: f32[2,4,256], index: 9, kind: output, shape index: {1}]
  %s10 = inlined_call_operand.vmem [shape: f32[2,4,1], index: 10, kind: output, shape index: {2}]
  %s11 = inlined_call_operand.vmem [shape: f32[2,4,1], index: 11, kind: output, shape index: {3}]
  %12 = xla_tuple %s8, %s9, %s10, %s11
  %s13 = sld [smem:[#allocation0]]
  $region89: #{forward.5} parent=0
    _
  %s15 = ssub.s32 1, %s13
  %s16 = scalar_select 0, %s15, %s13
  loop: start=0, step=1, limit=4
  $region2: #{forward.5} parent=0 // loop_pre_header
    _
  $region3: #{forward.5} parent=0 // loop_header
    %s18 = sphi 0, %s22
    %p19 = scmp.ge.s32.totalorder %s18, 4
    %s28 = sphi 0, %s30
    %s31 = sphi 0, %s28
    %s32 = sphi 0, %s31
    %s48 = sphi 0, %s32
    %s52 = sphi 0, %s52
    %s54 = sphi 0, %s52
    %s55 = sphi 0, %s54
    %s69 = sphi 0, %s55
    %s73 = sphi 0, %s73
    %s75 = sphi 0, %s73
    %s76 = sphi 0, %s75
    %s90 = sphi 0, %s76
    %s94 = sphi 0, %s94
    %s96 = sphi 0, %s94
    %s97 = sphi 0, %s96
    %s111 = sphi 0, %s97
    %s115 = sphi 0, %s115
    %s117 = sphi 0, %s115
    %s118 = sphi 0, %s117
    %s132 = sphi 0, %s118
    %s136 = sphi 0, %s136
    %s138 = sphi 0, %s136
    %s139 = sphi 0, %s138
    %s153 = sphi 0, %s139
    %s157 = sphi 0, %s157
    %s159 = sphi 0, %s157
    %s160 = sphi 0, %s159
    %s174 = sphi 0, %s160
    %s178 = sphi 0, %s178
    %s180 = sphi 0, %s178
    %s181 = sphi 0, %s180
    %s195 = sphi 0, %s181
    %s201 = sphi 0, %s203
    %s204 = sphi 0, %s201
    %s205 = sphi 0, %s204
    %s221 = sphi 0, %s205
    %s227 = sphi 0, %s229
    %s230 = sphi 0, %s227
    %s231 = sphi 0, %s230
    %s247 = sphi 0, %s231
    %s253 = sphi 0, %s255
    %s256 = sphi 0, %s253
    %s257 = sphi 0, %s256
    %s273 = sphi 0, %s257
    %s279 = sphi 0, %s281
    %s282 = sphi 0, %s279
    %s283 = sphi 0, %s282
    %s299 = sphi 0, %s283
  $region4: #{forward.5} parent=0 // loop_header_branch
    %21 = sbr.rel (%p19) target = $region8
  $region5: #{forward.5} parent=0 // loop_body
    %s23 = ssub.s32 %s18, 1
    %s24 = ssub.s32 %s18, 2
    %s25 = sadd.s32 %s18, 1
    %s26 = ssub.s32 %s18, %s25
    %p27 = scmp.eq.s32.totalorder %s26, 0
    %s29 = sadd.s32 %s28, 1
    %s30 = scalar_select %p27, %s28, %s29
    %p33 = pneg %p27
    %p34 = scmp.eq.s32.totalorder %s18, 1
    %p35 = por %p33, %p34
    %p36 = scmp.ne.s32.totalorder %s28, %s31
    %p37 = scmp.eq.s32.totalorder %s18, 0
    %p38 = por %p36, %p37
    %p39 = scmp.ne.s32.totalorder %s28, %s31
    %p40 = scmp.eq.s32.totalorder %s23, 1
    %p41 = por %p39, %p40
    %p42 = scmp.ne.s32.totalorder %s31, %s32
    %p43 = scmp.eq.s32.totalorder %s23, 0
    %p44 = por %p42, %p43
    %p45 = scmp.ne.s32.totalorder %s31, %s32
    %p46 = scmp.eq.s32.totalorder %s24, 1
    %p47 = por %p45, %p46
    %p49 = scmp.ne.s32.totalorder %s32, %s48
    %p50 = scmp.eq.s32.totalorder %s24, 0
    %p51 = por %p49, %p50
    %s53 = sadd.s32 %s52, 1
    %p56 = scmp.eq.s32.totalorder %s18, 1
    %p57 = scmp.ne.s32.totalorder %s52, %s54
    %p58 = scmp.eq.s32.totalorder %s18, 0
    %p59 = por %p57, %p58
    %p60 = scmp.ne.s32.totalorder %s52, %s54
    %p61 = scmp.eq.s32.totalorder %s23, 1
    %p62 = por %p60, %p61
    %p63 = scmp.ne.s32.totalorder %s54, %s55
    %p64 = scmp.eq.s32.totalorder %s23, 0
    %p65 = por %p63, %p64
    %p66 = scmp.ne.s32.totalorder %s54, %s55
    %p67 = scmp.eq.s32.totalorder %s24, 1
    %p68 = por %p66, %p67
    %p70 = scmp.ne.s32.totalorder %s55, %s69
    %p71 = scmp.eq.s32.totalorder %s24, 0
    %p72 = por %p70, %p71
    %s74 = sadd.s32 %s73, 1
    %p77 = scmp.eq.s32.totalorder %s18, 1
    %p78 = scmp.ne.s32.totalorder %s73, %s75
    %p79 = scmp.eq.s32.totalorder %s18, 0
    %p80 = por %p78, %p79
    %p81 = scmp.ne.s32.totalorder %s73, %s75
    %p82 = scmp.eq.s32.totalorder %s23, 1
    %p83 = por %p81, %p82
    %p84 = scmp.ne.s32.totalorder %s75, %s76
    %p85 = scmp.eq.s32.totalorder %s23, 0
    %p86 = por %p84, %p85
    %p87 = scmp.ne.s32.totalorder %s75, %s76
    %p88 = scmp.eq.s32.totalorder %s24, 1
    %p89 = por %p87, %p88
    %p91 = scmp.ne.s32.totalorder %s76, %s90
    %p92 = scmp.eq.s32.totalorder %s24, 0
    %p93 = por %p91, %p92
    %s95 = sadd.s32 %s94, 1
    %p98 = scmp.eq.s32.totalorder %s18, 1
    %p99 = scmp.ne.s32.totalorder %s94, %s96
    %p100 = scmp.eq.s32.totalorder %s18, 0
    %p101 = por %p99, %p100
    %p102 = scmp.ne.s32.totalorder %s94, %s96
    %p103 = scmp.eq.s32.totalorder %s23, 1
    %p104 = por %p102, %p103
    %p105 = scmp.ne.s32.totalorder %s96, %s97
    %p106 = scmp.eq.s32.totalorder %s23, 0
    %p107 = por %p105, %p106
    %p108 = scmp.ne.s32.totalorder %s96, %s97
    %p109 = scmp.eq.s32.totalorder %s24, 1
    %p110 = por %p108, %p109
    %p112 = scmp.ne.s32.totalorder %s97, %s111
    %p113 = scmp.eq.s32.totalorder %s24, 0
    %p114 = por %p112, %p113
    %s116 = sadd.s32 %s115, 1
    %p119 = scmp.eq.s32.totalorder %s18, 1
    %p120 = scmp.ne.s32.totalorder %s115, %s117
    %p121 = scmp.eq.s32.totalorder %s18, 0
    %p122 = por %p120, %p121
    %p123 = scmp.ne.s32.totalorder %s115, %s117
    %p124 = scmp.eq.s32.totalorder %s23, 1
    %p125 = por %p123, %p124
    %p126 = scmp.ne.s32.totalorder %s117, %s118
    %p127 = scmp.eq.s32.totalorder %s23, 0
    %p128 = por %p126, %p127
    %p129 = scmp.ne.s32.totalorder %s117, %s118
    %p130 = scmp.eq.s32.totalorder %s24, 1
    %p131 = por %p129, %p130
    %p133 = scmp.ne.s32.totalorder %s118, %s132
    %p134 = scmp.eq.s32.totalorder %s24, 0
    %p135 = por %p133, %p134
    %s137 = sadd.s32 %s136, 1
    %p140 = scmp.eq.s32.totalorder %s18, 1
    %p141 = scmp.ne.s32.totalorder %s136, %s138
    %p142 = scmp.eq.s32.totalorder %s18, 0
    %p143 = por %p141, %p142
    %p144 = scmp.ne.s32.totalorder %s136, %s138
    %p145 = scmp.eq.s32.totalorder %s23, 1
    %p146 = por %p144, %p145
    %p147 = scmp.ne.s32.totalorder %s138, %s139
    %p148 = scmp.eq.s32.totalorder %s23, 0
    %p149 = por %p147, %p148
    %p150 = scmp.ne.s32.totalorder %s138, %s139
    %p151 = scmp.eq.s32.totalorder %s24, 1
    %p152 = por %p150, %p151
    %p154 = scmp.ne.s32.totalorder %s139, %s153
    %p155 = scmp.eq.s32.totalorder %s24, 0
    %p156 = por %p154, %p155
    %s158 = sadd.s32 %s157, 1
    %p161 = scmp.eq.s32.totalorder %s18, 1
    %p162 = scmp.ne.s32.totalorder %s157, %s159
    %p163 = scmp.eq.s32.totalorder %s18, 0
    %p164 = por %p162, %p163
    %p165 = scmp.ne.s32.totalorder %s157, %s159
    %p166 = scmp.eq.s32.totalorder %s23, 1
    %p167 = por %p165, %p166
    %p168 = scmp.ne.s32.totalorder %s159, %s160
    %p169 = scmp.eq.s32.totalorder %s23, 0
    %p170 = por %p168, %p169
    %p171 = scmp.ne.s32.totalorder %s159, %s160
    %p172 = scmp.eq.s32.totalorder %s24, 1
    %p173 = por %p171, %p172
    %p175 = scmp.ne.s32.totalorder %s160, %s174
    %p176 = scmp.eq.s32.totalorder %s24, 0
    %p177 = por %p175, %p176
    %s179 = sadd.s32 %s178, 1
    %p182 = scmp.eq.s32.totalorder %s18, 1
    %p183 = scmp.ne.s32.totalorder %s178, %s180
    %p184 = scmp.eq.s32.totalorder %s18, 0
    %p185 = por %p183, %p184
    %p186 = scmp.ne.s32.totalorder %s178, %s180
    %p187 = scmp.eq.s32.totalorder %s23, 1
    %p188 = por %p186, %p187
    %p189 = scmp.ne.s32.totalorder %s180, %s181
    %p190 = scmp.eq.s32.totalorder %s23, 0
    %p191 = por %p189, %p190
    %p192 = scmp.ne.s32.totalorder %s180, %s181
    %p193 = scmp.eq.s32.totalorder %s24, 1
    %p194 = por %p192, %p193
    %p196 = scmp.ne.s32.totalorder %s181, %s195
    %p197 = scmp.eq.s32.totalorder %s24, 0
    %p198 = por %p196, %p197
    %s199 = ssub.s32 %s18, %s25
    %p200 = scmp.eq.s32.totalorder %s199, 0
    %s202 = sadd.s32 %s201, 1
    %s203 = scalar_select %p200, %s201, %s202
    %p206 = pneg %p200
    %p207 = scmp.eq.s32.totalorder %s18, 1
    %p208 = por %p206, %p207
    %p209 = scmp.ne.s32.totalorder %s201, %s204
    %p210 = scmp.eq.s32.totalorder %s18, 0
    %p211 = por %p209, %p210
    %p212 = scmp.ne.s32.totalorder %s201, %s204
    %p213 = scmp.eq.s32.totalorder %s23, 1
    %p214 = por %p212, %p213
    %p215 = scmp.ne.s32.totalorder %s204, %s205
    %p216 = scmp.eq.s32.totalorder %s23, 0
    %p217 = por %p215, %p216
    %p218 = scmp.ne.s32.totalorder %s204, %s205
    %p219 = scmp.eq.s32.totalorder %s24, 1
    %p220 = por %p218, %p219
    %p222 = scmp.ne.s32.totalorder %s205, %s221
    %p223 = scmp.eq.s32.totalorder %s24, 0
    %p224 = por %p222, %p223
    %s225 = ssub.s32 %s18, %s25
    %p226 = scmp.eq.s32.totalorder %s225, 0
    %s228 = sadd.s32 %s227, 1
    %s229 = scalar_select %p226, %s227, %s228
    %p232 = pneg %p226
    %p233 = scmp.eq.s32.totalorder %s18, 1
    %p234 = por %p232, %p233
    %p235 = scmp.ne.s32.totalorder %s227, %s230
    %p236 = scmp.eq.s32.totalorder %s18, 0
    %p237 = por %p235, %p236
    %p238 = scmp.ne.s32.totalorder %s227, %s230
    %p239 = scmp.eq.s32.totalorder %s23, 1
    %p240 = por %p238, %p239
    %p241 = scmp.ne.s32.totalorder %s230, %s231
    %p242 = scmp.eq.s32.totalorder %s23, 0
    %p243 = por %p241, %p242
    %p244 = scmp.ne.s32.totalorder %s230, %s231
    %p245 = scmp.eq.s32.totalorder %s24, 1
    %p246 = por %p244, %p245
    %p248 = scmp.ne.s32.totalorder %s231, %s247
    %p249 = scmp.eq.s32.totalorder %s24, 0
    %p250 = por %p248, %p249
    %s251 = ssub.s32 %s18, %s25
    %p252 = scmp.eq.s32.totalorder %s251, 0
    %s254 = sadd.s32 %s253, 1
    %s255 = scalar_select %p252, %s253, %s254
    %p258 = pneg %p252
    %p259 = scmp.eq.s32.totalorder %s18, 1
    %p260 = por %p258, %p259
    %p261 = scmp.ne.s32.totalorder %s253, %s256
    %p262 = scmp.eq.s32.totalorder %s18, 0
    %p263 = por %p261, %p262
    %p264 = scmp.ne.s32.totalorder %s253, %s256
    %p265 = scmp.eq.s32.totalorder %s23, 1
    %p266 = por %p264, %p265
    %p267 = scmp.ne.s32.totalorder %s256, %s257
    %p268 = scmp.eq.s32.totalorder %s23, 0
    %p269 = por %p267, %p268
    %p270 = scmp.ne.s32.totalorder %s256, %s257
    %p271 = scmp.eq.s32.totalorder %s24, 1
    %p272 = por %p270, %p271
    %p274 = scmp.ne.s32.totalorder %s257, %s273
    %p275 = scmp.eq.s32.totalorder %s24, 0
    %p276 = por %p274, %p275
    %s277 = ssub.s32 %s18, %s25
    %p278 = scmp.eq.s32.totalorder %s277, 0
    %s280 = sadd.s32 %s279, 1
    %s281 = scalar_select %p278, %s279, %s280
    %p284 = pneg %p278
    %p285 = scmp.eq.s32.totalorder %s18, 1
    %p286 = por %p284, %p285
    %p287 = scmp.ne.s32.totalorder %s279, %s282
    %p288 = scmp.eq.s32.totalorder %s18, 0
    %p289 = por %p287, %p288
    %p290 = scmp.ne.s32.totalorder %s279, %s282
    %p291 = scmp.eq.s32.totalorder %s23, 1
    %p292 = por %p290, %p291
    %p293 = scmp.ne.s32.totalorder %s282, %s283
    %p294 = scmp.eq.s32.totalorder %s23, 0
    %p295 = por %p293, %p294
    %p296 = scmp.ne.s32.totalorder %s282, %s283
    %p297 = scmp.eq.s32.totalorder %s24, 1
    %p298 = por %p296, %p297
    %p300 = scmp.ne.s32.totalorder %s283, %s299
    %p301 = scmp.eq.s32.totalorder %s24, 0
    %p302 = por %p300, %p301
    %p303 = scmp.le.s32.totalorder 1, %s18
    %p304 = scmp.lt.s32.totalorder %s18, 3
    %p305 = pnand %p303, %p304
    %p306 = pneg %p305
    // Predicated region
    $region9: #{forward.5} parent=5 // pred_check
      _
    $region10: #{forward.5} parent=5 // pred_check_branch
      %308 = sbr.rel (%p305) target = $region12
    $region11: #{forward.5} parent=5 // pred_region
      %s309 = ssub.s32 %s18, 1
      // Predicated region
      $region13: #{forward.5} parent=11 // pred_check
        %p310 = pneg %p65
      $region14: #{forward.5} parent=11 // pred_check_branch
        %312 = sbr.rel (%p310) target = $region16
      $region15: #{forward.5} parent=11 // pred_region
        _
      $region16: #{forward.5} parent=11 // pred_fallthru
        _
      // Predicated region
      $region17: #{forward.5} parent=11 // pred_check
        %p313 = pneg %p86
      $region18: #{forward.5} parent=11 // pred_check_branch
        %315 = sbr.rel (%p313) target = $region20
      $region19: #{forward.5} parent=11 // pred_region
        _
      $region20: #{forward.5} parent=11 // pred_fallthru
        _
      // Predicated region
      $region21: #{forward.5} parent=11 // pred_check
        %p316 = pneg %p107
      $region22: #{forward.5} parent=11 // pred_check_branch
        %318 = sbr.rel (%p316) target = $region24
      $region23: #{forward.5} parent=11 // pred_region
        _
      $region24: #{forward.5} parent=11 // pred_fallthru
        _
      // Predicated region
      $region25: #{forward.5} parent=11 // pred_check
        %p319 = pneg %p128
      $region26: #{forward.5} parent=11 // pred_check_branch
        %321 = sbr.rel (%p319) target = $region28
      $region27: #{forward.5} parent=11 // pred_region
        _
      $region28: #{forward.5} parent=11 // pred_fallthru
        _
      // Predicated region
      $region29: #{forward.5} parent=11 // pred_check
        %p322 = pneg %p149
      $region30: #{forward.5} parent=11 // pred_check_branch
        %324 = sbr.rel (%p322) target = $region32
      $region31: #{forward.5} parent=11 // pred_region
        _
      $region32: #{forward.5} parent=11 // pred_fallthru
        _
      // Predicated region
      $region33: #{forward.5} parent=11 // pred_check
        %p325 = pneg %p170
      $region34: #{forward.5} parent=11 // pred_check_branch
        %327 = sbr.rel (%p325) target = $region36
      $region35: #{forward.5} parent=11 // pred_region
        _
      $region36: #{forward.5} parent=11 // pred_fallthru
        _
      // Predicated region
      $region37: #{forward.5} parent=11 // pred_check
        %p328 = pneg %p191
      $region38: #{forward.5} parent=11 // pred_check_branch
        %330 = sbr.rel (%p328) target = $region40
      $region39: #{forward.5} parent=11 // pred_region
        _
      $region40: #{forward.5} parent=11 // pred_fallthru
        _
    $region12: #{forward.5} parent=5 // pred_fallthru
      _
    %p331 = scmp.lt.s32.totalorder %s18, 2
    // Predicated region
    $region41: #{forward.5} parent=5 // pred_check
      %p332 = pneg %p331
    $region42: #{forward.5} parent=5 // pred_check_branch
      %334 = sbr.rel (%p332) target = $region44
    $region43: #{forward.5} parent=5 // pred_region
      // Predicated region
      $region45: #{forward.5} parent=43 // pred_check
        %p335 = pneg %p38
      $region46: #{forward.5} parent=43 // pred_check_branch
        %337 = sbr.rel (%p335) target = $region48
      $region47: #{forward.5} parent=43 // pred_region
        %p338 = scmp.lt.s32.totalorder %s18, 1
        %s339 = scalar_select %p338, %s18, 1
        %s340 = smul.addr %s339, 4
        %s341 = smul.addr %s340, 8
        %s342 = scalar_lea.vmem %s0, %s341
      $region48: #{forward.5} parent=43 // pred_fallthru
        _
    $region44: #{forward.5} parent=5 // pred_fallthru
      _
    %p343 = scmp.le.s32.totalorder 1, %s18
    %p344 = scmp.lt.s32.totalorder %s18, 3
    %p345 = pnand %p343, %p344
    %p346 = pneg %p345
    // Predicated region
    $region49: #{forward.5} parent=5 // pred_check
      _
    $region50: #{forward.5} parent=5 // pred_check_branch
      %348 = sbr.rel (%p345) target = $region52
    $region51: #{forward.5} parent=5 // pred_region
      %s349 = ssub.s32 %s18, 1
      %p350 = scmp.lt.s32.totalorder %s23, 1
      %s351 = scalar_select %p350, %s23, 1
      %s352 = smul.addr %s351, 4
      %s353 = smul.addr %s352, 8
      %s354 = scalar_lea.vmem %s0, %s353
      %p355 = pneg %p44
      %p356 = pneg %p41
      %p357 = pneg %p65
      %p358 = pneg %p62
      %p359 = pneg %p86
      %p360 = pneg %p83
      %p361 = pneg %p107
      %p362 = pneg %p104
      %p363 = pneg %p128
      %p364 = pneg %p125
      %p365 = pneg %p149
      %p366 = pneg %p146
      %p367 = pneg %p170
      %p368 = pneg %p167
      %p369 = pneg %p191
      %p370 = pneg %p188
      %p371 = pneg %p217
      %p372 = pneg %p214
      %p373 = scmp.lt.s32.totalorder %s23, 1
      %s374 = scalar_select %p373, %s23, 1
      %s375 = smul.addr %s374, 4
      %s376 = smul.addr %s375, 8
      %s377 = scalar_lea.vmem %s8, %s376
      %p378 = pneg %p243
      %p379 = pneg %p240
      %p380 = scmp.lt.s32.totalorder %s23, 1
      %s381 = scalar_select %p380, %s23, 1
      %s382 = smul.addr %s381, 2
      %s383 = smul.addr %s382, 4
      %s384 = scalar_lea.vmem %s9, %s383
      %p385 = pneg %p269
      %p386 = pneg %p266
      %p387 = scmp.lt.s32.totalorder %s23, 1
      %s388 = scalar_select %p387, %s23, 1
      %s389 = smul.addr %s388, 4
      %s390 = scalar_lea.vmem %s10, %s389
      %p391 = pneg %p295
      %p392 = pneg %p292
      %p393 = scmp.lt.s32.totalorder %s23, 1
      %s394 = scalar_select %p393, %s23, 1
      %s395 = smul.addr %s394, 4
      %s396 = scalar_lea.vmem %s11, %s395
      %p397 = scmp.lt.s32.totalorder %s23, 1
      %s398 = scalar_select %p397, %s23, 1
      %s399 = smul.addr %s398, 4
      %s400 = smul.addr %s399, 8
      %s401 = scalar_lea.vmem %s0, %s400
      %p402 = scmp.lt.s32.totalorder %s23, 1
      %s403 = scalar_select %p402, %s23, 1
      %s404 = smul.addr %s403, 4
      %s405 = smul.addr %s404, 8
      %s406 = scalar_lea.vmem %s8, %s405
      %p407 = scmp.lt.s32.totalorder %s23, 1
      %s408 = scalar_select %p407, %s23, 1
      %s409 = smul.addr %s408, 2
      %s410 = smul.addr %s409, 4
      %s411 = scalar_lea.vmem %s9, %s410
      %p412 = scmp.lt.s32.totalorder %s23, 1
      %s413 = scalar_select %p412, %s23, 1
      %s414 = smul.addr %s413, 4
      %s415 = scalar_lea.vmem %s10, %s414
      %p416 = scmp.lt.s32.totalorder %s23, 1
      %s417 = scalar_select %p416, %s23, 1
      %s418 = smul.addr %s417, 4
      %s419 = scalar_lea.vmem %s11, %s418
      %v420 = vld [vmem:[%s401] sm:$0xff]
      %v421 = vld [vmem:[%s401 + $0x8] sm:$0xff]
      %v422 = vld [vmem:[%s401 + $0x10] sm:$0xff]
      %v423 = vld [vmem:[%s401 + $0x18] sm:$0xff]
      %v424 = vld [vmem:[%s1] sm:$0xff]
      %v425 = vld [vmem:[%s1 + $0x8] sm:$0xff]
      %427 = vset.pattern.permute.xlu0 0
      %428 = vperm.xlu0 %427, %v424
      %v429 = vpop.permute.xlu0 %428
      %432 = vset.pattern.permute.xlu0 0
      %433 = vperm.xlu0 %432, %v425
      %v434 = vpop.permute.xlu0 %433
      %v436 = vsub.f32 %v420, %v429
      %v437 = vsub.f32 %v421, %v429
      %v438 = vsub.f32 %v422, %v434
      %v439 = vsub.f32 %v423, %v434
      %v440 = vld [vmem:[%s2] sm:$0xff]
      %v441 = vld [vmem:[%s2 + $0x8] sm:$0xff]
      %443 = vset.pattern.permute.xlu0 0
      %444 = vperm.xlu0 %443, %v440
      %v445 = vpop.permute.xlu0 %444
      %448 = vset.pattern.permute.xlu0 0
      %449 = vperm.xlu0 %448, %v441
      %v450 = vpop.permute.xlu0 %449
      %v452 = vmul.f32 %v436, %v445
      %v453 = vmul.f32 %v437, %v445
      %v454 = vmul.f32 %v438, %v450
      %v455 = vmul.f32 %v439, %v450
      %vm456 = vcmp.ge.f32.partialorder %v452, 0.0
      %vm457 = vcmp.ge.f32.partialorder %v453, 0.0
      %vm458 = vcmp.ge.f32.partialorder %v454, 0.0
      %vm459 = vcmp.ge.f32.partialorder %v455, 0.0
      %v460 = vmul.f32 %v452, 0.2
      %v461 = vmul.f32 %v453, 0.2
      %v462 = vmul.f32 %v454, 0.2
      %v463 = vmul.f32 %v455, 0.2
      %v464 = vsel %vm456, %v452, %v460
      %v465 = vsel %vm457, %v453, %v461
      %v466 = vsel %vm458, %v454, %v462
      %v467 = vsel %vm459, %v455, %v463
      %468 = vst [vmem:[%s406] sm:$0xff] %v464
      %469 = vst [vmem:[%s406 + $0x8] sm:$0xff] %v465
      %470 = vst [vmem:[%s406 + $0x10] sm:$0xff] %v466
      %471 = vst [vmem:[%s406 + $0x18] sm:$0xff] %v467
      %v474 = vrot.slane %v464, 4
      %v475 = vrot.slane %v465, 4
      %v478 = vmax.f32 %v464, %v474
      %v479 = vmax.f32 %v465, %v475
      %v482 = vrot.slane %v466, 4
      %v483 = vrot.slane %v467, 4
      %v486 = vmax.f32 %v466, %v482
      %v487 = vmax.f32 %v467, %v483
      %v488 = vmax.f32 %v478, %v486
      %v489 = vmax.f32 %v479, %v487
      %v490 = vand.u32 2147483647, %v488
      %vm491 = vcmp.le.f32.partialorder %v490, 0.7853982
      %vm492 = vcmp.lt.s32.totalorder %v488, 0
      %v493 = vand.u32 %v488, 2139095040
      %v494 = vshrl.u32 %v493, 23
      %v495 = vsub.s32 %v494, 127
      %v496 = vand.u32 2147483647, %v488
      %v497 = vand.u32 %v496, 8388607
      %v498 = vor.u32 %v497, 8388608
      %v499 = vsub.s32 0, %v498
      %v500 = vadd.s32 %v495, 1
      %vm501 = vcmp.gt.s32.totalorder %v500, 0
      %v502 = vsel %vm501, %v500, 0
      %v503 = vshrl.u32 %v502, 5
      %v504 = vand.u32 %v502, 31
      %v505 = vsub.s32 32, %v504
      %v506 = vshrl.u32 683565275, %v505
      %v507 = vshll.u32 683565275, %v504
      %v508 = vshrl.u32 2475754826, %v505
      %v509 = vor.u32 %v507, %v508
      %v510 = vshll.u32 2475754826, %v504
      %v511 = vshrl.u32 2131351028, %v505
      %v512 = vor.u32 %v510, %v511
      %v513 = vshll.u32 2131351028, %v504
      %v514 = vshrl.u32 2102212464, %v505
      %v515 = vor.u32 %v513, %v514
      %v516 = vshll.u32 2102212464, %v504
      %v517 = vshrl.u32 920167782, %v505
      %v518 = vor.u32 %v516, %v517
      %v519 = vshll.u32 920167782, %v504
      %v520 = vshrl.u32 1326507024, %v505
      %v521 = vor.u32 %v519, %v520
      %vm522 = vcmp.lt.s32.totalorder %v503, 1
      %vm523 = vcmp.lt.s32.totalorder %v503, 2
      %vm524 = vcmp.lt.s32.totalorder %v503, 3
      %vm525 = vcmp.lt.s32.totalorder %v503, 4
      %v526 = vsel %vm522, %v506, %v509
      %v527 = vsel %vm525, %v515, 2102212464
      %v528 = vsel %vm524, %v512, %v527
      %v529 = vsel %vm523, %v526, %v528
      %v530 = vsel %vm522, %v509, %v512
      %v531 = vsel %vm525, %v518, 920167782
      %v532 = vsel %vm524, %v515, %v531
      %v533 = vsel %vm523, %v530, %v532
      %v534 = vsel %vm522, %v512, %v515
      %v535 = vsel %vm525, %v521, 1326507024
      %v536 = vsel %vm524, %v518, %v535
      %v537 = vsel %vm523, %v534, %v536
      %v538 = vshll.u32 %v498, 8
      %v539 = vmul.u32.u64.compose %v538, %v537
      %v540 = vextract.low.u32 %v539
      %v541 = vextract.high.u32 %v539
      %v542 = vmul.u32.u64.compose %v538, %v533
      %v543 = vextract.low.u32 %v542
      %v544 = vextract.high.u32 %v542
      %v545 = vmul.u32 %v538, %v529
      %v546 = vadd.s32 %v541, %v543
      %vm547 = vc.u32 %v541, %v543
      %v548 = vadd.s32 %v544, 1
      %v549 = vsel %vm547, %v548, %v544
      %v550 = vadd.s32 %v545, %v549
      %v551 = vadd.s32 %v550, 536870912
      %v552 = vshrl.u32 %v551, 30
      %v553 = vshll.u32 %v552, 30
      %v554 = vsub.s32 %v550, %v553
      %vm555 = vcmp.lt.s32.totalorder %v554, 0
      %v556 = vsub.s32 0, %v554
      %v557 = vsel %vm555, %v556, %v554
      %v558 = vclz %v557
      %v559 = vsub.s32 %v558, 2
      %vm560 = vcmp.gt.s32.totalorder 0, %v559
      %v561 = vsel %vm560, 0, %v559
      %v562 = vsub.s32 32, %v561
      %v563 = vshll.u32 %v554, %v561
      %v564 = vshrl.u32 %v546, %v562
      %v565 = vor.u32 %v563, %v564
      %v566 = vsub.s32 4294967266, %v561
      %v567 = vadd.s32 %v566, 127
      %v568 = vshll.u32 %v567, 23
      %v569 = vor.u32 4788187, %v568
      %v570 = vand.u32 2147483647, %v569
      %v572 = vcvt.s32.f32 %v565
      %v573 = vmul.f32 %v572, %v570
      %v574 = vxor.u32 %v573, 2147483648
      %v575 = vsel %vm492, %v574, %v573
      %v576 = vsub.s32 4, %v552
      %v577 = vsel %vm492, %v576, %v552
      %v578 = vsel %vm491, %v488, %v575
      %v579 = vsel %vm491, 0, %v577
      %v580 = vcosq.f32.pop %v578
      %v581 = vsinq.f32.pop %v578
      %vm582 = vweird.f32 %v488
      %v583 = vand.u32 %v579, 3
      %vm584 = vcmp.lt.s32.totalorder %v583, 2
      %vm585 = vcmp.eq.s32.totalorder %v583, 0
      %v586 = vxor.u32 %v581, 2147483648
      %v587 = vsel %vm585, %v580, %v586
      %vm588 = vcmp.eq.s32.totalorder %v583, 2
      %v589 = vxor.u32 %v580, 2147483648
      %v590 = vsel %vm588, %v589, %v581
      %v591 = vsel %vm584, %v587, %v590
      %v592 = vsel %vm582, nan, %v591
      %v593 = vand.u32 2147483647, %v489
      %vm594 = vcmp.le.f32.partialorder %v593, 0.7853982
      %vm595 = vcmp.lt.s32.totalorder %v489, 0
      %v596 = vand.u32 %v489, 2139095040
      %v597 = vshrl.u32 %v596, 23
      %v598 = vsub.s32 %v597, 127
      %v599 = vand.u32 2147483647, %v489
      %v600 = vand.u32 %v599, 8388607
      %v601 = vor.u32 %v600, 8388608
      %v602 = vsub.s32 0, %v601
      %v603 = vadd.s32 %v598, 1
      %vm604 = vcmp.gt.s32.totalorder %v603, 0
      %v605 = vsel %vm604, %v603, 0
      %v606 = vshrl.u32 %v605, 5
      %v607 = vand.u32 %v605, 31
      %v608 = vsub.s32 32, %v607
      %v609 = vshrl.u32 683565275, %v608
      %v610 = vshll.u32 683565275, %v607
      %v611 = vshrl.u32 2475754826, %v608
      %v612 = vor.u32 %v610, %v611
      %v613 = vshll.u32 2475754826, %v607
      %v614 = vshrl.u32 2131351028, %v608
      %v615 = vor.u32 %v613, %v614
      %v616 = vshll.u32 2131351028, %v607
      %v617 = vshrl.u32 2102212464, %v608
      %v618 = vor.u32 %v616, %v617
      %v619 = vshll.u32 2102212464, %v607
      %v620 = vshrl.u32 920167782, %v608
      %v621 = vor.u32 %v619, %v620
      %v622 = vshll.u32 920167782, %v607
      %v623 = vshrl.u32 1326507024, %v608
      %v624 = vor.u32 %v622, %v623
      %vm625 = vcmp.lt.s32.totalorder %v606, 1
      %vm626 = vcmp.lt.s32.totalorder %v606, 2
      %vm627 = vcmp.lt.s32.totalorder %v606, 3
      %vm628 = vcmp.lt.s32.totalorder %v606, 4
      %v629 = vsel %vm625, %v609, %v612
      %v630 = vsel %vm628, %v618, 2102212464
      %v631 = vsel %vm627, %v615, %v630
      %v632 = vsel %vm626, %v629, %v631
      %v633 = vsel %vm625, %v612, %v615
      %v634 = vsel %vm628, %v621, 920167782
      %v635 = vsel %vm627, %v618, %v634
      %v636 = vsel %vm626, %v633, %v635
      %v637 = vsel %vm625, %v615, %v618
      %v638 = vsel %vm628, %v624, 1326507024
      %v639 = vsel %vm627, %v621, %v638
      %v640 = vsel %vm626, %v637, %v639
      %v641 = vshll.u32 %v601, 8
      %v642 = vmul.u32.u64.compose %v641, %v640
      %v643 = vextract.low.u32 %v642
      %v644 = vextract.high.u32 %v642
      %v645 = vmul.u32.u64.compose %v641, %v636
      %v646 = vextract.low.u32 %v645
      %v647 = vextract.high.u32 %v645
      %v648 = vmul.u32 %v641, %v632
      %v649 = vadd.s32 %v644, %v646
      %vm650 = vc.u32 %v644, %v646
      %v651 = vadd.s32 %v647, 1
      %v652 = vsel %vm650, %v651, %v647
      %v653 = vadd.s32 %v648, %v652
      %v654 = vadd.s32 %v653, 536870912
      %v655 = vshrl.u32 %v654, 30
      %v656 = vshll.u32 %v655, 30
      %v657 = vsub.s32 %v653, %v656
      %vm658 = vcmp.lt.s32.totalorder %v657, 0
      %v659 = vsub.s32 0, %v657
      %v660 = vsel %vm658, %v659, %v657
      %v661 = vclz %v660
      %v662 = vsub.s32 %v661, 2
      %vm663 = vcmp.gt.s32.totalorder 0, %v662
      %v664 = vsel %vm663, 0, %v662
      %v665 = vsub.s32 32, %v664
      %v666 = vshll.u32 %v657, %v664
      %v667 = vshrl.u32 %v649, %v665
      %v668 = vor.u32 %v666, %v667
      %v669 = vsub.s32 4294967266, %v664
      %v670 = vadd.s32 %v669, 127
      %v671 = vshll.u32 %v670, 23
      %v672 = vor.u32 4788187, %v671
      %v673 = vand.u32 2147483647, %v672
      %v675 = vcvt.s32.f32 %v668
      %v676 = vmul.f32 %v675, %v673
      %v677 = vxor.u32 %v676, 2147483648
      %v678 = vsel %vm595, %v677, %v676
      %v679 = vsub.s32 4, %v655
      %v680 = vsel %vm595, %v679, %v655
      %v681 = vsel %vm594, %v489, %v678
      %v682 = vsel %vm594, 0, %v680
      %v683 = vcosq.f32.pop %v681
      %v684 = vsinq.f32.pop %v681
      %vm685 = vweird.f32 %v489
      %v686 = vand.u32 %v682, 3
      %vm687 = vcmp.lt.s32.totalorder %v686, 2
      %vm688 = vcmp.eq.s32.totalorder %v686, 0
      %v689 = vxor.u32 %v684, 2147483648
      %v690 = vsel %vm688, %v683, %v689
      %vm691 = vcmp.eq.s32.totalorder %v686, 2
      %v692 = vxor.u32 %v683, 2147483648
      %v693 = vsel %vm691, %v692, %v684
      %v694 = vsel %vm687, %v690, %v693
      %v695 = vsel %vm685, nan, %v694
      %v696 = vand.u32 2147483647, %v488
      %vm697 = vcmp.le.f32.partialorder %v696, 0.7853982
      %vm698 = vcmp.lt.s32.totalorder %v488, 0
      %v699 = vand.u32 %v488, 2139095040
      %v700 = vshrl.u32 %v699, 23
      %v701 = vsub.s32 %v700, 127
      %v702 = vand.u32 2147483647, %v488
      %v703 = vand.u32 %v702, 8388607
      %v704 = vor.u32 %v703, 8388608
      %v705 = vsub.s32 0, %v704
      %v706 = vadd.s32 %v701, 1
      %vm707 = vcmp.gt.s32.totalorder %v706, 0
      %v708 = vsel %vm707, %v706, 0
      %v709 = vshrl.u32 %v708, 5
      %v710 = vand.u32 %v708, 31
      %v711 = vsub.s32 32, %v710
      %v712 = vshrl.u32 683565275, %v711
      %v713 = vshll.u32 683565275, %v710
      %v714 = vshrl.u32 2475754826, %v711
      %v715 = vor.u32 %v713, %v714
      %v716 = vshll.u32 2475754826, %v710
      %v717 = vshrl.u32 2131351028, %v711
      %v718 = vor.u32 %v716, %v717
      %v719 = vshll.u32 2131351028, %v710
      %v720 = vshrl.u32 2102212464, %v711
      %v721 = vor.u32 %v719, %v720
      %v722 = vshll.u32 2102212464, %v710
      %v723 = vshrl.u32 920167782, %v711
      %v724 = vor.u32 %v722, %v723
      %v725 = vshll.u32 920167782, %v710
      %v726 = vshrl.u32 1326507024, %v711
      %v727 = vor.u32 %v725, %v726
      %vm728 = vcmp.lt.s32.totalorder %v709, 1
      %vm729 = vcmp.lt.s32.totalorder %v709, 2
      %vm730 = vcmp.lt.s32.totalorder %v709, 3
      %vm731 = vcmp.lt.s32.totalorder %v709, 4
      %v732 = vsel %vm728, %v712, %v715
      %v733 = vsel %vm731, %v721, 2102212464
      %v734 = vsel %vm730, %v718, %v733
      %v735 = vsel %vm729, %v732, %v734
      %v736 = vsel %vm728, %v715, %v718
      %v737 = vsel %vm731, %v724, 920167782
      %v738 = vsel %vm730, %v721, %v737
      %v739 = vsel %vm729, %v736, %v738
      %v740 = vsel %vm728, %v718, %v721
      %v741 = vsel %vm731, %v727, 1326507024
      %v742 = vsel %vm730, %v724, %v741
      %v743 = vsel %vm729, %v740, %v742
      %v744 = vshll.u32 %v704, 8
      %v745 = vmul.u32.u64.compose %v744, %v743
      %v746 = vextract.low.u32 %v745
      %v747 = vextract.high.u32 %v745
      %v748 = vmul.u32.u64.compose %v744, %v739
      %v749 = vextract.low.u32 %v748
      %v750 = vextract.high.u32 %v748
      %v751 = vmul.u32 %v744, %v735
      %v752 = vadd.s32 %v747, %v749
      %vm753 = vc.u32 %v747, %v749
      %v754 = vadd.s32 %v750, 1
      %v755 = vsel %vm753, %v754, %v750
      %v756 = vadd.s32 %v751, %v755
      %v757 = vadd.s32 %v756, 536870912
      %v758 = vshrl.u32 %v757, 30
      %v759 = vshll.u32 %v758, 30
      %v760 = vsub.s32 %v756, %v759
      %vm761 = vcmp.lt.s32.totalorder %v760, 0
      %v762 = vsub.s32 0, %v760
      %v763 = vsel %vm761, %v762, %v760
      %v764 = vclz %v763
      %v765 = vsub.s32 %v764, 2
      %vm766 = vcmp.gt.s32.totalorder 0, %v765
      %v767 = vsel %vm766, 0, %v765
      %v768 = vsub.s32 32, %v767
      %v769 = vshll.u32 %v760, %v767
      %v770 = vshrl.u32 %v752, %v768
      %v771 = vor.u32 %v769, %v770
      %v772 = vsub.s32 4294967266, %v767
      %v773 = vadd.s32 %v772, 127
      %v774 = vshll.u32 %v773, 23
      %v775 = vor.u32 4788187, %v774
      %v776 = vand.u32 2147483647, %v775
      %v778 = vcvt.s32.f32 %v771
      %v779 = vmul.f32 %v778, %v776
      %v780 = vxor.u32 %v779, 2147483648
      %v781 = vsel %vm698, %v780, %v779
      %v782 = vsub.s32 4, %v758
      %v783 = vsel %vm698, %v782, %v758
      %v784 = vsel %vm697, %v488, %v781
      %v785 = vsel %vm697, 0, %v783
      %v786 = vcosq.f32.pop %v784
      %v787 = vsinq.f32.pop %v784
      %vm788 = vweird.f32 %v488
      %v789 = vadd.s32 %v785, 3
      %v790 = vand.u32 %v789, 3
      %vm791 = vcmp.lt.s32.totalorder %v790, 2
      %vm792 = vcmp.eq.s32.totalorder %v790, 0
      %v793 = vxor.u32 %v787, 2147483648
      %v794 = vsel %vm792, %v786, %v793
      %vm795 = vcmp.eq.s32.totalorder %v790, 2
      %v796 = vxor.u32 %v786, 2147483648
      %v797 = vsel %vm795, %v796, %v787
      %v798 = vsel %vm791, %v794, %v797
      %v799 = vsel %vm788, nan, %v798
      %v800 = vand.u32 2147483647, %v489
      %vm801 = vcmp.le.f32.partialorder %v800, 0.7853982
      %vm802 = vcmp.lt.s32.totalorder %v489, 0
      %v803 = vand.u32 %v489, 2139095040
      %v804 = vshrl.u32 %v803, 23
      %v805 = vsub.s32 %v804, 127
      %v806 = vand.u32 2147483647, %v489
      %v807 = vand.u32 %v806, 8388607
      %v808 = vor.u32 %v807, 8388608
      %v809 = vsub.s32 0, %v808
      %v810 = vadd.s32 %v805, 1
      %vm811 = vcmp.gt.s32.totalorder %v810, 0
      %v812 = vsel %vm811, %v810, 0
      %v813 = vshrl.u32 %v812, 5
      %v814 = vand.u32 %v812, 31
      %v815 = vsub.s32 32, %v814
      %v816 = vshrl.u32 683565275, %v815
      %v817 = vshll.u32 683565275, %v814
      %v818 = vshrl.u32 2475754826, %v815
      %v819 = vor.u32 %v817, %v818
      %v820 = vshll.u32 2475754826, %v814
      %v821 = vshrl.u32 2131351028, %v815
      %v822 = vor.u32 %v820, %v821
      %v823 = vshll.u32 2131351028, %v814
      %v824 = vshrl.u32 2102212464, %v815
      %v825 = vor.u32 %v823, %v824
      %v826 = vshll.u32 2102212464, %v814
      %v827 = vshrl.u32 920167782, %v815
      %v828 = vor.u32 %v826, %v827
      %v829 = vshll.u32 920167782, %v814
      %v830 = vshrl.u32 1326507024, %v815
      %v831 = vor.u32 %v829, %v830
      %vm832 = vcmp.lt.s32.totalorder %v813, 1
      %vm833 = vcmp.lt.s32.totalorder %v813, 2
      %vm834 = vcmp.lt.s32.totalorder %v813, 3
      %vm835 = vcmp.lt.s32.totalorder %v813, 4
      %v836 = vsel %vm832, %v816, %v819
      %v837 = vsel %vm835, %v825, 2102212464
      %v838 = vsel %vm834, %v822, %v837
      %v839 = vsel %vm833, %v836, %v838
      %v840 = vsel %vm832, %v819, %v822
      %v841 = vsel %vm835, %v828, 920167782
      %v842 = vsel %vm834, %v825, %v841
      %v843 = vsel %vm833, %v840, %v842
      %v844 = vsel %vm832, %v822, %v825
      %v845 = vsel %vm835, %v831, 1326507024
      %v846 = vsel %vm834, %v828, %v845
      %v847 = vsel %vm833, %v844, %v846
      %v848 = vshll.u32 %v808, 8
      %v849 = vmul.u32.u64.compose %v848, %v847
      %v850 = vextract.low.u32 %v849
      %v851 = vextract.high.u32 %v849
      %v852 = vmul.u32.u64.compose %v848, %v843
      %v853 = vextract.low.u32 %v852
      %v854 = vextract.high.u32 %v852
      %v855 = vmul.u32 %v848, %v839
      %v856 = vadd.s32 %v851, %v853
      %vm857 = vc.u32 %v851, %v853
      %v858 = vadd.s32 %v854, 1
      %v859 = vsel %vm857, %v858, %v854
      %v860 = vadd.s32 %v855, %v859
      %v861 = vadd.s32 %v860, 536870912
      %v862 = vshrl.u32 %v861, 30
      %v863 = vshll.u32 %v862, 30
      %v864 = vsub.s32 %v860, %v863
      %vm865 = vcmp.lt.s32.totalorder %v864, 0
      %v866 = vsub.s32 0, %v864
      %v867 = vsel %vm865, %v866, %v864
      %v868 = vclz %v867
      %v869 = vsub.s32 %v868, 2
      %vm870 = vcmp.gt.s32.totalorder 0, %v869
      %v871 = vsel %vm870, 0, %v869
      %v872 = vsub.s32 32, %v871
      %v873 = vshll.u32 %v864, %v871
      %v874 = vshrl.u32 %v856, %v872
      %v875 = vor.u32 %v873, %v874
      %v876 = vsub.s32 4294967266, %v871
      %v877 = vadd.s32 %v876, 127
      %v878 = vshll.u32 %v877, 23
      %v879 = vor.u32 4788187, %v878
      %v880 = vand.u32 2147483647, %v879
      %v882 = vcvt.s32.f32 %v875
      %v883 = vmul.f32 %v882, %v880
      %v884 = vxor.u32 %v883, 2147483648
      %v885 = vsel %vm802, %v884, %v883
      %v886 = vsub.s32 4, %v862
      %v887 = vsel %vm802, %v886, %v862
      %v888 = vsel %vm801, %v489, %v885
      %v889 = vsel %vm801, 0, %v887
      %v890 = vcosq.f32.pop %v888
      %v891 = vsinq.f32.pop %v888
      %vm892 = vweird.f32 %v489
      %v893 = vadd.s32 %v889, 3
      %v894 = vand.u32 %v893, 3
      %vm895 = vcmp.lt.s32.totalorder %v894, 2
      %vm896 = vcmp.eq.s32.totalorder %v894, 0
      %v897 = vxor.u32 %v891, 2147483648
      %v898 = vsel %vm896, %v890, %v897
      %vm899 = vcmp.eq.s32.totalorder %v894, 2
      %v900 = vxor.u32 %v890, 2147483648
      %v901 = vsel %vm899, %v900, %v891
      %v902 = vsel %vm895, %v898, %v901
      %v903 = vsel %vm892, nan, %v902
      %v904 = vld [vmem:[%s3] sm:$0x3]
      %905 = vrot.lane.b32.xlu0 %v592, 17
      %v906 = vpop.permute.xlu0 %905
      %907 = vrot.lane.b32.xlu0 %v695, 17
      %v908 = vpop.permute.xlu0 %907
      %v909 = vlaneseq
      %v910 = vand.u32 %v909, 127
      %vm911 = vcmp.lt.s32.totalorder %v910, 17
      %v912 = vsel %vm911, %v906, %v908
      %v913 = vsel %vm911, %v908, %v906
      %v915 = vlaneseq
      %v916 = vshrl.u32 %v915, 7
      %v917 = vsub.s32 0, %v916
      %v918 = vrot.slane %v904, %v917
      %v919 = vlaneseq
      %v920 = vshrl.u32 %v919, 7
      %v921 = vsub.s32 1, %v920
      %v922 = vrot.slane %v904, %v921
      %v925 = vmul.f32 %v913, %v918
      %v926 = vmul.f32 %v912, %v922
      %v927 = vld [vmem:[%s4] sm:$0xf]
      %928 = vrot.lane.b32.xlu0 %v799, 17
      %v929 = vpop.permute.xlu0 %928
      %930 = vrot.lane.b32.xlu0 %v903, 17
      %v931 = vpop.permute.xlu0 %930
      %v932 = vsel %vm911, %v929, %v931
      %v933 = vsel %vm911, %v931, %v929
      %v934 = vmul.f32 %v933, %v918
      %v935 = vmul.f32 %v932, %v922
      %v936 = vld [vmem:[%s5] sm:$0xf]
      %vm937 = vcmask 31744
      %v939 = vsel %vm937, %v936, 0
      %vm941 = vcmask 1043456
      %v943 = vsel %vm941, %v934, 0
      %v946 = vsel %vm941, %v935, 0
      %948 = vmatprep.subr.mxu0 %v946
      %949 = vmatpush1.msra.mxu0 %v943
      %950 = vmatprep.subr.mxu0 0.0
      %951 = vmatpush1.msra.mxu0 0.0
      %952 = vmatprep.subr.mxu0 0.0
      %953 = vmatpush1.msra.mxu0 0.0
      %954 = vmatprep.subr.mxu0 0.0
      %955 = vmatpush1.msra.mxu0 0.0
      %956 = vmatprep.subr.mxu0 0.0
      %957 = vmatpush1.msra.mxu0 0.0
      %958 = vmatprep.subr.mxu0 0.0
      %959 = vmatpush1.msra.mxu0 0.0
      %960 = vmatprep.subr.mxu0 0.0
      %961 = vmatpush1.msra.mxu0 0.0
      %962 = vmatprep.subr.mxu0 0.0
      %963 = vmatpush1.msra.mxu0 0.0
      %964 = vmatprep.subr.mxu0 0.0
      %965 = vmatpush1.msra.mxu0 0.0
      %966 = vmatprep.subr.mxu0 0.0
      %967 = vmatpush1.msra.mxu0 0.0
      %968 = vmatprep.subr.mxu0 0.0
      %969 = vmatpush1.msra.mxu0 0.0
      %970 = vmatprep.subr.mxu0 0.0
      %971 = vmatpush1.msra.mxu0 0.0
      %972 = vmatprep.subr.mxu0 0.0
      %973 = vmatpush1.msra.mxu0 0.0
      %974 = vmatprep.subr.mxu0 0.0
      %975 = vmatpush1.msra.mxu0 0.0
      %976 = vmatprep.subr.mxu0 0.0
      %977 = vmatpush1.msra.mxu0 0.0
      %978 = vmatprep.subr.mxu0 0.0
      %979 = vmatpush1.msra.mxu0 0.0
      %980 = vmatprep.subr.mxu0 0.0
      %981 = vmatpush1.msra.mxu0 0.0
      %982 = vmatprep.subr.mxu0 0.0
      %983 = vmatpush1.msra.mxu0 0.0
      %984 = vmatprep.subr.mxu0 0.0
      %985 = vmatpush1.msra.mxu0 0.0
      %986 = vmatprep.subr.mxu0 0.0
      %987 = vmatpush1.msra.mxu0 0.0
      %988 = vmatprep.subr.mxu0 0.0
      %989 = vmatpush1.msra.mxu0 0.0
      %990 = vmatprep.subr.mxu0 0.0
      %991 = vmatpush1.msra.mxu0 0.0
      %992 = vmatprep.subr.mxu0 0.0
      %993 = vmatpush1.msra.mxu0 0.0
      %994 = vmatprep.subr.mxu0 0.0
      %995 = vmatpush1.msra.mxu0 0.0
      %996 = vmatprep.subr.mxu0 0.0
      %997 = vmatpush1.msra.mxu0 0.0
      %998 = vmatprep.subr.mxu0 0.0
      %999 = vmatpush1.msra.mxu0 0.0
      %1000 = vmatprep.subr.mxu0 0.0
      %1001 = vmatpush1.msra.mxu0 0.0
      %1002 = vmatprep.subr.mxu0 0.0
      %1003 = vmatpush1.msra.mxu0 0.0
      %1004 = vmatprep.subr.mxu0 0.0
      %1005 = vmatpush1.msra.mxu0 0.0
      %1006 = vmatprep.subr.mxu0 0.0
      %1007 = vmatpush1.msra.mxu0 0.0
      %1008 = vmatprep.subr.mxu0 0.0
      %1009 = vmatpush1.msra.mxu0 0.0
      %1010 = vmatprep.subr.mxu0 0.0
      %1011 = vmatpush1.msra.mxu0 0.0
      %1012 = vmatprep.mubr.f32.mxu0 0.0
      %1013 = vmatmul.mubr.f32.gmra.mrb[0].mxu0 %v939
      %v1014 = vpop.f32.mrb[0].mxu0
      %v1015 = vadd.f32 0.0, %v1014
      %v1016 = vpop.f32.mrb[0].mxu0
      %v1017 = vadd.f32 0.0, %v1016
      %1018 = vdwg.mxu0
      %v1020 = vsel %vm937, %v927, 0
      %v1023 = vsel %vm941, %v925, 0
      %v1026 = vsel %vm941, %v926, 0
      %1028 = vmatprep.subr.mxu0 %v1026
      %1029 = vmatpush1.msra.mxu0 %v1023
      %1030 = vmatprep.subr.mxu0 0.0
      %1031 = vmatpush1.msra.mxu0 0.0
      %1032 = vmatprep.subr.mxu0 0.0
      %1033 = vmatpush1.msra.mxu0 0.0
      %1034 = vmatprep.subr.mxu0 0.0
      %1035 = vmatpush1.msra.mxu0 0.0
      %1036 = vmatprep.subr.mxu0 0.0
      %1037 = vmatpush1.msra.mxu0 0.0
      %1038 = vmatprep.subr.mxu0 0.0
      %1039 = vmatpush1.msra.mxu0 0.0
      %1040 = vmatprep.subr.mxu0 0.0
      %1041 = vmatpush1.msra.mxu0 0.0
      %1042 = vmatprep.subr.mxu0 0.0
      %1043 = vmatpush1.msra.mxu0 0.0
      %1044 = vmatprep.subr.mxu0 0.0
      %1045 = vmatpush1.msra.mxu0 0.0
      %1046 = vmatprep.subr.mxu0 0.0
      %1047 = vmatpush1.msra.mxu0 0.0
      %1048 = vmatprep.subr.mxu0 0.0
      %1049 = vmatpush1.msra.mxu0 0.0
      %1050 = vmatprep.subr.mxu0 0.0
      %1051 = vmatpush1.msra.mxu0 0.0
      %1052 = vmatprep.subr.mxu0 0.0
      %1053 = vmatpush1.msra.mxu0 0.0
      %1054 = vmatprep.subr.mxu0 0.0
      %1055 = vmatpush1.msra.mxu0 0.0
      %1056 = vmatprep.subr.mxu0 0.0
      %1057 = vmatpush1.msra.mxu0 0.0
      %1058 = vmatprep.subr.mxu0 0.0
      %1059 = vmatpush1.msra.mxu0 0.0
      %1060 = vmatprep.subr.mxu0 0.0
      %1061 = vmatpush1.msra.mxu0 0.0
      %1062 = vmatprep.subr.mxu0 0.0
      %1063 = vmatpush1.msra.mxu0 0.0
      %1064 = vmatprep.subr.mxu0 0.0
      %1065 = vmatpush1.msra.mxu0 0.0
      %1066 = vmatprep.subr.mxu0 0.0
      %1067 = vmatpush1.msra.mxu0 0.0
      %1068 = vmatprep.subr.mxu0 0.0
      %1069 = vmatpush1.msra.mxu0 0.0
      %1070 = vmatprep.subr.mxu0 0.0
      %1071 = vmatpush1.msra.mxu0 0.0
      %1072 = vmatprep.subr.mxu0 0.0
      %1073 = vmatpush1.msra.mxu0 0.0
      %1074 = vmatprep.subr.mxu0 0.0
      %1075 = vmatpush1.msra.mxu0 0.0
      %1076 = vmatprep.subr.mxu0 0.0
      %1077 = vmatpush1.msra.mxu0 0.0
      %1078 = vmatprep.subr.mxu0 0.0
      %1079 = vmatpush1.msra.mxu0 0.0
      %1080 = vmatprep.subr.mxu0 0.0
      %1081 = vmatpush1.msra.mxu0 0.0
      %1082 = vmatprep.subr.mxu0 0.0
      %1083 = vmatpush1.msra.mxu0 0.0
      %1084 = vmatprep.subr.mxu0 0.0
      %1085 = vmatpush1.msra.mxu0 0.0
      %1086 = vmatprep.subr.mxu0 0.0
      %1087 = vmatpush1.msra.mxu0 0.0
      %1088 = vmatprep.subr.mxu0 0.0
      %1089 = vmatpush1.msra.mxu0 0.0
      %1090 = vmatprep.subr.mxu0 0.0
      %1091 = vmatpush1.msra.mxu0 0.0
      %1092 = vmatprep.mubr.f32.mxu0 0.0
      %1093 = vmatmul.mubr.f32.gmra.mrb[0].mxu0 %v1020
      %v1094 = vpop.f32.mrb[0].mxu0
      %v1095 = vadd.f32 %v1015, %v1094
      %v1096 = vpop.f32.mrb[0].mxu0
      %v1097 = vadd.f32 %v1017, %v1096
      %1098 = vdwg.mxu0
      %1099 = vrot.lane.b32.xlu0 %v488, 17
      %v1100 = vpop.permute.xlu0 %1099
      %1101 = vrot.lane.b32.xlu0 %v489, 17
      %v1102 = vpop.permute.xlu0 %1101
      %v1103 = vsel %vm911, %v1100, %v1102
      %v1104 = vsel %vm911, %v1102, %v1100
      %v1105 = vmul.f32 %v1104, %v918
      %v1106 = vmul.f32 %v1103, %v922
      %v1107 = vld [vmem:[%s6] sm:$0xf]
      %v1109 = vsel %vm937, %v1107, 0
      %v1112 = vsel %vm941, %v1105, 0
      %v1115 = vsel %vm941, %v1106, 0
      %1117 = vmatprep.subr.mxu0 %v1115
      %1118 = vmatpush1.msra.mxu0 %v1112
      %1119 = vmatprep.subr.mxu0 0.0
      %1120 = vmatpush1.msra.mxu0 0.0
      %1121 = vmatprep.subr.mxu0 0.0
      %1122 = vmatpush1.msra.mxu0 0.0
      %1123 = vmatprep.subr.mxu0 0.0
      %1124 = vmatpush1.msra.mxu0 0.0
      %1125 = vmatprep.subr.mxu0 0.0
      %1126 = vmatpush1.msra.mxu0 0.0
      %1127 = vmatprep.subr.mxu0 0.0
      %1128 = vmatpush1.msra.mxu0 0.0
      %1129 = vmatprep.subr.mxu0 0.0
      %1130 = vmatpush1.msra.mxu0 0.0
      %1131 = vmatprep.subr.mxu0 0.0
      %1132 = vmatpush1.msra.mxu0 0.0
      %1133 = vmatprep.subr.mxu0 0.0
      %1134 = vmatpush1.msra.mxu0 0.0
      %1135 = vmatprep.subr.mxu0 0.0
      %1136 = vmatpush1.msra.mxu0 0.0
      %1137 = vmatprep.subr.mxu0 0.0
      %1138 = vmatpush1.msra.mxu0 0.0
      %1139 = vmatprep.subr.mxu0 0.0
      %1140 = vmatpush1.msra.mxu0 0.0
      %1141 = vmatprep.subr.mxu0 0.0
      %1142 = vmatpush1.msra.mxu0 0.0
      %1143 = vmatprep.subr.mxu0 0.0
      %1144 = vmatpush1.msra.mxu0 0.0
      %1145 = vmatprep.subr.mxu0 0.0
      %1146 = vmatpush1.msra.mxu0 0.0
      %1147 = vmatprep.subr.mxu0 0.0
      %1148 = vmatpush1.msra.mxu0 0.0
      %1149 = vmatprep.subr.mxu0 0.0
      %1150 = vmatpush1.msra.mxu0 0.0
      %1151 = vmatprep.subr.mxu0 0.0
      %1152 = vmatpush1.msra.mxu0 0.0
      %1153 = vmatprep.subr.mxu0 0.0
      %1154 = vmatpush1.msra.mxu0 0.0
      %1155 = vmatprep.subr.mxu0 0.0
      %1156 = vmatpush1.msra.mxu0 0.0
      %1157 = vmatprep.subr.mxu0 0.0
      %1158 = vmatpush1.msra.mxu0 0.0
      %1159 = vmatprep.subr.mxu0 0.0
      %1160 = vmatpush1.msra.mxu0 0.0
      %1161 = vmatprep.subr.mxu0 0.0
      %1162 = vmatpush1.msra.mxu0 0.0
      %1163 = vmatprep.subr.mxu0 0.0
      %1164 = vmatpush1.msra.mxu0 0.0
      %1165 = vmatprep.subr.mxu0 0.0
      %1166 = vmatpush1.msra.mxu0 0.0
      %1167 = vmatprep.subr.mxu0 0.0
      %1168 = vmatpush1.msra.mxu0 0.0
      %1169 = vmatprep.subr.mxu0 0.0
      %1170 = vmatpush1.msra.mxu0 0.0
      %1171 = vmatprep.subr.mxu0 0.0
      %1172 = vmatpush1.msra.mxu0 0.0
      %1173 = vmatprep.subr.mxu0 0.0
      %1174 = vmatpush1.msra.mxu0 0.0
      %1175 = vmatprep.subr.mxu0 0.0
      %1176 = vmatpush1.msra.mxu0 0.0
      %1177 = vmatprep.subr.mxu0 0.0
      %1178 = vmatpush1.msra.mxu0 0.0
      %1179 = vmatprep.subr.mxu0 0.0
      %1180 = vmatpush1.msra.mxu0 0.0
      %1181 = vmatprep.mubr.f32.mxu0 0.0
      %1182 = vmatmul.mubr.f32.gmra.mrb[0].mxu0 %v1109
      %v1183 = vpop.f32.mrb[0].mxu0
      %v1184 = vadd.f32 0.0, %v1183
      %v1185 = vpop.f32.mrb[0].mxu0
      %v1186 = vadd.f32 0.0, %v1185
      %1187 = vdwg.mxu0
      %v1188 = vadd.f32 %v1095, %v1184
      %v1189 = vadd.f32 %v1097, %v1186
      %s1190 = scalar_lea.vmem %s3, 2
      %v1191 = vld [vmem:[%s1190] sm:$0x3]
      %1192 = vrot.lane.b32.xlu0 %v592, 16
      %v1193 = vpop.permute.xlu0 %1192
      %1194 = vrot.lane.b32.xlu0 %v695, 16
      %v1195 = vpop.permute.xlu0 %1194
      %vm1196 = vcmp.lt.s32.totalorder %v910, 16
      %v1197 = vsel %vm1196, %v1193, %v1195
      %v1198 = vsel %vm1196, %v1195, %v1193
      %v1200 = vlaneseq
      %v1201 = vshrl.u32 %v1200, 7
      %v1202 = vsub.s32 0, %v1201
      %v1203 = vrot.slane %v1191, %v1202
      %v1204 = vlaneseq
      %v1205 = vshrl.u32 %v1204, 7
      %v1206 = vsub.s32 1, %v1205
      %v1207 = vrot.slane %v1191, %v1206
      %v1210 = vmul.f32 %v1198, %v1203
      %v1211 = vmul.f32 %v1197, %v1207
      %s1212 = scalar_lea.vmem %s4, 4
      %v1213 = vld [vmem:[%s1212] sm:$0xf]
      %v1215 = vsel %vm937, %v1213, 0
      %v1218 = vsel %vm941, %v1210, 0
      %v1221 = vsel %vm941, %v1211, 0
      %1223 = vmatprep.subr.mxu0 %v1221
      %1224 = vmatpush1.msra.mxu0 %v1218
      %1225 = vmatprep.subr.mxu0 0.0
      %1226 = vmatpush1.msra.mxu0 0.0
      %1227 = vmatprep.subr.mxu0 0.0
      %1228 = vmatpush1.msra.mxu0 0.0
      %1229 = vmatprep.subr.mxu0 0.0
      %1230 = vmatpush1.msra.mxu0 0.0
      %1231 = vmatprep.subr.mxu0 0.0
      %1232 = vmatpush1.msra.mxu0 0.0
      %1233 = vmatprep.subr.mxu0 0.0
      %1234 = vmatpush1.msra.mxu0 0.0
      %1235 = vmatprep.subr.mxu0 0.0
      %1236 = vmatpush1.msra.mxu0 0.0
      %1237 = vmatprep.subr.mxu0 0.0
      %1238 = vmatpush1.msra.mxu0 0.0
      %1239 = vmatprep.subr.mxu0 0.0
      %1240 = vmatpush1.msra.mxu0 0.0
      %1241 = vmatprep.subr.mxu0 0.0
      %1242 = vmatpush1.msra.mxu0 0.0
      %1243 = vmatprep.subr.mxu0 0.0
      %1244 = vmatpush1.msra.mxu0 0.0
      %1245 = vmatprep.subr.mxu0 0.0
      %1246 = vmatpush1.msra.mxu0 0.0
      %1247 = vmatprep.subr.mxu0 0.0
      %1248 = vmatpush1.msra.mxu0 0.0
      %1249 = vmatprep.subr.mxu0 0.0
      %1250 = vmatpush1.msra.mxu0 0.0
      %1251 = vmatprep.subr.mxu0 0.0
      %1252 = vmatpush1.msra.mxu0 0.0
      %1253 = vmatprep.subr.mxu0 0.0
      %1254 = vmatpush1.msra.mxu0 0.0
      %1255 = vmatprep.subr.mxu0 0.0
      %1256 = vmatpush1.msra.mxu0 0.0
      %1257 = vmatprep.subr.mxu0 0.0
      %1258 = vmatpush1.msra.mxu0 0.0
      %1259 = vmatprep.subr.mxu0 0.0
      %1260 = vmatpush1.msra.mxu0 0.0
      %1261 = vmatprep.subr.mxu0 0.0
      %1262 = vmatpush1.msra.mxu0 0.0
      %1263 = vmatprep.subr.mxu0 0.0
      %1264 = vmatpush1.msra.mxu0 0.0
      %1265 = vmatprep.subr.mxu0 0.0
      %1266 = vmatpush1.msra.mxu0 0.0
      %1267 = vmatprep.subr.mxu0 0.0
      %1268 = vmatpush1.msra.mxu0 0.0
      %1269 = vmatprep.subr.mxu0 0.0
      %1270 = vmatpush1.msra.mxu0 0.0
      %1271 = vmatprep.subr.mxu0 0.0
      %1272 = vmatpush1.msra.mxu0 0.0
      %1273 = vmatprep.subr.mxu0 0.0
      %1274 = vmatpush1.msra.mxu0 0.0
      %1275 = vmatprep.subr.mxu0 0.0
      %1276 = vmatpush1.msra.mxu0 0.0
      %1277 = vmatprep.subr.mxu0 0.0
      %1278 = vmatpush1.msra.mxu0 0.0
      %1279 = vmatprep.subr.mxu0 0.0
      %1280 = vmatpush1.msra.mxu0 0.0
      %1281 = vmatprep.subr.mxu0 0.0
      %1282 = vmatpush1.msra.mxu0 0.0
      %1283 = vmatprep.subr.mxu0 0.0
      %1284 = vmatpush1.msra.mxu0 0.0
      %1285 = vmatprep.subr.mxu0 0.0
      %1286 = vmatpush1.msra.mxu0 0.0
      %1287 = vmatprep.mubr.f32.mxu0 0.0
      %1288 = vmatmul.mubr.f32.gmra.mrb[0].mxu0 %v1215
      %v1289 = vpop.f32.mrb[0].mxu0
      %v1290 = vadd.f32 0.0, %v1289
      %v1291 = vpop.f32.mrb[0].mxu0
      %v1292 = vadd.f32 0.0, %v1291
      %1293 = vdwg.mxu0
      %v1294 = vadd.f32 %v1188, %v1290
      %v1295 = vadd.f32 %v1189, %v1292
      %1296 = vrot.lane.b32.xlu0 %v799, 16
      %v1297 = vpop.permute.xlu0 %1296
      %1298 = vrot.lane.b32.xlu0 %v903, 16
      %v1299 = vpop.permute.xlu0 %1298
      %v1300 = vsel %vm1196, %v1297, %v1299
      %v1301 = vsel %vm1196, %v1299, %v1297
      %v1302 = vmul.f32 %v1301, %v1203
      %v1303 = vmul.f32 %v1300, %v1207
      %s1304 = scalar_lea.vmem %s5, 4
      %v1305 = vld [vmem:[%s1304] sm:$0xf]
      %v1307 = vsel %vm937, %v1305, 0
      %v1310 = vsel %vm941, %v1302, 0
      %v1313 = vsel %vm941, %v1303, 0
      %1315 = vmatprep.subr.mxu0 %v1313
      %1316 = vmatpush1.msra.mxu0 %v1310
      %1317 = vmatprep.subr.mxu0 0.0
      %1318 = vmatpush1.msra.mxu0 0.0
      %1319 = vmatprep.subr.mxu0 0.0
      %1320 = vmatpush1.msra.mxu0 0.0
      %1321 = vmatprep.subr.mxu0 0.0
      %1322 = vmatpush1.msra.mxu0 0.0
      %1323 = vmatprep.subr.mxu0 0.0
      %1324 = vmatpush1.msra.mxu0 0.0
      %1325 = vmatprep.subr.mxu0 0.0
      %1326 = vmatpush1.msra.mxu0 0.0
      %1327 = vmatprep.subr.mxu0 0.0
      %1328 = vmatpush1.msra.mxu0 0.0
      %1329 = vmatprep.subr.mxu0 0.0
      %1330 = vmatpush1.msra.mxu0 0.0
      %1331 = vmatprep.subr.mxu0 0.0
      %1332 = vmatpush1.msra.mxu0 0.0
      %1333 = vmatprep.subr.mxu0 0.0
      %1334 = vmatpush1.msra.mxu0 0.0
      %1335 = vmatprep.subr.mxu0 0.0
      %1336 = vmatpush1.msra.mxu0 0.0
      %1337 = vmatprep.subr.mxu0 0.0
      %1338 = vmatpush1.msra.mxu0 0.0
      %1339 = vmatprep.subr.mxu0 0.0
      %1340 = vmatpush1.msra.mxu0 0.0
      %1341 = vmatprep.subr.mxu0 0.0
      %1342 = vmatpush1.msra.mxu0 0.0
      %1343 = vmatprep.subr.mxu0 0.0
      %1344 = vmatpush1.msra.mxu0 0.0
      %1345 = vmatprep.subr.mxu0 0.0
      %1346 = vmatpush1.msra.mxu0 0.0
      %1347 = vmatprep.subr.mxu0 0.0
      %1348 = vmatpush1.msra.mxu0 0.0
      %1349 = vmatprep.subr.mxu0 0.0
      %1350 = vmatpush1.msra.mxu0 0.0
      %1351 = vmatprep.subr.mxu0 0.0
      %1352 = vmatpush1.msra.mxu0 0.0
      %1353 = vmatprep.subr.mxu0 0.0
      %1354 = vmatpush1.msra.mxu0 0.0
      %1355 = vmatprep.subr.mxu0 0.0
      %1356 = vmatpush1.msra.mxu0 0.0
      %1357 = vmatprep.subr.mxu0 0.0
      %1358 = vmatpush1.msra.mxu0 0.0
      %1359 = vmatprep.subr.mxu0 0.0
      %1360 = vmatpush1.msra.mxu0 0.0
      %1361 = vmatprep.subr.mxu0 0.0
      %1362 = vmatpush1.msra.mxu0 0.0
      %1363 = vmatprep.subr.mxu0 0.0
      %1364 = vmatpush1.msra.mxu0 0.0
      %1365 = vmatprep.subr.mxu0 0.0
      %1366 = vmatpush1.msra.mxu0 0.0
      %1367 = vmatprep.subr.mxu0 0.0
      %1368 = vmatpush1.msra.mxu0 0.0
      %1369 = vmatprep.subr.mxu0 0.0
      %1370 = vmatpush1.msra.mxu0 0.0
      %1371 = vmatprep.subr.mxu0 0.0
      %1372 = vmatpush1.msra.mxu0 0.0
      %1373 = vmatprep.subr.mxu0 0.0
      %1374 = vmatpush1.msra.mxu0 0.0
      %1375 = vmatprep.subr.mxu0 0.0
      %1376 = vmatpush1.msra.mxu0 0.0
      %1377 = vmatprep.subr.mxu0 0.0
      %1378 = vmatpush1.msra.mxu0 0.0
      %1379 = vmatprep.mubr.f32.mxu0 0.0
      %1380 = vmatmul.mubr.f32.gmra.mrb[0].mxu0 %v1307
      %v1381 = vpop.f32.mrb[0].mxu0
      %v1382 = vadd.f32 0.0, %v1381
      %v1383 = vpop.f32.mrb[0].mxu0
      %v1384 = vadd.f32 0.0, %v1383
      %1385 = vdwg.mxu0
      %v1386 = vadd.f32 %v1294, %v1382
      %v1387 = vadd.f32 %v1295, %v1384
      %1388 = vrot.lane.b32.xlu0 %v488, 16
      %v1389 = vpop.permute.xlu0 %1388
      %1390 = vrot.lane.b32.xlu0 %v489, 16
      %v1391 = vpop.permute.xlu0 %1390
      %v1392 = vsel %vm1196, %v1389, %v1391
      %v1393 = vsel %vm1196, %v1391, %v1389
      %v1394 = vmul.f32 %v1393, %v1203
      %v1395 = vmul.f32 %v1392, %v1207
      %s1396 = scalar_lea.vmem %s6, 4
      %v1397 = vld [vmem:[%s1396] sm:$0xf]
      %v1399 = vsel %vm937, %v1397, 0
      %v1402 = vsel %vm941, %v1394, 0
      %v1405 = vsel %vm941, %v1395, 0
      %1407 = vmatprep.subr.mxu0 %v1405
      %1408 = vmatpush1.msra.mxu0 %v1402
      %1409 = vmatprep.subr.mxu0 0.0
      %1410 = vmatpush1.msra.mxu0 0.0
      %1411 = vmatprep.subr.mxu0 0.0
      %1412 = vmatpush1.msra.mxu0 0.0
      %1413 = vmatprep.subr.mxu0 0.0
      %1414 = vmatpush1.msra.mxu0 0.0
      %1415 = vmatprep.subr.mxu0 0.0
      %1416 = vmatpush1.msra.mxu0 0.0
      %1417 = vmatprep.subr.mxu0 0.0
      %1418 = vmatpush1.msra.mxu0 0.0
      %1419 = vmatprep.subr.mxu0 0.0
      %1420 = vmatpush1.msra.mxu0 0.0
      %1421 = vmatprep.subr.mxu0 0.0
      %1422 = vmatpush1.msra.mxu0 0.0
      %1423 = vmatprep.subr.mxu0 0.0
      %1424 = vmatpush1.msra.mxu0 0.0
      %1425 = vmatprep.subr.mxu0 0.0
      %1426 = vmatpush1.msra.mxu0 0.0
      %1427 = vmatprep.subr.mxu0 0.0
      %1428 = vmatpush1.msra.mxu0 0.0
      %1429 = vmatprep.subr.mxu0 0.0
      %1430 = vmatpush1.msra.mxu0 0.0
      %1431 = vmatprep.subr.mxu0 0.0
      %1432 = vmatpush1.msra.mxu0 0.0
      %1433 = vmatprep.subr.mxu0 0.0
      %1434 = vmatpush1.msra.mxu0 0.0
      %1435 = vmatprep.subr.mxu0 0.0
      %1436 = vmatpush1.msra.mxu0 0.0
      %1437 = vmatprep.subr.mxu0 0.0
      %1438 = vmatpush1.msra.mxu0 0.0
      %1439 = vmatprep.subr.mxu0 0.0
      %1440 = vmatpush1.msra.mxu0 0.0
      %1441 = vmatprep.subr.mxu0 0.0
      %1442 = vmatpush1.msra.mxu0 0.0
      %1443 = vmatprep.subr.mxu0 0.0
      %1444 = vmatpush1.msra.mxu0 0.0
      %1445 = vmatprep.subr.mxu0 0.0
      %1446 = vmatpush1.msra.mxu0 0.0
      %1447 = vmatprep.subr.mxu0 0.0
      %1448 = vmatpush1.msra.mxu0 0.0
      %1449 = vmatprep.subr.mxu0 0.0
      %1450 = vmatpush1.msra.mxu0 0.0
      %1451 = vmatprep.subr.mxu0 0.0
      %1452 = vmatpush1.msra.mxu0 0.0
      %1453 = vmatprep.subr.mxu0 0.0
      %1454 = vmatpush1.msra.mxu0 0.0
      %1455 = vmatprep.subr.mxu0 0.0
      %1456 = vmatpush1.msra.mxu0 0.0
      %1457 = vmatprep.subr.mxu0 0.0
      %1458 = vmatpush1.msra.mxu0 0.0
      %1459 = vmatprep.subr.mxu0 0.0
      %1460 = vmatpush1.msra.mxu0 0.0
      %1461 = vmatprep.subr.mxu0 0.0
      %1462 = vmatpush1.msra.mxu0 0.0
      %1463 = vmatprep.subr.mxu0 0.0
      %1464 = vmatpush1.msra.mxu0 0.0
      %1465 = vmatprep.subr.mxu0 0.0
      %1466 = vmatpush1.msra.mxu0 0.0
      %1467 = vmatprep.subr.mxu0 0.0
      %1468 = vmatpush1.msra.mxu0 0.0
      %1469 = vmatprep.subr.mxu0 0.0
      %1470 = vmatpush1.msra.mxu0 0.0
      %1471 = vmatprep.mubr.f32.mxu0 0.0
      %1472 = vmatmul.mubr.f32.gmra.mrb[0].mxu0 %v1399
      %v1473 = vpop.f32.mrb[0].mxu0
      %v1474 = vadd.f32 0.0, %v1473
      %v1475 = vpop.f32.mrb[0].mxu0
      %v1476 = vadd.f32 0.0, %v1475
      %1477 = vdwg.mxu0
      %v1478 = vadd.f32 %v1386, %v1474
      %v1479 = vadd.f32 %v1387, %v1476
      %s1480 = scalar_lea.vmem %s3, 4
      %v1481 = vld [vmem:[%s1480] sm:$0x3]
      %1482 = vrot.lane.b32.xlu0 %v592, 15
      %v1483 = vpop.permute.xlu0 %1482
      %1484 = vrot.lane.b32.xlu0 %v695, 15
      %v1485 = vpop.permute.xlu0 %1484
      %vm1486 = vcmp.lt.s32.totalorder %v910, 15
      %v1487 = vsel %vm1486, %v1483, %v1485
      %v1488 = vsel %vm1486, %v1485, %v1483
      %v1490 = vlaneseq
      %v1491 = vshrl.u32 %v1490, 7
      %v1492 = vsub.s32 0, %v1491
      %v1493 = vrot.slane %v1481, %v1492
      %v1494 = vlaneseq
      %v1495 = vshrl.u32 %v1494, 7
      %v1496 = vsub.s32 1, %v1495
      %v1497 = vrot.slane %v1481, %v1496
      %v1500 = vmul.f32 %v1488, %v1493
      %v1501 = vmul.f32 %v1487, %v1497
      %s1502 = scalar_lea.vmem %s4, 8
      %v1503 = vld [vmem:[%s1502] sm:$0xf]
      %v1505 = vsel %vm937, %v1503, 0
      %v1508 = vsel %vm941, %v1500, 0
      %v1511 = vsel %vm941, %v1501, 0
      %1513 = vmatprep.subr.mxu0 %v1511
      %1514 = vmatpush1.msra.mxu0 %v1508
      %1515 = vmatprep.subr.mxu0 0.0
      %1516 = vmatpush1.msra.mxu0 0.0
      %1517 = vmatprep.subr.mxu0 0.0
      %1518 = vmatpush1.msra.mxu0 0.0
      %1519 = vmatprep.subr.mxu0 0.0
      %1520 = vmatpush1.msra.mxu0 0.0
      %1521 = vmatprep.subr.mxu0 0.0
      %1522 = vmatpush1.msra.mxu0 0.0
      %1523 = vmatprep.subr.mxu0 0.0
      %1524 = vmatpush1.msra.mxu0 0.0
      %1525 = vmatprep.subr.mxu0 0.0
      %1526 = vmatpush1.msra.mxu0 0.0
      %1527 = vmatprep.subr.mxu0 0.0
      %1528 = vmatpush1.msra.mxu0 0.0
      %1529 = vmatprep.subr.mxu0 0.0
      %1530 = vmatpush1.msra.mxu0 0.0
      %1531 = vmatprep.subr.mxu0 0.0
      %1532 = vmatpush1.msra.mxu0 0.0
      %1533 = vmatprep.subr.mxu0 0.0
      %1534 = vmatpush1.msra.mxu0 0.0
      %1535 = vmatprep.subr.mxu0 0.0
      %1536 = vmatpush1.msra.mxu0 0.0
      %1537 = vmatprep.subr.mxu0 0.0
      %1538 = vmatpush1.msra.mxu0 0.0
      %1539 = vmatprep.subr.mxu0 0.0
      %1540 = vmatpush1.msra.mxu0 0.0
      %1541 = vmatprep.subr.mxu0 0.0
      %1542 = vmatpush1.msra.mxu0 0.0
      %1543 = vmatprep.subr.mxu0 0.0
      %1544 = vmatpush1.msra.mxu0 0.0
      %1545 = vmatprep.subr.mxu0 0.0
      %1546 = vmatpush1.msra.mxu0 0.0
      %1547 = vmatprep.subr.mxu0 0.0
      %1548 = vmatpush1.msra.mxu0 0.0
      %1549 = vmatprep.subr.mxu0 0.0
      %1550 = vmatpush1.msra.mxu0 0.0
      %1551 = vmatprep.subr.mxu0 0.0
      %1552 = vmatpush1.msra.mxu0 0.0
      %1553 = vmatprep.subr.mxu0 0.0
      %1554 = vmatpush1.msra.mxu0 0.0
      %1555 = vmatprep.subr.mxu0 0.0
      %1556 = vmatpush1.msra.mxu0 0.0
      %1557 = vmatprep.subr.mxu0 0.0
      %1558 = vmatpush1.msra.mxu0 0.0
      %1559 = vmatprep.subr.mxu0 0.0
      %1560 = vmatpush1.msra.mxu0 0.0
      %1561 = vmatprep.subr.mxu0 0.0
      %1562 = vmatpush1.msra.mxu0 0.0
      %1563 = vmatprep.subr.mxu0 0.0
      %1564 = vmatpush1.msra.mxu0 0.0
      %1565 = vmatprep.subr.mxu0 0.0
      %1566 = vmatpush1.msra.mxu0 0.0
      %1567 = vmatprep.subr.mxu0 0.0
      %1568 = vmatpush1.msra.mxu0 0.0
      %1569 = vmatprep.subr.mxu0 0.0
      %1570 = vmatpush1.msra.mxu0 0.0
      %1571 = vmatprep.subr.mxu0 0.0
      %1572 = vmatpush1.msra.mxu0 0.0
      %1573 = vmatprep.subr.mxu0 0.0
      %1574 = vmatpush1.msra.mxu0 0.0
      %1575 = vmatprep.subr.mxu0 0.0
      %1576 = vmatpush1.msra.mxu0 0.0
      %1577 = vmatprep.mubr.f32.mxu0 0.0
      %1578 = vmatmul.mubr.f32.gmra.mrb[0].mxu0 %v1505
      %v1579 = vpop.f32.mrb[0].mxu0
      %v1580 = vadd.f32 0.0, %v1579
      %v1581 = vpop.f32.mrb[0].mxu0
      %v1582 = vadd.f32 0.0, %v1581
      %1583 = vdwg.mxu0
      %v1584 = vadd.f32 %v1478, %v1580
      %v1585 = vadd.f32 %v1479, %v1582
      %1586 = vrot.lane.b32.xlu0 %v799, 15
      %v1587 = vpop.permute.xlu0 %1586
      %1588 = vrot.lane.b32.xlu0 %v903, 15
      %v1589 = vpop.permute.xlu0 %1588
      %v1590 = vsel %vm1486, %v1587, %v1589
      %v1591 = vsel %vm1486, %v1589, %v1587
      %v1592 = vmul.f32 %v1591, %v1493
      %v1593 = vmul.f32 %v1590, %v1497
      %s1594 = scalar_lea.vmem %s5, 8
      %v1595 = vld [vmem:[%s1594] sm:$0xf]
      %v1597 = vsel %vm937, %v1595, 0
      %v1600 = vsel %vm941, %v1592, 0
      %v1603 = vsel %vm941, %v1593, 0
      %1605 = vmatprep.subr.mxu0 %v1603
      %1606 = vmatpush1.msra.mxu0 %v1600
      %1607 = vmatprep.subr.mxu0 0.0
      %1608 = vmatpush1.msra.mxu0 0.0
      %1609 = vmatprep.subr.mxu0 0.0
      %1610 = vmatpush1.msra.mxu0 0.0
      %1611 = vmatprep.subr.mxu0 0.0
      %1612 = vmatpush1.msra.mxu0 0.0
      %1613 = vmatprep.subr.mxu0 0.0
      %1614 = vmatpush1.msra.mxu0 0.0
      %1615 = vmatprep.subr.mxu0 0.0
      %1616 = vmatpush1.msra.mxu0 0.0
      %1617 = vmatprep.subr.mxu0 0.0
      %1618 = vmatpush1.msra.mxu0 0.0
      %1619 = vmatprep.subr.mxu0 0.0
      %1620 = vmatpush1.msra.mxu0 0.0
      %1621 = vmatprep.subr.mxu0 0.0
      %1622 = vmatpush1.msra.mxu0 0.0
      %1623 = vmatprep.subr.mxu0 0.0
      %1624 = vmatpush1.msra.mxu0 0.0
      %1625 = vmatprep.subr.mxu0 0.0
      %1626 = vmatpush1.msra.mxu0 0.0
      %1627 = vmatprep.subr.mxu0 0.0
      %1628 = vmatpush1.msra.mxu0 0.0
      %1629 = vmatprep.subr.mxu0 0.0
      %1630 = vmatpush1.msra.mxu0 0.0
      %1631 = vmatprep.subr.mxu0 0.0
      %1632 = vmatpush1.msra.mxu0 0.0
      %1633 = vmatprep.subr.mxu0 0.0
      %1634 = vmatpush1.msra.mxu0 0.0
      %1635 = vmatprep.subr.mxu0 0.0
      %1636 = vmatpush1.msra.mxu0 0.0
      %1637 = vmatprep.subr.mxu0 0.0
      %1638 = vmatpush1.msra.mxu0 0.0
      %1639 = vmatprep.subr.mxu0 0.0
      %1640 = vmatpush1.msra.mxu0 0.0
      %1641 = vmatprep.subr.mxu0 0.0
      %1642 = vmatpush1.msra.mxu0 0.0
      %1643 = vmatprep.subr.mxu0 0.0
      %1644 = vmatpush1.msra.mxu0 0.0
      %1645 = vmatprep.subr.mxu0 0.0
      %1646 = vmatpush1.msra.mxu0 0.0
      %1647 = vmatprep.subr.mxu0 0.0
      %1648 = vmatpush1.msra.mxu0 0.0
      %1649 = vmatprep.subr.mxu0 0.0
      %1650 = vmatpush1.msra.mxu0 0.0
      %1651 = vmatprep.subr.mxu0 0.0
      %1652 = vmatpush1.msra.mxu0 0.0
      %1653 = vmatprep.subr.mxu0 0.0
      %1654 = vmatpush1.msra.mxu0 0.0
      %1655 = vmatprep.subr.mxu0 0.0
      %1656 = vmatpush1.msra.mxu0 0.0
      %1657 = vmatprep.subr.mxu0 0.0
      %1658 = vmatpush1.msra.mxu0 0.0
      %1659 = vmatprep.subr.mxu0 0.0
      %1660 = vmatpush1.msra.mxu0 0.0
      %1661 = vmatprep.subr.mxu0 0.0
      %1662 = vmatpush1.msra.mxu0 0.0
      %1663 = vmatprep.subr.mxu0 0.0
      %1664 = vmatpush1.msra.mxu0 0.0
      %1665 = vmatprep.subr.mxu0 0.0
      %1666 = vmatpush1.msra.mxu0 0.0
      %1667 = vmatprep.subr.mxu0 0.0
      %1668 = vmatpush1.msra.mxu0 0.0
      %1669 = vmatprep.mubr.f32.mxu0 0.0
      %1670 = vmatmul.mubr.f32.gmra.mrb[0].mxu0 %v1597
      %v1671 = vpop.f32.mrb[0].mxu0
      %v1672 = vadd.f32 0.0, %v1671
      %v1673 = vpop.f32.mrb[0].mxu0
      %v1674 = vadd.f32 0.0, %v1673
      %1675 = vdwg.mxu0
      %v1676 = vadd.f32 %v1584, %v1672
      %v1677 = vadd.f32 %v1585, %v1674
      %1678 = vrot.lane.b32.xlu0 %v488, 15
      %v1679 = vpop.permute.xlu0 %1678
      %1680 = vrot.lane.b32.xlu0 %v489, 15
      %v1681 = vpop.permute.xlu0 %1680
      %v1682 = vsel %vm1486, %v1679, %v1681
      %v1683 = vsel %vm1486, %v1681, %v1679
      %v1684 = vmul.f32 %v1683, %v1493
      %v1685 = vmul.f32 %v1682, %v1497
      %s1686 = scalar_lea.vmem %s6, 8
      %v1687 = vld [vmem:[%s1686] sm:$0xf]
      %v1689 = vsel %vm937, %v1687, 0
      %v1692 = vsel %vm941, %v1684, 0
      %v1695 = vsel %vm941, %v1685, 0
      %1697 = vmatprep.subr.mxu0 %v1695
      %1698 = vmatpush1.msra.mxu0 %v1692
      %1699 = vmatprep.subr.mxu0 0.0
      %1700 = vmatpush1.msra.mxu0 0.0
      %1701 = vmatprep.subr.mxu0 0.0
      %1702 = vmatpush1.msra.mxu0 0.0
      %1703 = vmatprep.subr.mxu0 0.0
      %1704 = vmatpush1.msra.mxu0 0.0
      %1705 = vmatprep.subr.mxu0 0.0
      %1706 = vmatpush1.msra.mxu0 0.0
      %1707 = vmatprep.subr.mxu0 0.0
      %1708 = vmatpush1.msra.mxu0 0.0
      %1709 = vmatprep.subr.mxu0 0.0
      %1710 = vmatpush1.msra.mxu0 0.0
      %1711 = vmatprep.subr.mxu0 0.0
      %1712 = vmatpush1.msra.mxu0 0.0
      %1713 = vmatprep.subr.mxu0 0.0
      %1714 = vmatpush1.msra.mxu0 0.0
      %1715 = vmatprep.subr.mxu0 0.0
      %1716 = vmatpush1.msra.mxu0 0.0
      %1717 = vmatprep.subr.mxu0 0.0
      %1718 = vmatpush1.msra.mxu0 0.0
      %1719 = vmatprep.subr.mxu0 0.0
      %1720 = vmatpush1.msra.mxu0 0.0
      %1721 = vmatprep.subr.mxu0 0.0
      %1722 = vmatpush1.msra.mxu0 0.0
      %1723 = vmatprep.subr.mxu0 0.0
      %1724 = vmatpush1.msra.mxu0 0.0
      %1725 = vmatprep.subr.mxu0 0.0
      %1726 = vmatpush1.msra.mxu0 0.0
      %1727 = vmatprep.subr.mxu0 0.0
      %1728 = vmatpush1.msra.mxu0 0.0
      %1729 = vmatprep.subr.mxu0 0.0
      %1730 = vmatpush1.msra.mxu0 0.0
      %1731 = vmatprep.subr.mxu0 0.0
      %1732 = vmatpush1.msra.mxu0 0.0
      %1733 = vmatprep.subr.mxu0 0.0
      %1734 = vmatpush1.msra.mxu0 0.0
      %1735 = vmatprep.subr.mxu0 0.0
      %1736 = vmatpush1.msra.mxu0 0.0
      %1737 = vmatprep.subr.mxu0 0.0
      %1738 = vmatpush1.msra.mxu0 0.0
      %1739 = vmatprep.subr.mxu0 0.0
      %1740 = vmatpush1.msra.mxu0 0.0
      %1741 = vmatprep.subr.mxu0 0.0
      %1742 = vmatpush1.msra.mxu0 0.0
      %1743 = vmatprep.subr.mxu0 0.0
      %1744 = vmatpush1.msra.mxu0 0.0
      %1745 = vmatprep.subr.mxu0 0.0
      %1746 = vmatpush1.msra.mxu0 0.0
      %1747 = vmatprep.subr.mxu0 0.0
      %1748 = vmatpush1.msra.mxu0 0.0
      %1749 = vmatprep.subr.mxu0 0.0
      %1750 = vmatpush1.msra.mxu0 0.0
      %1751 = vmatprep.subr.mxu0 0.0
      %1752 = vmatpush1.msra.mxu0 0.0
      %1753 = vmatprep.subr.mxu0 0.0
      %1754 = vmatpush1.msra.mxu0 0.0
      %1755 = vmatprep.subr.mxu0 0.0
      %1756 = vmatpush1.msra.mxu0 0.0
      %1757 = vmatprep.subr.mxu0 0.0
      %1758 = vmatpush1.msra.mxu0 0.0
      %1759 = vmatprep.subr.mxu0 0.0
      %1760 = vmatpush1.msra.mxu0 0.0
      %1761 = vmatprep.mubr.f32.mxu0 0.0
      %1762 = vmatmul.mubr.f32.gmra.mrb[0].mxu0 %v1689
      %v1763 = vpop.f32.mrb[0].mxu0
      %v1764 = vadd.f32 0.0, %v1763
      %v1765 = vpop.f32.mrb[0].mxu0
      %v1766 = vadd.f32 0.0, %v1765
      %1767 = vdwg.mxu0
      %v1768 = vadd.f32 %v1676, %v1764
      %v1769 = vadd.f32 %v1677, %v1766
      %s1770 = scalar_lea.vmem %s3, 6
      %v1771 = vld [vmem:[%s1770] sm:$0x3]
      %1772 = vrot.lane.b32.xlu0 %v592, 1
      %v1773 = vpop.permute.xlu0 %1772
      %1774 = vrot.lane.b32.xlu0 %v695, 1
      %v1775 = vpop.permute.xlu0 %1774
      %vm1776 = vcmp.lt.s32.totalorder %v910, 1
      %v1777 = vsel %vm1776, %v1773, %v1775
      %v1778 = vsel %vm1776, %v1775, %v1773
      %v1780 = vlaneseq
      %v1781 = vshrl.u32 %v1780, 7
      %v1782 = vsub.s32 0, %v1781
      %v1783 = vrot.slane %v1771, %v1782
      %v1784 = vlaneseq
      %v1785 = vshrl.u32 %v1784, 7
      %v1786 = vsub.s32 1, %v1785
      %v1787 = vrot.slane %v1771, %v1786
      %v1790 = vmul.f32 %v1778, %v1783
      %v1791 = vmul.f32 %v1777, %v1787
      %s1792 = scalar_lea.vmem %s4, 12
      %v1793 = vld [vmem:[%s1792] sm:$0xf]
      %v1795 = vsel %vm937, %v1793, 0
      %v1798 = vsel %vm941, %v1790, 0
      %v1801 = vsel %vm941, %v1791, 0
      %1803 = vmatprep.subr.mxu0 %v1801
      %1804 = vmatpush1.msra.mxu0 %v1798
      %1805 = vmatprep.subr.mxu0 0.0
      %1806 = vmatpush1.msra.mxu0 0.0
      %1807 = vmatprep.subr.mxu0 0.0
      %1808 = vmatpush1.msra.mxu0 0.0
      %1809 = vmatprep.subr.mxu0 0.0
      %1810 = vmatpush1.msra.mxu0 0.0
      %1811 = vmatprep.subr.mxu0 0.0
      %1812 = vmatpush1.msra.mxu0 0.0
      %1813 = vmatprep.subr.mxu0 0.0
      %1814 = vmatpush1.msra.mxu0 0.0
      %1815 = vmatprep.subr.mxu0 0.0
      %1816 = vmatpush1.msra.mxu0 0.0
      %1817 = vmatprep.subr.mxu0 0.0
      %1818 = vmatpush1.msra.mxu0 0.0
      %1819 = vmatprep.subr.mxu0 0.0
      %1820 = vmatpush1.msra.mxu0 0.0
      %1821 = vmatprep.subr.mxu0 0.0
      %1822 = vmatpush1.msra.mxu0 0.0
      %1823 = vmatprep.subr.mxu0 0.0
      %1824 = vmatpush1.msra.mxu0 0.0
      %1825 = vmatprep.subr.mxu0 0.0
      %1826 = vmatpush1.msra.mxu0 0.0
      %1827 = vmatprep.subr.mxu0 0.0
      %1828 = vmatpush1.msra.mxu0 0.0
      %1829 = vmatprep.subr.mxu0 0.0
      %1830 = vmatpush1.msra.mxu0 0.0
      %1831 = vmatprep.subr.mxu0 0.0
      %1832 = vmatpush1.msra.mxu0 0.0
      %1833 = vmatprep.subr.mxu0 0.0
      %1834 = vmatpush1.msra.mxu0 0.0
      %1835 = vmatprep.subr.mxu0 0.0
      %1836 = vmatpush1.msra.mxu0 0.0
      %1837 = vmatprep.subr.mxu0 0.0
      %1838 = vmatpush1.msra.mxu0 0.0
      %1839 = vmatprep.subr.mxu0 0.0
      %1840 = vmatpush1.msra.mxu0 0.0
      %1841 = vmatprep.subr.mxu0 0.0
      %1842 = vmatpush1.msra.mxu0 0.0
      %1843 = vmatprep.subr.mxu0 0.0
      %1844 = vmatpush1.msra.mxu0 0.0
      %1845 = vmatprep.subr.mxu0 0.0
      %1846 = vmatpush1.msra.mxu0 0.0
      %1847 = vmatprep.subr.mxu0 0.0
      %1848 = vmatpush1.msra.mxu0 0.0
      %1849 = vmatprep.subr.mxu0 0.0
      %1850 = vmatpush1.msra.mxu0 0.0
      %1851 = vmatprep.subr.mxu0 0.0
      %1852 = vmatpush1.msra.mxu0 0.0
      %1853 = vmatprep.subr.mxu0 0.0
      %1854 = vmatpush1.msra.mxu0 0.0
      %1855 = vmatprep.subr.mxu0 0.0
      %1856 = vmatpush1.msra.mxu0 0.0
      %1857 = vmatprep.subr.mxu0 0.0
      %1858 = vmatpush1.msra.mxu0 0.0
      %1859 = vmatprep.subr.mxu0 0.0
      %1860 = vmatpush1.msra.mxu0 0.0
      %1861 = vmatprep.subr.mxu0 0.0
      %1862 = vmatpush1.msra.mxu0 0.0
      %1863 = vmatprep.subr.mxu0 0.0
      %1864 = vmatpush1.msra.mxu0 0.0
      %1865 = vmatprep.subr.mxu0 0.0
      %1866 = vmatpush1.msra.mxu0 0.0
      %1867 = vmatprep.mubr.f32.mxu0 0.0
      %1868 = vmatmul.mubr.f32.gmra.mrb[0].mxu0 %v1795
      %v1869 = vpop.f32.mrb[0].mxu0
      %v1870 = vadd.f32 0.0, %v1869
      %v1871 = vpop.f32.mrb[0].mxu0
      %v1872 = vadd.f32 0.0, %v1871
      %1873 = vdwg.mxu0
      %v1874 = vadd.f32 %v1768, %v1870
      %v1875 = vadd.f32 %v1769, %v1872
      %1876 = vrot.lane.b32.xlu0 %v799, 1
      %v1877 = vpop.permute.xlu0 %1876
      %1878 = vrot.lane.b32.xlu0 %v903, 1
      %v1879 = vpop.permute.xlu0 %1878
      %v1880 = vsel %vm1776, %v1877, %v1879
      %v1881 = vsel %vm1776, %v1879, %v1877
      %v1882 = vmul.f32 %v1881, %v1783
      %v1883 = vmul.f32 %v1880, %v1787
      %s1884 = scalar_lea.vmem %s5, 12
      %v1885 = vld [vmem:[%s1884] sm:$0xf]
      %v1887 = vsel %vm937, %v1885, 0
      %v1890 = vsel %vm941, %v1882, 0
      %v1893 = vsel %vm941, %v1883, 0
      %1895 = vmatprep.subr.mxu0 %v1893
      %1896 = vmatpush1.msra.mxu0 %v1890
      %1897 = vmatprep.subr.mxu0 0.0
      %1898 = vmatpush1.msra.mxu0 0.0
      %1899 = vmatprep.subr.mxu0 0.0
      %1900 = vmatpush1.msra.mxu0 0.0
      %1901 = vmatprep.subr.mxu0 0.0
      %1902 = vmatpush1.msra.mxu0 0.0
      %1903 = vmatprep.subr.mxu0 0.0
      %1904 = vmatpush1.msra.mxu0 0.0
      %1905 = vmatprep.subr.mxu0 0.0
      %1906 = vmatpush1.msra.mxu0 0.0
      %1907 = vmatprep.subr.mxu0 0.0
      %1908 = vmatpush1.msra.mxu0 0.0
      %1909 = vmatprep.subr.mxu0 0.0
      %1910 = vmatpush1.msra.mxu0 0.0
      %1911 = vmatprep.subr.mxu0 0.0
      %1912 = vmatpush1.msra.mxu0 0.0
      %1913 = vmatprep.subr.mxu0 0.0
      %1914 = vmatpush1.msra.mxu0 0.0
      %1915 = vmatprep.subr.mxu0 0.0
      %1916 = vmatpush1.msra.mxu0 0.0
      %1917 = vmatprep.subr.mxu0 0.0
      %1918 = vmatpush1.msra.mxu0 0.0
      %1919 = vmatprep.subr.mxu0 0.0
      %1920 = vmatpush1.msra.mxu0 0.0
      %1921 = vmatprep.subr.mxu0 0.0
      %1922 = vmatpush1.msra.mxu0 0.0
      %1923 = vmatprep.subr.mxu0 0.0
      %1924 = vmatpush1.msra.mxu0 0.0
      %1925 = vmatprep.subr.mxu0 0.0
      %1926 = vmatpush1.msra.mxu0 0.0
      %1927 = vmatprep.subr.mxu0 0.0
      %1928 = vmatpush1.msra.mxu0 0.0
      %1929 = vmatprep.subr.mxu0 0.0
      %1930 = vmatpush1.msra.mxu0 0.0
      %1931 = vmatprep.subr.mxu0 0.0
      %1932 = vmatpush1.msra.mxu0 0.0
      %1933 = vmatprep.subr.mxu0 0.0
      %1934 = vmatpush1.msra.mxu0 0.0
      %1935 = vmatprep.subr.mxu0 0.0
      %1936 = vmatpush1.msra.mxu0 0.0
      %1937 = vmatprep.subr.mxu0 0.0
      %1938 = vmatpush1.msra.mxu0 0.0
      %1939 = vmatprep.subr.mxu0 0.0
      %1940 = vmatpush1.msra.mxu0 0.0
      %1941 = vmatprep.subr.mxu0 0.0
      %1942 = vmatpush1.msra.mxu0 0.0
      %1943 = vmatprep.subr.mxu0 0.0
      %1944 = vmatpush1.msra.mxu0 0.0
      %1945 = vmatprep.subr.mxu0 0.0
      %1946 = vmatpush1.msra.mxu0 0.0
      %1947 = vmatprep.subr.mxu0 0.0
      %1948 = vmatpush1.msra.mxu0 0.0
      %1949 = vmatprep.subr.mxu0 0.0
      %1950 = vmatpush1.msra.mxu0 0.0
      %1951 = vmatprep.subr.mxu0 0.0
      %1952 = vmatpush1.msra.mxu0 0.0
      %1953 = vmatprep.subr.mxu0 0.0
      %1954 = vmatpush1.msra.mxu0 0.0
      %1955 = vmatprep.subr.mxu0 0.0
      %1956 = vmatpush1.msra.mxu0 0.0
      %1957 = vmatprep.subr.mxu0 0.0
      %1958 = vmatpush1.msra.mxu0 0.0
      %1959 = vmatprep.mubr.f32.mxu0 0.0
      %1960 = vmatmul.mubr.f32.gmra.mrb[0].mxu0 %v1887
      %v1961 = vpop.f32.mrb[0].mxu0
      %v1962 = vadd.f32 0.0, %v1961
      %v1963 = vpop.f32.mrb[0].mxu0
      %v1964 = vadd.f32 0.0, %v1963
      %1965 = vdwg.mxu0
      %v1966 = vadd.f32 %v1874, %v1962
      %v1967 = vadd.f32 %v1875, %v1964
      %1968 = vrot.lane.b32.xlu0 %v488, 1
      %v1969 = vpop.permute.xlu0 %1968
      %1970 = vrot.lane.b32.xlu0 %v489, 1
      %v1971 = vpop.permute.xlu0 %1970
      %v1972 = vsel %vm1776, %v1969, %v1971
      %v1973 = vsel %vm1776, %v1971, %v1969
      %v1974 = vmul.f32 %v1973, %v1783
      %v1975 = vmul.f32 %v1972, %v1787
      %s1976 = scalar_lea.vmem %s6, 12
      %v1977 = vld [vmem:[%s1976] sm:$0xf]
      %v1979 = vsel %vm937, %v1977, 0
      %v1982 = vsel %vm941, %v1974, 0
      %v1985 = vsel %vm941, %v1975, 0
      %1987 = vmatprep.subr.mxu0 %v1985
      %1988 = vmatpush1.msra.mxu0 %v1982
      %1989 = vmatprep.subr.mxu0 0.0
      %1990 = vmatpush1.msra.mxu0 0.0
      %1991 = vmatprep.subr.mxu0 0.0
      %1992 = vmatpush1.msra.mxu0 0.0
      %1993 = vmatprep.subr.mxu0 0.0
      %1994 = vmatpush1.msra.mxu0 0.0
      %1995 = vmatprep.subr.mxu0 0.0
      %1996 = vmatpush1.msra.mxu0 0.0
      %1997 = vmatprep.subr.mxu0 0.0
      %1998 = vmatpush1.msra.mxu0 0.0
      %1999 = vmatprep.subr.mxu0 0.0
      %2000 = vmatpush1.msra.mxu0 0.0
      %2001 = vmatprep.subr.mxu0 0.0
      %2002 = vmatpush1.msra.mxu0 0.0
      %2003 = vmatprep.subr.mxu0 0.0
      %2004 = vmatpush1.msra.mxu0 0.0
      %2005 = vmatprep.subr.mxu0 0.0
      %2006 = vmatpush1.msra.mxu0 0.0
      %2007 = vmatprep.subr.mxu0 0.0
      %2008 = vmatpush1.msra.mxu0 0.0
      %2009 = vmatprep.subr.mxu0 0.0
      %2010 = vmatpush1.msra.mxu0 0.0
      %2011 = vmatprep.subr.mxu0 0.0
      %2012 = vmatpush1.msra.mxu0 0.0
      %2013 = vmatprep.subr.mxu0 0.0
      %2014 = vmatpush1.msra.mxu0 0.0
      %2015 = vmatprep.subr.mxu0 0.0
      %2016 = vmatpush1.msra.mxu0 0.0
      %2017 = vmatprep.subr.mxu0 0.0
      %2018 = vmatpush1.msra.mxu0 0.0
      %2019 = vmatprep.subr.mxu0 0.0
      %2020 = vmatpush1.msra.mxu0 0.0
      %2021 = vmatprep.subr.mxu0 0.0
      %2022 = vmatpush1.msra.mxu0 0.0
      %2023 = vmatprep.subr.mxu0 0.0
      %2024 = vmatpush1.msra.mxu0 0.0
      %2025 = vmatprep.subr.mxu0 0.0
      %2026 = vmatpush1.msra.mxu0 0.0
      %2027 = vmatprep.subr.mxu0 0.0
      %2028 = vmatpush1.msra.mxu0 0.0
      %2029 = vmatprep.subr.mxu0 0.0
      %2030 = vmatpush1.msra.mxu0 0.0
      %2031 = vmatprep.subr.mxu0 0.0
      %2032 = vmatpush1.msra.mxu0 0.0
      %2033 = vmatprep.subr.mxu0 0.0
      %2034 = vmatpush1.msra.mxu0 0.0
      %2035 = vmatprep.subr.mxu0 0.0
      %2036 = vmatpush1.msra.mxu0 0.0
      %2037 = vmatprep.subr.mxu0 0.0
      %2038 = vmatpush1.msra.mxu0 0.0
      %2039 = vmatprep.subr.mxu0 0.0
      %2040 = vmatpush1.msra.mxu0 0.0
      %2041 = vmatprep.subr.mxu0 0.0
      %2042 = vmatpush1.msra.mxu0 0.0
      %2043 = vmatprep.subr.mxu0 0.0
      %2044 = vmatpush1.msra.mxu0 0.0
      %2045 = vmatprep.subr.mxu0 0.0
      %2046 = vmatpush1.msra.mxu0 0.0
      %2047 = vmatprep.subr.mxu0 0.0
      %2048 = vmatpush1.msra.mxu0 0.0
      %2049 = vmatprep.subr.mxu0 0.0
      %2050 = vmatpush1.msra.mxu0 0.0
      %2051 = vmatprep.mubr.f32.mxu0 0.0
      %2052 = vmatmul.mubr.f32.gmra.mrb[0].mxu0 %v1979
      %v2053 = vpop.f32.mrb[0].mxu0
      %v2054 = vadd.f32 0.0, %v2053
      %v2055 = vpop.f32.mrb[0].mxu0
      %v2056 = vadd.f32 0.0, %v2055
      %2057 = vdwg.mxu0
      %v2058 = vadd.f32 %v1966, %v2054
      %v2059 = vadd.f32 %v1967, %v2056
      %s2060 = scalar_lea.vmem %s4, 16
      %v2061 = vld [vmem:[%s2060] sm:$0xf]
      %v2063 = vsel %vm937, %v2061, 0
      %v2066 = vsel %vm941, %v592, 0
      %v2069 = vsel %vm941, %v695, 0
      %2071 = vmatprep.subr.mxu0 %v2069
      %2072 = vmatpush1.msra.mxu0 %v2066
      %2073 = vmatprep.subr.mxu0 0.0
      %2074 = vmatpush1.msra.mxu0 0.0
      %2075 = vmatprep.subr.mxu0 0.0
      %2076 = vmatpush1.msra.mxu0 0.0
      %2077 = vmatprep.subr.mxu0 0.0
      %2078 = vmatpush1.msra.mxu0 0.0
      %2079 = vmatprep.subr.mxu0 0.0
      %2080 = vmatpush1.msra.mxu0 0.0
      %2081 = vmatprep.subr.mxu0 0.0
      %2082 = vmatpush1.msra.mxu0 0.0
      %2083 = vmatprep.subr.mxu0 0.0
      %2084 = vmatpush1.msra.mxu0 0.0
      %2085 = vmatprep.subr.mxu0 0.0
      %2086 = vmatpush1.msra.mxu0 0.0
      %2087 = vmatprep.subr.mxu0 0.0
      %2088 = vmatpush1.msra.mxu0 0.0
      %2089 = vmatprep.subr.mxu0 0.0
      %2090 = vmatpush1.msra.mxu0 0.0
      %2091 = vmatprep.subr.mxu0 0.0
      %2092 = vmatpush1.msra.mxu0 0.0
      %2093 = vmatprep.subr.mxu0 0.0
      %2094 = vmatpush1.msra.mxu0 0.0
      %2095 = vmatprep.subr.mxu0 0.0
      %2096 = vmatpush1.msra.mxu0 0.0
      %2097 = vmatprep.subr.mxu0 0.0
      %2098 = vmatpush1.msra.mxu0 0.0
      %2099 = vmatprep.subr.mxu0 0.0
      %2100 = vmatpush1.msra.mxu0 0.0
      %2101 = vmatprep.subr.mxu0 0.0
      %2102 = vmatpush1.msra.mxu0 0.0
      %2103 = vmatprep.subr.mxu0 0.0
      %2104 = vmatpush1.msra.mxu0 0.0
      %2105 = vmatprep.subr.mxu0 0.0
      %2106 = vmatpush1.msra.mxu0 0.0
      %2107 = vmatprep.subr.mxu0 0.0
      %2108 = vmatpush1.msra.mxu0 0.0
      %2109 = vmatprep.subr.mxu0 0.0
      %2110 = vmatpush1.msra.mxu0 0.0
      %2111 = vmatprep.subr.mxu0 0.0
      %2112 = vmatpush1.msra.mxu0 0.0
      %2113 = vmatprep.subr.mxu0 0.0
      %2114 = vmatpush1.msra.mxu0 0.0
      %2115 = vmatprep.subr.mxu0 0.0
      %2116 = vmatpush1.msra.mxu0 0.0
      %2117 = vmatprep.subr.mxu0 0.0
      %2118 = vmatpush1.msra.mxu0 0.0
      %2119 = vmatprep.subr.mxu0 0.0
      %2120 = vmatpush1.msra.mxu0 0.0
      %2121 = vmatprep.subr.mxu0 0.0
      %2122 = vmatpush1.msra.mxu0 0.0
      %2123 = vmatprep.subr.mxu0 0.0
      %2124 = vmatpush1.msra.mxu0 0.0
      %2125 = vmatprep.subr.mxu0 0.0
      %2126 = vmatpush1.msra.mxu0 0.0
      %2127 = vmatprep.subr.mxu0 0.0
      %2128 = vmatpush1.msra.mxu0 0.0
      %2129 = vmatprep.subr.mxu0 0.0
      %2130 = vmatpush1.msra.mxu0 0.0
      %2131 = vmatprep.subr.mxu0 0.0
      %2132 = vmatpush1.msra.mxu0 0.0
      %2133 = vmatprep.subr.mxu0 0.0
      %2134 = vmatpush1.msra.mxu0 0.0
      %2135 = vmatprep.mubr.f32.mxu0 0.0
      %2136 = vmatmul.mubr.f32.gmra.mrb[0].mxu0 %v2063
      %v2137 = vpop.f32.mrb[0].mxu0
      %v2138 = vadd.f32 0.0, %v2137
      %v2139 = vpop.f32.mrb[0].mxu0
      %v2140 = vadd.f32 0.0, %v2139
      %2141 = vdwg.mxu0
      %v2142 = vadd.f32 %v2058, %v2138
      %v2143 = vadd.f32 %v2059, %v2140
      %s2144 = scalar_lea.vmem %s5, 16
      %v2145 = vld [vmem:[%s2144] sm:$0xf]
      %v2147 = vsel %vm937, %v2145, 0
      %v2150 = vsel %vm941, %v799, 0
      %v2153 = vsel %vm941, %v903, 0
      %2155 = vmatprep.subr.mxu0 %v2153
      %2156 = vmatpush1.msra.mxu0 %v2150
      %2157 = vmatprep.subr.mxu0 0.0
      %2158 = vmatpush1.msra.mxu0 0.0
      %2159 = vmatprep.subr.mxu0 0.0
      %2160 = vmatpush1.msra.mxu0 0.0
      %2161 = vmatprep.subr.mxu0 0.0
      %2162 = vmatpush1.msra.mxu0 0.0
      %2163 = vmatprep.subr.mxu0 0.0
      %2164 = vmatpush1.msra.mxu0 0.0
      %2165 = vmatprep.subr.mxu0 0.0
      %2166 = vmatpush1.msra.mxu0 0.0
      %2167 = vmatprep.subr.mxu0 0.0
      %2168 = vmatpush1.msra.mxu0 0.0
      %2169 = vmatprep.subr.mxu0 0.0
      %2170 = vmatpush1.msra.mxu0 0.0
      %2171 = vmatprep.subr.mxu0 0.0
      %2172 = vmatpush1.msra.mxu0 0.0
      %2173 = vmatprep.subr.mxu0 0.0
      %2174 = vmatpush1.msra.mxu0 0.0
      %2175 = vmatprep.subr.mxu0 0.0
      %2176 = vmatpush1.msra.mxu0 0.0
      %2177 = vmatprep.subr.mxu0 0.0
      %2178 = vmatpush1.msra.mxu0 0.0
      %2179 = vmatprep.subr.mxu0 0.0
      %2180 = vmatpush1.msra.mxu0 0.0
      %2181 = vmatprep.subr.mxu0 0.0
      %2182 = vmatpush1.msra.mxu0 0.0
      %2183 = vmatprep.subr.mxu0 0.0
      %2184 = vmatpush1.msra.mxu0 0.0
      %2185 = vmatprep.subr.mxu0 0.0
      %2186 = vmatpush1.msra.mxu0 0.0
      %2187 = vmatprep.subr.mxu0 0.0
      %2188 = vmatpush1.msra.mxu0 0.0
      %2189 = vmatprep.subr.mxu0 0.0
      %2190 = vmatpush1.msra.mxu0 0.0
      %2191 = vmatprep.subr.mxu0 0.0
      %2192 = vmatpush1.msra.mxu0 0.0
      %2193 = vmatprep.subr.mxu0 0.0
      %2194 = vmatpush1.msra.mxu0 0.0
      %2195 = vmatprep.subr.mxu0 0.0
      %2196 = vmatpush1.msra.mxu0 0.0
      %2197 = vmatprep.subr.mxu0 0.0
      %2198 = vmatpush1.msra.mxu0 0.0
      %2199 = vmatprep.subr.mxu0 0.0
      %2200 = vmatpush1.msra.mxu0 0.0
      %2201 = vmatprep.subr.mxu0 0.0
      %2202 = vmatpush1.msra.mxu0 0.0
      %2203 = vmatprep.subr.mxu0 0.0
      %2204 = vmatpush1.msra.mxu0 0.0
      %2205 = vmatprep.subr.mxu0 0.0
      %2206 = vmatpush1.msra.mxu0 0.0
      %2207 = vmatprep.subr.mxu0 0.0
      %2208 = vmatpush1.msra.mxu0 0.0
      %2209 = vmatprep.subr.mxu0 0.0
      %2210 = vmatpush1.msra.mxu0 0.0
      %2211 = vmatprep.subr.mxu0 0.0
      %2212 = vmatpush1.msra.mxu0 0.0
      %2213 = vmatprep.subr.mxu0 0.0
      %2214 = vmatpush1.msra.mxu0 0.0
      %2215 = vmatprep.subr.mxu0 0.0
      %2216 = vmatpush1.msra.mxu0 0.0
      %2217 = vmatprep.subr.mxu0 0.0
      %2218 = vmatpush1.msra.mxu0 0.0
      %2219 = vmatprep.mubr.f32.mxu0 0.0
      %2220 = vmatmul.mubr.f32.gmra.mrb[0].mxu0 %v2147
      %v2221 = vpop.f32.mrb[0].mxu0
      %v2222 = vadd.f32 0.0, %v2221
      %v2223 = vpop.f32.mrb[0].mxu0
      %v2224 = vadd.f32 0.0, %v2223
      %2225 = vdwg.mxu0
      %v2226 = vadd.f32 %v2142, %v2222
      %v2227 = vadd.f32 %v2143, %v2224
      %s2228 = scalar_lea.vmem %s6, 16
      %v2229 = vld [vmem:[%s2228] sm:$0xf]
      %v2231 = vsel %vm937, %v2229, 0
      %v2234 = vsel %vm941, %v488, 0
      %v2237 = vsel %vm941, %v489, 0
      %2239 = vmatprep.subr.mxu0 %v2237
      %2240 = vmatpush1.msra.mxu0 %v2234
      %2241 = vmatprep.subr.mxu0 0.0
      %2242 = vmatpush1.msra.mxu0 0.0
      %2243 = vmatprep.subr.mxu0 0.0
      %2244 = vmatpush1.msra.mxu0 0.0
      %2245 = vmatprep.subr.mxu0 0.0
      %2246 = vmatpush1.msra.mxu0 0.0
      %2247 = vmatprep.subr.mxu0 0.0
      %2248 = vmatpush1.msra.mxu0 0.0
      %2249 = vmatprep.subr.mxu0 0.0
      %2250 = vmatpush1.msra.mxu0 0.0
      %2251 = vmatprep.subr.mxu0 0.0
      %2252 = vmatpush1.msra.mxu0 0.0
      %2253 = vmatprep.subr.mxu0 0.0
      %2254 = vmatpush1.msra.mxu0 0.0
      %2255 = vmatprep.subr.mxu0 0.0
      %2256 = vmatpush1.msra.mxu0 0.0
      %2257 = vmatprep.subr.mxu0 0.0
      %2258 = vmatpush1.msra.mxu0 0.0
      %2259 = vmatprep.subr.mxu0 0.0
      %2260 = vmatpush1.msra.mxu0 0.0
      %2261 = vmatprep.subr.mxu0 0.0
      %2262 = vmatpush1.msra.mxu0 0.0
      %2263 = vmatprep.subr.mxu0 0.0
      %2264 = vmatpush1.msra.mxu0 0.0
      %2265 = vmatprep.subr.mxu0 0.0
      %2266 = vmatpush1.msra.mxu0 0.0
      %2267 = vmatprep.subr.mxu0 0.0
      %2268 = vmatpush1.msra.mxu0 0.0
      %2269 = vmatprep.subr.mxu0 0.0
      %2270 = vmatpush1.msra.mxu0 0.0
      %2271 = vmatprep.subr.mxu0 0.0
      %2272 = vmatpush1.msra.mxu0 0.0
      %2273 = vmatprep.subr.mxu0 0.0
      %2274 = vmatpush1.msra.mxu0 0.0
      %2275 = vmatprep.subr.mxu0 0.0
      %2276 = vmatpush1.msra.mxu0 0.0
      %2277 = vmatprep.subr.mxu0 0.0
      %2278 = vmatpush1.msra.mxu0 0.0
      %2279 = vmatprep.subr.mxu0 0.0
      %2280 = vmatpush1.msra.mxu0 0.0
      %2281 = vmatprep.subr.mxu0 0.0
      %2282 = vmatpush1.msra.mxu0 0.0
      %2283 = vmatprep.subr.mxu0 0.0
      %2284 = vmatpush1.msra.mxu0 0.0
      %2285 = vmatprep.subr.mxu0 0.0
      %2286 = vmatpush1.msra.mxu0 0.0
      %2287 = vmatprep.subr.mxu0 0.0
      %2288 = vmatpush1.msra.mxu0 0.0
      %2289 = vmatprep.subr.mxu0 0.0
      %2290 = vmatpush1.msra.mxu0 0.0
      %2291 = vmatprep.subr.mxu0 0.0
      %2292 = vmatpush1.msra.mxu0 0.0
      %2293 = vmatprep.subr.mxu0 0.0
      %2294 = vmatpush1.msra.mxu0 0.0
      %2295 = vmatprep.subr.mxu0 0.0
      %2296 = vmatpush1.msra.mxu0 0.0
      %2297 = vmatprep.subr.mxu0 0.0
      %2298 = vmatpush1.msra.mxu0 0.0
      %2299 = vmatprep.subr.mxu0 0.0
      %2300 = vmatpush1.msra.mxu0 0.0
      %2301 = vmatprep.subr.mxu0 0.0
      %2302 = vmatpush1.msra.mxu0 0.0
      %2303 = vmatprep.mubr.f32.mxu0 0.0
      %2304 = vmatmul.mubr.f32.gmra.mrb[0].mxu0 %v2231
      %v2305 = vpop.f32.mrb[0].mxu0
      %v2306 = vadd.f32 0.0, %v2305
      %v2307 = vpop.f32.mrb[0].mxu0
      %v2308 = vadd.f32 0.0, %v2307
      %2309 = vdwg.mxu0
      %v2310 = vadd.f32 %v2226, %v2306
      %v2311 = vadd.f32 %v2227, %v2308
      %s2312 = scalar_lea.vmem %s3, 10
      %v2313 = vld [vmem:[%s2312] sm:$0x3]
      %2314 = vrot.lane.b32.xlu0 %v592, 127
      %v2315 = vpop.permute.xlu0 %2314
      %2316 = vrot.lane.b32.xlu0 %v695, 127
      %v2317 = vpop.permute.xlu0 %2316
      %vm2318 = vcmp.lt.s32.totalorder %v910, 127
      %v2319 = vsel %vm2318, %v2315, %v2317
      %v2320 = vsel %vm2318, %v2317, %v2315
      %v2322 = vlaneseq
      %v2323 = vshrl.u32 %v2322, 7
      %v2324 = vsub.s32 0, %v2323
      %v2325 = vrot.slane %v2313, %v2324
      %v2326 = vlaneseq
      %v2327 = vshrl.u32 %v2326, 7
      %v2328 = vsub.s32 1, %v2327
      %v2329 = vrot.slane %v2313, %v2328
      %v2332 = vmul.f32 %v2319, %v2325
      %v2333 = vmul.f32 %v2320, %v2329
      %s2334 = scalar_lea.vmem %s4, 20
      %v2335 = vld [vmem:[%s2334] sm:$0xf]
      %v2337 = vsel %vm937, %v2335, 0
      %v2340 = vsel %vm941, %v2332, 0
      %v2343 = vsel %vm941, %v2333, 0
      %2345 = vmatprep.subr.mxu0 %v2343
      %2346 = vmatpush1.msra.mxu0 %v2340
      %2347 = vmatprep.subr.mxu0 0.0
      %2348 = vmatpush1.msra.mxu0 0.0
      %2349 = vmatprep.subr.mxu0 0.0
      %2350 = vmatpush1.msra.mxu0 0.0
      %2351 = vmatprep.subr.mxu0 0.0
      %2352 = vmatpush1.msra.mxu0 0.0
      %2353 = vmatprep.subr.mxu0 0.0
      %2354 = vmatpush1.msra.mxu0 0.0
      %2355 = vmatprep.subr.mxu0 0.0
      %2356 = vmatpush1.msra.mxu0 0.0
      %2357 = vmatprep.subr.mxu0 0.0
      %2358 = vmatpush1.msra.mxu0 0.0
      %2359 = vmatprep.subr.mxu0 0.0
      %2360 = vmatpush1.msra.mxu0 0.0
      %2361 = vmatprep.subr.mxu0 0.0
      %2362 = vmatpush1.msra.mxu0 0.0
      %2363 = vmatprep.subr.mxu0 0.0
      %2364 = vmatpush1.msra.mxu0 0.0
      %2365 = vmatprep.subr.mxu0 0.0
      %2366 = vmatpush1.msra.mxu0 0.0
      %2367 = vmatprep.subr.mxu0 0.0
      %2368 = vmatpush1.msra.mxu0 0.0
      %2369 = vmatprep.subr.mxu0 0.0
      %2370 = vmatpush1.msra.mxu0 0.0
      %2371 = vmatprep.subr.mxu0 0.0
      %2372 = vmatpush1.msra.mxu0 0.0
      %2373 = vmatprep.subr.mxu0 0.0
      %2374 = vmatpush1.msra.mxu0 0.0
      %2375 = vmatprep.subr.mxu0 0.0
      %2376 = vmatpush1.msra.mxu0 0.0
      %2377 = vmatprep.subr.mxu0 0.0
      %2378 = vmatpush1.msra.mxu0 0.0
      %2379 = vmatprep.subr.mxu0 0.0
      %2380 = vmatpush1.msra.mxu0 0.0
      %2381 = vmatprep.subr.mxu0 0.0
      %2382 = vmatpush1.msra.mxu0 0.0
      %2383 = vmatprep.subr.mxu0 0.0
      %2384 = vmatpush1.msra.mxu0 0.0
      %2385 = vmatprep.subr.mxu0 0.0
      %2386 = vmatpush1.msra.mxu0 0.0
      %2387 = vmatprep.subr.mxu0 0.0
      %2388 = vmatpush1.msra.mxu0 0.0
      %2389 = vmatprep.subr.mxu0 0.0
      %2390 = vmatpush1.msra.mxu0 0.0
      %2391 = vmatprep.subr.mxu0 0.0
      %2392 = vmatpush1.msra.mxu0 0.0
      %2393 = vmatprep.subr.mxu0 0.0
      %2394 = vmatpush1.msra.mxu0 0.0
      %2395 = vmatprep.subr.mxu0 0.0
      %2396 = vmatpush1.msra.mxu0 0.0
      %2397 = vmatprep.subr.mxu0 0.0
      %2398 = vmatpush1.msra.mxu0 0.0
      %2399 = vmatprep.subr.mxu0 0.0
      %2400 = vmatpush1.msra.mxu0 0.0
      %2401 = vmatprep.subr.mxu0 0.0
      %2402 = vmatpush1.msra.mxu0 0.0
      %2403 = vmatprep.subr.mxu0 0.0
      %2404 = vmatpush1.msra.mxu0 0.0
      %2405 = vmatprep.subr.mxu0 0.0
      %2406 = vmatpush1.msra.mxu0 0.0
      %2407 = vmatprep.subr.mxu0 0.0
      %2408 = vmatpush1.msra.mxu0 0.0
      %2409 = vmatprep.mubr.f32.mxu0 0.0
      %2410 = vmatmul.mubr.f32.gmra.mrb[0].mxu0 %v2337
      %v2411 = vpop.f32.mrb[0].mxu0
      %v2412 = vadd.f32 0.0, %v2411
      %v2413 = vpop.f32.mrb[0].mxu0
      %v2414 = vadd.f32 0.0, %v2413
      %2415 = vdwg.mxu0
      %v2416 = vadd.f32 %v2310, %v2412
      %v2417 = vadd.f32 %v2311, %v2414
      %2418 = vrot.lane.b32.xlu0 %v799, 127
      %v2419 = vpop.permute.xlu0 %2418
      %2420 = vrot.lane.b32.xlu0 %v903, 127
      %v2421 = vpop.permute.xlu0 %2420
      %v2422 = vsel %vm2318, %v2419, %v2421
      %v2423 = vsel %vm2318, %v2421, %v2419
      %v2424 = vmul.f32 %v2422, %v2325
      %v2425 = vmul.f32 %v2423, %v2329
      %s2426 = scalar_lea.vmem %s5, 20
      %v2427 = vld [vmem:[%s2426] sm:$0xf]
      %v2429 = vsel %vm937, %v2427, 0
      %v2432 = vsel %vm941, %v2424, 0
      %v2435 = vsel %vm941, %v2425, 0
      %2437 = vmatprep.subr.mxu0 %v2435
      %2438 = vmatpush1.msra.mxu0 %v2432
      %2439 = vmatprep.subr.mxu0 0.0
      %2440 = vmatpush1.msra.mxu0 0.0
      %2441 = vmatprep.subr.mxu0 0.0
      %2442 = vmatpush1.msra.mxu0 0.0
      %2443 = vmatprep.subr.mxu0 0.0
      %2444 = vmatpush1.msra.mxu0 0.0
      %2445 = vmatprep.subr.mxu0 0.0
      %2446 = vmatpush1.msra.mxu0 0.0
      %2447 = vmatprep.subr.mxu0 0.0
      %2448 = vmatpush1.msra.mxu0 0.0
      %2449 = vmatprep.subr.mxu0 0.0
      %2450 = vmatpush1.msra.mxu0 0.0
      %2451 = vmatprep.subr.mxu0 0.0
      %2452 = vmatpush1.msra.mxu0 0.0
      %2453 = vmatprep.subr.mxu0 0.0
      %2454 = vmatpush1.msra.mxu0 0.0
      %2455 = vmatprep.subr.mxu0 0.0
      %2456 = vmatpush1.msra.mxu0 0.0
      %2457 = vmatprep.subr.mxu0 0.0
      %2458 = vmatpush1.msra.mxu0 0.0
      %2459 = vmatprep.subr.mxu0 0.0
      %2460 = vmatpush1.msra.mxu0 0.0
      %2461 = vmatprep.subr.mxu0 0.0
      %2462 = vmatpush1.msra.mxu0 0.0
      %2463 = vmatprep.subr.mxu0 0.0
      %2464 = vmatpush1.msra.mxu0 0.0
      %2465 = vmatprep.subr.mxu0 0.0
      %2466 = vmatpush1.msra.mxu0 0.0
      %2467 = vmatprep.subr.mxu0 0.0
      %2468 = vmatpush1.msra.mxu0 0.0
      %2469 = vmatprep.subr.mxu0 0.0
      %2470 = vmatpush1.msra.mxu0 0.0
      %2471 = vmatprep.subr.mxu0 0.0
      %2472 = vmatpush1.msra.mxu0 0.0
      %2473 = vmatprep.subr.mxu0 0.0
      %2474 = vmatpush1.msra.mxu0 0.0
      %2475 = vmatprep.subr.mxu0 0.0
      %2476 = vmatpush1.msra.mxu0 0.0
      %2477 = vmatprep.subr.mxu0 0.0
      %2478 = vmatpush1.msra.mxu0 0.0
      %2479 = vmatprep.subr.mxu0 0.0
      %2480 = vmatpush1.msra.mxu0 0.0
      %2481 = vmatprep.subr.mxu0 0.0
      %2482 = vmatpush1.msra.mxu0 0.0
      %2483 = vmatprep.subr.mxu0 0.0
      %2484 = vmatpush1.msra.mxu0 0.0
      %2485 = vmatprep.subr.mxu0 0.0
      %2486 = vmatpush1.msra.mxu0 0.0
      %2487 = vmatprep.subr.mxu0 0.0
      %2488 = vmatpush1.msra.mxu0 0.0
      %2489 = vmatprep.subr.mxu0 0.0
      %2490 = vmatpush1.msra.mxu0 0.0
      %2491 = vmatprep.subr.mxu0 0.0
      %2492 = vmatpush1.msra.mxu0 0.0
      %2493 = vmatprep.subr.mxu0 0.0
      %2494 = vmatpush1.msra.mxu0 0.0
      %2495 = vmatprep.subr.mxu0 0.0
      %2496 = vmatpush1.msra.mxu0 0.0
      %2497 = vmatprep.subr.mxu0 0.0
      %2498 = vmatpush1.msra.mxu0 0.0
      %2499 = vmatprep.subr.mxu0 0.0
      %2500 = vmatpush1.msra.mxu0 0.0
      %2501 = vmatprep.mubr.f32.mxu0 0.0
      %2502 = vmatmul.mubr.f32.gmra.mrb[0].mxu0 %v2429
      %v2503 = vpop.f32.mrb[0].mxu0
      %v2504 = vadd.f32 0.0, %v2503
      %v2505 = vpop.f32.mrb[0].mxu0
      %v2506 = vadd.f32 0.0, %v2505
      %2507 = vdwg.mxu0
      %v2508 = vadd.f32 %v2416, %v2504
      %v2509 = vadd.f32 %v2417, %v2506
      %2510 = vrot.lane.b32.xlu0 %v488, 127
      %v2511 = vpop.permute.xlu0 %2510
      %2512 = vrot.lane.b32.xlu0 %v489, 127
      %v2513 = vpop.permute.xlu0 %2512
      %v2514 = vsel %vm2318, %v2511, %v2513
      %v2515 = vsel %vm2318, %v2513, %v2511
      %v2516 = vmul.f32 %v2514, %v2325
      %v2517 = vmul.f32 %v2515, %v2329
      %s2518 = scalar_lea.vmem %s6, 20
      %v2519 = vld [vmem:[%s2518] sm:$0xf]
      %v2521 = vsel %vm937, %v2519, 0
      %v2524 = vsel %vm941, %v2516, 0
      %v2527 = vsel %vm941, %v2517, 0
      %2529 = vmatprep.subr.mxu0 %v2527
      %2530 = vmatpush1.msra.mxu0 %v2524
      %2531 = vmatprep.subr.mxu0 0.0
      %2532 = vmatpush1.msra.mxu0 0.0
      %2533 = vmatprep.subr.mxu0 0.0
      %2534 = vmatpush1.msra.mxu0 0.0
      %2535 = vmatprep.subr.mxu0 0.0
      %2536 = vmatpush1.msra.mxu0 0.0
      %2537 = vmatprep.subr.mxu0 0.0
      %2538 = vmatpush1.msra.mxu0 0.0
      %2539 = vmatprep.subr.mxu0 0.0
      %2540 = vmatpush1.msra.mxu0 0.0
      %2541 = vmatprep.subr.mxu0 0.0
      %2542 = vmatpush1.msra.mxu0 0.0
      %2543 = vmatprep.subr.mxu0 0.0
      %2544 = vmatpush1.msra.mxu0 0.0
      %2545 = vmatprep.subr.mxu0 0.0
      %2546 = vmatpush1.msra.mxu0 0.0
      %2547 = vmatprep.subr.mxu0 0.0
      %2548 = vmatpush1.msra.mxu0 0.0
      %2549 = vmatprep.subr.mxu0 0.0
      %2550 = vmatpush1.msra.mxu0 0.0
      %2551 = vmatprep.subr.mxu0 0.0
      %2552 = vmatpush1.msra.mxu0 0.0
      %2553 = vmatprep.subr.mxu0 0.0
      %2554 = vmatpush1.msra.mxu0 0.0
      %2555 = vmatprep.subr.mxu0 0.0
      %2556 = vmatpush1.msra.mxu0 0.0
      %2557 = vmatprep.subr.mxu0 0.0
      %2558 = vmatpush1.msra.mxu0 0.0
      %2559 = vmatprep.subr.mxu0 0.0
      %2560 = vmatpush1.msra.mxu0 0.0
      %2561 = vmatprep.subr.mxu0 0.0
      %2562 = vmatpush1.msra.mxu0 0.0
      %2563 = vmatprep.subr.mxu0 0.0
      %2564 = vmatpush1.msra.mxu0 0.0
      %2565 = vmatprep.subr.mxu0 0.0
      %2566 = vmatpush1.msra.mxu0 0.0
      %2567 = vmatprep.subr.mxu0 0.0
      %2568 = vmatpush1.msra.mxu0 0.0
      %2569 = vmatprep.subr.mxu0 0.0
      %2570 = vmatpush1.msra.mxu0 0.0
      %2571 = vmatprep.subr.mxu0 0.0
      %2572 = vmatpush1.msra.mxu0 0.0
      %2573 = vmatprep.subr.mxu0 0.0
      %2574 = vmatpush1.msra.mxu0 0.0
      %2575 = vmatprep.subr.mxu0 0.0
      %2576 = vmatpush1.msra.mxu0 0.0
      %2577 = vmatprep.subr.mxu0 0.0
      %2578 = vmatpush1.msra.mxu0 0.0
      %2579 = vmatprep.subr.mxu0 0.0
      %2580 = vmatpush1.msra.mxu0 0.0
      %2581 = vmatprep.subr.mxu0 0.0
      %2582 = vmatpush1.msra.mxu0 0.0
      %2583 = vmatprep.subr.mxu0 0.0
      %2584 = vmatpush1.msra.mxu0 0.0
      %2585 = vmatprep.subr.mxu0 0.0
      %2586 = vmatpush1.msra.mxu0 0.0
      %2587 = vmatprep.subr.mxu0 0.0
      %2588 = vmatpush1.msra.mxu0 0.0
      %2589 = vmatprep.subr.mxu0 0.0
      %2590 = vmatpush1.msra.mxu0 0.0
      %2591 = vmatprep.subr.mxu0 0.0
      %2592 = vmatpush1.msra.mxu0 0.0
      %2593 = vmatprep.mubr.f32.mxu0 0.0
      %2594 = vmatmul.mubr.f32.gmra.mrb[0].mxu0 %v2521
      %v2595 = vpop.f32.mrb[0].mxu0
      %v2596 = vadd.f32 0.0, %v2595
      %v2597 = vpop.f32.mrb[0].mxu0
      %v2598 = vadd.f32 0.0, %v2597
      %2599 = vdwg.mxu0
      %v2600 = vadd.f32 %v2508, %v2596
      %v2601 = vadd.f32 %v2509, %v2598
      %s2602 = scalar_lea.vmem %s3, 12
      %v2603 = vld [vmem:[%s2602] sm:$0x3]
      %2604 = vrot.lane.b32.xlu0 %v592, 113
      %v2605 = vpop.permute.xlu0 %2604
      %2606 = vrot.lane.b32.xlu0 %v695, 113
      %v2607 = vpop.permute.xlu0 %2606
      %vm2608 = vcmp.lt.s32.totalorder %v910, 113
      %v2609 = vsel %vm2608, %v2605, %v2607
      %v2610 = vsel %vm2608, %v2607, %v2605
      %v2612 = vlaneseq
      %v2613 = vshrl.u32 %v2612, 7
      %v2614 = vsub.s32 0, %v2613
      %v2615 = vrot.slane %v2603, %v2614
      %v2616 = vlaneseq
      %v2617 = vshrl.u32 %v2616, 7
      %v2618 = vsub.s32 1, %v2617
      %v2619 = vrot.slane %v2603, %v2618
      %v2622 = vmul.f32 %v2609, %v2615
      %v2623 = vmul.f32 %v2610, %v2619
      %s2624 = scalar_lea.vmem %s4, 24
      %v2625 = vld [vmem:[%s2624] sm:$0xf]
      %v2627 = vsel %vm937, %v2625, 0
      %v2630 = vsel %vm941, %v2622, 0
      %v2633 = vsel %vm941, %v2623, 0
      %2635 = vmatprep.subr.mxu0 %v2633
      %2636 = vmatpush1.msra.mxu0 %v2630
      %2637 = vmatprep.subr.mxu0 0.0
      %2638 = vmatpush1.msra.mxu0 0.0
      %2639 = vmatprep.subr.mxu0 0.0
      %2640 = vmatpush1.msra.mxu0 0.0
      %2641 = vmatprep.subr.mxu0 0.0
      %2642 = vmatpush1.msra.mxu0 0.0
      %2643 = vmatprep.subr.mxu0 0.0
      %2644 = vmatpush1.msra.mxu0 0.0
      %2645 = vmatprep.subr.mxu0 0.0
      %2646 = vmatpush1.msra.mxu0 0.0
      %2647 = vmatprep.subr.mxu0 0.0
      %2648 = vmatpush1.msra.mxu0 0.0
      %2649 = vmatprep.subr.mxu0 0.0
      %2650 = vmatpush1.msra.mxu0 0.0
      %2651 = vmatprep.subr.mxu0 0.0
      %2652 = vmatpush1.msra.mxu0 0.0
      %2653 = vmatprep.subr.mxu0 0.0
      %2654 = vmatpush1.msra.mxu0 0.0
      %2655 = vmatprep.subr.mxu0 0.0
      %2656 = vmatpush1.msra.mxu0 0.0
      %2657 = vmatprep.subr.mxu0 0.0
      %2658 = vmatpush1.msra.mxu0 0.0
      %2659 = vmatprep.subr.mxu0 0.0
      %2660 = vmatpush1.msra.mxu0 0.0
      %2661 = vmatprep.subr.mxu0 0.0
      %2662 = vmatpush1.msra.mxu0 0.0
      %2663 = vmatprep.subr.mxu0 0.0
      %2664 = vmatpush1.msra.mxu0 0.0
      %2665 = vmatprep.subr.mxu0 0.0
      %2666 = vmatpush1.msra.mxu0 0.0
      %2667 = vmatprep.subr.mxu0 0.0
      %2668 = vmatpush1.msra.mxu0 0.0
      %2669 = vmatprep.subr.mxu0 0.0
      %2670 = vmatpush1.msra.mxu0 0.0
      %2671 = vmatprep.subr.mxu0 0.0
      %2672 = vmatpush1.msra.mxu0 0.0
      %2673 = vmatprep.subr.mxu0 0.0
      %2674 = vmatpush1.msra.mxu0 0.0
      %2675 = vmatprep.subr.mxu0 0.0
      %2676 = vmatpush1.msra.mxu0 0.0
      %2677 = vmatprep.subr.mxu0 0.0
      %2678 = vmatpush1.msra.mxu0 0.0
      %2679 = vmatprep.subr.mxu0 0.0
      %2680 = vmatpush1.msra.mxu0 0.0
      %2681 = vmatprep.subr.mxu0 0.0
      %2682 = vmatpush1.msra.mxu0 0.0
      %2683 = vmatprep.subr.mxu0 0.0
      %2684 = vmatpush1.msra.mxu0 0.0
      %2685 = vmatprep.subr.mxu0 0.0
      %2686 = vmatpush1.msra.mxu0 0.0
      %2687 = vmatprep.subr.mxu0 0.0
      %2688 = vmatpush1.msra.mxu0 0.0
      %2689 = vmatprep.subr.mxu0 0.0
      %2690 = vmatpush1.msra.mxu0 0.0
      %2691 = vmatprep.subr.mxu0 0.0
      %2692 = vmatpush1.msra.mxu0 0.0
      %2693 = vmatprep.subr.mxu0 0.0
      %2694 = vmatpush1.msra.mxu0 0.0
      %2695 = vmatprep.subr.mxu0 0.0
      %2696 = vmatpush1.msra.mxu0 0.0
      %2697 = vmatprep.subr.mxu0 0.0
      %2698 = vmatpush1.msra.mxu0 0.0
      %2699 = vmatprep.mubr.f32.mxu0 0.0
      %2700 = vmatmul.mubr.f32.gmra.mrb[0].mxu0 %v2627
      %v2701 = vpop.f32.mrb[0].mxu0
      %v2702 = vadd.f32 0.0, %v2701
      %v2703 = vpop.f32.mrb[0].mxu0
      %v2704 = vadd.f32 0.0, %v2703
      %2705 = vdwg.mxu0
      %v2706 = vadd.f32 %v2600, %v2702
      %v2707 = vadd.f32 %v2601, %v2704
      %2708 = vrot.lane.b32.xlu0 %v799, 113
      %v2709 = vpop.permute.xlu0 %2708
      %2710 = vrot.lane.b32.xlu0 %v903, 113
      %v2711 = vpop.permute.xlu0 %2710
      %v2712 = vsel %vm2608, %v2709, %v2711
      %v2713 = vsel %vm2608, %v2711, %v2709
      %v2714 = vmul.f32 %v2712, %v2615
      %v2715 = vmul.f32 %v2713, %v2619
      %s2716 = scalar_lea.vmem %s5, 24
      %v2717 = vld [vmem:[%s2716] sm:$0xf]
      %v2719 = vsel %vm937, %v2717, 0
      %v2722 = vsel %vm941, %v2714, 0
      %v2725 = vsel %vm941, %v2715, 0
      %2727 = vmatprep.subr.mxu0 %v2725
      %2728 = vmatpush1.msra.mxu0 %v2722
      %2729 = vmatprep.subr.mxu0 0.0
      %2730 = vmatpush1.msra.mxu0 0.0
      %2731 = vmatprep.subr.mxu0 0.0
      %2732 = vmatpush1.msra.mxu0 0.0
      %2733 = vmatprep.subr.mxu0 0.0
      %2734 = vmatpush1.msra.mxu0 0.0
      %2735 = vmatprep.subr.mxu0 0.0
      %2736 = vmatpush1.msra.mxu0 0.0
      %2737 = vmatprep.subr.mxu0 0.0
      %2738 = vmatpush1.msra.mxu0 0.0
      %2739 = vmatprep.subr.mxu0 0.0
      %2740 = vmatpush1.msra.mxu0 0.0
      %2741 = vmatprep.subr.mxu0 0.0
      %2742 = vmatpush1.msra.mxu0 0.0
      %2743 = vmatprep.subr.mxu0 0.0
      %2744 = vmatpush1.msra.mxu0 0.0
      %2745 = vmatprep.subr.mxu0 0.0
      %2746 = vmatpush1.msra.mxu0 0.0
      %2747 = vmatprep.subr.mxu0 0.0
      %2748 = vmatpush1.msra.mxu0 0.0
      %2749 = vmatprep.subr.mxu0 0.0
      %2750 = vmatpush1.msra.mxu0 0.0
      %2751 = vmatprep.subr.mxu0 0.0
      %2752 = vmatpush1.msra.mxu0 0.0
      %2753 = vmatprep.subr.mxu0 0.0
      %2754 = vmatpush1.msra.mxu0 0.0
      %2755 = vmatprep.subr.mxu0 0.0
      %2756 = vmatpush1.msra.mxu0 0.0
      %2757 = vmatprep.subr.mxu0 0.0
      %2758 = vmatpush1.msra.mxu0 0.0
      %2759 = vmatprep.subr.mxu0 0.0
      %2760 = vmatpush1.msra.mxu0 0.0
      %2761 = vmatprep.subr.mxu0 0.0
      %2762 = vmatpush1.msra.mxu0 0.0
      %2763 = vmatprep.subr.mxu0 0.0
      %2764 = vmatpush1.msra.mxu0 0.0
      %2765 = vmatprep.subr.mxu0 0.0
      %2766 = vmatpush1.msra.mxu0 0.0
      %2767 = vmatprep.subr.mxu0 0.0
      %2768 = vmatpush1.msra.mxu0 0.0
      %2769 = vmatprep.subr.mxu0 0.0
      %2770 = vmatpush1.msra.mxu0 0.0
      %2771 = vmatprep.subr.mxu0 0.0
      %2772 = vmatpush1.msra.mxu0 0.0
      %2773 = vmatprep.subr.mxu0 0.0
      %2774 = vmatpush1.msra.mxu0 0.0
      %2775 = vmatprep.subr.mxu0 0.0
      %2776 = vmatpush1.msra.mxu0 0.0
      %2777 = vmatprep.subr.mxu0 0.0
      %2778 = vmatpush1.msra.mxu0 0.0
      %2779 = vmatprep.subr.mxu0 0.0
      %2780 = vmatpush1.msra.mxu0 0.0
      %2781 = vmatprep.subr.mxu0 0.0
      %2782 = vmatpush1.msra.mxu0 0.0
      %2783 = vmatprep.subr.mxu0 0.0
      %2784 = vmatpush1.msra.mxu0 0.0
      %2785 = vmatprep.subr.mxu0 0.0
      %2786 = vmatpush1.msra.mxu0 0.0
      %2787 = vmatprep.subr.mxu0 0.0
      %2788 = vmatpush1.msra.mxu0 0.0
      %2789 = vmatprep.subr.mxu0 0.0
      %2790 = vmatpush1.msra.mxu0 0.0
      %2791 = vmatprep.mubr.f32.mxu0 0.0
      %2792 = vmatmul.mubr.f32.gmra.mrb[0].mxu0 %v2719
      %v2793 = vpop.f32.mrb[0].mxu0
      %v2794 = vadd.f32 0.0, %v2793
      %v2795 = vpop.f32.mrb[0].mxu0
      %v2796 = vadd.f32 0.0, %v2795
      %2797 = vdwg.mxu0
      %v2798 = vadd.f32 %v2706, %v2794
      %v2799 = vadd.f32 %v2707, %v2796
      %2800 = vrot.lane.b32.xlu0 %v488, 113
      %v2801 = vpop.permute.xlu0 %2800
      %2802 = vrot.lane.b32.xlu0 %v489, 113
      %v2803 = vpop.permute.xlu0 %2802
      %v2804 = vsel %vm2608, %v2801, %v2803
      %v2805 = vsel %vm2608, %v2803, %v2801
      %v2806 = vmul.f32 %v2804, %v2615
      %v2807 = vmul.f32 %v2805, %v2619
      %s2808 = scalar_lea.vmem %s6, 24
      %v2809 = vld [vmem:[%s2808] sm:$0xf]
      %v2811 = vsel %vm937, %v2809, 0
      %v2814 = vsel %vm941, %v2806, 0
      %v2817 = vsel %vm941, %v2807, 0
      %2819 = vmatprep.subr.mxu0 %v2817
      %2820 = vmatpush1.msra.mxu0 %v2814
      %2821 = vmatprep.subr.mxu0 0.0
      %2822 = vmatpush1.msra.mxu0 0.0
      %2823 = vmatprep.subr.mxu0 0.0
      %2824 = vmatpush1.msra.mxu0 0.0
      %2825 = vmatprep.subr.mxu0 0.0
      %2826 = vmatpush1.msra.mxu0 0.0
      %2827 = vmatprep.subr.mxu0 0.0
      %2828 = vmatpush1.msra.mxu0 0.0
      %2829 = vmatprep.subr.mxu0 0.0
      %2830 = vmatpush1.msra.mxu0 0.0
      %2831 = vmatprep.subr.mxu0 0.0
      %2832 = vmatpush1.msra.mxu0 0.0
      %2833 = vmatprep.subr.mxu0 0.0
      %2834 = vmatpush1.msra.mxu0 0.0
      %2835 = vmatprep.subr.mxu0 0.0
      %2836 = vmatpush1.msra.mxu0 0.0
      %2837 = vmatprep.subr.mxu0 0.0
      %2838 = vmatpush1.msra.mxu0 0.0
      %2839 = vmatprep.subr.mxu0 0.0
      %2840 = vmatpush1.msra.mxu0 0.0
      %2841 = vmatprep.subr.mxu0 0.0
      %2842 = vmatpush1.msra.mxu0 0.0
      %2843 = vmatprep.subr.mxu0 0.0
      %2844 = vmatpush1.msra.mxu0 0.0
      %2845 = vmatprep.subr.mxu0 0.0
      %2846 = vmatpush1.msra.mxu0 0.0
      %2847 = vmatprep.subr.mxu0 0.0
      %2848 = vmatpush1.msra.mxu0 0.0
      %2849 = vmatprep.subr.mxu0 0.0
      %2850 = vmatpush1.msra.mxu0 0.0
      %2851 = vmatprep.subr.mxu0 0.0
      %2852 = vmatpush1.msra.mxu0 0.0
      %2853 = vmatprep.subr.mxu0 0.0
      %2854 = vmatpush1.msra.mxu0 0.0
      %2855 = vmatprep.subr.mxu0 0.0
      %2856 = vmatpush1.msra.mxu0 0.0
      %2857 = vmatprep.subr.mxu0 0.0
      %2858 = vmatpush1.msra.mxu0 0.0
      %2859 = vmatprep.subr.mxu0 0.0
      %2860 = vmatpush1.msra.mxu0 0.0
      %2861 = vmatprep.subr.mxu0 0.0
      %2862 = vmatpush1.msra.mxu0 0.0
      %2863 = vmatprep.subr.mxu0 0.0
      %2864 = vmatpush1.msra.mxu0 0.0
      %2865 = vmatprep.subr.mxu0 0.0
      %2866 = vmatpush1.msra.mxu0 0.0
      %2867 = vmatprep.subr.mxu0 0.0
      %2868 = vmatpush1.msra.mxu0 0.0
      %2869 = vmatprep.subr.mxu0 0.0
      %2870 = vmatpush1.msra.mxu0 0.0
      %2871 = vmatprep.subr.mxu0 0.0
      %2872 = vmatpush1.msra.mxu0 0.0
      %2873 = vmatprep.subr.mxu0 0.0
      %2874 = vmatpush1.msra.mxu0 0.0
      %2875 = vmatprep.subr.mxu0 0.0
      %2876 = vmatpush1.msra.mxu0 0.0
      %2877 = vmatprep.subr.mxu0 0.0
      %2878 = vmatpush1.msra.mxu0 0.0
      %2879 = vmatprep.subr.mxu0 0.0
      %2880 = vmatpush1.msra.mxu0 0.0
      %2881 = vmatprep.subr.mxu0 0.0
      %2882 = vmatpush1.msra.mxu0 0.0
      %2883 = vmatprep.mubr.f32.mxu0 0.0
      %2884 = vmatmul.mubr.f32.gmra.mrb[0].mxu0 %v2811
      %v2885 = vpop.f32.mrb[0].mxu0
      %v2886 = vadd.f32 0.0, %v2885
      %v2887 = vpop.f32.mrb[0].mxu0
      %v2888 = vadd.f32 0.0, %v2887
      %2889 = vdwg.mxu0
      %v2890 = vadd.f32 %v2798, %v2886
      %v2891 = vadd.f32 %v2799, %v2888
      %s2892 = scalar_lea.vmem %s3, 14
      %v2893 = vld [vmem:[%s2892] sm:$0x3]
      %2894 = vrot.lane.b32.xlu0 %v592, 112
      %v2895 = vpop.permute.xlu0 %2894
      %2896 = vrot.lane.b32.xlu0 %v695, 112
      %v2897 = vpop.permute.xlu0 %2896
      %vm2898 = vcmp.lt.s32.totalorder %v910, 112
      %v2899 = vsel %vm2898, %v2895, %v2897
      %v2900 = vsel %vm2898, %v2897, %v2895
      %v2902 = vlaneseq
      %v2903 = vshrl.u32 %v2902, 7
      %v2904 = vsub.s32 0, %v2903
      %v2905 = vrot.slane %v2893, %v2904
      %v2906 = vlaneseq
      %v2907 = vshrl.u32 %v2906, 7
      %v2908 = vsub.s32 1, %v2907
      %v2909 = vrot.slane %v2893, %v2908
      %v2912 = vmul.f32 %v2899, %v2905
      %v2913 = vmul.f32 %v2900, %v2909
      %s2914 = scalar_lea.vmem %s4, 28
      %v2915 = vld [vmem:[%s2914] sm:$0xf]
      %v2917 = vsel %vm937, %v2915, 0
      %v2920 = vsel %vm941, %v2912, 0
      %v2923 = vsel %vm941, %v2913, 0
      %2925 = vmatprep.subr.mxu0 %v2923
      %2926 = vmatpush1.msra.mxu0 %v2920
      %2927 = vmatprep.subr.mxu0 0.0
      %2928 = vmatpush1.msra.mxu0 0.0
      %2929 = vmatprep.subr.mxu0 0.0
      %2930 = vmatpush1.msra.mxu0 0.0
      %2931 = vmatprep.subr.mxu0 0.0
      %2932 = vmatpush1.msra.mxu0 0.0
      %2933 = vmatprep.subr.mxu0 0.0
      %2934 = vmatpush1.msra.mxu0 0.0
      %2935 = vmatprep.subr.mxu0 0.0
      %2936 = vmatpush1.msra.mxu0 0.0
      %2937 = vmatprep.subr.mxu0 0.0
      %2938 = vmatpush1.msra.mxu0 0.0
      %2939 = vmatprep.subr.mxu0 0.0
      %2940 = vmatpush1.msra.mxu0 0.0
      %2941 = vmatprep.subr.mxu0 0.0
      %2942 = vmatpush1.msra.mxu0 0.0
      %2943 = vmatprep.subr.mxu0 0.0
      %2944 = vmatpush1.msra.mxu0 0.0
      %2945 = vmatprep.subr.mxu0 0.0
      %2946 = vmatpush1.msra.mxu0 0.0
      %2947 = vmatprep.subr.mxu0 0.0
      %2948 = vmatpush1.msra.mxu0 0.0
      %2949 = vmatprep.subr.mxu0 0.0
      %2950 = vmatpush1.msra.mxu0 0.0
      %2951 = vmatprep.subr.mxu0 0.0
      %2952 = vmatpush1.msra.mxu0 0.0
      %2953 = vmatprep.subr.mxu0 0.0
      %2954 = vmatpush1.msra.mxu0 0.0
      %2955 = vmatprep.subr.mxu0 0.0
      %2956 = vmatpush1.msra.mxu0 0.0
      %2957 = vmatprep.subr.mxu0 0.0
      %2958 = vmatpush1.msra.mxu0 0.0
      %2959 = vmatprep.subr.mxu0 0.0
      %2960 = vmatpush1.msra.mxu0 0.0
      %2961 = vmatprep.subr.mxu0 0.0
      %2962 = vmatpush1.msra.mxu0 0.0
      %2963 = vmatprep.subr.mxu0 0.0
      %2964 = vmatpush1.msra.mxu0 0.0
      %2965 = vmatprep.subr.mxu0 0.0
      %2966 = vmatpush1.msra.mxu0 0.0
      %2967 = vmatprep.subr.mxu0 0.0
      %2968 = vmatpush1.msra.mxu0 0.0
      %2969 = vmatprep.subr.mxu0 0.0
      %2970 = vmatpush1.msra.mxu0 0.0
      %2971 = vmatprep.subr.mxu0 0.0
      %2972 = vmatpush1.msra.mxu0 0.0
      %2973 = vmatprep.subr.mxu0 0.0
      %2974 = vmatpush1.msra.mxu0 0.0
      %2975 = vmatprep.subr.mxu0 0.0
      %2976 = vmatpush1.msra.mxu0 0.0
      %2977 = vmatprep.subr.mxu0 0.0
      %2978 = vmatpush1.msra.mxu0 0.0
      %2979 = vmatprep.subr.mxu0 0.0
      %2980 = vmatpush1.msra.mxu0 0.0
      %2981 = vmatprep.subr.mxu0 0.0
      %2982 = vmatpush1.msra.mxu0 0.0
      %2983 = vmatprep.subr.mxu0 0.0
      %2984 = vmatpush1.msra.mxu0 0.0
      %2985 = vmatprep.subr.mxu0 0.0
      %2986 = vmatpush1.msra.mxu0 0.0
      %2987 = vmatprep.subr.mxu0 0.0
      %2988 = vmatpush1.msra.mxu0 0.0
      %2989 = vmatprep.mubr.f32.mxu0 0.0
      %2990 = vmatmul.mubr.f32.gmra.mrb[0].mxu0 %v2917
      %v2991 = vpop.f32.mrb[0].mxu0
      %v2992 = vadd.f32 0.0, %v2991
      %v2993 = vpop.f32.mrb[0].mxu0
      %v2994 = vadd.f32 0.0, %v2993
      %2995 = vdwg.mxu0
      %v2996 = vadd.f32 %v2890, %v2992
      %v2997 = vadd.f32 %v2891, %v2994
      %2998 = vrot.lane.b32.xlu0 %v799, 112
      %v2999 = vpop.permute.xlu0 %2998
      %3000 = vrot.lane.b32.xlu0 %v903, 112
      %v3001 = vpop.permute.xlu0 %3000
      %v3002 = vsel %vm2898, %v2999, %v3001
      %v3003 = vsel %vm2898, %v3001, %v2999
      %v3004 = vmul.f32 %v3002, %v2905
      %v3005 = vmul.f32 %v3003, %v2909
      %s3006 = scalar_lea.vmem %s5, 28
      %v3007 = vld [vmem:[%s3006] sm:$0xf]
      %v3009 = vsel %vm937, %v3007, 0
      %v3012 = vsel %vm941, %v3004, 0
      %v3015 = vsel %vm941, %v3005, 0
      %3017 = vmatprep.subr.mxu0 %v3015
      %3018 = vmatpush1.msra.mxu0 %v3012
      %3019 = vmatprep.subr.mxu0 0.0
      %3020 = vmatpush1.msra.mxu0 0.0
      %3021 = vmatprep.subr.mxu0 0.0
      %3022 = vmatpush1.msra.mxu0 0.0
      %3023 = vmatprep.subr.mxu0 0.0
      %3024 = vmatpush1.msra.mxu0 0.0
      %3025 = vmatprep.subr.mxu0 0.0
      %3026 = vmatpush1.msra.mxu0 0.0
      %3027 = vmatprep.subr.mxu0 0.0
      %3028 = vmatpush1.msra.mxu0 0.0
      %3029 = vmatprep.subr.mxu0 0.0
      %3030 = vmatpush1.msra.mxu0 0.0
      %3031 = vmatprep.subr.mxu0 0.0
      %3032 = vmatpush1.msra.mxu0 0.0
      %3033 = vmatprep.subr.mxu0 0.0
      %3034 = vmatpush1.msra.mxu0 0.0
      %3035 = vmatprep.subr.mxu0 0.0
      %3036 = vmatpush1.msra.mxu0 0.0
      %3037 = vmatprep.subr.mxu0 0.0
      %3038 = vmatpush1.msra.mxu0 0.0
      %3039 = vmatprep.subr.mxu0 0.0
      %3040 = vmatpush1.msra.mxu0 0.0
      %3041 = vmatprep.subr.mxu0 0.0
      %3042 = vmatpush1.msra.mxu0 0.0
      %3043 = vmatprep.subr.mxu0 0.0
      %3044 = vmatpush1.msra.mxu0 0.0
      %3045 = vmatprep.subr.mxu0 0.0
      %3046 = vmatpush1.msra.mxu0 0.0
      %3047 = vmatprep.subr.mxu0 0.0
      %3048 = vmatpush1.msra.mxu0 0.0
      %3049 = vmatprep.subr.mxu0 0.0
      %3050 = vmatpush1.msra.mxu0 0.0
      %3051 = vmatprep.subr.mxu0 0.0
      %3052 = vmatpush1.msra.mxu0 0.0
      %3053 = vmatprep.subr.mxu0 0.0
      %3054 = vmatpush1.msra.mxu0 0.0
      %3055 = vmatprep.subr.mxu0 0.0
      %3056 = vmatpush1.msra.mxu0 0.0
      %3057 = vmatprep.subr.mxu0 0.0
      %3058 = vmatpush1.msra.mxu0 0.0
      %3059 = vmatprep.subr.mxu0 0.0
      %3060 = vmatpush1.msra.mxu0 0.0
      %3061 = vmatprep.subr.mxu0 0.0
      %3062 = vmatpush1.msra.mxu0 0.0
      %3063 = vmatprep.subr.mxu0 0.0
      %3064 = vmatpush1.msra.mxu0 0.0
      %3065 = vmatprep.subr.mxu0 0.0
      %3066 = vmatpush1.msra.mxu0 0.0
      %3067 = vmatprep.subr.mxu0 0.0
      %3068 = vmatpush1.msra.mxu0 0.0
      %3069 = vmatprep.subr.mxu0 0.0
      %3070 = vmatpush1.msra.mxu0 0.0
      %3071 = vmatprep.subr.mxu0 0.0
      %3072 = vmatpush1.msra.mxu0 0.0
      %3073 = vmatprep.subr.mxu0 0.0
      %3074 = vmatpush1.msra.mxu0 0.0
      %3075 = vmatprep.subr.mxu0 0.0
      %3076 = vmatpush1.msra.mxu0 0.0
      %3077 = vmatprep.subr.mxu0 0.0
      %3078 = vmatpush1.msra.mxu0 0.0
      %3079 = vmatprep.subr.mxu0 0.0
      %3080 = vmatpush1.msra.mxu0 0.0
      %3081 = vmatprep.mubr.f32.mxu0 0.0
      %3082 = vmatmul.mubr.f32.gmra.mrb[0].mxu0 %v3009
      %v3083 = vpop.f32.mrb[0].mxu0
      %v3084 = vadd.f32 0.0, %v3083
      %v3085 = vpop.f32.mrb[0].mxu0
      %v3086 = vadd.f32 0.0, %v3085
      %3087 = vdwg.mxu0
      %v3088 = vadd.f32 %v2996, %v3084
      %v3089 = vadd.f32 %v2997, %v3086
      %3090 = vrot.lane.b32.xlu0 %v488, 112
      %v3091 = vpop.permute.xlu0 %3090
      %3092 = vrot.lane.b32.xlu0 %v489, 112
      %v3093 = vpop.permute.xlu0 %3092
      %v3094 = vsel %vm2898, %v3091, %v3093
      %v3095 = vsel %vm2898, %v3093, %v3091
      %v3096 = vmul.f32 %v3094, %v2905
      %v3097 = vmul.f32 %v3095, %v2909
      %s3098 = scalar_lea.vmem %s6, 28
      %v3099 = vld [vmem:[%s3098] sm:$0xf]
      %v3101 = vsel %vm937, %v3099, 0
      %v3104 = vsel %vm941, %v3096, 0
      %v3107 = vsel %vm941, %v3097, 0
      %3109 = vmatprep.subr.mxu0 %v3107
      %3110 = vmatpush1.msra.mxu0 %v3104
      %3111 = vmatprep.subr.mxu0 0.0
      %3112 = vmatpush1.msra.mxu0 0.0
      %3113 = vmatprep.subr.mxu0 0.0
      %3114 = vmatpush1.msra.mxu0 0.0
      %3115 = vmatprep.subr.mxu0 0.0
      %3116 = vmatpush1.msra.mxu0 0.0
      %3117 = vmatprep.subr.mxu0 0.0
      %3118 = vmatpush1.msra.mxu0 0.0
      %3119 = vmatprep.subr.mxu0 0.0
      %3120 = vmatpush1.msra.mxu0 0.0
      %3121 = vmatprep.subr.mxu0 0.0
      %3122 = vmatpush1.msra.mxu0 0.0
      %3123 = vmatprep.subr.mxu0 0.0
      %3124 = vmatpush1.msra.mxu0 0.0
      %3125 = vmatprep.subr.mxu0 0.0
      %3126 = vmatpush1.msra.mxu0 0.0
      %3127 = vmatprep.subr.mxu0 0.0
      %3128 = vmatpush1.msra.mxu0 0.0
      %3129 = vmatprep.subr.mxu0 0.0
      %3130 = vmatpush1.msra.mxu0 0.0
      %3131 = vmatprep.subr.mxu0 0.0
      %3132 = vmatpush1.msra.mxu0 0.0
      %3133 = vmatprep.subr.mxu0 0.0
      %3134 = vmatpush1.msra.mxu0 0.0
      %3135 = vmatprep.subr.mxu0 0.0
      %3136 = vmatpush1.msra.mxu0 0.0
      %3137 = vmatprep.subr.mxu0 0.0
      %3138 = vmatpush1.msra.mxu0 0.0
      %3139 = vmatprep.subr.mxu0 0.0
      %3140 = vmatpush1.msra.mxu0 0.0
      %3141 = vmatprep.subr.mxu0 0.0
      %3142 = vmatpush1.msra.mxu0 0.0
      %3143 = vmatprep.subr.mxu0 0.0
      %3144 = vmatpush1.msra.mxu0 0.0
      %3145 = vmatprep.subr.mxu0 0.0
      %3146 = vmatpush1.msra.mxu0 0.0
      %3147 = vmatprep.subr.mxu0 0.0
      %3148 = vmatpush1.msra.mxu0 0.0
      %3149 = vmatprep.subr.mxu0 0.0
      %3150 = vmatpush1.msra.mxu0 0.0
      %3151 = vmatprep.subr.mxu0 0.0
      %3152 = vmatpush1.msra.mxu0 0.0
      %3153 = vmatprep.subr.mxu0 0.0
      %3154 = vmatpush1.msra.mxu0 0.0
      %3155 = vmatprep.subr.mxu0 0.0
      %3156 = vmatpush1.msra.mxu0 0.0
      %3157 = vmatprep.subr.mxu0 0.0
      %3158 = vmatpush1.msra.mxu0 0.0
      %3159 = vmatprep.subr.mxu0 0.0
      %3160 = vmatpush1.msra.mxu0 0.0
      %3161 = vmatprep.subr.mxu0 0.0
      %3162 = vmatpush1.msra.mxu0 0.0
      %3163 = vmatprep.subr.mxu0 0.0
      %3164 = vmatpush1.msra.mxu0 0.0
      %3165 = vmatprep.subr.mxu0 0.0
      %3166 = vmatpush1.msra.mxu0 0.0
      %3167 = vmatprep.subr.mxu0 0.0
      %3168 = vmatpush1.msra.mxu0 0.0
      %3169 = vmatprep.subr.mxu0 0.0
      %3170 = vmatpush1.msra.mxu0 0.0
      %3171 = vmatprep.subr.mxu0 0.0
      %3172 = vmatpush1.msra.mxu0 0.0
      %3173 = vmatprep.mubr.f32.mxu0 0.0
      %3174 = vmatmul.mubr.f32.gmra.mrb[0].mxu0 %v3101
      %v3175 = vpop.f32.mrb[0].mxu0
      %v3176 = vadd.f32 0.0, %v3175
      %v3177 = vpop.f32.mrb[0].mxu0
      %v3178 = vadd.f32 0.0, %v3177
      %3179 = vdwg.mxu0
      %v3180 = vadd.f32 %v3088, %v3176
      %v3181 = vadd.f32 %v3089, %v3178
      %s3182 = scalar_lea.vmem %s3, 16
      %v3183 = vld [vmem:[%s3182] sm:$0x3]
      %3184 = vrot.lane.b32.xlu0 %v592, 111
      %v3185 = vpop.permute.xlu0 %3184
      %3186 = vrot.lane.b32.xlu0 %v695, 111
      %v3187 = vpop.permute.xlu0 %3186
      %vm3188 = vcmp.lt.s32.totalorder %v910, 111
      %v3189 = vsel %vm3188, %v3185, %v3187
      %v3190 = vsel %vm3188, %v3187, %v3185
      %v3192 = vlaneseq
      %v3193 = vshrl.u32 %v3192, 7
      %v3194 = vsub.s32 0, %v3193
      %v3195 = vrot.slane %v3183, %v3194
      %v3196 = vlaneseq
      %v3197 = vshrl.u32 %v3196, 7
      %v3198 = vsub.s32 1, %v3197
      %v3199 = vrot.slane %v3183, %v3198
      %v3202 = vmul.f32 %v3189, %v3195
      %v3203 = vmul.f32 %v3190, %v3199
      %s3204 = scalar_lea.vmem %s4, 32
      %v3205 = vld [vmem:[%s3204] sm:$0xf]
      %v3207 = vsel %vm937, %v3205, 0
      %v3210 = vsel %vm941, %v3202, 0
      %v3213 = vsel %vm941, %v3203, 0
      %3215 = vmatprep.subr.mxu0 %v3213
      %3216 = vmatpush1.msra.mxu0 %v3210
      %3217 = vmatprep.subr.mxu0 0.0
      %3218 = vmatpush1.msra.mxu0 0.0
      %3219 = vmatprep.subr.mxu0 0.0
      %3220 = vmatpush1.msra.mxu0 0.0
      %3221 = vmatprep.subr.mxu0 0.0
      %3222 = vmatpush1.msra.mxu0 0.0
      %3223 = vmatprep.subr.mxu0 0.0
      %3224 = vmatpush1.msra.mxu0 0.0
      %3225 = vmatprep.subr.mxu0 0.0
      %3226 = vmatpush1.msra.mxu0 0.0
      %3227 = vmatprep.subr.mxu0 0.0
      %3228 = vmatpush1.msra.mxu0 0.0
      %3229 = vmatprep.subr.mxu0 0.0
      %3230 = vmatpush1.msra.mxu0 0.0
      %3231 = vmatprep.subr.mxu0 0.0
      %3232 = vmatpush1.msra.mxu0 0.0
      %3233 = vmatprep.subr.mxu0 0.0
      %3234 = vmatpush1.msra.mxu0 0.0
      %3235 = vmatprep.subr.mxu0 0.0
      %3236 = vmatpush1.msra.mxu0 0.0
      %3237 = vmatprep.subr.mxu0 0.0
      %3238 = vmatpush1.msra.mxu0 0.0
      %3239 = vmatprep.subr.mxu0 0.0
      %3240 = vmatpush1.msra.mxu0 0.0
      %3241 = vmatprep.subr.mxu0 0.0
      %3242 = vmatpush1.msra.mxu0 0.0
      %3243 = vmatprep.subr.mxu0 0.0
      %3244 = vmatpush1.msra.mxu0 0.0
      %3245 = vmatprep.subr.mxu0 0.0
      %3246 = vmatpush1.msra.mxu0 0.0
      %3247 = vmatprep.subr.mxu0 0.0
      %3248 = vmatpush1.msra.mxu0 0.0
      %3249 = vmatprep.subr.mxu0 0.0
      %3250 = vmatpush1.msra.mxu0 0.0
      %3251 = vmatprep.subr.mxu0 0.0
      %3252 = vmatpush1.msra.mxu0 0.0
      %3253 = vmatprep.subr.mxu0 0.0
      %3254 = vmatpush1.msra.mxu0 0.0
      %3255 = vmatprep.subr.mxu0 0.0
      %3256 = vmatpush1.msra.mxu0 0.0
      %3257 = vmatprep.subr.mxu0 0.0
      %3258 = vmatpush1.msra.mxu0 0.0
      %3259 = vmatprep.subr.mxu0 0.0
      %3260 = vmatpush1.msra.mxu0 0.0
      %3261 = vmatprep.subr.mxu0 0.0
      %3262 = vmatpush1.msra.mxu0 0.0
      %3263 = vmatprep.subr.mxu0 0.0
      %3264 = vmatpush1.msra.mxu0 0.0
      %3265 = vmatprep.subr.mxu0 0.0
      %3266 = vmatpush1.msra.mxu0 0.0
      %3267 = vmatprep.subr.mxu0 0.0
      %3268 = vmatpush1.msra.mxu0 0.0
      %3269 = vmatprep.subr.mxu0 0.0
      %3270 = vmatpush1.msra.mxu0 0.0
      %3271 = vmatprep.subr.mxu0 0.0
      %3272 = vmatpush1.msra.mxu0 0.0
      %3273 = vmatprep.subr.mxu0 0.0
      %3274 = vmatpush1.msra.mxu0 0.0
      %3275 = vmatprep.subr.mxu0 0.0
      %3276 = vmatpush1.msra.mxu0 0.0
      %3277 = vmatprep.subr.mxu0 0.0
      %3278 = vmatpush1.msra.mxu0 0.0
      %3279 = vmatprep.mubr.f32.mxu0 0.0
      %3280 = vmatmul.mubr.f32.gmra.mrb[0].mxu0 %v3207
      %v3281 = vpop.f32.mrb[0].mxu0
      %v3282 = vadd.f32 0.0, %v3281
      %v3283 = vpop.f32.mrb[0].mxu0
      %v3284 = vadd.f32 0.0, %v3283
      %3285 = vdwg.mxu0
      %v3286 = vadd.f32 %v3180, %v3282
      %v3287 = vadd.f32 %v3181, %v3284
      %3288 = vrot.lane.b32.xlu0 %v799, 111
      %v3289 = vpop.permute.xlu0 %3288
      %3290 = vrot.lane.b32.xlu0 %v903, 111
      %v3291 = vpop.permute.xlu0 %3290
      %v3292 = vsel %vm3188, %v3289, %v3291
      %v3293 = vsel %vm3188, %v3291, %v3289
      %v3294 = vmul.f32 %v3292, %v3195
      %v3295 = vmul.f32 %v3293, %v3199
      %s3296 = scalar_lea.vmem %s5, 32
      %v3297 = vld [vmem:[%s3296] sm:$0xf]
      %v3299 = vsel %vm937, %v3297, 0
      %v3302 = vsel %vm941, %v3294, 0
      %v3305 = vsel %vm941, %v3295, 0
      %3307 = vmatprep.subr.mxu0 %v3305
      %3308 = vmatpush1.msra.mxu0 %v3302
      %3309 = vmatprep.subr.mxu0 0.0
      %3310 = vmatpush1.msra.mxu0 0.0
      %3311 = vmatprep.subr.mxu0 0.0
      %3312 = vmatpush1.msra.mxu0 0.0
      %3313 = vmatprep.subr.mxu0 0.0
      %3314 = vmatpush1.msra.mxu0 0.0
      %3315 = vmatprep.subr.mxu0 0.0
      %3316 = vmatpush1.msra.mxu0 0.0
      %3317 = vmatprep.subr.mxu0 0.0
      %3318 = vmatpush1.msra.mxu0 0.0
      %3319 = vmatprep.subr.mxu0 0.0
      %3320 = vmatpush1.msra.mxu0 0.0
      %3321 = vmatprep.subr.mxu0 0.0
      %3322 = vmatpush1.msra.mxu0 0.0
      %3323 = vmatprep.subr.mxu0 0.0
      %3324 = vmatpush1.msra.mxu0 0.0
      %3325 = vmatprep.subr.mxu0 0.0
      %3326 = vmatpush1.msra.mxu0 0.0
      %3327 = vmatprep.subr.mxu0 0.0
      %3328 = vmatpush1.msra.mxu0 0.0
      %3329 = vmatprep.subr.mxu0 0.0
      %3330 = vmatpush1.msra.mxu0 0.0
      %3331 = vmatprep.subr.mxu0 0.0
      %3332 = vmatpush1.msra.mxu0 0.0
      %3333 = vmatprep.subr.mxu0 0.0
      %3334 = vmatpush1.msra.mxu0 0.0
      %3335 = vmatprep.subr.mxu0 0.0
      %3336 = vmatpush1.msra.mxu0 0.0
      %3337 = vmatprep.subr.mxu0 0.0
      %3338 = vmatpush1.msra.mxu0 0.0
      %3339 = vmatprep.subr.mxu0 0.0
      %3340 = vmatpush1.msra.mxu0 0.0
      %3341 = vmatprep.subr.mxu0 0.0
      %3342 = vmatpush1.msra.mxu0 0.0
      %3343 = vmatprep.subr.mxu0 0.0
      %3344 = vmatpush1.msra.mxu0 0.0
      %3345 = vmatprep.subr.mxu0 0.0
      %3346 = vmatpush1.msra.mxu0 0.0
      %3347 = vmatprep.subr.mxu0 0.0
      %3348 = vmatpush1.msra.mxu0 0.0
      %3349 = vmatprep.subr.mxu0 0.0
      %3350 = vmatpush1.msra.mxu0 0.0
      %3351 = vmatprep.subr.mxu0 0.0
      %3352 = vmatpush1.msra.mxu0 0.0
      %3353 = vmatprep.subr.mxu0 0.0
      %3354 = vmatpush1.msra.mxu0 0.0
      %3355 = vmatprep.subr.mxu0 0.0
      %3356 = vmatpush1.msra.mxu0 0.0
      %3357 = vmatprep.subr.mxu0 0.0
      %3358 = vmatpush1.msra.mxu0 0.0
      %3359 = vmatprep.subr.mxu0 0.0
      %3360 = vmatpush1.msra.mxu0 0.0
      %3361 = vmatprep.subr.mxu0 0.0
      %3362 = vmatpush1.msra.mxu0 0.0
      %3363 = vmatprep.subr.mxu0 0.0
      %3364 = vmatpush1.msra.mxu0 0.0
      %3365 = vmatprep.subr.mxu0 0.0
      %3366 = vmatpush1.msra.mxu0 0.0
      %3367 = vmatprep.subr.mxu0 0.0
      %3368 = vmatpush1.msra.mxu0 0.0
      %3369 = vmatprep.subr.mxu0 0.0
      %3370 = vmatpush1.msra.mxu0 0.0
      %3371 = vmatprep.mubr.f32.mxu0 0.0
      %3372 = vmatmul.mubr.f32.gmra.mrb[0].mxu0 %v3299
      %v3373 = vpop.f32.mrb[0].mxu0
      %v3374 = vadd.f32 0.0, %v3373
      %v3375 = vpop.f32.mrb[0].mxu0
      %v3376 = vadd.f32 0.0, %v3375
      %3377 = vdwg.mxu0
      %v3378 = vadd.f32 %v3286, %v3374
      %v3379 = vadd.f32 %v3287, %v3376
      %3380 = vrot.lane.b32.xlu0 %v488, 111
      %v3381 = vpop.permute.xlu0 %3380
      %3382 = vrot.lane.b32.xlu0 %v489, 111
      %v3383 = vpop.permute.xlu0 %3382
      %v3384 = vsel %vm3188, %v3381, %v3383
      %v3385 = vsel %vm3188, %v3383, %v3381
      %v3386 = vmul.f32 %v3384, %v3195
      %v3387 = vmul.f32 %v3385, %v3199
      %s3388 = scalar_lea.vmem %s6, 32
      %v3389 = vld [vmem:[%s3388] sm:$0xf]
      %v3391 = vsel %vm937, %v3389, 0
      %v3394 = vsel %vm941, %v3386, 0
      %v3397 = vsel %vm941, %v3387, 0
      %3399 = vmatprep.subr.mxu0 %v3397
      %3400 = vmatpush1.msra.mxu0 %v3394
      %3401 = vmatprep.subr.mxu0 0.0
      %3402 = vmatpush1.msra.mxu0 0.0
      %3403 = vmatprep.subr.mxu0 0.0
      %3404 = vmatpush1.msra.mxu0 0.0
      %3405 = vmatprep.subr.mxu0 0.0
      %3406 = vmatpush1.msra.mxu0 0.0
      %3407 = vmatprep.subr.mxu0 0.0
      %3408 = vmatpush1.msra.mxu0 0.0
      %3409 = vmatprep.subr.mxu0 0.0
      %3410 = vmatpush1.msra.mxu0 0.0
      %3411 = vmatprep.subr.mxu0 0.0
      %3412 = vmatpush1.msra.mxu0 0.0
      %3413 = vmatprep.subr.mxu0 0.0
      %3414 = vmatpush1.msra.mxu0 0.0
      %3415 = vmatprep.subr.mxu0 0.0
      %3416 = vmatpush1.msra.mxu0 0.0
      %3417 = vmatprep.subr.mxu0 0.0
      %3418 = vmatpush1.msra.mxu0 0.0
      %3419 = vmatprep.subr.mxu0 0.0
      %3420 = vmatpush1.msra.mxu0 0.0
      %3421 = vmatprep.subr.mxu0 0.0
      %3422 = vmatpush1.msra.mxu0 0.0
      %3423 = vmatprep.subr.mxu0 0.0
      %3424 = vmatpush1.msra.mxu0 0.0
      %3425 = vmatprep.subr.mxu0 0.0
      %3426 = vmatpush1.msra.mxu0 0.0
      %3427 = vmatprep.subr.mxu0 0.0
      %3428 = vmatpush1.msra.mxu0 0.0
      %3429 = vmatprep.subr.mxu0 0.0
      %3430 = vmatpush1.msra.mxu0 0.0
      %3431 = vmatprep.subr.mxu0 0.0
      %3432 = vmatpush1.msra.mxu0 0.0
      %3433 = vmatprep.subr.mxu0 0.0
      %3434 = vmatpush1.msra.mxu0 0.0
      %3435 = vmatprep.subr.mxu0 0.0
      %3436 = vmatpush1.msra.mxu0 0.0
      %3437 = vmatprep.subr.mxu0 0.0
      %3438 = vmatpush1.msra.mxu0 0.0
      %3439 = vmatprep.subr.mxu0 0.0
      %3440 = vmatpush1.msra.mxu0 0.0
      %3441 = vmatprep.subr.mxu0 0.0
      %3442 = vmatpush1.msra.mxu0 0.0
      %3443 = vmatprep.subr.mxu0 0.0
      %3444 = vmatpush1.msra.mxu0 0.0
      %3445 = vmatprep.subr.mxu0 0.0
      %3446 = vmatpush1.msra.mxu0 0.0
      %3447 = vmatprep.subr.mxu0 0.0
      %3448 = vmatpush1.msra.mxu0 0.0
      %3449 = vmatprep.subr.mxu0 0.0
      %3450 = vmatpush1.msra.mxu0 0.0
      %3451 = vmatprep.subr.mxu0 0.0
      %3452 = vmatpush1.msra.mxu0 0.0
      %3453 = vmatprep.subr.mxu0 0.0
      %3454 = vmatpush1.msra.mxu0 0.0
      %3455 = vmatprep.subr.mxu0 0.0
      %3456 = vmatpush1.msra.mxu0 0.0
      %3457 = vmatprep.subr.mxu0 0.0
      %3458 = vmatpush1.msra.mxu0 0.0
      %3459 = vmatprep.subr.mxu0 0.0
      %3460 = vmatpush1.msra.mxu0 0.0
      %3461 = vmatprep.subr.mxu0 0.0
      %3462 = vmatpush1.msra.mxu0 0.0
      %3463 = vmatprep.mubr.f32.mxu0 0.0
      %3464 = vmatmul.mubr.f32.gmra.mrb[0].mxu0 %v3391
      %v3465 = vpop.f32.mrb[0].mxu0
      %v3466 = vadd.f32 0.0, %v3465
      %v3467 = vpop.f32.mrb[0].mxu0
      %v3468 = vadd.f32 0.0, %v3467
      %3469 = vdwg.mxu0
      %v3470 = vadd.f32 %v3378, %v3466
      %v3471 = vadd.f32 %v3379, %v3468
      %v3472 = vld [vmem:[%s7] sm:$0xf]
      %3474 = vset.pattern.permute.xlu0 0
      %3475 = vperm.xlu0 %3474, %v3472
      %v3476 = vpop.permute.xlu0 %3475
      %v3478 = vadd.f32 %v3470, %v3476
      %v3479 = vadd.f32 %v3471, %v3476
      %v3482 = vcombine.low %v3478, %v3479
      %3484 = vst [vmem:[%s411] sm:$0xff] %v3482
      %v3485 = vsel %vm941, %v3478, 0.0
      %v3486 = vsel %vm941, %v3479, 0.0
      %v3487 = vadd.f32 %v3485, %v3486
      %3488 = vadd.xlane.f32.xlu0 %v3487
      %v3489 = vpop.xlane.xlu0 %3488
      %vm3490 = vcmask 3072
      %3491 = vst.msk [vmem:[%s415] sm:$0xf] %vm3490, %v3489
      %v3492 = vmul.f32 %v3478, %v3478
      %v3493 = vmul.f32 %v3479, %v3479
      %v3494 = vsel %vm941, %v3492, 0.0
      %v3495 = vsel %vm941, %v3493, 0.0
      %v3496 = vadd.f32 %v3494, %v3495
      %3497 = vadd.xlane.f32.xlu0 %v3496
      %v3498 = vpop.xlane.xlu0 %3497
      %3499 = vst.msk [vmem:[%s419] sm:$0xf] %vm3490, %v3498
      %p3500 = scmp.lt.s32.totalorder %s23, 1
      %s3501 = scalar_select %p3500, %s23, 1
      %s3502 = smul.addr %s3501, 4
      %s3503 = smul.addr %s3502, 8
      %s3504 = scalar_lea.vmem %s8, %s3503
      %p3505 = scmp.lt.s32.totalorder %s23, 1
      %s3506 = scalar_select %p3505, %s23, 1
      %s3507 = smul.addr %s3506, 2
      %s3508 = smul.addr %s3507, 4
      %s3509 = scalar_lea.vmem %s9, %s3508
      %p3510 = scmp.lt.s32.totalorder %s23, 1
      %s3511 = scalar_select %p3510, %s23, 1
      %s3512 = smul.addr %s3511, 4
      %s3513 = scalar_lea.vmem %s10, %s3512
      %p3514 = scmp.lt.s32.totalorder %s23, 1
      %s3515 = scalar_select %p3514, %s23, 1
      %s3516 = smul.addr %s3515, 4
      %s3517 = scalar_lea.vmem %s11, %s3516
      // Predicated region
      $region53: #{forward.5} parent=51 // pred_check
        %p3518 = pneg %p214
      $region54: #{forward.5} parent=51 // pred_check_branch
        %3520 = sbr.rel (%p3518) target = $region56
      $region55: #{forward.5} parent=51 // pred_region
        _
      $region56: #{forward.5} parent=51 // pred_fallthru
        _
      // Predicated region
      $region57: #{forward.5} parent=51 // pred_check
        %p3521 = pneg %p240
      $region58: #{forward.5} parent=51 // pred_check_branch
        %3523 = sbr.rel (%p3521) target = $region60
      $region59: #{forward.5} parent=51 // pred_region
        _
      $region60: #{forward.5} parent=51 // pred_fallthru
        _
      // Predicated region
      $region61: #{forward.5} parent=51 // pred_check
        %p3524 = pneg %p266
      $region62: #{forward.5} parent=51 // pred_check_branch
        %3526 = sbr.rel (%p3524) target = $region64
      $region63: #{forward.5} parent=51 // pred_region
        _
      $region64: #{forward.5} parent=51 // pred_fallthru
        _
      // Predicated region
      $region65: #{forward.5} parent=51 // pred_check
        %p3527 = pneg %p292
      $region66: #{forward.5} parent=51 // pred_check_branch
        %3529 = sbr.rel (%p3527) target = $region68
      $region67: #{forward.5} parent=51 // pred_region
        _
      $region68: #{forward.5} parent=51 // pred_fallthru
        _
    $region52: #{forward.5} parent=5 // pred_fallthru
      _
    %p3530 = scmp.le.s32.totalorder 2, %s18
    // Predicated region
    $region69: #{forward.5} parent=5 // pred_check
      %p3531 = pneg %p3530
    $region70: #{forward.5} parent=5 // pred_check_branch
      %3533 = sbr.rel (%p3531) target = $region72
    $region71: #{forward.5} parent=5 // pred_region
      %s3534 = ssub.s32 %s18, 2
      // Predicated region
      $region73: #{forward.5} parent=71 // pred_check
        %p3535 = pneg %p220
      $region74: #{forward.5} parent=71 // pred_check_branch
        %3537 = sbr.rel (%p3535) target = $region76
      $region75: #{forward.5} parent=71 // pred_region
        %p3538 = scmp.lt.s32.totalorder %s24, 1
        %s3539 = scalar_select %p3538, %s24, 1
        %s3540 = smul.addr %s3539, 4
        %s3541 = smul.addr %s3540, 8
        %s3542 = scalar_lea.vmem %s8, %s3541
      $region76: #{forward.5} parent=71 // pred_fallthru
        _
      // Predicated region
      $region77: #{forward.5} parent=71 // pred_check
        %p3543 = pneg %p246
      $region78: #{forward.5} parent=71 // pred_check_branch
        %3545 = sbr.rel (%p3543) target = $region80
      $region79: #{forward.5} parent=71 // pred_region
        %p3546 = scmp.lt.s32.totalorder %s24, 1
        %s3547 = scalar_select %p3546, %s24, 1
        %s3548 = smul.addr %s3547, 2
        %s3549 = smul.addr %s3548, 4
        %s3550 = scalar_lea.vmem %s9, %s3549
      $region80: #{forward.5} parent=71 // pred_fallthru
        _
      // Predicated region
      $region81: #{forward.5} parent=71 // pred_check
        %p3551 = pneg %p272
      $region82: #{forward.5} parent=71 // pred_check_branch
        %3553 = sbr.rel (%p3551) target = $region84
      $region83: #{forward.5} parent=71 // pred_region
        %p3554 = scmp.lt.s32.totalorder %s24, 1
        %s3555 = scalar_select %p3554, %s24, 1
        %s3556 = smul.addr %s3555, 4
        %s3557 = scalar_lea.vmem %s10, %s3556
      $region84: #{forward.5} parent=71 // pred_fallthru
        _
      // Predicated region
      $region85: #{forward.5} parent=71 // pred_check
        %p3558 = pneg %p298
      $region86: #{forward.5} parent=71 // pred_check_branch
        %3560 = sbr.rel (%p3558) target = $region88
      $region87: #{forward.5} parent=71 // pred_region
        %p3561 = scmp.lt.s32.totalorder %s24, 1
        %s3562 = scalar_select %p3561, %s24, 1
        %s3563 = smul.addr %s3562, 4
        %s3564 = scalar_lea.vmem %s11, %s3563
      $region88: #{forward.5} parent=71 // pred_fallthru
        _
    $region72: #{forward.5} parent=5 // pred_fallthru
      _
  $region6: #{forward.5} parent=0 // loop_footer
    %s22 = sadd.s32 1, %s18
  $region7: #{forward.5} parent=0 // loop_footer_branch
    %17 = sbr.rel target = $region3
  $region8: #{forward.5} parent=0 // loop_exit
    _

// kernel: forward.7
$region0: #{forward.7}
  #allocation0 [shape = 'u32[]', space=smem, size = 0x4, offset = 0x4, fixed_abs, tag = 'smem constant byte address 0x4 - core index']
  #allocation1 [shape = 'u32[144,128]{1,0:T(1,128)}', space=vmem, size = 0x12000, scoped, tag = 'internal scratch']
  %s0 = inlined_call_operand.vmem [shape: f32[2,16,256], index: 0, kind: input, shape index: {}]
  %s1 = inlined_call_operand.vmem [shape: f32[2,16,256], index: 1, kind: input, shape index: {}]
  %s2 = inlined_call_operand.vmem [shape: f32[16,1], index: 2, kind: input, shape index: {}]
  %s3 = inlined_call_operand.vmem [shape: f32[16,1], index: 3, kind: input, shape index: {}]
  %s4 = inlined_call_operand.vmem [shape: f32[16,96], index: 4, kind: input, shape index: {}]
  %s5 = inlined_call_operand.vmem [shape: f32[16,1], index: 5, kind: input, shape index: {}]
  %s6 = inlined_call_operand.vmem [shape: f32[2,16,256], index: 6, kind: output, shape index: {}]
  %s7 = sld [smem:[#allocation0]]
  $region57: #{forward.7} parent=0
    _
  %s9 = ssub.s32 1, %s7
  %s10 = scalar_select 0, %s9, %s7
  loop: start=0, step=1, limit=4
  $region2: #{forward.7} parent=0 // loop_pre_header
    _
  $region3: #{forward.7} parent=0 // loop_header
    %s12 = sphi 0, %s16
    %p13 = scmp.ge.s32.totalorder %s12, 4
    %s22 = sphi 0, %s24
    %s25 = sphi 0, %s22
    %s26 = sphi 0, %s25
    %s42 = sphi 0, %s26
    %s48 = sphi 0, %s50
    %s51 = sphi 0, %s48
    %s52 = sphi 0, %s51
    %s68 = sphi 0, %s52
    %s72 = sphi 0, %s72
    %s74 = sphi 0, %s72
    %s75 = sphi 0, %s74
    %s89 = sphi 0, %s75
    %s93 = sphi 0, %s93
    %s95 = sphi 0, %s93
    %s96 = sphi 0, %s95
    %s110 = sphi 0, %s96
    %s114 = sphi 0, %s114
    %s116 = sphi 0, %s114
    %s117 = sphi 0, %s116
    %s131 = sphi 0, %s117
    %s135 = sphi 0, %s135
    %s137 = sphi 0, %s135
    %s138 = sphi 0, %s137
    %s152 = sphi 0, %s138
    %s158 = sphi 0, %s160
    %s161 = sphi 0, %s158
    %s162 = sphi 0, %s161
    %s178 = sphi 0, %s162
  $region4: #{forward.7} parent=0 // loop_header_branch
    %15 = sbr.rel (%p13) target = $region8
  $region5: #{forward.7} parent=0 // loop_body
    %s17 = ssub.s32 %s12, 1
    %s18 = ssub.s32 %s12, 2
    %s19 = sadd.s32 %s12, 1
    %s20 = ssub.s32 %s12, %s19
    %p21 = scmp.eq.s32.totalorder %s20, 0
    %s23 = sadd.s32 %s22, 1
    %s24 = scalar_select %p21, %s22, %s23
    %p27 = pneg %p21
    %p28 = scmp.eq.s32.totalorder %s12, 1
    %p29 = por %p27, %p28
    %p30 = scmp.ne.s32.totalorder %s22, %s25
    %p31 = scmp.eq.s32.totalorder %s12, 0
    %p32 = por %p30, %p31
    %p33 = scmp.ne.s32.totalorder %s22, %s25
    %p34 = scmp.eq.s32.totalorder %s17, 1
    %p35 = por %p33, %p34
    %p36 = scmp.ne.s32.totalorder %s25, %s26
    %p37 = scmp.eq.s32.totalorder %s17, 0
    %p38 = por %p36, %p37
    %p39 = scmp.ne.s32.totalorder %s25, %s26
    %p40 = scmp.eq.s32.totalorder %s18, 1
    %p41 = por %p39, %p40
    %p43 = scmp.ne.s32.totalorder %s26, %s42
    %p44 = scmp.eq.s32.totalorder %s18, 0
    %p45 = por %p43, %p44
    %s46 = ssub.s32 %s12, %s19
    %p47 = scmp.eq.s32.totalorder %s46, 0
    %s49 = sadd.s32 %s48, 1
    %s50 = scalar_select %p47, %s48, %s49
    %p53 = pneg %p47
    %p54 = scmp.eq.s32.totalorder %s12, 1
    %p55 = por %p53, %p54
    %p56 = scmp.ne.s32.totalorder %s48, %s51
    %p57 = scmp.eq.s32.totalorder %s12, 0
    %p58 = por %p56, %p57
    %p59 = scmp.ne.s32.totalorder %s48, %s51
    %p60 = scmp.eq.s32.totalorder %s17, 1
    %p61 = por %p59, %p60
    %p62 = scmp.ne.s32.totalorder %s51, %s52
    %p63 = scmp.eq.s32.totalorder %s17, 0
    %p64 = por %p62, %p63
    %p65 = scmp.ne.s32.totalorder %s51, %s52
    %p66 = scmp.eq.s32.totalorder %s18, 1
    %p67 = por %p65, %p66
    %p69 = scmp.ne.s32.totalorder %s52, %s68
    %p70 = scmp.eq.s32.totalorder %s18, 0
    %p71 = por %p69, %p70
    %s73 = sadd.s32 %s72, 1
    %p76 = scmp.eq.s32.totalorder %s12, 1
    %p77 = scmp.ne.s32.totalorder %s72, %s74
    %p78 = scmp.eq.s32.totalorder %s12, 0
    %p79 = por %p77, %p78
    %p80 = scmp.ne.s32.totalorder %s72, %s74
    %p81 = scmp.eq.s32.totalorder %s17, 1
    %p82 = por %p80, %p81
    %p83 = scmp.ne.s32.totalorder %s74, %s75
    %p84 = scmp.eq.s32.totalorder %s17, 0
    %p85 = por %p83, %p84
    %p86 = scmp.ne.s32.totalorder %s74, %s75
    %p87 = scmp.eq.s32.totalorder %s18, 1
    %p88 = por %p86, %p87
    %p90 = scmp.ne.s32.totalorder %s75, %s89
    %p91 = scmp.eq.s32.totalorder %s18, 0
    %p92 = por %p90, %p91
    %s94 = sadd.s32 %s93, 1
    %p97 = scmp.eq.s32.totalorder %s12, 1
    %p98 = scmp.ne.s32.totalorder %s93, %s95
    %p99 = scmp.eq.s32.totalorder %s12, 0
    %p100 = por %p98, %p99
    %p101 = scmp.ne.s32.totalorder %s93, %s95
    %p102 = scmp.eq.s32.totalorder %s17, 1
    %p103 = por %p101, %p102
    %p104 = scmp.ne.s32.totalorder %s95, %s96
    %p105 = scmp.eq.s32.totalorder %s17, 0
    %p106 = por %p104, %p105
    %p107 = scmp.ne.s32.totalorder %s95, %s96
    %p108 = scmp.eq.s32.totalorder %s18, 1
    %p109 = por %p107, %p108
    %p111 = scmp.ne.s32.totalorder %s96, %s110
    %p112 = scmp.eq.s32.totalorder %s18, 0
    %p113 = por %p111, %p112
    %s115 = sadd.s32 %s114, 1
    %p118 = scmp.eq.s32.totalorder %s12, 1
    %p119 = scmp.ne.s32.totalorder %s114, %s116
    %p120 = scmp.eq.s32.totalorder %s12, 0
    %p121 = por %p119, %p120
    %p122 = scmp.ne.s32.totalorder %s114, %s116
    %p123 = scmp.eq.s32.totalorder %s17, 1
    %p124 = por %p122, %p123
    %p125 = scmp.ne.s32.totalorder %s116, %s117
    %p126 = scmp.eq.s32.totalorder %s17, 0
    %p127 = por %p125, %p126
    %p128 = scmp.ne.s32.totalorder %s116, %s117
    %p129 = scmp.eq.s32.totalorder %s18, 1
    %p130 = por %p128, %p129
    %p132 = scmp.ne.s32.totalorder %s117, %s131
    %p133 = scmp.eq.s32.totalorder %s18, 0
    %p134 = por %p132, %p133
    %s136 = sadd.s32 %s135, 1
    %p139 = scmp.eq.s32.totalorder %s12, 1
    %p140 = scmp.ne.s32.totalorder %s135, %s137
    %p141 = scmp.eq.s32.totalorder %s12, 0
    %p142 = por %p140, %p141
    %p143 = scmp.ne.s32.totalorder %s135, %s137
    %p144 = scmp.eq.s32.totalorder %s17, 1
    %p145 = por %p143, %p144
    %p146 = scmp.ne.s32.totalorder %s137, %s138
    %p147 = scmp.eq.s32.totalorder %s17, 0
    %p148 = por %p146, %p147
    %p149 = scmp.ne.s32.totalorder %s137, %s138
    %p150 = scmp.eq.s32.totalorder %s18, 1
    %p151 = por %p149, %p150
    %p153 = scmp.ne.s32.totalorder %s138, %s152
    %p154 = scmp.eq.s32.totalorder %s18, 0
    %p155 = por %p153, %p154
    %s156 = ssub.s32 %s12, %s19
    %p157 = scmp.eq.s32.totalorder %s156, 0
    %s159 = sadd.s32 %s158, 1
    %s160 = scalar_select %p157, %s158, %s159
    %p163 = pneg %p157
    %p164 = scmp.eq.s32.totalorder %s12, 1
    %p165 = por %p163, %p164
    %p166 = scmp.ne.s32.totalorder %s158, %s161
    %p167 = scmp.eq.s32.totalorder %s12, 0
    %p168 = por %p166, %p167
    %p169 = scmp.ne.s32.totalorder %s158, %s161
    %p170 = scmp.eq.s32.totalorder %s17, 1
    %p171 = por %p169, %p170
    %p172 = scmp.ne.s32.totalorder %s161, %s162
    %p173 = scmp.eq.s32.totalorder %s17, 0
    %p174 = por %p172, %p173
    %p175 = scmp.ne.s32.totalorder %s161, %s162
    %p176 = scmp.eq.s32.totalorder %s18, 1
    %p177 = por %p175, %p176
    %p179 = scmp.ne.s32.totalorder %s162, %s178
    %p180 = scmp.eq.s32.totalorder %s18, 0
    %p181 = por %p179, %p180
    %p182 = scmp.le.s32.totalorder 1, %s12
    %p183 = scmp.lt.s32.totalorder %s12, 3
    %p184 = pnand %p182, %p183
    %p185 = pneg %p184
    // Predicated region
    $region9: #{forward.7} parent=5 // pred_check
      _
    $region10: #{forward.7} parent=5 // pred_check_branch
      %187 = sbr.rel (%p184) target = $region12
    $region11: #{forward.7} parent=5 // pred_region
      %s188 = ssub.s32 %s12, 1
      // Predicated region
      $region13: #{forward.7} parent=11 // pred_check
        %p189 = pneg %p85
      $region14: #{forward.7} parent=11 // pred_check_branch
        %191 = sbr.rel (%p189) target = $region16
      $region15: #{forward.7} parent=11 // pred_region
        _
      $region16: #{forward.7} parent=11 // pred_fallthru
        _
      // Predicated region
      $region17: #{forward.7} parent=11 // pred_check
        %p192 = pneg %p106
      $region18: #{forward.7} parent=11 // pred_check_branch
        %194 = sbr.rel (%p192) target = $region20
      $region19: #{forward.7} parent=11 // pred_region
        _
      $region20: #{forward.7} parent=11 // pred_fallthru
        _
      // Predicated region
      $region21: #{forward.7} parent=11 // pred_check
        %p195 = pneg %p127
      $region22: #{forward.7} parent=11 // pred_check_branch
        %197 = sbr.rel (%p195) target = $region24
      $region23: #{forward.7} parent=11 // pred_region
        _
      $region24: #{forward.7} parent=11 // pred_fallthru
        _
      // Predicated region
      $region25: #{forward.7} parent=11 // pred_check
        %p198 = pneg %p148
      $region26: #{forward.7} parent=11 // pred_check_branch
        %200 = sbr.rel (%p198) target = $region28
      $region27: #{forward.7} parent=11 // pred_region
        _
      $region28: #{forward.7} parent=11 // pred_fallthru
        _
    $region12: #{forward.7} parent=5 // pred_fallthru
      _
    %p201 = scmp.lt.s32.totalorder %s12, 2
    // Predicated region
    $region29: #{forward.7} parent=5 // pred_check
      %p202 = pneg %p201
    $region30: #{forward.7} parent=5 // pred_check_branch
      %204 = sbr.rel (%p202) target = $region32
    $region31: #{forward.7} parent=5 // pred_region
      // Predicated region
      $region33: #{forward.7} parent=31 // pred_check
        %p205 = pneg %p32
      $region34: #{forward.7} parent=31 // pred_check_branch
        %207 = sbr.rel (%p205) target = $region36
      $region35: #{forward.7} parent=31 // pred_region
        %p208 = scmp.lt.s32.totalorder %s12, 1
        %s209 = scalar_select %p208, %s12, 1
        %s210 = smul.addr %s209, 4
        %s211 = smul.addr %s210, 8
        %s212 = scalar_lea.vmem %s0, %s211
      $region36: #{forward.7} parent=31 // pred_fallthru
        _
      // Predicated region
      $region37: #{forward.7} parent=31 // pred_check
        %p213 = pneg %p58
      $region38: #{forward.7} parent=31 // pred_check_branch
        %215 = sbr.rel (%p213) target = $region40
      $region39: #{forward.7} parent=31 // pred_region
        %p216 = scmp.lt.s32.totalorder %s12, 1
        %s217 = scalar_select %p216, %s12, 1
        %s218 = smul.addr %s217, 4
        %s219 = smul.addr %s218, 8
        %s220 = scalar_lea.vmem %s1, %s219
      $region40: #{forward.7} parent=31 // pred_fallthru
        _
    $region32: #{forward.7} parent=5 // pred_fallthru
      _
    %p221 = scmp.le.s32.totalorder 1, %s12
    %p222 = scmp.lt.s32.totalorder %s12, 3
    %p223 = pnand %p221, %p222
    %p224 = pneg %p223
    // Predicated region
    $region41: #{forward.7} parent=5 // pred_check
      _
    $region42: #{forward.7} parent=5 // pred_check_branch
      %226 = sbr.rel (%p223) target = $region44
    $region43: #{forward.7} parent=5 // pred_region
      %s227 = ssub.s32 %s12, 1
      %p228 = scmp.lt.s32.totalorder %s17, 1
      %s229 = scalar_select %p228, %s17, 1
      %s230 = smul.addr %s229, 4
      %s231 = smul.addr %s230, 8
      %s232 = scalar_lea.vmem %s0, %s231
      %p233 = pneg %p38
      %p234 = pneg %p35
      %p235 = scmp.lt.s32.totalorder %s17, 1
      %s236 = scalar_select %p235, %s17, 1
      %s237 = smul.addr %s236, 4
      %s238 = smul.addr %s237, 8
      %s239 = scalar_lea.vmem %s1, %s238
      %p240 = pneg %p64
      %p241 = pneg %p61
      %p242 = pneg %p85
      %p243 = pneg %p82
      %p244 = pneg %p106
      %p245 = pneg %p103
      %p246 = pneg %p127
      %p247 = pneg %p124
      %p248 = pneg %p148
      %p249 = pneg %p145
      %p250 = pneg %p174
      %p251 = pneg %p171
      %p252 = scmp.lt.s32.totalorder %s17, 1
      %s253 = scalar_select %p252, %s17, 1
      %s254 = smul.addr %s253, 4
      %s255 = smul.addr %s254, 8
      %s256 = scalar_lea.vmem %s6, %s255
      %p257 = scmp.lt.s32.totalorder %s17, 1
      %s258 = scalar_select %p257, %s17, 1
      %s259 = smul.addr %s258, 4
      %s260 = smul.addr %s259, 8
      %s261 = scalar_lea.vmem %s0, %s260
      %p262 = scmp.lt.s32.totalorder %s17, 1
      %s263 = scalar_select %p262, %s17, 1
      %s264 = smul.addr %s263, 4
      %s265 = smul.addr %s264, 8
      %s266 = scalar_lea.vmem %s1, %s265
      %p267 = scmp.lt.s32.totalorder %s17, 1
      %s268 = scalar_select %p267, %s17, 1
      %s269 = smul.addr %s268, 4
      %s270 = smul.addr %s269, 8
      %s271 = scalar_lea.vmem %s6, %s270
      %v272 = vld [vmem:[%s261] sm:$0xff]
      %v273 = vld [vmem:[%s261 + $0x8] sm:$0xff]
      %v274 = vld [vmem:[%s261 + $0x10] sm:$0xff]
      %v275 = vld [vmem:[%s261 + $0x18] sm:$0xff]
      %v276 = vld [vmem:[%s266] sm:$0xff]
      %v277 = vld [vmem:[%s266 + $0x8] sm:$0xff]
      %v278 = vld [vmem:[%s266 + $0x10] sm:$0xff]
      %v279 = vld [vmem:[%s266 + $0x18] sm:$0xff]
      %v280 = vld [vmem:[%s2] sm:$0xff]
      %v281 = vld [vmem:[%s2 + $0x8] sm:$0xff]
      %283 = vset.pattern.permute.xlu0 0
      %284 = vperm.xlu0 %283, %v280
      %v285 = vpop.permute.xlu0 %284
      %288 = vset.pattern.permute.xlu0 0
      %289 = vperm.xlu0 %288, %v281
      %v290 = vpop.permute.xlu0 %289
      %v292 = vsub.f32 %v276, %v285
      %v293 = vsub.f32 %v277, %v285
      %v294 = vsub.f32 %v278, %v290
      %v295 = vsub.f32 %v279, %v290
      %v296 = vld [vmem:[%s3] sm:$0xff]
      %v297 = vld [vmem:[%s3 + $0x8] sm:$0xff]
      %299 = vset.pattern.permute.xlu0 0
      %300 = vperm.xlu0 %299, %v296
      %v301 = vpop.permute.xlu0 %300
      %304 = vset.pattern.permute.xlu0 0
      %305 = vperm.xlu0 %304, %v297
      %v306 = vpop.permute.xlu0 %305
      %v308 = vmul.f32 %v292, %v301
      %v309 = vmul.f32 %v293, %v301
      %v310 = vmul.f32 %v294, %v306
      %v311 = vmul.f32 %v295, %v306
      %vm312 = vcmp.ge.f32.partialorder %v308, 0.0
      %vm313 = vcmp.ge.f32.partialorder %v309, 0.0
      %vm314 = vcmp.ge.f32.partialorder %v310, 0.0
      %vm315 = vcmp.ge.f32.partialorder %v311, 0.0
      %v316 = vmul.f32 %v308, 0.2
      %v317 = vmul.f32 %v309, 0.2
      %v318 = vmul.f32 %v310, 0.2
      %v319 = vmul.f32 %v311, 0.2
      %v320 = vsel %vm312, %v308, %v316
      %v321 = vsel %vm313, %v309, %v317
      %v322 = vsel %vm314, %v310, %v318
      %v323 = vsel %vm315, %v311, %v319
      %v324 = vand.u32 2147483647, %v272
      %vm325 = vcmp.le.f32.partialorder %v324, 0.7853982
      %vm326 = vcmp.lt.s32.totalorder %v272, 0
      %v327 = vand.u32 %v272, 2139095040
      %v328 = vshrl.u32 %v327, 23
      %v329 = vsub.s32 %v328, 127
      %v330 = vand.u32 2147483647, %v272
      %v331 = vand.u32 %v330, 8388607
      %v332 = vor.u32 %v331, 8388608
      %v333 = vsub.s32 0, %v332
      %v334 = vadd.s32 %v329, 1
      %vm335 = vcmp.gt.s32.totalorder %v334, 0
      %v336 = vsel %vm335, %v334, 0
      %v337 = vshrl.u32 %v336, 5
      %v338 = vand.u32 %v336, 31
      %v339 = vsub.s32 32, %v338
      %v340 = vshrl.u32 683565275, %v339
      %v341 = vshll.u32 683565275, %v338
      %v342 = vshrl.u32 2475754826, %v339
      %v343 = vor.u32 %v341, %v342
      %v344 = vshll.u32 2475754826, %v338
      %v345 = vshrl.u32 2131351028, %v339
      %v346 = vor.u32 %v344, %v345
      %v347 = vshll.u32 2131351028, %v338
      %v348 = vshrl.u32 2102212464, %v339
      %v349 = vor.u32 %v347, %v348
      %v350 = vshll.u32 2102212464, %v338
      %v351 = vshrl.u32 920167782, %v339
      %v352 = vor.u32 %v350, %v351
      %v353 = vshll.u32 920167782, %v338
      %v354 = vshrl.u32 1326507024, %v339
      %v355 = vor.u32 %v353, %v354
      %vm356 = vcmp.lt.s32.totalorder %v337, 1
      %vm357 = vcmp.lt.s32.totalorder %v337, 2
      %vm358 = vcmp.lt.s32.totalorder %v337, 3
      %vm359 = vcmp.lt.s32.totalorder %v337, 4
      %v360 = vsel %vm356, %v340, %v343
      %v361 = vsel %vm359, %v349, 2102212464
      %v362 = vsel %vm358, %v346, %v361
      %v363 = vsel %vm357, %v360, %v362
      %v364 = vsel %vm356, %v343, %v346
      %v365 = vsel %vm359, %v352, 920167782
      %v366 = vsel %vm358, %v349, %v365
      %v367 = vsel %vm357, %v364, %v366
      %v368 = vsel %vm356, %v346, %v349
      %v369 = vsel %vm359, %v355, 1326507024
      %v370 = vsel %vm358, %v352, %v369
      %v371 = vsel %vm357, %v368, %v370
      %v372 = vshll.u32 %v332, 8
      %v373 = vmul.u32.u64.compose %v372, %v371
      %v374 = vextract.low.u32 %v373
      %v375 = vextract.high.u32 %v373
      %v376 = vmul.u32.u64.compose %v372, %v367
      %v377 = vextract.low.u32 %v376
      %v378 = vextract.high.u32 %v376
      %v379 = vmul.u32 %v372, %v363
      %v380 = vadd.s32 %v375, %v377
      %vm381 = vc.u32 %v375, %v377
      %v382 = vadd.s32 %v378, 1
      %v383 = vsel %vm381, %v382, %v378
      %v384 = vadd.s32 %v379, %v383
      %v385 = vadd.s32 %v384, 536870912
      %v386 = vshrl.u32 %v385, 30
      %v387 = vshll.u32 %v386, 30
      %v388 = vsub.s32 %v384, %v387
      %vm389 = vcmp.lt.s32.totalorder %v388, 0
      %v390 = vsub.s32 0, %v388
      %v391 = vsel %vm389, %v390, %v388
      %v392 = vclz %v391
      %v393 = vsub.s32 %v392, 2
      %vm394 = vcmp.gt.s32.totalorder 0, %v393
      %v395 = vsel %vm394, 0, %v393
      %v396 = vsub.s32 32, %v395
      %v397 = vshll.u32 %v388, %v395
      %v398 = vshrl.u32 %v380, %v396
      %v399 = vor.u32 %v397, %v398
      %v400 = vsub.s32 4294967266, %v395
      %v401 = vadd.s32 %v400, 127
      %v402 = vshll.u32 %v401, 23
      %v403 = vor.u32 4788187, %v402
      %v404 = vand.u32 2147483647, %v403
      %v406 = vcvt.s32.f32 %v399
      %v407 = vmul.f32 %v406, %v404
      %v408 = vxor.u32 %v407, 2147483648
      %v409 = vsel %vm326, %v408, %v407
      %v410 = vsub.s32 4, %v386
      %v411 = vsel %vm326, %v410, %v386
      %v412 = vsel %vm325, %v272, %v409
      %v413 = vsel %vm325, 0, %v411
      %v414 = vcosq.f32.pop %v412
      %v415 = vsinq.f32.pop %v412
      %vm416 = vweird.f32 %v272
      %v417 = vand.u32 %v413, 3
      %vm418 = vcmp.lt.s32.totalorder %v417, 2
      %vm419 = vcmp.eq.s32.totalorder %v417, 0
      %v420 = vxor.u32 %v415, 2147483648
      %v421 = vsel %vm419, %v414, %v420
      %vm422 = vcmp.eq.s32.totalorder %v417, 2
      %v423 = vxor.u32 %v414, 2147483648
      %v424 = vsel %vm422, %v423, %v415
      %v425 = vsel %vm418, %v421, %v424
      %v426 = vsel %vm416, nan, %v425
      %v427 = vand.u32 2147483647, %v273
      %vm428 = vcmp.le.f32.partialorder %v427, 0.7853982
      %vm429 = vcmp.lt.s32.totalorder %v273, 0
      %v430 = vand.u32 %v273, 2139095040
      %v431 = vshrl.u32 %v430, 23
      %v432 = vsub.s32 %v431, 127
      %v433 = vand.u32 2147483647, %v273
      %v434 = vand.u32 %v433, 8388607
      %v435 = vor.u32 %v434, 8388608
      %v436 = vsub.s32 0, %v435
      %v437 = vadd.s32 %v432, 1
      %vm438 = vcmp.gt.s32.totalorder %v437, 0
      %v439 = vsel %vm438, %v437, 0
      %v440 = vshrl.u32 %v439, 5
      %v441 = vand.u32 %v439, 31
      %v442 = vsub.s32 32, %v441
      %v443 = vshrl.u32 683565275, %v442
      %v444 = vshll.u32 683565275, %v441
      %v445 = vshrl.u32 2475754826, %v442
      %v446 = vor.u32 %v444, %v445
      %v447 = vshll.u32 2475754826, %v441
      %v448 = vshrl.u32 2131351028, %v442
      %v449 = vor.u32 %v447, %v448
      %v450 = vshll.u32 2131351028, %v441
      %v451 = vshrl.u32 2102212464, %v442
      %v452 = vor.u32 %v450, %v451
      %v453 = vshll.u32 2102212464, %v441
      %v454 = vshrl.u32 920167782, %v442
      %v455 = vor.u32 %v453, %v454
      %v456 = vshll.u32 920167782, %v441
      %v457 = vshrl.u32 1326507024, %v442
      %v458 = vor.u32 %v456, %v457
      %vm459 = vcmp.lt.s32.totalorder %v440, 1
      %vm460 = vcmp.lt.s32.totalorder %v440, 2
      %vm461 = vcmp.lt.s32.totalorder %v440, 3
      %vm462 = vcmp.lt.s32.totalorder %v440, 4
      %v463 = vsel %vm459, %v443, %v446
      %v464 = vsel %vm462, %v452, 2102212464
      %v465 = vsel %vm461, %v449, %v464
      %v466 = vsel %vm460, %v463, %v465
      %v467 = vsel %vm459, %v446, %v449
      %v468 = vsel %vm462, %v455, 920167782
      %v469 = vsel %vm461, %v452, %v468
      %v470 = vsel %vm460, %v467, %v469
      %v471 = vsel %vm459, %v449, %v452
      %v472 = vsel %vm462, %v458, 1326507024
      %v473 = vsel %vm461, %v455, %v472
      %v474 = vsel %vm460, %v471, %v473
      %v475 = vshll.u32 %v435, 8
      %v476 = vmul.u32.u64.compose %v475, %v474
      %v477 = vextract.low.u32 %v476
      %v478 = vextract.high.u32 %v476
      %v479 = vmul.u32.u64.compose %v475, %v470
      %v480 = vextract.low.u32 %v479
      %v481 = vextract.high.u32 %v479
      %v482 = vmul.u32 %v475, %v466
      %v483 = vadd.s32 %v478, %v480
      %vm484 = vc.u32 %v478, %v480
      %v485 = vadd.s32 %v481, 1
      %v486 = vsel %vm484, %v485, %v481
      %v487 = vadd.s32 %v482, %v486
      %v488 = vadd.s32 %v487, 536870912
      %v489 = vshrl.u32 %v488, 30
      %v490 = vshll.u32 %v489, 30
      %v491 = vsub.s32 %v487, %v490
      %vm492 = vcmp.lt.s32.totalorder %v491, 0
      %v493 = vsub.s32 0, %v491
      %v494 = vsel %vm492, %v493, %v491
      %v495 = vclz %v494
      %v496 = vsub.s32 %v495, 2
      %vm497 = vcmp.gt.s32.totalorder 0, %v496
      %v498 = vsel %vm497, 0, %v496
      %v499 = vsub.s32 32, %v498
      %v500 = vshll.u32 %v491, %v498
      %v501 = vshrl.u32 %v483, %v499
      %v502 = vor.u32 %v500, %v501
      %v503 = vsub.s32 4294967266, %v498
      %v504 = vadd.s32 %v503, 127
      %v505 = vshll.u32 %v504, 23
      %v506 = vor.u32 4788187, %v505
      %v507 = vand.u32 2147483647, %v506
      %v509 = vcvt.s32.f32 %v502
      %v510 = vmul.f32 %v509, %v507
      %v511 = vxor.u32 %v510, 2147483648
      %v512 = vsel %vm429, %v511, %v510
      %v513 = vsub.s32 4, %v489
      %v514 = vsel %vm429, %v513, %v489
      %v515 = vsel %vm428, %v273, %v512
      %v516 = vsel %vm428, 0, %v514
      %v517 = vcosq.f32.pop %v515
      %v518 = vsinq.f32.pop %v515
      %vm519 = vweird.f32 %v273
      %v520 = vand.u32 %v516, 3
      %vm521 = vcmp.lt.s32.totalorder %v520, 2
      %vm522 = vcmp.eq.s32.totalorder %v520, 0
      %v523 = vxor.u32 %v518, 2147483648
      %v524 = vsel %vm522, %v517, %v523
      %vm525 = vcmp.eq.s32.totalorder %v520, 2
      %v526 = vxor.u32 %v517, 2147483648
      %v527 = vsel %vm525, %v526, %v518
      %v528 = vsel %vm521, %v524, %v527
      %v529 = vsel %vm519, nan, %v528
      %v530 = vand.u32 2147483647, %v274
      %vm531 = vcmp.le.f32.partialorder %v530, 0.7853982
      %vm532 = vcmp.lt.s32.totalorder %v274, 0
      %v533 = vand.u32 %v274, 2139095040
      %v534 = vshrl.u32 %v533, 23
      %v535 = vsub.s32 %v534, 127
      %v536 = vand.u32 2147483647, %v274
      %v537 = vand.u32 %v536, 8388607
      %v538 = vor.u32 %v537, 8388608
      %v539 = vsub.s32 0, %v538
      %v540 = vadd.s32 %v535, 1
      %vm541 = vcmp.gt.s32.totalorder %v540, 0
      %v542 = vsel %vm541, %v540, 0
      %v543 = vshrl.u32 %v542, 5
      %v544 = vand.u32 %v542, 31
      %v545 = vsub.s32 32, %v544
      %v546 = vshrl.u32 683565275, %v545
      %v547 = vshll.u32 683565275, %v544
      %v548 = vshrl.u32 2475754826, %v545
      %v549 = vor.u32 %v547, %v548
      %v550 = vshll.u32 2475754826, %v544
      %v551 = vshrl.u32 2131351028, %v545
      %v552 = vor.u32 %v550, %v551
      %v553 = vshll.u32 2131351028, %v544
      %v554 = vshrl.u32 2102212464, %v545
      %v555 = vor.u32 %v553, %v554
      %v556 = vshll.u32 2102212464, %v544
      %v557 = vshrl.u32 920167782, %v545
      %v558 = vor.u32 %v556, %v557
      %v559 = vshll.u32 920167782, %v544
      %v560 = vshrl.u32 1326507024, %v545
      %v561 = vor.u32 %v559, %v560
      %vm562 = vcmp.lt.s32.totalorder %v543, 1
      %vm563 = vcmp.lt.s32.totalorder %v543, 2
      %vm564 = vcmp.lt.s32.totalorder %v543, 3
      %vm565 = vcmp.lt.s32.totalorder %v543, 4
      %v566 = vsel %vm562, %v546, %v549
      %v567 = vsel %vm565, %v555, 2102212464
      %v568 = vsel %vm564, %v552, %v567
      %v569 = vsel %vm563, %v566, %v568
      %v570 = vsel %vm562, %v549, %v552
      %v571 = vsel %vm565, %v558, 920167782
      %v572 = vsel %vm564, %v555, %v571
      %v573 = vsel %vm563, %v570, %v572
      %v574 = vsel %vm562, %v552, %v555
      %v575 = vsel %vm565, %v561, 1326507024
      %v576 = vsel %vm564, %v558, %v575
      %v577 = vsel %vm563, %v574, %v576
      %v578 = vshll.u32 %v538, 8
      %v579 = vmul.u32.u64.compose %v578, %v577
      %v580 = vextract.low.u32 %v579
      %v581 = vextract.high.u32 %v579
      %v582 = vmul.u32.u64.compose %v578, %v573
      %v583 = vextract.low.u32 %v582
      %v584 = vextract.high.u32 %v582
      %v585 = vmul.u32 %v578, %v569
      %v586 = vadd.s32 %v581, %v583
      %vm587 = vc.u32 %v581, %v583
      %v588 = vadd.s32 %v584, 1
      %v589 = vsel %vm587, %v588, %v584
      %v590 = vadd.s32 %v585, %v589
      %v591 = vadd.s32 %v590, 536870912
      %v592 = vshrl.u32 %v591, 30
      %v593 = vshll.u32 %v592, 30
      %v594 = vsub.s32 %v590, %v593
      %vm595 = vcmp.lt.s32.totalorder %v594, 0
      %v596 = vsub.s32 0, %v594
      %v597 = vsel %vm595, %v596, %v594
      %v598 = vclz %v597
      %v599 = vsub.s32 %v598, 2
      %vm600 = vcmp.gt.s32.totalorder 0, %v599
      %v601 = vsel %vm600, 0, %v599
      %v602 = vsub.s32 32, %v601
      %v603 = vshll.u32 %v594, %v601
      %v604 = vshrl.u32 %v586, %v602
      %v605 = vor.u32 %v603, %v604
      %v606 = vsub.s32 4294967266, %v601
      %v607 = vadd.s32 %v606, 127
      %v608 = vshll.u32 %v607, 23
      %v609 = vor.u32 4788187, %v608
      %v610 = vand.u32 2147483647, %v609
      %v612 = vcvt.s32.f32 %v605
      %v613 = vmul.f32 %v612, %v610
      %v614 = vxor.u32 %v613, 2147483648
      %v615 = vsel %vm532, %v614, %v613
      %v616 = vsub.s32 4, %v592
      %v617 = vsel %vm532, %v616, %v592
      %v618 = vsel %vm531, %v274, %v615
      %v619 = vsel %vm531, 0, %v617
      %v620 = vcosq.f32.pop %v618
      %v621 = vsinq.f32.pop %v618
      %vm622 = vweird.f32 %v274
      %v623 = vand.u32 %v619, 3
      %vm624 = vcmp.lt.s32.totalorder %v623, 2
      %vm625 = vcmp.eq.s32.totalorder %v623, 0
      %v626 = vxor.u32 %v621, 2147483648
      %v627 = vsel %vm625, %v620, %v626
      %vm628 = vcmp.eq.s32.totalorder %v623, 2
      %v629 = vxor.u32 %v620, 2147483648
      %v630 = vsel %vm628, %v629, %v621
      %v631 = vsel %vm624, %v627, %v630
      %v632 = vsel %vm622, nan, %v631
      %v633 = vand.u32 2147483647, %v275
      %vm634 = vcmp.le.f32.partialorder %v633, 0.7853982
      %vm635 = vcmp.lt.s32.totalorder %v275, 0
      %v636 = vand.u32 %v275, 2139095040
      %v637 = vshrl.u32 %v636, 23
      %v638 = vsub.s32 %v637, 127
      %v639 = vand.u32 2147483647, %v275
      %v640 = vand.u32 %v639, 8388607
      %v641 = vor.u32 %v640, 8388608
      %v642 = vsub.s32 0, %v641
      %v643 = vadd.s32 %v638, 1
      %vm644 = vcmp.gt.s32.totalorder %v643, 0
      %v645 = vsel %vm644, %v643, 0
      %v646 = vshrl.u32 %v645, 5
      %v647 = vand.u32 %v645, 31
      %v648 = vsub.s32 32, %v647
      %v649 = vshrl.u32 683565275, %v648
      %v650 = vshll.u32 683565275, %v647
      %v651 = vshrl.u32 2475754826, %v648
      %v652 = vor.u32 %v650, %v651
      %v653 = vshll.u32 2475754826, %v647
      %v654 = vshrl.u32 2131351028, %v648
      %v655 = vor.u32 %v653, %v654
      %v656 = vshll.u32 2131351028, %v647
      %v657 = vshrl.u32 2102212464, %v648
      %v658 = vor.u32 %v656, %v657
      %v659 = vshll.u32 2102212464, %v647
      %v660 = vshrl.u32 920167782, %v648
      %v661 = vor.u32 %v659, %v660
      %v662 = vshll.u32 920167782, %v647
      %v663 = vshrl.u32 1326507024, %v648
      %v664 = vor.u32 %v662, %v663
      %vm665 = vcmp.lt.s32.totalorder %v646, 1
      %vm666 = vcmp.lt.s32.totalorder %v646, 2
      %vm667 = vcmp.lt.s32.totalorder %v646, 3
      %vm668 = vcmp.lt.s32.totalorder %v646, 4
      %v669 = vsel %vm665, %v649, %v652
      %v670 = vsel %vm668, %v658, 2102212464
      %v671 = vsel %vm667, %v655, %v670
      %v672 = vsel %vm666, %v669, %v671
      %v673 = vsel %vm665, %v652, %v655
      %v674 = vsel %vm668, %v661, 920167782
      %v675 = vsel %vm667, %v658, %v674
      %v676 = vsel %vm666, %v673, %v675
      %v677 = vsel %vm665, %v655, %v658
      %v678 = vsel %vm668, %v664, 1326507024
      %v679 = vsel %vm667, %v661, %v678
      %v680 = vsel %vm666, %v677, %v679
      %v681 = vshll.u32 %v641, 8
      %v682 = vmul.u32.u64.compose %v681, %v680
      %v683 = vextract.low.u32 %v682
      %v684 = vextract.high.u32 %v682
      %v685 = vmul.u32.u64.compose %v681, %v676
      %v686 = vextract.low.u32 %v685
      %v687 = vextract.high.u32 %v685
      %v688 = vmul.u32 %v681, %v672
      %v689 = vadd.s32 %v684, %v686
      %vm690 = vc.u32 %v684, %v686
      %v691 = vadd.s32 %v687, 1
      %v692 = vsel %vm690, %v691, %v687
      %v693 = vadd.s32 %v688, %v692
      %v694 = vadd.s32 %v693, 536870912
      %v695 = vshrl.u32 %v694, 30
      %v696 = vshll.u32 %v695, 30
      %v697 = vsub.s32 %v693, %v696
      %vm698 = vcmp.lt.s32.totalorder %v697, 0
      %v699 = vsub.s32 0, %v697
      %v700 = vsel %vm698, %v699, %v697
      %v701 = vclz %v700
      %v702 = vsub.s32 %v701, 2
      %vm703 = vcmp.gt.s32.totalorder 0, %v702
      %v704 = vsel %vm703, 0, %v702
      %v705 = vsub.s32 32, %v704
      %v706 = vshll.u32 %v697, %v704
      %v707 = vshrl.u32 %v689, %v705
      %v708 = vor.u32 %v706, %v707
      %v709 = vsub.s32 4294967266, %v704
      %v710 = vadd.s32 %v709, 127
      %v711 = vshll.u32 %v710, 23
      %v712 = vor.u32 4788187, %v711
      %v713 = vand.u32 2147483647, %v712
      %v715 = vcvt.s32.f32 %v708
      %v716 = vmul.f32 %v715, %v713
      %v717 = vxor.u32 %v716, 2147483648
      %v718 = vsel %vm635, %v717, %v716
      %v719 = vsub.s32 4, %v695
      %v720 = vsel %vm635, %v719, %v695
      %v721 = vsel %vm634, %v275, %v718
      %v722 = vsel %vm634, 0, %v720
      %v723 = vcosq.f32.pop %v721
      %v724 = vsinq.f32.pop %v721
      %vm725 = vweird.f32 %v275
      %v726 = vand.u32 %v722, 3
      %vm727 = vcmp.lt.s32.totalorder %v726, 2
      %vm728 = vcmp.eq.s32.totalorder %v726, 0
      %v729 = vxor.u32 %v724, 2147483648
      %v730 = vsel %vm728, %v723, %v729
      %vm731 = vcmp.eq.s32.totalorder %v726, 2
      %v732 = vxor.u32 %v723, 2147483648
      %v733 = vsel %vm731, %v732, %v724
      %v734 = vsel %vm727, %v730, %v733
      %v735 = vsel %vm725, nan, %v734
      %v736 = vand.u32 2147483647, %v320
      %vm737 = vcmp.le.f32.partialorder %v736, 0.7853982
      %vm738 = vcmp.lt.s32.totalorder %v320, 0
      %v739 = vand.u32 %v320, 2139095040
      %v740 = vshrl.u32 %v739, 23
      %v741 = vsub.s32 %v740, 127
      %v742 = vand.u32 2147483647, %v320
      %v743 = vand.u32 %v742, 8388607
      %v744 = vor.u32 %v743, 8388608
      %v745 = vsub.s32 0, %v744
      %v746 = vadd.s32 %v741, 1
      %vm747 = vcmp.gt.s32.totalorder %v746, 0
      %v748 = vsel %vm747, %v746, 0
      %v749 = vshrl.u32 %v748, 5
      %v750 = vand.u32 %v748, 31
      %v751 = vsub.s32 32, %v750
      %v752 = vshrl.u32 683565275, %v751
      %v753 = vshll.u32 683565275, %v750
      %v754 = vshrl.u32 2475754826, %v751
      %v755 = vor.u32 %v753, %v754
      %v756 = vshll.u32 2475754826, %v750
      %v757 = vshrl.u32 2131351028, %v751
      %v758 = vor.u32 %v756, %v757
      %v759 = vshll.u32 2131351028, %v750
      %v760 = vshrl.u32 2102212464, %v751
      %v761 = vor.u32 %v759, %v760
      %v762 = vshll.u32 2102212464, %v750
      %v763 = vshrl.u32 920167782, %v751
      %v764 = vor.u32 %v762, %v763
      %v765 = vshll.u32 920167782, %v750
      %v766 = vshrl.u32 1326507024, %v751
      %v767 = vor.u32 %v765, %v766
      %vm768 = vcmp.lt.s32.totalorder %v749, 1
      %vm769 = vcmp.lt.s32.totalorder %v749, 2
      %vm770 = vcmp.lt.s32.totalorder %v749, 3
      %vm771 = vcmp.lt.s32.totalorder %v749, 4
      %v772 = vsel %vm768, %v752, %v755
      %v773 = vsel %vm771, %v761, 2102212464
      %v774 = vsel %vm770, %v758, %v773
      %v775 = vsel %vm769, %v772, %v774
      %v776 = vsel %vm768, %v755, %v758
      %v777 = vsel %vm771, %v764, 920167782
      %v778 = vsel %vm770, %v761, %v777
      %v779 = vsel %vm769, %v776, %v778
      %v780 = vsel %vm768, %v758, %v761
      %v781 = vsel %vm771, %v767, 1326507024
      %v782 = vsel %vm770, %v764, %v781
      %v783 = vsel %vm769, %v780, %v782
      %v784 = vshll.u32 %v744, 8
      %v785 = vmul.u32.u64.compose %v784, %v783
      %v786 = vextract.low.u32 %v785
      %v787 = vextract.high.u32 %v785
      %v788 = vmul.u32.u64.compose %v784, %v779
      %v789 = vextract.low.u32 %v788
      %v790 = vextract.high.u32 %v788
      %v791 = vmul.u32 %v784, %v775
      %v792 = vadd.s32 %v787, %v789
      %vm793 = vc.u32 %v787, %v789
      %v794 = vadd.s32 %v790, 1
      %v795 = vsel %vm793, %v794, %v790
      %v796 = vadd.s32 %v791, %v795
      %v797 = vadd.s32 %v796, 536870912
      %v798 = vshrl.u32 %v797, 30
      %v799 = vshll.u32 %v798, 30
      %v800 = vsub.s32 %v796, %v799
      %vm801 = vcmp.lt.s32.totalorder %v800, 0
      %v802 = vsub.s32 0, %v800
      %v803 = vsel %vm801, %v802, %v800
      %v804 = vclz %v803
      %v805 = vsub.s32 %v804, 2
      %vm806 = vcmp.gt.s32.totalorder 0, %v805
      %v807 = vsel %vm806, 0, %v805
      %v808 = vsub.s32 32, %v807
      %v809 = vshll.u32 %v800, %v807
      %v810 = vshrl.u32 %v792, %v808
      %v811 = vor.u32 %v809, %v810
      %v812 = vsub.s32 4294967266, %v807
      %v813 = vadd.s32 %v812, 127
      %v814 = vshll.u32 %v813, 23
      %v815 = vor.u32 4788187, %v814
      %v816 = vand.u32 2147483647, %v815
      %v818 = vcvt.s32.f32 %v811
      %v819 = vmul.f32 %v818, %v816
      %v820 = vxor.u32 %v819, 2147483648
      %v821 = vsel %vm738, %v820, %v819
      %v822 = vsub.s32 4, %v798
      %v823 = vsel %vm738, %v822, %v798
      %v824 = vsel %vm737, %v320, %v821
      %v825 = vsel %vm737, 0, %v823
      %v826 = vcosq.f32.pop %v824
      %v827 = vsinq.f32.pop %v824
      %vm828 = vweird.f32 %v320
      %v829 = vand.u32 %v825, 3
      %vm830 = vcmp.lt.s32.totalorder %v829, 2
      %vm831 = vcmp.eq.s32.totalorder %v829, 0
      %v832 = vxor.u32 %v827, 2147483648
      %v833 = vsel %vm831, %v826, %v832
      %vm834 = vcmp.eq.s32.totalorder %v829, 2
      %v835 = vxor.u32 %v826, 2147483648
      %v836 = vsel %vm834, %v835, %v827
      %v837 = vsel %vm830, %v833, %v836
      %v838 = vsel %vm828, nan, %v837
      %v839 = vand.u32 2147483647, %v321
      %vm840 = vcmp.le.f32.partialorder %v839, 0.7853982
      %vm841 = vcmp.lt.s32.totalorder %v321, 0
      %v842 = vand.u32 %v321, 2139095040
      %v843 = vshrl.u32 %v842, 23
      %v844 = vsub.s32 %v843, 127
      %v845 = vand.u32 2147483647, %v321
      %v846 = vand.u32 %v845, 8388607
      %v847 = vor.u32 %v846, 8388608
      %v848 = vsub.s32 0, %v847
      %v849 = vadd.s32 %v844, 1
      %vm850 = vcmp.gt.s32.totalorder %v849, 0
      %v851 = vsel %vm850, %v849, 0
      %v852 = vshrl.u32 %v851, 5
      %v853 = vand.u32 %v851, 31
      %v854 = vsub.s32 32, %v853
      %v855 = vshrl.u32 683565275, %v854
      %v856 = vshll.u32 683565275, %v853
      %v857 = vshrl.u32 2475754826, %v854
      %v858 = vor.u32 %v856, %v857
      %v859 = vshll.u32 2475754826, %v853
      %v860 = vshrl.u32 2131351028, %v854
      %v861 = vor.u32 %v859, %v860
      %v862 = vshll.u32 2131351028, %v853
      %v863 = vshrl.u32 2102212464, %v854
      %v864 = vor.u32 %v862, %v863
      %v865 = vshll.u32 2102212464, %v853
      %v866 = vshrl.u32 920167782, %v854
      %v867 = vor.u32 %v865, %v866
      %v868 = vshll.u32 920167782, %v853
      %v869 = vshrl.u32 1326507024, %v854
      %v870 = vor.u32 %v868, %v869
      %vm871 = vcmp.lt.s32.totalorder %v852, 1
      %vm872 = vcmp.lt.s32.totalorder %v852, 2
      %vm873 = vcmp.lt.s32.totalorder %v852, 3
      %vm874 = vcmp.lt.s32.totalorder %v852, 4
      %v875 = vsel %vm871, %v855, %v858
      %v876 = vsel %vm874, %v864, 2102212464
      %v877 = vsel %vm873, %v861, %v876
      %v878 = vsel %vm872, %v875, %v877
      %v879 = vsel %vm871, %v858, %v861
      %v880 = vsel %vm874, %v867, 920167782
      %v881 = vsel %vm873, %v864, %v880
      %v882 = vsel %vm872, %v879, %v881
      %v883 = vsel %vm871, %v861, %v864
      %v884 = vsel %vm874, %v870, 1326507024
      %v885 = vsel %vm873, %v867, %v884
      %v886 = vsel %vm872, %v883, %v885
      %v887 = vshll.u32 %v847, 8
      %v888 = vmul.u32.u64.compose %v887, %v886
      %v889 = vextract.low.u32 %v888
      %v890 = vextract.high.u32 %v888
      %v891 = vmul.u32.u64.compose %v887, %v882
      %v892 = vextract.low.u32 %v891
      %v893 = vextract.high.u32 %v891
      %v894 = vmul.u32 %v887, %v878
      %v895 = vadd.s32 %v890, %v892
      %vm896 = vc.u32 %v890, %v892
      %v897 = vadd.s32 %v893, 1
      %v898 = vsel %vm896, %v897, %v893
      %v899 = vadd.s32 %v894, %v898
      %v900 = vadd.s32 %v899, 536870912
      %v901 = vshrl.u32 %v900, 30
      %v902 = vshll.u32 %v901, 30
      %v903 = vsub.s32 %v899, %v902
      %vm904 = vcmp.lt.s32.totalorder %v903, 0
      %v905 = vsub.s32 0, %v903
      %v906 = vsel %vm904, %v905, %v903
      %v907 = vclz %v906
      %v908 = vsub.s32 %v907, 2
      %vm909 = vcmp.gt.s32.totalorder 0, %v908
      %v910 = vsel %vm909, 0, %v908
      %v911 = vsub.s32 32, %v910
      %v912 = vshll.u32 %v903, %v910
      %v913 = vshrl.u32 %v895, %v911
      %v914 = vor.u32 %v912, %v913
      %v915 = vsub.s32 4294967266, %v910
      %v916 = vadd.s32 %v915, 127
      %v917 = vshll.u32 %v916, 23
      %v918 = vor.u32 4788187, %v917
      %v919 = vand.u32 2147483647, %v918
      %v921 = vcvt.s32.f32 %v914
      %v922 = vmul.f32 %v921, %v919
      %v923 = vxor.u32 %v922, 2147483648
      %v924 = vsel %vm841, %v923, %v922
      %v925 = vsub.s32 4, %v901
      %v926 = vsel %vm841, %v925, %v901
      %v927 = vsel %vm840, %v321, %v924
      %v928 = vsel %vm840, 0, %v926
      %v929 = vcosq.f32.pop %v927
      %v930 = vsinq.f32.pop %v927
      %vm931 = vweird.f32 %v321
      %v932 = vand.u32 %v928, 3
      %vm933 = vcmp.lt.s32.totalorder %v932, 2
      %vm934 = vcmp.eq.s32.totalorder %v932, 0
      %v935 = vxor.u32 %v930, 2147483648
      %v936 = vsel %vm934, %v929, %v935
      %vm937 = vcmp.eq.s32.totalorder %v932, 2
      %v938 = vxor.u32 %v929, 2147483648
      %v939 = vsel %vm937, %v938, %v930
      %v940 = vsel %vm933, %v936, %v939
      %v941 = vsel %vm931, nan, %v940
      %v942 = vand.u32 2147483647, %v322
      %vm943 = vcmp.le.f32.partialorder %v942, 0.7853982
      %vm944 = vcmp.lt.s32.totalorder %v322, 0
      %v945 = vand.u32 %v322, 2139095040
      %v946 = vshrl.u32 %v945, 23
      %v947 = vsub.s32 %v946, 127
      %v948 = vand.u32 2147483647, %v322
      %v949 = vand.u32 %v948, 8388607
      %v950 = vor.u32 %v949, 8388608
      %v951 = vsub.s32 0, %v950
      %v952 = vadd.s32 %v947, 1
      %vm953 = vcmp.gt.s32.totalorder %v952, 0
      %v954 = vsel %vm953, %v952, 0
      %v955 = vshrl.u32 %v954, 5
      %v956 = vand.u32 %v954, 31
      %v957 = vsub.s32 32, %v956
      %v958 = vshrl.u32 683565275, %v957
      %v959 = vshll.u32 683565275, %v956
      %v960 = vshrl.u32 2475754826, %v957
      %v961 = vor.u32 %v959, %v960
      %v962 = vshll.u32 2475754826, %v956
      %v963 = vshrl.u32 2131351028, %v957
      %v964 = vor.u32 %v962, %v963
      %v965 = vshll.u32 2131351028, %v956
      %v966 = vshrl.u32 2102212464, %v957
      %v967 = vor.u32 %v965, %v966
      %v968 = vshll.u32 2102212464, %v956
      %v969 = vshrl.u32 920167782, %v957
      %v970 = vor.u32 %v968, %v969
      %v971 = vshll.u32 920167782, %v956
      %v972 = vshrl.u32 1326507024, %v957
      %v973 = vor.u32 %v971, %v972
      %vm974 = vcmp.lt.s32.totalorder %v955, 1
      %vm975 = vcmp.lt.s32.totalorder %v955, 2
      %vm976 = vcmp.lt.s32.totalorder %v955, 3
      %vm977 = vcmp.lt.s32.totalorder %v955, 4
      %v978 = vsel %vm974, %v958, %v961
      %v979 = vsel %vm977, %v967, 2102212464
      %v980 = vsel %vm976, %v964, %v979
      %v981 = vsel %vm975, %v978, %v980
      %v982 = vsel %vm974, %v961, %v964
      %v983 = vsel %vm977, %v970, 920167782
      %v984 = vsel %vm976, %v967, %v983
      %v985 = vsel %vm975, %v982, %v984
      %v986 = vsel %vm974, %v964, %v967
      %v987 = vsel %vm977, %v973, 1326507024
      %v988 = vsel %vm976, %v970, %v987
      %v989 = vsel %vm975, %v986, %v988
      %v990 = vshll.u32 %v950, 8
      %v991 = vmul.u32.u64.compose %v990, %v989
      %v992 = vextract.low.u32 %v991
      %v993 = vextract.high.u32 %v991
      %v994 = vmul.u32.u64.compose %v990, %v985
      %v995 = vextract.low.u32 %v994
      %v996 = vextract.high.u32 %v994
      %v997 = vmul.u32 %v990, %v981
      %v998 = vadd.s32 %v993, %v995
      %vm999 = vc.u32 %v993, %v995
      %v1000 = vadd.s32 %v996, 1
      %v1001 = vsel %vm999, %v1000, %v996
      %v1002 = vadd.s32 %v997, %v1001
      %v1003 = vadd.s32 %v1002, 536870912
      %v1004 = vshrl.u32 %v1003, 30
      %v1005 = vshll.u32 %v1004, 30
      %v1006 = vsub.s32 %v1002, %v1005
      %vm1007 = vcmp.lt.s32.totalorder %v1006, 0
      %v1008 = vsub.s32 0, %v1006
      %v1009 = vsel %vm1007, %v1008, %v1006
      %v1010 = vclz %v1009
      %v1011 = vsub.s32 %v1010, 2
      %vm1012 = vcmp.gt.s32.totalorder 0, %v1011
      %v1013 = vsel %vm1012, 0, %v1011
      %v1014 = vsub.s32 32, %v1013
      %v1015 = vshll.u32 %v1006, %v1013
      %v1016 = vshrl.u32 %v998, %v1014
      %v1017 = vor.u32 %v1015, %v1016
      %v1018 = vsub.s32 4294967266, %v1013
      %v1019 = vadd.s32 %v1018, 127
      %v1020 = vshll.u32 %v1019, 23
      %v1021 = vor.u32 4788187, %v1020
      %v1022 = vand.u32 2147483647, %v1021
      %v1024 = vcvt.s32.f32 %v1017
      %v1025 = vmul.f32 %v1024, %v1022
      %v1026 = vxor.u32 %v1025, 2147483648
      %v1027 = vsel %vm944, %v1026, %v1025
      %v1028 = vsub.s32 4, %v1004
      %v1029 = vsel %vm944, %v1028, %v1004
      %v1030 = vsel %vm943, %v322, %v1027
      %v1031 = vsel %vm943, 0, %v1029
      %v1032 = vcosq.f32.pop %v1030
      %v1033 = vsinq.f32.pop %v1030
      %vm1034 = vweird.f32 %v322
      %v1035 = vand.u32 %v1031, 3
      %vm1036 = vcmp.lt.s32.totalorder %v1035, 2
      %vm1037 = vcmp.eq.s32.totalorder %v1035, 0
      %v1038 = vxor.u32 %v1033, 2147483648
      %v1039 = vsel %vm1037, %v1032, %v1038
      %vm1040 = vcmp.eq.s32.totalorder %v1035, 2
      %v1041 = vxor.u32 %v1032, 2147483648
      %v1042 = vsel %vm1040, %v1041, %v1033
      %v1043 = vsel %vm1036, %v1039, %v1042
      %v1044 = vsel %vm1034, nan, %v1043
      %v1045 = vand.u32 2147483647, %v323
      %vm1046 = vcmp.le.f32.partialorder %v1045, 0.7853982
      %vm1047 = vcmp.lt.s32.totalorder %v323, 0
      %v1048 = vand.u32 %v323, 2139095040
      %v1049 = vshrl.u32 %v1048, 23
      %v1050 = vsub.s32 %v1049, 127
      %v1051 = vand.u32 2147483647, %v323
      %v1052 = vand.u32 %v1051, 8388607
      %v1053 = vor.u32 %v1052, 8388608
      %v1054 = vsub.s32 0, %v1053
      %v1055 = vadd.s32 %v1050, 1
      %vm1056 = vcmp.gt.s32.totalorder %v1055, 0
      %v1057 = vsel %vm1056, %v1055, 0
      %v1058 = vshrl.u32 %v1057, 5
      %v1059 = vand.u32 %v1057, 31
      %v1060 = vsub.s32 32, %v1059
      %v1061 = vshrl.u32 683565275, %v1060
      %v1062 = vshll.u32 683565275, %v1059
      %v1063 = vshrl.u32 2475754826, %v1060
      %v1064 = vor.u32 %v1062, %v1063
      %v1065 = vshll.u32 2475754826, %v1059
      %v1066 = vshrl.u32 2131351028, %v1060
      %v1067 = vor.u32 %v1065, %v1066
      %v1068 = vshll.u32 2131351028, %v1059
      %v1069 = vshrl.u32 2102212464, %v1060
      %v1070 = vor.u32 %v1068, %v1069
      %v1071 = vshll.u32 2102212464, %v1059
      %v1072 = vshrl.u32 920167782, %v1060
      %v1073 = vor.u32 %v1071, %v1072
      %v1074 = vshll.u32 920167782, %v1059
      %v1075 = vshrl.u32 1326507024, %v1060
      %v1076 = vor.u32 %v1074, %v1075
      %vm1077 = vcmp.lt.s32.totalorder %v1058, 1
      %vm1078 = vcmp.lt.s32.totalorder %v1058, 2
      %vm1079 = vcmp.lt.s32.totalorder %v1058, 3
      %vm1080 = vcmp.lt.s32.totalorder %v1058, 4
      %v1081 = vsel %vm1077, %v1061, %v1064
      %v1082 = vsel %vm1080, %v1070, 2102212464
      %v1083 = vsel %vm1079, %v1067, %v1082
      %v1084 = vsel %vm1078, %v1081, %v1083
      %v1085 = vsel %vm1077, %v1064, %v1067
      %v1086 = vsel %vm1080, %v1073, 920167782
      %v1087 = vsel %vm1079, %v1070, %v1086
      %v1088 = vsel %vm1078, %v1085, %v1087
      %v1089 = vsel %vm1077, %v1067, %v1070
      %v1090 = vsel %vm1080, %v1076, 1326507024
      %v1091 = vsel %vm1079, %v1073, %v1090
      %v1092 = vsel %vm1078, %v1089, %v1091
      %v1093 = vshll.u32 %v1053, 8
      %v1094 = vmul.u32.u64.compose %v1093, %v1092
      %v1095 = vextract.low.u32 %v1094
      %v1096 = vextract.high.u32 %v1094
      %v1097 = vmul.u32.u64.compose %v1093, %v1088
      %v1098 = vextract.low.u32 %v1097
      %v1099 = vextract.high.u32 %v1097
      %v1100 = vmul.u32 %v1093, %v1084
      %v1101 = vadd.s32 %v1096, %v1098
      %vm1102 = vc.u32 %v1096, %v1098
      %v1103 = vadd.s32 %v1099, 1
      %v1104 = vsel %vm1102, %v1103, %v1099
      %v1105 = vadd.s32 %v1100, %v1104
      %v1106 = vadd.s32 %v1105, 536870912
      %v1107 = vshrl.u32 %v1106, 30
      %v1108 = vshll.u32 %v1107, 30
      %v1109 = vsub.s32 %v1105, %v1108
      %vm1110 = vcmp.lt.s32.totalorder %v1109, 0
      %v1111 = vsub.s32 0, %v1109
      %v1112 = vsel %vm1110, %v1111, %v1109
      %v1113 = vclz %v1112
      %v1114 = vsub.s32 %v1113, 2
      %vm1115 = vcmp.gt.s32.totalorder 0, %v1114
      %v1116 = vsel %vm1115, 0, %v1114
      %v1117 = vsub.s32 32, %v1116
      %v1118 = vshll.u32 %v1109, %v1116
      %v1119 = vshrl.u32 %v1101, %v1117
      %v1120 = vor.u32 %v1118, %v1119
      %v1121 = vsub.s32 4294967266, %v1116
      %v1122 = vadd.s32 %v1121, 127
      %v1123 = vshll.u32 %v1122, 23
      %v1124 = vor.u32 4788187, %v1123
      %v1125 = vand.u32 2147483647, %v1124
      %v1127 = vcvt.s32.f32 %v1120
      %v1128 = vmul.f32 %v1127, %v1125
      %v1129 = vxor.u32 %v1128, 2147483648
      %v1130 = vsel %vm1047, %v1129, %v1128
      %v1131 = vsub.s32 4, %v1107
      %v1132 = vsel %vm1047, %v1131, %v1107
      %v1133 = vsel %vm1046, %v323, %v1130
      %v1134 = vsel %vm1046, 0, %v1132
      %v1135 = vcosq.f32.pop %v1133
      %v1136 = vsinq.f32.pop %v1133
      %vm1137 = vweird.f32 %v323
      %v1138 = vand.u32 %v1134, 3
      %vm1139 = vcmp.lt.s32.totalorder %v1138, 2
      %vm1140 = vcmp.eq.s32.totalorder %v1138, 0
      %v1141 = vxor.u32 %v1136, 2147483648
      %v1142 = vsel %vm1140, %v1135, %v1141
      %vm1143 = vcmp.eq.s32.totalorder %v1138, 2
      %v1144 = vxor.u32 %v1135, 2147483648
      %v1145 = vsel %vm1143, %v1144, %v1136
      %v1146 = vsel %vm1139, %v1142, %v1145
      %v1147 = vsel %vm1137, nan, %v1146
      %v1148 = vand.u32 2147483647, %v272
      %vm1149 = vcmp.le.f32.partialorder %v1148, 0.7853982
      %vm1150 = vcmp.lt.s32.totalorder %v272, 0
      %v1151 = vand.u32 %v272, 2139095040
      %v1152 = vshrl.u32 %v1151, 23
      %v1153 = vsub.s32 %v1152, 127
      %v1154 = vand.u32 2147483647, %v272
      %v1155 = vand.u32 %v1154, 8388607
      %v1156 = vor.u32 %v1155, 8388608
      %v1157 = vsub.s32 0, %v1156
      %v1158 = vadd.s32 %v1153, 1
      %vm1159 = vcmp.gt.s32.totalorder %v1158, 0
      %v1160 = vsel %vm1159, %v1158, 0
      %v1161 = vshrl.u32 %v1160, 5
      %v1162 = vand.u32 %v1160, 31
      %v1163 = vsub.s32 32, %v1162
      %v1164 = vshrl.u32 683565275, %v1163
      %v1165 = vshll.u32 683565275, %v1162
      %v1166 = vshrl.u32 2475754826, %v1163
      %v1167 = vor.u32 %v1165, %v1166
      %v1168 = vshll.u32 2475754826, %v1162
      %v1169 = vshrl.u32 2131351028, %v1163
      %v1170 = vor.u32 %v1168, %v1169
      %v1171 = vshll.u32 2131351028, %v1162
      %v1172 = vshrl.u32 2102212464, %v1163
      %v1173 = vor.u32 %v1171, %v1172
      %v1174 = vshll.u32 2102212464, %v1162
      %v1175 = vshrl.u32 920167782, %v1163
      %v1176 = vor.u32 %v1174, %v1175
      %v1177 = vshll.u32 920167782, %v1162
      %v1178 = vshrl.u32 1326507024, %v1163
      %v1179 = vor.u32 %v1177, %v1178
      %vm1180 = vcmp.lt.s32.totalorder %v1161, 1
      %vm1181 = vcmp.lt.s32.totalorder %v1161, 2
      %vm1182 = vcmp.lt.s32.totalorder %v1161, 3
      %vm1183 = vcmp.lt.s32.totalorder %v1161, 4
      %v1184 = vsel %vm1180, %v1164, %v1167
      %v1185 = vsel %vm1183, %v1173, 2102212464
      %v1186 = vsel %vm1182, %v1170, %v1185
      %v1187 = vsel %vm1181, %v1184, %v1186
      %v1188 = vsel %vm1180, %v1167, %v1170
      %v1189 = vsel %vm1183, %v1176, 920167782
      %v1190 = vsel %vm1182, %v1173, %v1189
      %v1191 = vsel %vm1181, %v1188, %v1190
      %v1192 = vsel %vm1180, %v1170, %v1173
      %v1193 = vsel %vm1183, %v1179, 1326507024
      %v1194 = vsel %vm1182, %v1176, %v1193
      %v1195 = vsel %vm1181, %v1192, %v1194
      %v1196 = vshll.u32 %v1156, 8
      %v1197 = vmul.u32.u64.compose %v1196, %v1195
      %v1198 = vextract.low.u32 %v1197
      %v1199 = vextract.high.u32 %v1197
      %v1200 = vmul.u32.u64.compose %v1196, %v1191
      %v1201 = vextract.low.u32 %v1200
      %v1202 = vextract.high.u32 %v1200
      %v1203 = vmul.u32 %v1196, %v1187
      %v1204 = vadd.s32 %v1199, %v1201
      %vm1205 = vc.u32 %v1199, %v1201
      %v1206 = vadd.s32 %v1202, 1
      %v1207 = vsel %vm1205, %v1206, %v1202
      %v1208 = vadd.s32 %v1203, %v1207
      %v1209 = vadd.s32 %v1208, 536870912
      %v1210 = vshrl.u32 %v1209, 30
      %v1211 = vshll.u32 %v1210, 30
      %v1212 = vsub.s32 %v1208, %v1211
      %vm1213 = vcmp.lt.s32.totalorder %v1212, 0
      %v1214 = vsub.s32 0, %v1212
      %v1215 = vsel %vm1213, %v1214, %v1212
      %v1216 = vclz %v1215
      %v1217 = vsub.s32 %v1216, 2
      %vm1218 = vcmp.gt.s32.totalorder 0, %v1217
      %v1219 = vsel %vm1218, 0, %v1217
      %v1220 = vsub.s32 32, %v1219
      %v1221 = vshll.u32 %v1212, %v1219
      %v1222 = vshrl.u32 %v1204, %v1220
      %v1223 = vor.u32 %v1221, %v1222
      %v1224 = vsub.s32 4294967266, %v1219
      %v1225 = vadd.s32 %v1224, 127
      %v1226 = vshll.u32 %v1225, 23
      %v1227 = vor.u32 4788187, %v1226
      %v1228 = vand.u32 2147483647, %v1227
      %v1230 = vcvt.s32.f32 %v1223
      %v1231 = vmul.f32 %v1230, %v1228
      %v1232 = vxor.u32 %v1231, 2147483648
      %v1233 = vsel %vm1150, %v1232, %v1231
      %v1234 = vsub.s32 4, %v1210
      %v1235 = vsel %vm1150, %v1234, %v1210
      %v1236 = vsel %vm1149, %v272, %v1233
      %v1237 = vsel %vm1149, 0, %v1235
      %v1238 = vcosq.f32.pop %v1236
      %v1239 = vsinq.f32.pop %v1236
      %vm1240 = vweird.f32 %v272
      %v1241 = vadd.s32 %v1237, 3
      %v1242 = vand.u32 %v1241, 3
      %vm1243 = vcmp.lt.s32.totalorder %v1242, 2
      %vm1244 = vcmp.eq.s32.totalorder %v1242, 0
      %v1245 = vxor.u32 %v1239, 2147483648
      %v1246 = vsel %vm1244, %v1238, %v1245
      %vm1247 = vcmp.eq.s32.totalorder %v1242, 2
      %v1248 = vxor.u32 %v1238, 2147483648
      %v1249 = vsel %vm1247, %v1248, %v1239
      %v1250 = vsel %vm1243, %v1246, %v1249
      %v1251 = vsel %vm1240, nan, %v1250
      %v1252 = vand.u32 2147483647, %v273
      %vm1253 = vcmp.le.f32.partialorder %v1252, 0.7853982
      %vm1254 = vcmp.lt.s32.totalorder %v273, 0
      %v1255 = vand.u32 %v273, 2139095040
      %v1256 = vshrl.u32 %v1255, 23
      %v1257 = vsub.s32 %v1256, 127
      %v1258 = vand.u32 2147483647, %v273
      %v1259 = vand.u32 %v1258, 8388607
      %v1260 = vor.u32 %v1259, 8388608
      %v1261 = vsub.s32 0, %v1260
      %v1262 = vadd.s32 %v1257, 1
      %vm1263 = vcmp.gt.s32.totalorder %v1262, 0
      %v1264 = vsel %vm1263, %v1262, 0
      %v1265 = vshrl.u32 %v1264, 5
      %v1266 = vand.u32 %v1264, 31
      %v1267 = vsub.s32 32, %v1266
      %v1268 = vshrl.u32 683565275, %v1267
      %v1269 = vshll.u32 683565275, %v1266
      %v1270 = vshrl.u32 2475754826, %v1267
      %v1271 = vor.u32 %v1269, %v1270
      %v1272 = vshll.u32 2475754826, %v1266
      %v1273 = vshrl.u32 2131351028, %v1267
      %v1274 = vor.u32 %v1272, %v1273
      %v1275 = vshll.u32 2131351028, %v1266
      %v1276 = vshrl.u32 2102212464, %v1267
      %v1277 = vor.u32 %v1275, %v1276
      %v1278 = vshll.u32 2102212464, %v1266
      %v1279 = vshrl.u32 920167782, %v1267
      %v1280 = vor.u32 %v1278, %v1279
      %v1281 = vshll.u32 920167782, %v1266
      %v1282 = vshrl.u32 1326507024, %v1267
      %v1283 = vor.u32 %v1281, %v1282
      %vm1284 = vcmp.lt.s32.totalorder %v1265, 1
      %vm1285 = vcmp.lt.s32.totalorder %v1265, 2
      %vm1286 = vcmp.lt.s32.totalorder %v1265, 3
      %vm1287 = vcmp.lt.s32.totalorder %v1265, 4
      %v1288 = vsel %vm1284, %v1268, %v1271
      %v1289 = vsel %vm1287, %v1277, 2102212464
      %v1290 = vsel %vm1286, %v1274, %v1289
      %v1291 = vsel %vm1285, %v1288, %v1290
      %v1292 = vsel %vm1284, %v1271, %v1274
      %v1293 = vsel %vm1287, %v1280, 920167782
      %v1294 = vsel %vm1286, %v1277, %v1293
      %v1295 = vsel %vm1285, %v1292, %v1294
      %v1296 = vsel %vm1284, %v1274, %v1277
      %v1297 = vsel %vm1287, %v1283, 1326507024
      %v1298 = vsel %vm1286, %v1280, %v1297
      %v1299 = vsel %vm1285, %v1296, %v1298
      %v1300 = vshll.u32 %v1260, 8
      %v1301 = vmul.u32.u64.compose %v1300, %v1299
      %v1302 = vextract.low.u32 %v1301
      %v1303 = vextract.high.u32 %v1301
      %v1304 = vmul.u32.u64.compose %v1300, %v1295
      %v1305 = vextract.low.u32 %v1304
      %v1306 = vextract.high.u32 %v1304
      %v1307 = vmul.u32 %v1300, %v1291
      %v1308 = vadd.s32 %v1303, %v1305
      %vm1309 = vc.u32 %v1303, %v1305
      %v1310 = vadd.s32 %v1306, 1
      %v1311 = vsel %vm1309, %v1310, %v1306
      %v1312 = vadd.s32 %v1307, %v1311
      %v1313 = vadd.s32 %v1312, 536870912
      %v1314 = vshrl.u32 %v1313, 30
      %v1315 = vshll.u32 %v1314, 30
      %v1316 = vsub.s32 %v1312, %v1315
      %vm1317 = vcmp.lt.s32.totalorder %v1316, 0
      %v1318 = vsub.s32 0, %v1316
      %v1319 = vsel %vm1317, %v1318, %v1316
      %v1320 = vclz %v1319
      %v1321 = vsub.s32 %v1320, 2
      %vm1322 = vcmp.gt.s32.totalorder 0, %v1321
      %v1323 = vsel %vm1322, 0, %v1321
      %v1324 = vsub.s32 32, %v1323
      %v1325 = vshll.u32 %v1316, %v1323
      %v1326 = vshrl.u32 %v1308, %v1324
      %v1327 = vor.u32 %v1325, %v1326
      %v1328 = vsub.s32 4294967266, %v1323
      %v1329 = vadd.s32 %v1328, 127
      %v1330 = vshll.u32 %v1329, 23
      %v1331 = vor.u32 4788187, %v1330
      %v1332 = vand.u32 2147483647, %v1331
      %v1334 = vcvt.s32.f32 %v1327
      %v1335 = vmul.f32 %v1334, %v1332
      %v1336 = vxor.u32 %v1335, 2147483648
      %v1337 = vsel %vm1254, %v1336, %v1335
      %v1338 = vsub.s32 4, %v1314
      %v1339 = vsel %vm1254, %v1338, %v1314
      %v1340 = vsel %vm1253, %v273, %v1337
      %v1341 = vsel %vm1253, 0, %v1339
      %v1342 = vcosq.f32.pop %v1340
      %v1343 = vsinq.f32.pop %v1340
      %vm1344 = vweird.f32 %v273
      %v1345 = vadd.s32 %v1341, 3
      %v1346 = vand.u32 %v1345, 3
      %vm1347 = vcmp.lt.s32.totalorder %v1346, 2
      %vm1348 = vcmp.eq.s32.totalorder %v1346, 0
      %v1349 = vxor.u32 %v1343, 2147483648
      %v1350 = vsel %vm1348, %v1342, %v1349
      %vm1351 = vcmp.eq.s32.totalorder %v1346, 2
      %v1352 = vxor.u32 %v1342, 2147483648
      %v1353 = vsel %vm1351, %v1352, %v1343
      %v1354 = vsel %vm1347, %v1350, %v1353
      %v1355 = vsel %vm1344, nan, %v1354
      %v1356 = vand.u32 2147483647, %v274
      %vm1357 = vcmp.le.f32.partialorder %v1356, 0.7853982
      %vm1358 = vcmp.lt.s32.totalorder %v274, 0
      %v1359 = vand.u32 %v274, 2139095040
      %v1360 = vshrl.u32 %v1359, 23
      %v1361 = vsub.s32 %v1360, 127
      %v1362 = vand.u32 2147483647, %v274
      %v1363 = vand.u32 %v1362, 8388607
      %v1364 = vor.u32 %v1363, 8388608
      %v1365 = vsub.s32 0, %v1364
      %v1366 = vadd.s32 %v1361, 1
      %vm1367 = vcmp.gt.s32.totalorder %v1366, 0
      %v1368 = vsel %vm1367, %v1366, 0
      %v1369 = vshrl.u32 %v1368, 5
      %v1370 = vand.u32 %v1368, 31
      %v1371 = vsub.s32 32, %v1370
      %v1372 = vshrl.u32 683565275, %v1371
      %v1373 = vshll.u32 683565275, %v1370
      %v1374 = vshrl.u32 2475754826, %v1371
      %v1375 = vor.u32 %v1373, %v1374
      %v1376 = vshll.u32 2475754826, %v1370
      %v1377 = vshrl.u32 2131351028, %v1371
      %v1378 = vor.u32 %v1376, %v1377
      %v1379 = vshll.u32 2131351028, %v1370
      %v1380 = vshrl.u32 2102212464, %v1371
      %v1381 = vor.u32 %v1379, %v1380
      %v1382 = vshll.u32 2102212464, %v1370
      %v1383 = vshrl.u32 920167782, %v1371
      %v1384 = vor.u32 %v1382, %v1383
      %v1385 = vshll.u32 920167782, %v1370
      %v1386 = vshrl.u32 1326507024, %v1371
      %v1387 = vor.u32 %v1385, %v1386
      %vm1388 = vcmp.lt.s32.totalorder %v1369, 1
      %vm1389 = vcmp.lt.s32.totalorder %v1369, 2
      %vm1390 = vcmp.lt.s32.totalorder %v1369, 3
      %vm1391 = vcmp.lt.s32.totalorder %v1369, 4
      %v1392 = vsel %vm1388, %v1372, %v1375
      %v1393 = vsel %vm1391, %v1381, 2102212464
      %v1394 = vsel %vm1390, %v1378, %v1393
      %v1395 = vsel %vm1389, %v1392, %v1394
      %v1396 = vsel %vm1388, %v1375, %v1378
      %v1397 = vsel %vm1391, %v1384, 920167782
      %v1398 = vsel %vm1390, %v1381, %v1397
      %v1399 = vsel %vm1389, %v1396, %v1398
      %v1400 = vsel %vm1388, %v1378, %v1381
      %v1401 = vsel %vm1391, %v1387, 1326507024
      %v1402 = vsel %vm1390, %v1384, %v1401
      %v1403 = vsel %vm1389, %v1400, %v1402
      %v1404 = vshll.u32 %v1364, 8
      %v1405 = vmul.u32.u64.compose %v1404, %v1403
      %v1406 = vextract.low.u32 %v1405
      %v1407 = vextract.high.u32 %v1405
      %v1408 = vmul.u32.u64.compose %v1404, %v1399
      %v1409 = vextract.low.u32 %v1408
      %v1410 = vextract.high.u32 %v1408
      %v1411 = vmul.u32 %v1404, %v1395
      %v1412 = vadd.s32 %v1407, %v1409
      %vm1413 = vc.u32 %v1407, %v1409
      %v1414 = vadd.s32 %v1410, 1
      %v1415 = vsel %vm1413, %v1414, %v1410
      %v1416 = vadd.s32 %v1411, %v1415
      %v1417 = vadd.s32 %v1416, 536870912
      %v1418 = vshrl.u32 %v1417, 30
      %v1419 = vshll.u32 %v1418, 30
      %v1420 = vsub.s32 %v1416, %v1419
      %vm1421 = vcmp.lt.s32.totalorder %v1420, 0
      %v1422 = vsub.s32 0, %v1420
      %v1423 = vsel %vm1421, %v1422, %v1420
      %v1424 = vclz %v1423
      %v1425 = vsub.s32 %v1424, 2
      %vm1426 = vcmp.gt.s32.totalorder 0, %v1425
      %v1427 = vsel %vm1426, 0, %v1425
      %v1428 = vsub.s32 32, %v1427
      %v1429 = vshll.u32 %v1420, %v1427
      %v1430 = vshrl.u32 %v1412, %v1428
      %v1431 = vor.u32 %v1429, %v1430
      %v1432 = vsub.s32 4294967266, %v1427
      %v1433 = vadd.s32 %v1432, 127
      %v1434 = vshll.u32 %v1433, 23
      %v1435 = vor.u32 4788187, %v1434
      %v1436 = vand.u32 2147483647, %v1435
      %v1438 = vcvt.s32.f32 %v1431
      %v1439 = vmul.f32 %v1438, %v1436
      %v1440 = vxor.u32 %v1439, 2147483648
      %v1441 = vsel %vm1358, %v1440, %v1439
      %v1442 = vsub.s32 4, %v1418
      %v1443 = vsel %vm1358, %v1442, %v1418
      %v1444 = vsel %vm1357, %v274, %v1441
      %v1445 = vsel %vm1357, 0, %v1443
      %v1446 = vcosq.f32.pop %v1444
      %v1447 = vsinq.f32.pop %v1444
      %vm1448 = vweird.f32 %v274
      %v1449 = vadd.s32 %v1445, 3
      %v1450 = vand.u32 %v1449, 3
      %vm1451 = vcmp.lt.s32.totalorder %v1450, 2
      %vm1452 = vcmp.eq.s32.totalorder %v1450, 0
      %v1453 = vxor.u32 %v1447, 2147483648
      %v1454 = vsel %vm1452, %v1446, %v1453
      %vm1455 = vcmp.eq.s32.totalorder %v1450, 2
      %v1456 = vxor.u32 %v1446, 2147483648
      %v1457 = vsel %vm1455, %v1456, %v1447
      %v1458 = vsel %vm1451, %v1454, %v1457
      %v1459 = vsel %vm1448, nan, %v1458
      %v1460 = vand.u32 2147483647, %v275
      %vm1461 = vcmp.le.f32.partialorder %v1460, 0.7853982
      %vm1462 = vcmp.lt.s32.totalorder %v275, 0
      %v1463 = vand.u32 %v275, 2139095040
      %v1464 = vshrl.u32 %v1463, 23
      %v1465 = vsub.s32 %v1464, 127
      %v1466 = vand.u32 2147483647, %v275
      %v1467 = vand.u32 %v1466, 8388607
      %v1468 = vor.u32 %v1467, 8388608
      %v1469 = vsub.s32 0, %v1468
      %v1470 = vadd.s32 %v1465, 1
      %vm1471 = vcmp.gt.s32.totalorder %v1470, 0
      %v1472 = vsel %vm1471, %v1470, 0
      %v1473 = vshrl.u32 %v1472, 5
      %v1474 = vand.u32 %v1472, 31
      %v1475 = vsub.s32 32, %v1474
      %v1476 = vshrl.u32 683565275, %v1475
      %v1477 = vshll.u32 683565275, %v1474
      %v1478 = vshrl.u32 2475754826, %v1475
      %v1479 = vor.u32 %v1477, %v1478
      %v1480 = vshll.u32 2475754826, %v1474
      %v1481 = vshrl.u32 2131351028, %v1475
      %v1482 = vor.u32 %v1480, %v1481
      %v1483 = vshll.u32 2131351028, %v1474
      %v1484 = vshrl.u32 2102212464, %v1475
      %v1485 = vor.u32 %v1483, %v1484
      %v1486 = vshll.u32 2102212464, %v1474
      %v1487 = vshrl.u32 920167782, %v1475
      %v1488 = vor.u32 %v1486, %v1487
      %v1489 = vshll.u32 920167782, %v1474
      %v1490 = vshrl.u32 1326507024, %v1475
      %v1491 = vor.u32 %v1489, %v1490
      %vm1492 = vcmp.lt.s32.totalorder %v1473, 1
      %vm1493 = vcmp.lt.s32.totalorder %v1473, 2
      %vm1494 = vcmp.lt.s32.totalorder %v1473, 3
      %vm1495 = vcmp.lt.s32.totalorder %v1473, 4
      %v1496 = vsel %vm1492, %v1476, %v1479
      %v1497 = vsel %vm1495, %v1485, 2102212464
      %v1498 = vsel %vm1494, %v1482, %v1497
      %v1499 = vsel %vm1493, %v1496, %v1498
      %v1500 = vsel %vm1492, %v1479, %v1482
      %v1501 = vsel %vm1495, %v1488, 920167782
      %v1502 = vsel %vm1494, %v1485, %v1501
      %v1503 = vsel %vm1493, %v1500, %v1502
      %v1504 = vsel %vm1492, %v1482, %v1485
      %v1505 = vsel %vm1495, %v1491, 1326507024
      %v1506 = vsel %vm1494, %v1488, %v1505
      %v1507 = vsel %vm1493, %v1504, %v1506
      %v1508 = vshll.u32 %v1468, 8
      %v1509 = vmul.u32.u64.compose %v1508, %v1507
      %v1510 = vextract.low.u32 %v1509
      %v1511 = vextract.high.u32 %v1509
      %v1512 = vmul.u32.u64.compose %v1508, %v1503
      %v1513 = vextract.low.u32 %v1512
      %v1514 = vextract.high.u32 %v1512
      %v1515 = vmul.u32 %v1508, %v1499
      %v1516 = vadd.s32 %v1511, %v1513
      %vm1517 = vc.u32 %v1511, %v1513
      %v1518 = vadd.s32 %v1514, 1
      %v1519 = vsel %vm1517, %v1518, %v1514
      %v1520 = vadd.s32 %v1515, %v1519
      %v1521 = vadd.s32 %v1520, 536870912
      %v1522 = vshrl.u32 %v1521, 30
      %v1523 = vshll.u32 %v1522, 30
      %v1524 = vsub.s32 %v1520, %v1523
      %vm1525 = vcmp.lt.s32.totalorder %v1524, 0
      %v1526 = vsub.s32 0, %v1524
      %v1527 = vsel %vm1525, %v1526, %v1524
      %v1528 = vclz %v1527
      %v1529 = vsub.s32 %v1528, 2
      %vm1530 = vcmp.gt.s32.totalorder 0, %v1529
      %v1531 = vsel %vm1530, 0, %v1529
      %v1532 = vsub.s32 32, %v1531
      %v1533 = vshll.u32 %v1524, %v1531
      %v1534 = vshrl.u32 %v1516, %v1532
      %v1535 = vor.u32 %v1533, %v1534
      %v1536 = vsub.s32 4294967266, %v1531
      %v1537 = vadd.s32 %v1536, 127
      %v1538 = vshll.u32 %v1537, 23
      %v1539 = vor.u32 4788187, %v1538
      %v1540 = vand.u32 2147483647, %v1539
      %v1542 = vcvt.s32.f32 %v1535
      %v1543 = vmul.f32 %v1542, %v1540
      %v1544 = vxor.u32 %v1543, 2147483648
      %v1545 = vsel %vm1462, %v1544, %v1543
      %v1546 = vsub.s32 4, %v1522
      %v1547 = vsel %vm1462, %v1546, %v1522
      %v1548 = vsel %vm1461, %v275, %v1545
      %v1549 = vsel %vm1461, 0, %v1547
      %v1550 = vcosq.f32.pop %v1548
      %v1551 = vsinq.f32.pop %v1548
      %vm1552 = vweird.f32 %v275
      %v1553 = vadd.s32 %v1549, 3
      %v1554 = vand.u32 %v1553, 3
      %vm1555 = vcmp.lt.s32.totalorder %v1554, 2
      %vm1556 = vcmp.eq.s32.totalorder %v1554, 0
      %v1557 = vxor.u32 %v1551, 2147483648
      %v1558 = vsel %vm1556, %v1550, %v1557
      %vm1559 = vcmp.eq.s32.totalorder %v1554, 2
      %v1560 = vxor.u32 %v1550, 2147483648
      %v1561 = vsel %vm1559, %v1560, %v1551
      %v1562 = vsel %vm1555, %v1558, %v1561
      %v1563 = vsel %vm1552, nan, %v1562
      %v1564 = vand.u32 2147483647, %v320
      %vm1565 = vcmp.le.f32.partialorder %v1564, 0.7853982
      %vm1566 = vcmp.lt.s32.totalorder %v320, 0
      %v1567 = vand.u32 %v320, 2139095040
      %v1568 = vshrl.u32 %v1567, 23
      %v1569 = vsub.s32 %v1568, 127
      %v1570 = vand.u32 2147483647, %v320
      %v1571 = vand.u32 %v1570, 8388607
      %v1572 = vor.u32 %v1571, 8388608
      %v1573 = vsub.s32 0, %v1572
      %v1574 = vadd.s32 %v1569, 1
      %vm1575 = vcmp.gt.s32.totalorder %v1574, 0
      %v1576 = vsel %vm1575, %v1574, 0
      %v1577 = vshrl.u32 %v1576, 5
      %v1578 = vand.u32 %v1576, 31
      %v1579 = vsub.s32 32, %v1578
      %v1580 = vshrl.u32 683565275, %v1579
      %v1581 = vshll.u32 683565275, %v1578
      %v1582 = vshrl.u32 2475754826, %v1579
      %v1583 = vor.u32 %v1581, %v1582
      %v1584 = vshll.u32 2475754826, %v1578
      %v1585 = vshrl.u32 2131351028, %v1579
      %v1586 = vor.u32 %v1584, %v1585
      %v1587 = vshll.u32 2131351028, %v1578
      %v1588 = vshrl.u32 2102212464, %v1579
      %v1589 = vor.u32 %v1587, %v1588
      %v1590 = vshll.u32 2102212464, %v1578
      %v1591 = vshrl.u32 920167782, %v1579
      %v1592 = vor.u32 %v1590, %v1591
      %v1593 = vshll.u32 920167782, %v1578
      %v1594 = vshrl.u32 1326507024, %v1579
      %v1595 = vor.u32 %v1593, %v1594
      %vm1596 = vcmp.lt.s32.totalorder %v1577, 1
      %vm1597 = vcmp.lt.s32.totalorder %v1577, 2
      %vm1598 = vcmp.lt.s32.totalorder %v1577, 3
      %vm1599 = vcmp.lt.s32.totalorder %v1577, 4
      %v1600 = vsel %vm1596, %v1580, %v1583
      %v1601 = vsel %vm1599, %v1589, 2102212464
      %v1602 = vsel %vm1598, %v1586, %v1601
      %v1603 = vsel %vm1597, %v1600, %v1602
      %v1604 = vsel %vm1596, %v1583, %v1586
      %v1605 = vsel %vm1599, %v1592, 920167782
      %v1606 = vsel %vm1598, %v1589, %v1605
      %v1607 = vsel %vm1597, %v1604, %v1606
      %v1608 = vsel %vm1596, %v1586, %v1589
      %v1609 = vsel %vm1599, %v1595, 1326507024
      %v1610 = vsel %vm1598, %v1592, %v1609
      %v1611 = vsel %vm1597, %v1608, %v1610
      %v1612 = vshll.u32 %v1572, 8
      %v1613 = vmul.u32.u64.compose %v1612, %v1611
      %v1614 = vextract.low.u32 %v1613
      %v1615 = vextract.high.u32 %v1613
      %v1616 = vmul.u32.u64.compose %v1612, %v1607
      %v1617 = vextract.low.u32 %v1616
      %v1618 = vextract.high.u32 %v1616
      %v1619 = vmul.u32 %v1612, %v1603
      %v1620 = vadd.s32 %v1615, %v1617
      %vm1621 = vc.u32 %v1615, %v1617
      %v1622 = vadd.s32 %v1618, 1
      %v1623 = vsel %vm1621, %v1622, %v1618
      %v1624 = vadd.s32 %v1619, %v1623
      %v1625 = vadd.s32 %v1624, 536870912
      %v1626 = vshrl.u32 %v1625, 30
      %v1627 = vshll.u32 %v1626, 30
      %v1628 = vsub.s32 %v1624, %v1627
      %vm1629 = vcmp.lt.s32.totalorder %v1628, 0
      %v1630 = vsub.s32 0, %v1628
      %v1631 = vsel %vm1629, %v1630, %v1628
      %v1632 = vclz %v1631
      %v1633 = vsub.s32 %v1632, 2
      %vm1634 = vcmp.gt.s32.totalorder 0, %v1633
      %v1635 = vsel %vm1634, 0, %v1633
      %v1636 = vsub.s32 32, %v1635
      %v1637 = vshll.u32 %v1628, %v1635
      %v1638 = vshrl.u32 %v1620, %v1636
      %v1639 = vor.u32 %v1637, %v1638
      %v1640 = vsub.s32 4294967266, %v1635
      %v1641 = vadd.s32 %v1640, 127
      %v1642 = vshll.u32 %v1641, 23
      %v1643 = vor.u32 4788187, %v1642
      %v1644 = vand.u32 2147483647, %v1643
      %v1646 = vcvt.s32.f32 %v1639
      %v1647 = vmul.f32 %v1646, %v1644
      %v1648 = vxor.u32 %v1647, 2147483648
      %v1649 = vsel %vm1566, %v1648, %v1647
      %v1650 = vsub.s32 4, %v1626
      %v1651 = vsel %vm1566, %v1650, %v1626
      %v1652 = vsel %vm1565, %v320, %v1649
      %v1653 = vsel %vm1565, 0, %v1651
      %v1654 = vcosq.f32.pop %v1652
      %v1655 = vsinq.f32.pop %v1652
      %vm1656 = vweird.f32 %v320
      %v1657 = vadd.s32 %v1653, 3
      %v1658 = vand.u32 %v1657, 3
      %vm1659 = vcmp.lt.s32.totalorder %v1658, 2
      %vm1660 = vcmp.eq.s32.totalorder %v1658, 0
      %v1661 = vxor.u32 %v1655, 2147483648
      %v1662 = vsel %vm1660, %v1654, %v1661
      %vm1663 = vcmp.eq.s32.totalorder %v1658, 2
      %v1664 = vxor.u32 %v1654, 2147483648
      %v1665 = vsel %vm1663, %v1664, %v1655
      %v1666 = vsel %vm1659, %v1662, %v1665
      %v1667 = vsel %vm1656, nan, %v1666
      %v1668 = vand.u32 2147483647, %v321
      %vm1669 = vcmp.le.f32.partialorder %v1668, 0.7853982
      %vm1670 = vcmp.lt.s32.totalorder %v321, 0
      %v1671 = vand.u32 %v321, 2139095040
      %v1672 = vshrl.u32 %v1671, 23
      %v1673 = vsub.s32 %v1672, 127
      %v1674 = vand.u32 2147483647, %v321
      %v1675 = vand.u32 %v1674, 8388607
      %v1676 = vor.u32 %v1675, 8388608
      %v1677 = vsub.s32 0, %v1676
      %v1678 = vadd.s32 %v1673, 1
      %vm1679 = vcmp.gt.s32.totalorder %v1678, 0
      %v1680 = vsel %vm1679, %v1678, 0
      %v1681 = vshrl.u32 %v1680, 5
      %v1682 = vand.u32 %v1680, 31
      %v1683 = vsub.s32 32, %v1682
      %v1684 = vshrl.u32 683565275, %v1683
      %v1685 = vshll.u32 683565275, %v1682
      %v1686 = vshrl.u32 2475754826, %v1683
      %v1687 = vor.u32 %v1685, %v1686
      %v1688 = vshll.u32 2475754826, %v1682
      %v1689 = vshrl.u32 2131351028, %v1683
      %v1690 = vor.u32 %v1688, %v1689
      %v1691 = vshll.u32 2131351028, %v1682
      %v1692 = vshrl.u32 2102212464, %v1683
      %v1693 = vor.u32 %v1691, %v1692
      %v1694 = vshll.u32 2102212464, %v1682
      %v1695 = vshrl.u32 920167782, %v1683
      %v1696 = vor.u32 %v1694, %v1695
      %v1697 = vshll.u32 920167782, %v1682
      %v1698 = vshrl.u32 1326507024, %v1683
      %v1699 = vor.u32 %v1697, %v1698
      %vm1700 = vcmp.lt.s32.totalorder %v1681, 1
      %vm1701 = vcmp.lt.s32.totalorder %v1681, 2
      %vm1702 = vcmp.lt.s32.totalorder %v1681, 3
      %vm1703 = vcmp.lt.s32.totalorder %v1681, 4
      %v1704 = vsel %vm1700, %v1684, %v1687
      %v1705 = vsel %vm1703, %v1693, 2102212464
      %v1706 = vsel %vm1702, %v1690, %v1705
      %v1707 = vsel %vm1701, %v1704, %v1706
      %v1708 = vsel %vm1700, %v1687, %v1690
      %v1709 = vsel %vm1703, %v1696, 920167782
      %v1710 = vsel %vm1702, %v1693, %v1709
      %v1711 = vsel %vm1701, %v1708, %v1710
      %v1712 = vsel %vm1700, %v1690, %v1693
      %v1713 = vsel %vm1703, %v1699, 1326507024
      %v1714 = vsel %vm1702, %v1696, %v1713
      %v1715 = vsel %vm1701, %v1712, %v1714
      %v1716 = vshll.u32 %v1676, 8
      %v1717 = vmul.u32.u64.compose %v1716, %v1715
      %v1718 = vextract.low.u32 %v1717
      %v1719 = vextract.high.u32 %v1717
      %v1720 = vmul.u32.u64.compose %v1716, %v1711
      %v1721 = vextract.low.u32 %v1720
      %v1722 = vextract.high.u32 %v1720
      %v1723 = vmul.u32 %v1716, %v1707
      %v1724 = vadd.s32 %v1719, %v1721
      %vm1725 = vc.u32 %v1719, %v1721
      %v1726 = vadd.s32 %v1722, 1
      %v1727 = vsel %vm1725, %v1726, %v1722
      %v1728 = vadd.s32 %v1723, %v1727
      %v1729 = vadd.s32 %v1728, 536870912
      %v1730 = vshrl.u32 %v1729, 30
      %v1731 = vshll.u32 %v1730, 30
      %v1732 = vsub.s32 %v1728, %v1731
      %vm1733 = vcmp.lt.s32.totalorder %v1732, 0
      %v1734 = vsub.s32 0, %v1732
      %v1735 = vsel %vm1733, %v1734, %v1732
      %v1736 = vclz %v1735
      %v1737 = vsub.s32 %v1736, 2
      %vm1738 = vcmp.gt.s32.totalorder 0, %v1737
      %v1739 = vsel %vm1738, 0, %v1737
      %v1740 = vsub.s32 32, %v1739
      %v1741 = vshll.u32 %v1732, %v1739
      %v1742 = vshrl.u32 %v1724, %v1740
      %v1743 = vor.u32 %v1741, %v1742
      %v1744 = vsub.s32 4294967266, %v1739
      %v1745 = vadd.s32 %v1744, 127
      %v1746 = vshll.u32 %v1745, 23
      %v1747 = vor.u32 4788187, %v1746
      %v1748 = vand.u32 2147483647, %v1747
      %v1750 = vcvt.s32.f32 %v1743
      %v1751 = vmul.f32 %v1750, %v1748
      %v1752 = vxor.u32 %v1751, 2147483648
      %v1753 = vsel %vm1670, %v1752, %v1751
      %v1754 = vsub.s32 4, %v1730
      %v1755 = vsel %vm1670, %v1754, %v1730
      %v1756 = vsel %vm1669, %v321, %v1753
      %v1757 = vsel %vm1669, 0, %v1755
      %v1758 = vcosq.f32.pop %v1756
      %v1759 = vsinq.f32.pop %v1756
      %vm1760 = vweird.f32 %v321
      %v1761 = vadd.s32 %v1757, 3
      %v1762 = vand.u32 %v1761, 3
      %vm1763 = vcmp.lt.s32.totalorder %v1762, 2
      %vm1764 = vcmp.eq.s32.totalorder %v1762, 0
      %v1765 = vxor.u32 %v1759, 2147483648
      %v1766 = vsel %vm1764, %v1758, %v1765
      %vm1767 = vcmp.eq.s32.totalorder %v1762, 2
      %v1768 = vxor.u32 %v1758, 2147483648
      %v1769 = vsel %vm1767, %v1768, %v1759
      %v1770 = vsel %vm1763, %v1766, %v1769
      %v1771 = vsel %vm1760, nan, %v1770
      %v1772 = vand.u32 2147483647, %v322
      %vm1773 = vcmp.le.f32.partialorder %v1772, 0.7853982
      %vm1774 = vcmp.lt.s32.totalorder %v322, 0
      %v1775 = vand.u32 %v322, 2139095040
      %v1776 = vshrl.u32 %v1775, 23
      %v1777 = vsub.s32 %v1776, 127
      %v1778 = vand.u32 2147483647, %v322
      %v1779 = vand.u32 %v1778, 8388607
      %v1780 = vor.u32 %v1779, 8388608
      %v1781 = vsub.s32 0, %v1780
      %v1782 = vadd.s32 %v1777, 1
      %vm1783 = vcmp.gt.s32.totalorder %v1782, 0
      %v1784 = vsel %vm1783, %v1782, 0
      %v1785 = vshrl.u32 %v1784, 5
      %v1786 = vand.u32 %v1784, 31
      %v1787 = vsub.s32 32, %v1786
      %v1788 = vshrl.u32 683565275, %v1787
      %v1789 = vshll.u32 683565275, %v1786
      %v1790 = vshrl.u32 2475754826, %v1787
      %v1791 = vor.u32 %v1789, %v1790
      %v1792 = vshll.u32 2475754826, %v1786
      %v1793 = vshrl.u32 2131351028, %v1787
      %v1794 = vor.u32 %v1792, %v1793
      %v1795 = vshll.u32 2131351028, %v1786
      %v1796 = vshrl.u32 2102212464, %v1787
      %v1797 = vor.u32 %v1795, %v1796
      %v1798 = vshll.u32 2102212464, %v1786
      %v1799 = vshrl.u32 920167782, %v1787
      %v1800 = vor.u32 %v1798, %v1799
      %v1801 = vshll.u32 920167782, %v1786
      %v1802 = vshrl.u32 1326507024, %v1787
      %v1803 = vor.u32 %v1801, %v1802
      %vm1804 = vcmp.lt.s32.totalorder %v1785, 1
      %vm1805 = vcmp.lt.s32.totalorder %v1785, 2
      %vm1806 = vcmp.lt.s32.totalorder %v1785, 3
      %vm1807 = vcmp.lt.s32.totalorder %v1785, 4
      %v1808 = vsel %vm1804, %v1788, %v1791
      %v1809 = vsel %vm1807, %v1797, 2102212464
      %v1810 = vsel %vm1806, %v1794, %v1809
      %v1811 = vsel %vm1805, %v1808, %v1810
      %v1812 = vsel %vm1804, %v1791, %v1794
      %v1813 = vsel %vm1807, %v1800, 920167782
      %v1814 = vsel %vm1806, %v1797, %v1813
      %v1815 = vsel %vm1805, %v1812, %v1814
      %v1816 = vsel %vm1804, %v1794, %v1797
      %v1817 = vsel %vm1807, %v1803, 1326507024
      %v1818 = vsel %vm1806, %v1800, %v1817
      %v1819 = vsel %vm1805, %v1816, %v1818
      %v1820 = vshll.u32 %v1780, 8
      %v1821 = vmul.u32.u64.compose %v1820, %v1819
      %v1822 = vextract.low.u32 %v1821
      %v1823 = vextract.high.u32 %v1821
      %v1824 = vmul.u32.u64.compose %v1820, %v1815
      %v1825 = vextract.low.u32 %v1824
      %v1826 = vextract.high.u32 %v1824
      %v1827 = vmul.u32 %v1820, %v1811
      %v1828 = vadd.s32 %v1823, %v1825
      %vm1829 = vc.u32 %v1823, %v1825
      %v1830 = vadd.s32 %v1826, 1
      %v1831 = vsel %vm1829, %v1830, %v1826
      %v1832 = vadd.s32 %v1827, %v1831
      %v1833 = vadd.s32 %v1832, 536870912
      %v1834 = vshrl.u32 %v1833, 30
      %v1835 = vshll.u32 %v1834, 30
      %v1836 = vsub.s32 %v1832, %v1835
      %vm1837 = vcmp.lt.s32.totalorder %v1836, 0
      %v1838 = vsub.s32 0, %v1836
      %v1839 = vsel %vm1837, %v1838, %v1836
      %v1840 = vclz %v1839
      %v1841 = vsub.s32 %v1840, 2
      %vm1842 = vcmp.gt.s32.totalorder 0, %v1841
      %v1843 = vsel %vm1842, 0, %v1841
      %v1844 = vsub.s32 32, %v1843
      %v1845 = vshll.u32 %v1836, %v1843
      %v1846 = vshrl.u32 %v1828, %v1844
      %v1847 = vor.u32 %v1845, %v1846
      %v1848 = vsub.s32 4294967266, %v1843
      %v1849 = vadd.s32 %v1848, 127
      %v1850 = vshll.u32 %v1849, 23
      %v1851 = vor.u32 4788187, %v1850
      %v1852 = vand.u32 2147483647, %v1851
      %v1854 = vcvt.s32.f32 %v1847
      %v1855 = vmul.f32 %v1854, %v1852
      %v1856 = vxor.u32 %v1855, 2147483648
      %v1857 = vsel %vm1774, %v1856, %v1855
      %v1858 = vsub.s32 4, %v1834
      %v1859 = vsel %vm1774, %v1858, %v1834
      %v1860 = vsel %vm1773, %v322, %v1857
      %v1861 = vsel %vm1773, 0, %v1859
      %v1862 = vcosq.f32.pop %v1860
      %v1863 = vsinq.f32.pop %v1860
      %vm1864 = vweird.f32 %v322
      %v1865 = vadd.s32 %v1861, 3
      %v1866 = vand.u32 %v1865, 3
      %vm1867 = vcmp.lt.s32.totalorder %v1866, 2
      %vm1868 = vcmp.eq.s32.totalorder %v1866, 0
      %v1869 = vxor.u32 %v1863, 2147483648
      %v1870 = vsel %vm1868, %v1862, %v1869
      %vm1871 = vcmp.eq.s32.totalorder %v1866, 2
      %v1872 = vxor.u32 %v1862, 2147483648
      %v1873 = vsel %vm1871, %v1872, %v1863
      %v1874 = vsel %vm1867, %v1870, %v1873
      %v1875 = vsel %vm1864, nan, %v1874
      %v1876 = vand.u32 2147483647, %v323
      %vm1877 = vcmp.le.f32.partialorder %v1876, 0.7853982
      %vm1878 = vcmp.lt.s32.totalorder %v323, 0
      %v1879 = vand.u32 %v323, 2139095040
      %v1880 = vshrl.u32 %v1879, 23
      %v1881 = vsub.s32 %v1880, 127
      %v1882 = vand.u32 2147483647, %v323
      %v1883 = vand.u32 %v1882, 8388607
      %v1884 = vor.u32 %v1883, 8388608
      %v1885 = vsub.s32 0, %v1884
      %v1886 = vadd.s32 %v1881, 1
      %vm1887 = vcmp.gt.s32.totalorder %v1886, 0
      %v1888 = vsel %vm1887, %v1886, 0
      %v1889 = vshrl.u32 %v1888, 5
      %v1890 = vand.u32 %v1888, 31
      %v1891 = vsub.s32 32, %v1890
      %v1892 = vshrl.u32 683565275, %v1891
      %v1893 = vshll.u32 683565275, %v1890
      %v1894 = vshrl.u32 2475754826, %v1891
      %v1895 = vor.u32 %v1893, %v1894
      %v1896 = vshll.u32 2475754826, %v1890
      %v1897 = vshrl.u32 2131351028, %v1891
      %v1898 = vor.u32 %v1896, %v1897
      %v1899 = vshll.u32 2131351028, %v1890
      %v1900 = vshrl.u32 2102212464, %v1891
      %v1901 = vor.u32 %v1899, %v1900
      %v1902 = vshll.u32 2102212464, %v1890
      %v1903 = vshrl.u32 920167782, %v1891
      %v1904 = vor.u32 %v1902, %v1903
      %v1905 = vshll.u32 920167782, %v1890
      %v1906 = vshrl.u32 1326507024, %v1891
      %v1907 = vor.u32 %v1905, %v1906
      %vm1908 = vcmp.lt.s32.totalorder %v1889, 1
      %vm1909 = vcmp.lt.s32.totalorder %v1889, 2
      %vm1910 = vcmp.lt.s32.totalorder %v1889, 3
      %vm1911 = vcmp.lt.s32.totalorder %v1889, 4
      %v1912 = vsel %vm1908, %v1892, %v1895
      %v1913 = vsel %vm1911, %v1901, 2102212464
      %v1914 = vsel %vm1910, %v1898, %v1913
      %v1915 = vsel %vm1909, %v1912, %v1914
      %v1916 = vsel %vm1908, %v1895, %v1898
      %v1917 = vsel %vm1911, %v1904, 920167782
      %v1918 = vsel %vm1910, %v1901, %v1917
      %v1919 = vsel %vm1909, %v1916, %v1918
      %v1920 = vsel %vm1908, %v1898, %v1901
      %v1921 = vsel %vm1911, %v1907, 1326507024
      %v1922 = vsel %vm1910, %v1904, %v1921
      %v1923 = vsel %vm1909, %v1920, %v1922
      %v1924 = vshll.u32 %v1884, 8
      %v1925 = vmul.u32.u64.compose %v1924, %v1923
      %v1926 = vextract.low.u32 %v1925
      %v1927 = vextract.high.u32 %v1925
      %v1928 = vmul.u32.u64.compose %v1924, %v1919
      %v1929 = vextract.low.u32 %v1928
      %v1930 = vextract.high.u32 %v1928
      %v1931 = vmul.u32 %v1924, %v1915
      %v1932 = vadd.s32 %v1927, %v1929
      %vm1933 = vc.u32 %v1927, %v1929
      %v1934 = vadd.s32 %v1930, 1
      %v1935 = vsel %vm1933, %v1934, %v1930
      %v1936 = vadd.s32 %v1931, %v1935
      %v1937 = vadd.s32 %v1936, 536870912
      %v1938 = vshrl.u32 %v1937, 30
      %v1939 = vshll.u32 %v1938, 30
      %v1940 = vsub.s32 %v1936, %v1939
      %vm1941 = vcmp.lt.s32.totalorder %v1940, 0
      %v1942 = vsub.s32 0, %v1940
      %v1943 = vsel %vm1941, %v1942, %v1940
      %v1944 = vclz %v1943
      %v1945 = vsub.s32 %v1944, 2
      %vm1946 = vcmp.gt.s32.totalorder 0, %v1945
      %v1947 = vsel %vm1946, 0, %v1945
      %v1948 = vsub.s32 32, %v1947
      %v1949 = vshll.u32 %v1940, %v1947
      %v1950 = vshrl.u32 %v1932, %v1948
      %v1951 = vor.u32 %v1949, %v1950
      %v1952 = vsub.s32 4294967266, %v1947
      %v1953 = vadd.s32 %v1952, 127
      %v1954 = vshll.u32 %v1953, 23
      %v1955 = vor.u32 4788187, %v1954
      %v1956 = vand.u32 2147483647, %v1955
      %v1958 = vcvt.s32.f32 %v1951
      %v1959 = vmul.f32 %v1958, %v1956
      %v1960 = vxor.u32 %v1959, 2147483648
      %v1961 = vsel %vm1878, %v1960, %v1959
      %v1962 = vsub.s32 4, %v1938
      %v1963 = vsel %vm1878, %v1962, %v1938
      %v1964 = vsel %vm1877, %v323, %v1961
      %v1965 = vsel %vm1877, 0, %v1963
      %v1966 = vcosq.f32.pop %v1964
      %v1967 = vsinq.f32.pop %v1964
      %vm1968 = vweird.f32 %v323
      %v1969 = vadd.s32 %v1965, 3
      %v1970 = vand.u32 %v1969, 3
      %vm1971 = vcmp.lt.s32.totalorder %v1970, 2
      %vm1972 = vcmp.eq.s32.totalorder %v1970, 0
      %v1973 = vxor.u32 %v1967, 2147483648
      %v1974 = vsel %vm1972, %v1966, %v1973
      %vm1975 = vcmp.eq.s32.totalorder %v1970, 2
      %v1976 = vxor.u32 %v1966, 2147483648
      %v1977 = vsel %vm1975, %v1976, %v1967
      %v1978 = vsel %vm1971, %v1974, %v1977
      %v1979 = vsel %vm1968, nan, %v1978
      %v1980 = vld [vmem:[%s4] sm:$0xff]
      %v1981 = vld [vmem:[%s4 + $0x8] sm:$0xff]
      %v1982 = vld [vmem:[%s5] sm:$0xff]
      %v1983 = vld [vmem:[%s5 + $0x8] sm:$0xff]
      %1985 = vset.pattern.permute.xlu0 0
      %1986 = vperm.xlu0 %1985, %v1982
      %v1987 = vpop.permute.xlu0 %1986
      %1990 = vset.pattern.permute.xlu0 0
      %1991 = vperm.xlu0 %1990, %v1983
      %v1992 = vpop.permute.xlu0 %1991
      %vm1994 = vcmask 785408
      %v1996 = vsel %vm1994, %v1980, 0
      %v1999 = vsel %vm1994, %v1981, 0
      %2001 = vmatprep.subr.mxu0 %v529
      %2002 = vmatpush1.msra.mxu0 %v426
      %2003 = vmatprep.subr.mxu0 %v735
      %2004 = vmatpush1.msra.mxu0 %v632
      %2005 = vmatprep.subr.mxu0 %v941
      %2006 = vmatpush1.msra.mxu0 %v838
      %2007 = vmatprep.subr.mxu0 %v1147
      %2008 = vmatpush1.msra.mxu0 %v1044
      %2009 = vmatprep.subr.mxu0 %v1355
      %2010 = vmatpush1.msra.mxu0 %v1251
      %2011 = vmatprep.subr.mxu0 %v1563
      %2012 = vmatpush1.msra.mxu0 %v1459
      %2013 = vmatprep.subr.mxu0 %v1771
      %2014 = vmatpush1.msra.mxu0 %v1667
      %2015 = vmatprep.subr.mxu0 %v1979
      %2016 = vmatpush1.msra.mxu0 %v1875
      %2017 = vmatprep.subr.mxu0 %v273
      %2018 = vmatpush1.msra.mxu0 %v272
      %2019 = vmatprep.subr.mxu0 %v275
      %2020 = vmatpush1.msra.mxu0 %v274
      %2021 = vmatprep.subr.mxu0 %v321
      %2022 = vmatpush1.msra.mxu0 %v320
      %2023 = vmatprep.subr.mxu0 %v323
      %2024 = vmatpush1.msra.mxu0 %v322
      %2025 = vmatprep.subr.mxu0 0.0
      %2026 = vmatpush1.msra.mxu0 0.0
      %2027 = vmatprep.subr.mxu0 0.0
      %2028 = vmatpush1.msra.mxu0 0.0
      %2029 = vmatprep.subr.mxu0 0.0
      %2030 = vmatpush1.msra.mxu0 0.0
      %2031 = vmatprep.subr.mxu0 0.0
      %2032 = vmatpush1.msra.mxu0 0.0
      %2033 = vmatprep.subr.mxu0 0.0
      %2034 = vmatpush1.msra.mxu0 0.0
      %2035 = vmatprep.subr.mxu0 0.0
      %2036 = vmatpush1.msra.mxu0 0.0
      %2037 = vmatprep.subr.mxu0 0.0
      %2038 = vmatpush1.msra.mxu0 0.0
      %2039 = vmatprep.subr.mxu0 0.0
      %2040 = vmatpush1.msra.mxu0 0.0
      %2041 = vmatprep.subr.mxu0 0.0
      %2042 = vmatpush1.msra.mxu0 0.0
      %2043 = vmatprep.subr.mxu0 0.0
      %2044 = vmatpush1.msra.mxu0 0.0
      %2045 = vmatprep.subr.mxu0 0.0
      %2046 = vmatpush1.msra.mxu0 0.0
      %2047 = vmatprep.subr.mxu0 0.0
      %2048 = vmatpush1.msra.mxu0 0.0
      %2049 = vmatprep.subr.mxu0 0.0
      %2050 = vmatpush1.msra.mxu0 0.0
      %2051 = vmatprep.subr.mxu0 0.0
      %2052 = vmatpush1.msra.mxu0 0.0
      %2053 = vmatprep.subr.mxu0 0.0
      %2054 = vmatpush1.msra.mxu0 0.0
      %2055 = vmatprep.subr.mxu0 0.0
      %2056 = vmatpush1.msra.mxu0 0.0
      %2057 = vmatprep.subr.mxu0 0.0
      %2058 = vmatpush1.msra.mxu0 0.0
      %2059 = vmatprep.subr.mxu0 0.0
      %2060 = vmatpush1.msra.mxu0 0.0
      %2061 = vmatprep.subr.mxu0 0.0
      %2062 = vmatpush1.msra.mxu0 0.0
      %2063 = vmatprep.subr.mxu0 0.0
      %2064 = vmatpush1.msra.mxu0 0.0
      %2065 = vmatprep.mubr.f32.mxu0 0.0
      %2066 = vmatmul.mubr.f32.gmra.mrb[0].mxu0 %v1996
      %v2067 = vpop.f32.mrb[0].mxu0
      %v2068 = vadd.f32 %v1987, %v2067
      %v2069 = vpop.f32.mrb[0].mxu0
      %v2070 = vadd.f32 %v1987, %v2069
      %2071 = vmatprep.mubr.f32.mxu0 0.0
      %2072 = vmatmul.mubr.f32.gmra.mrb[0].mxu0 %v1999
      %v2073 = vpop.f32.mrb[0].mxu0
      %v2074 = vadd.f32 %v1992, %v2073
      %v2075 = vpop.f32.mrb[0].mxu0
      %v2076 = vadd.f32 %v1992, %v2075
      %2077 = vdwg.mxu0
      %2078 = vst [vmem:[%s271] sm:$0xff] %v2068
      %2079 = vst [vmem:[%s271 + $0x8] sm:$0xff] %v2070
      %2080 = vst [vmem:[%s271 + $0x10] sm:$0xff] %v2074
      %2081 = vst [vmem:[%s271 + $0x18] sm:$0xff] %v2076
      %p2082 = scmp.lt.s32.totalorder %s17, 1
      %s2083 = scalar_select %p2082, %s17, 1
      %s2084 = smul.addr %s2083, 4
      %s2085 = smul.addr %s2084, 8
      %s2086 = scalar_lea.vmem %s6, %s2085
      // Predicated region
      $region45: #{forward.7} parent=43 // pred_check
        %p2087 = pneg %p171
      $region46: #{forward.7} parent=43 // pred_check_branch
        %2089 = sbr.rel (%p2087) target = $region48
      $region47: #{forward.7} parent=43 // pred_region
        _
      $region48: #{forward.7} parent=43 // pred_fallthru
        _
    $region44: #{forward.7} parent=5 // pred_fallthru
      _
    %p2090 = scmp.le.s32.totalorder 2, %s12
    // Predicated region
    $region49: #{forward.7} parent=5 // pred_check
      %p2091 = pneg %p2090
    $region50: #{forward.7} parent=5 // pred_check_branch
      %2093 = sbr.rel (%p2091) target = $region52
    $region51: #{forward.7} parent=5 // pred_region
      %s2094 = ssub.s32 %s12, 2
      // Predicated region
      $region53: #{forward.7} parent=51 // pred_check
        %p2095 = pneg %p177
      $region54: #{forward.7} parent=51 // pred_check_branch
        %2097 = sbr.rel (%p2095) target = $region56
      $region55: #{forward.7} parent=51 // pred_region
        %p2098 = scmp.lt.s32.totalorder %s18, 1
        %s2099 = scalar_select %p2098, %s18, 1
        %s2100 = smul.addr %s2099, 4
        %s2101 = smul.addr %s2100, 8
        %s2102 = scalar_lea.vmem %s6, %s2101
      $region56: #{forward.7} parent=51 // pred_fallthru
        _
    $region52: #{forward.7} parent=5 // pred_fallthru
      _
  $region6: #{forward.7} parent=0 // loop_footer
    %s16 = sadd.s32 1, %s12
  $region7: #{forward.7} parent=0 // loop_footer_branch
    %11 = sbr.rel target = $region3
  $region8: #{forward.7} parent=0 // loop_exit
    _

</llo_original>
